<compile_context>
chip_gen: v7x
topology: tpu7x:2x2x1
jax: 0.10.0
libtpu: 0.0.40
codegen_flags: <defaults>
</compile_context>

<pallas_src>
import math

import jax
import jax.numpy as jnp
from jax.experimental import pallas as pl
from jax.experimental.pallas import tpu as pltpu

# ---------------- small, module-consistent sizes ----------------
B          = 2     # batch
T_ENC      = 8     # encoder tokens (PaSST sequence length)
T_DEC      = 8     # target caption length
D_ENC      = 64    # stand-in for 768 (PaSST embed dim)
NHID       = 32    # stand-in for 512 (decoder d_model / nhid)
NHEAD      = 4     # config.decoder.nhead
DHEAD      = NHID // NHEAD
DIM_FF     = 64    # config.decoder.dim_feedforward
NLAYERS    = 2     # config.decoder.nlayers
NTOKEN     = 50    # vocabulary size
NTOKEN_PAD = 128   # lane-dense final fc (sliced back to NTOKEN in the wrapper)
LN_EPS     = 1e-5
NEG_INF    = -1e30
SQRT_NHID  = math.sqrt(NHID)
ATTN_SCALE = 1.0 / math.sqrt(DHEAD)


# ============================= fused Pallas kernel =============================

def _add_layernorm(x, r, g, b):
    # post-norm residual: LayerNorm(x + r) over last dim
    h = x + r
    mu = jnp.mean(h, axis=-1, keepdims=True)
    var = jnp.mean((h - mu) ** 2, axis=-1, keepdims=True)
    return (h - mu) * jax.lax.rsqrt(var + LN_EPS) * g + b


def _attention(q, kv, wo, bo, mask):
    # q: (Tq, NHID) projected queries; kv: (Tk, 2*NHID) = [K | V] projected keys/values.
    # Output projection is fused: concat_h(attn_h) @ wo == sum_h attn_h @ wo[h*Dh:(h+1)*Dh, :].
    out = None
    for h in range(NHEAD):
        lo, hi = h * DHEAD, (h + 1) * DHEAD
        qh = q[:, lo:hi]
        kh = kv[:, lo:hi]
        vh = kv[:, NHID + lo:NHID + hi]
        s = jax.lax.dot_general(qh, kh, (((1,), (1,)), ((), ())),
                                preferred_element_type=jnp.float32) * ATTN_SCALE
        if mask is not None:
            s = s + mask
        s = s - jnp.max(s, axis=-1, keepdims=True)
        p = jnp.exp(s)
        p = p / jnp.sum(p, axis=-1, keepdims=True)
        ah = jnp.dot(p, vh, preferred_element_type=jnp.float32)
        contrib = jnp.dot(ah, wo[lo:hi, :], preferred_element_type=jnp.float32)
        out = contrib if out is None else out + contrib
    return out + bo


def _fused_caption_kernel(
        src_ref, emb_ref, pe_ref, mask_ref, enc_w_ref, enc_b_ref,
        sa_wqkv_ref, sa_bqkv_ref, sa_wo_ref, sa_bo_ref,
        ca_wq_ref, ca_bq_ref, ca_wkv_ref, ca_bkv_ref, ca_wo_ref, ca_bo_ref,
        ln1_g_ref, ln1_b_ref, ln2_g_ref, ln2_b_ref, ln3_g_ref, ln3_b_ref,
        ff1_w_ref, ff1_b_ref, ff2_w_ref, ff2_b_ref,
        fc_w_ref, fc_b_ref, out_ref):
    # ----- encode: F.relu_(encoder_linear(passt_feats)) for this batch element -----
    memory = jnp.maximum(
        jnp.dot(src_ref[0], enc_w_ref[...], preferred_element_type=jnp.float32)
        + enc_b_ref[...], 0.0)                                    # (T_enc, NHID)

    # ----- word_emb * sqrt(nhid) + positional encoding (dropout = identity in eval) -----
    x = emb_ref[0] * SQRT_NHID + pe_ref[...]                      # (T_dec, NHID)
    tgt_mask = mask_ref[...]                                      # (T_dec, T_dec) additive

    # ----- post-norm TransformerDecoder (norm_first=False, relu FFN), layers unrolled -----
    for l in range(NLAYERS):
        # self-attention with merged QKV projection
        qkv = jnp.dot(x, sa_wqkv_ref[l], preferred_element_type=jnp.float32) + sa_bqkv_ref[l]
        sa = _attention(qkv[:, :NHID], qkv[:, NHID:], sa_wo_ref[l], sa_bo_ref[l], tgt_mask)
        x = _add_layernorm(x, sa, ln1_g_ref[l], ln1_b_ref[l])

        # cross-attention: Q from x, merged KV projection from memory, no memory_mask
        q = jnp.dot(x, ca_wq_ref[l], preferred_element_type=jnp.float32) + ca_bq_ref[l]
        kv = jnp.dot(memory, ca_wkv_ref[l], preferred_element_type=jnp.float32) + ca_bkv_ref[l]
        ca = _attention(q, kv, ca_wo_ref[l], ca_bo_ref[l], None)
        x = _add_layernorm(x, ca, ln2_g_ref[l], ln2_b_ref[l])

        # feed-forward
        h = jnp.maximum(
            jnp.dot(x, ff1_w_ref[l], preferred_element_type=jnp.float32) + ff1_b_ref[l], 0.0)
        h = jnp.dot(h, ff2_w_ref[l], preferred_element_type=jnp.float32) + ff2_b_ref[l]
        x = _add_layernorm(x, h, ln3_g_ref[l], ln3_b_ref[l])

    # ----- final projection (lane-dense: ntoken padded to 128 columns) -----
    out_ref[0] = (jnp.dot(x, fc_w_ref[...], preferred_element_type=jnp.float32)
                  + fc_b_ref[...]).astype(out_ref.dtype)


# ============================= JAX glue =============================

def make_positional_encoding(max_len, d_model):
    position = jnp.arange(max_len, dtype=jnp.float32)[:, None]
    div_term = jnp.exp(jnp.arange(0, d_model, 2, dtype=jnp.float32)
                       * (-math.log(10000.0) / d_model))
    pe = jnp.zeros((max_len, d_model), jnp.float32)
    pe = pe.at[:, 0::2].set(jnp.sin(position * div_term))
    pe = pe.at[:, 1::2].set(jnp.cos(position * div_term))
    return pe                                                   # (max_len, d_model)


def generate_square_subsequent_mask(sz):
    # 0 on/below diagonal, -inf (approx) above — matches the PyTorch helper.
    i = jnp.arange(sz)[:, None]
    j = jnp.arange(sz)[None, :]
    return jnp.where(j <= i, 0.0, NEG_INF).astype(jnp.float32)


def caption_passt_forward(params, src_feats, tgt_tokens):
    """src_feats: [B, T_enc, D_ENC] (PaSST features), tgt_tokens: [B, T_dec] int32."""
    Bq, Tenc, _ = src_feats.shape
    Tdec = tgt_tokens.shape[1]

    # Embedding lookup (gather) kept as JAX glue; everything else runs in the fused kernel.
    tgt_emb = jnp.take(params["word_emb"], tgt_tokens, axis=0)   # (B, T_dec, NHID)
    pe_slice = params["pe"][:Tdec]                               # (T_dec, NHID)
    tgt_mask = generate_square_subsequent_mask(Tdec)             # (T_dec, T_dec)

    full2 = lambda shape: pl.BlockSpec(shape, lambda b: (0, 0))
    full3 = lambda shape: pl.BlockSpec(shape, lambda b: (0, 0, 0))

    in_specs = [
        pl.BlockSpec((1, Tenc, D_ENC), lambda b: (b, 0, 0)),               # src_feats
        pl.BlockSpec((1, Tdec, NHID), lambda b: (b, 0, 0)),                # tgt_emb
        full2((Tdec, NHID)),                                               # pe
        full2((Tdec, Tdec)),                                               # tgt_mask
        full2((D_ENC, NHID)), full2((1, NHID)),                            # enc_w, enc_b
        full3((NLAYERS, NHID, 3 * NHID)), full3((NLAYERS, 1, 3 * NHID)),   # sa_wqkv, sa_bqkv
        full3((NLAYERS, NHID, NHID)), full3((NLAYERS, 1, NHID)),           # sa_wo, sa_bo
        full3((NLAYERS, NHID, NHID)), full3((NLAYERS, 1, NHID)),           # ca_wq, ca_bq
        full3((NLAYERS, NHID, 2 * NHID)), full3((NLAYERS, 1, 2 * NHID)),   # ca_wkv, ca_bkv
        full3((NLAYERS, NHID, NHID)), full3((NLAYERS, 1, NHID)),           # ca_wo, ca_bo
        full3((NLAYERS, 1, NHID)), full3((NLAYERS, 1, NHID)),              # ln1_g, ln1_b
        full3((NLAYERS, 1, NHID)), full3((NLAYERS, 1, NHID)),              # ln2_g, ln2_b
        full3((NLAYERS, 1, NHID)), full3((NLAYERS, 1, NHID)),              # ln3_g, ln3_b
        full3((NLAYERS, NHID, DIM_FF)), full3((NLAYERS, 1, DIM_FF)),       # ff1_w, ff1_b
        full3((NLAYERS, DIM_FF, NHID)), full3((NLAYERS, 1, NHID)),         # ff2_w, ff2_b
        full2((NHID, NTOKEN_PAD)), full2((1, NTOKEN_PAD)),                 # fc_w_pad, fc_b_pad
    ]

    out = pl.pallas_call(
        _fused_caption_kernel,
        grid=(Bq,),
        in_specs=in_specs,
        out_specs=pl.BlockSpec((1, Tdec, NTOKEN_PAD), lambda b: (b, 0, 0)),
        out_shape=jax.ShapeDtypeStruct((Bq, Tdec, NTOKEN_PAD), jnp.float32),
        compiler_params=pltpu.CompilerParams(dimension_semantics=("parallel",)),
    )(src_feats, tgt_emb, pe_slice, tgt_mask,
      params["enc_w"], params["enc_b"],
      params["sa_wqkv"], params["sa_bqkv"], params["sa_wo"], params["sa_bo"],
      params["ca_wq"], params["ca_bq"], params["ca_wkv"], params["ca_bkv"],
      params["ca_wo"], params["ca_bo"],
      params["ln1_g"], params["ln1_b"], params["ln2_g"], params["ln2_b"],
      params["ln3_g"], params["ln3_b"],
      params["ff1_w"], params["ff1_b"], params["ff2_w"], params["ff2_b"],
      params["fc_w_pad"], params["fc_b_pad"])

    # (B, T_dec, PAD) -> (T_dec, B, ntoken), matching PyTorch's seq-first output
    return out.transpose(1, 0, 2)[:, :, :NTOKEN]


# ============================= pure-JAX reference (for correctness check) =============================

def caption_passt_reference(params, src_feats, tgt_tokens):
    Tdec = tgt_tokens.shape[1]
    memory = jax.nn.relu(src_feats @ params["enc_w"] + params["enc_b"])     # (B, T_enc, NHID)
    x = jnp.take(params["word_emb"], tgt_tokens, axis=0) * SQRT_NHID \
        + params["pe"][:Tdec][None]                                         # (B, T_dec, NHID)
    mask = generate_square_subsequent_mask(Tdec)

    def attn(q, k, v, wo, bo, m):
        Bq, Tq, _ = q.shape
        Tk = k.shape[1]
        qh = q.reshape(Bq, Tq, NHEAD, DHEAD).transpose(0, 2, 1, 3)
        kh = k.reshape(Bq, Tk, NHEAD, DHEAD).transpose(0, 2, 1, 3)
        vh = v.reshape(Bq, Tk, NHEAD, DHEAD).transpose(0, 2, 1, 3)
        s = jnp.einsum("bhqd,bhkd->bhqk", qh, kh) * ATTN_SCALE
        if m is not None:
            s = s + m
        p = jax.nn.softmax(s, axis=-1)
        o = jnp.einsum("bhqk,bhkd->bhqd", p, vh)
        o = o.transpose(0, 2, 1, 3).reshape(Bq, Tq, NHID)
        return o @ wo + bo

    def layernorm(h, g, b):
        mu = jnp.mean(h, -1, keepdims=True)
        var = jnp.mean((h - mu) ** 2, -1, keepdims=True)
        return (h - mu) * jax.lax.rsqrt(var + LN_EPS) * g + b

    for l in range(NLAYERS):
        qkv = x @ params["sa_wqkv"][l] + params["sa_bqkv"][l]
        sa = attn(qkv[..., :NHID], qkv[..., NHID:2 * NHID], qkv[..., 2 * NHID:],
                  params["sa_wo"][l], params["sa_bo"][l], mask)
        x = layernorm(x + sa, params["ln1_g"][l], params["ln1_b"][l])
        q = x @ params["ca_wq"][l] + params["ca_bq"][l]
        kv = memory @ params["ca_wkv"][l] + params["ca_bkv"][l]
        ca = attn(q, kv[..., :NHID], kv[..., NHID:], params["ca_wo"][l], params["ca_bo"][l], None)
        x = layernorm(x + ca, params["ln2_g"][l], params["ln2_b"][l])
        h = jax.nn.relu(x @ params["ff1_w"][l] + params["ff1_b"][l])
        h = h @ params["ff2_w"][l] + params["ff2_b"][l]
        x = layernorm(x + h, params["ln3_g"][l], params["ln3_b"][l])

    logits = x @ params["fc_w_pad"][:, :NTOKEN] + params["fc_b_pad"][:, :NTOKEN]
    return logits.transpose(1, 0, 2)                                        # (T_dec, B, ntoken)


# ============================= parameter init =============================

def init_params(seed=0):
    keys = iter(jax.random.split(jax.random.PRNGKey(seed), 16))

    def w(shape, scale=0.02):
        return jax.random.normal(next(keys), shape, jnp.float32) * scale

    zeros = lambda shape: jnp.zeros(shape, jnp.float32)
    ones = lambda shape: jnp.ones(shape, jnp.float32)

    fc_w = w((NHID, NTOKEN))
    return dict(
        enc_w=w((D_ENC, NHID)), enc_b=zeros((1, NHID)),
        word_emb=w((NTOKEN, NHID), scale=1.0),
        pe=make_positional_encoding(2000, NHID),
        # per-layer weights stacked with a leading NLAYERS axis (unrolled inside the kernel)
        sa_wqkv=w((NLAYERS, NHID, 3 * NHID)), sa_bqkv=zeros((NLAYERS, 1, 3 * NHID)),
        sa_wo=w((NLAYERS, NHID, NHID)), sa_bo=zeros((NLAYERS, 1, NHID)),
        ca_wq=w((NLAYERS, NHID, NHID)), ca_bq=zeros((NLAYERS, 1, NHID)),
        ca_wkv=w((NLAYERS, NHID, 2 * NHID)), ca_bkv=zeros((NLAYERS, 1, 2 * NHID)),
        ca_wo=w((NLAYERS, NHID, NHID)), ca_bo=zeros((NLAYERS, 1, NHID)),
        ln1_g=ones((NLAYERS, 1, NHID)), ln1_b=zeros((NLAYERS, 1, NHID)),
        ln2_g=ones((NLAYERS, 1, NHID)), ln2_b=zeros((NLAYERS, 1, NHID)),
        ln3_g=ones((NLAYERS, 1, NHID)), ln3_b=zeros((NLAYERS, 1, NHID)),
        ff1_w=w((NLAYERS, NHID, DIM_FF)), ff1_b=zeros((NLAYERS, 1, DIM_FF)),
        ff2_w=w((NLAYERS, DIM_FF, NHID)), ff2_b=zeros((NLAYERS, 1, NHID)),
        # final fc padded to a lane-dense 128-wide output (sliced back in the wrapper)
        fc_w_pad=jnp.pad(fc_w, ((0, 0), (0, NTOKEN_PAD - NTOKEN))),
        fc_b_pad=zeros((1, NTOKEN_PAD)),
    )


# ============================= main =============================

if __name__ == "__main__":
    params = init_params(0)

    key = jax.random.PRNGKey(0)
    k_src, k_tgt = jax.random.split(key)
    # stand-in PaSST encoder output features [B, T_enc, D_ENC]
    src_feats = jax.random.normal(k_src, (B, T_ENC, D_ENC), jnp.float32)
    # target caption token ids [B, T_dec]
    tgt_tokens = jax.random.randint(k_tgt, (B, T_DEC), 0, NTOKEN, dtype=jnp.int32)

    fwd = jax.jit(caption_passt_forward)
    out = jax.block_until_ready(fwd(params, src_feats, tgt_tokens))

    assert out.shape == (T_DEC, B, NTOKEN), out.shape
    assert bool(jnp.all(jnp.isfinite(out)))

    ref = caption_passt_reference(params, src_feats, tgt_tokens)
    max_err = float(jnp.max(jnp.abs(out - ref)))
    assert jnp.allclose(out, ref, atol=2e-4, rtol=2e-4), max_err

    print("KERNEL_OK")
</pallas_src>

<mosaic_0001>
module attributes {stable_mosaic.version = 11 : i64} {
  func.func @_fused_caption_kernel(%arg0: i32, %arg1: memref<1x8x64xf32, #tpu.memory_space<vmem>>, %arg2: memref<1x8x32xf32, #tpu.memory_space<vmem>>, %arg3: memref<8x32xf32, #tpu.memory_space<vmem>>, %arg4: memref<8x8xf32, #tpu.memory_space<vmem>>, %arg5: memref<64x32xf32, #tpu.memory_space<vmem>>, %arg6: memref<1x32xf32, #tpu.memory_space<vmem>>, %arg7: memref<2x32x96xf32, #tpu.memory_space<vmem>>, %arg8: memref<2x1x96xf32, #tpu.memory_space<vmem>>, %arg9: memref<2x32x32xf32, #tpu.memory_space<vmem>>, %arg10: memref<2x1x32xf32, #tpu.memory_space<vmem>>, %arg11: memref<2x32x32xf32, #tpu.memory_space<vmem>>, %arg12: memref<2x1x32xf32, #tpu.memory_space<vmem>>, %arg13: memref<2x32x64xf32, #tpu.memory_space<vmem>>, %arg14: memref<2x1x64xf32, #tpu.memory_space<vmem>>, %arg15: memref<2x32x32xf32, #tpu.memory_space<vmem>>, %arg16: memref<2x1x32xf32, #tpu.memory_space<vmem>>, %arg17: memref<2x1x32xf32, #tpu.memory_space<vmem>>, %arg18: memref<2x1x32xf32, #tpu.memory_space<vmem>>, %arg19: memref<2x1x32xf32, #tpu.memory_space<vmem>>, %arg20: memref<2x1x32xf32, #tpu.memory_space<vmem>>, %arg21: memref<2x1x32xf32, #tpu.memory_space<vmem>>, %arg22: memref<2x1x32xf32, #tpu.memory_space<vmem>>, %arg23: memref<2x32x64xf32, #tpu.memory_space<vmem>>, %arg24: memref<2x1x64xf32, #tpu.memory_space<vmem>>, %arg25: memref<2x64x32xf32, #tpu.memory_space<vmem>>, %arg26: memref<2x1x32xf32, #tpu.memory_space<vmem>>, %arg27: memref<32x128xf32, #tpu.memory_space<vmem>>, %arg28: memref<1x128xf32, #tpu.memory_space<vmem>>, %arg29: memref<1x8x128xf32, #tpu.memory_space<vmem>>) attributes {dimension_semantics = [#tpu.dimension_semantics<parallel>], iteration_bounds = array<i64: 2>, scalar_prefetch = 0 : i64, scratch_operands = 0 : i64, tpu.core_type = #tpu.core_type<tc>, window_params = [{transform_indices = @transform_0, window_bounds = array<i64: 1, 8, 64>}, {transform_indices = @transform_1, window_bounds = array<i64: 1, 8, 32>}, {pipeline_mode = #tpu.pipeline_mode<synchronous>, transform_indices = @transform_2, window_bounds = array<i64: 8, 32>}, {pipeline_mode = #tpu.pipeline_mode<synchronous>, transform_indices = @transform_3, window_bounds = array<i64: 8, 8>}, {pipeline_mode = #tpu.pipeline_mode<synchronous>, transform_indices = @transform_4, window_bounds = array<i64: 64, 32>}, {pipeline_mode = #tpu.pipeline_mode<synchronous>, transform_indices = @transform_5, window_bounds = array<i64: 1, 32>}, {pipeline_mode = #tpu.pipeline_mode<synchronous>, transform_indices = @transform_6, window_bounds = array<i64: 2, 32, 96>}, {pipeline_mode = #tpu.pipeline_mode<synchronous>, transform_indices = @transform_7, window_bounds = array<i64: 2, 1, 96>}, {pipeline_mode = #tpu.pipeline_mode<synchronous>, transform_indices = @transform_8, window_bounds = array<i64: 2, 32, 32>}, {pipeline_mode = #tpu.pipeline_mode<synchronous>, transform_indices = @transform_9, window_bounds = array<i64: 2, 1, 32>}, {pipeline_mode = #tpu.pipeline_mode<synchronous>, transform_indices = @transform_10, window_bounds = array<i64: 2, 32, 32>}, {pipeline_mode = #tpu.pipeline_mode<synchronous>, transform_indices = @transform_11, window_bounds = array<i64: 2, 1, 32>}, {pipeline_mode = #tpu.pipeline_mode<synchronous>, transform_indices = @transform_12, window_bounds = array<i64: 2, 32, 64>}, {pipeline_mode = #tpu.pipeline_mode<synchronous>, transform_indices = @transform_13, window_bounds = array<i64: 2, 1, 64>}, {pipeline_mode = #tpu.pipeline_mode<synchronous>, transform_indices = @transform_14, window_bounds = array<i64: 2, 32, 32>}, {pipeline_mode = #tpu.pipeline_mode<synchronous>, transform_indices = @transform_15, window_bounds = array<i64: 2, 1, 32>}, {pipeline_mode = #tpu.pipeline_mode<synchronous>, transform_indices = @transform_16, window_bounds = array<i64: 2, 1, 32>}, {pipeline_mode = #tpu.pipeline_mode<synchronous>, transform_indices = @transform_17, window_bounds = array<i64: 2, 1, 32>}, {pipeline_mode = #tpu.pipeline_mode<synchronous>, transform_indices = @transform_18, window_bounds = array<i64: 2, 1, 32>}, {pipeline_mode = #tpu.pipeline_mode<synchronous>, transform_indices = @transform_19, window_bounds = array<i64: 2, 1, 32>}, {pipeline_mode = #tpu.pipeline_mode<synchronous>, transform_indices = @transform_20, window_bounds = array<i64: 2, 1, 32>}, {pipeline_mode = #tpu.pipeline_mode<synchronous>, transform_indices = @transform_21, window_bounds = array<i64: 2, 1, 32>}, {pipeline_mode = #tpu.pipeline_mode<synchronous>, transform_indices = @transform_22, window_bounds = array<i64: 2, 32, 64>}, {pipeline_mode = #tpu.pipeline_mode<synchronous>, transform_indices = @transform_23, window_bounds = array<i64: 2, 1, 64>}, {pipeline_mode = #tpu.pipeline_mode<synchronous>, transform_indices = @transform_24, window_bounds = array<i64: 2, 64, 32>}, {pipeline_mode = #tpu.pipeline_mode<synchronous>, transform_indices = @transform_25, window_bounds = array<i64: 2, 1, 32>}, {pipeline_mode = #tpu.pipeline_mode<synchronous>, transform_indices = @transform_26, window_bounds = array<i64: 32, 128>}, {pipeline_mode = #tpu.pipeline_mode<synchronous>, transform_indices = @transform_27, window_bounds = array<i64: 1, 128>}, {transform_indices = @transform_28, window_bounds = array<i64: 1, 8, 128>}]} {
    %c0 = arith.constant 0 : index
    %c0_0 = arith.constant 0 : index
    %c0_1 = arith.constant 0 : index
    %0 = vector.load %arg1[%c0, %c0_0, %c0_1] : memref<1x8x64xf32, #tpu.memory_space<vmem>>, vector<1x8x64xf32>
    %1 = vector.shape_cast %0 : vector<1x8x64xf32> to vector<8x64xf32>
    %c0_2 = arith.constant 0 : index
    %c0_3 = arith.constant 0 : index
    %2 = vector.load %arg5[%c0_2, %c0_3] : memref<64x32xf32, #tpu.memory_space<vmem>>, vector<64x32xf32>
    %cst = arith.constant dense<0.000000e+00> : vector<8x32xf32>
    %3 = tpu.matmul %1, %2, %cst {dimension_numbers = #tpu.dot_dimension_numbers<[1], [0], [0], [1], [0, 0, 1, 1], [], []>} : vector<8x64xf32>, vector<64x32xf32>, vector<8x32xf32> -> vector<8x32xf32>
    %c0_4 = arith.constant 0 : index
    %c0_5 = arith.constant 0 : index
    %4 = vector.load %arg6[%c0_4, %c0_5] : memref<1x32xf32, #tpu.memory_space<vmem>>, vector<1x32xf32>
    %5 = vector.broadcast %4 : vector<1x32xf32> to vector<8x32xf32>
    %6 = arith.addf %3, %5 : vector<8x32xf32>
    %cst_6 = arith.constant 0.000000e+00 : f32
    %7 = vector.broadcast %cst_6 : f32 to vector<8x32xf32>
    %8 = arith.maximumf %6, %7 : vector<8x32xf32>
    %c0_7 = arith.constant 0 : index
    %c0_8 = arith.constant 0 : index
    %c0_9 = arith.constant 0 : index
    %9 = vector.load %arg2[%c0_7, %c0_8, %c0_9] : memref<1x8x32xf32, #tpu.memory_space<vmem>>, vector<1x8x32xf32>
    %10 = vector.shape_cast %9 : vector<1x8x32xf32> to vector<8x32xf32>
    %cst_10 = arith.constant 5.65685415 : f32
    %11 = vector.broadcast %cst_10 : f32 to vector<8x32xf32>
    %12 = arith.mulf %10, %11 : vector<8x32xf32>
    %c0_11 = arith.constant 0 : index
    %c0_12 = arith.constant 0 : index
    %13 = vector.load %arg3[%c0_11, %c0_12] : memref<8x32xf32, #tpu.memory_space<vmem>>, vector<8x32xf32>
    %14 = arith.addf %12, %13 : vector<8x32xf32>
    %c0_13 = arith.constant 0 : index
    %c0_14 = arith.constant 0 : index
    %15 = vector.load %arg4[%c0_13, %c0_14] : memref<8x8xf32, #tpu.memory_space<vmem>>, vector<8x8xf32>
    %c0_15 = arith.constant 0 : index
    %c0_16 = arith.constant 0 : index
    %c0_17 = arith.constant 0 : index
    %16 = vector.load %arg7[%c0_15, %c0_16, %c0_17] : memref<2x32x96xf32, #tpu.memory_space<vmem>>, vector<1x32x96xf32>
    %17 = vector.shape_cast %16 : vector<1x32x96xf32> to vector<32x96xf32>
    %cst_18 = arith.constant dense<0.000000e+00> : vector<8x96xf32>
    %18 = tpu.matmul %14, %17, %cst_18 {dimension_numbers = #tpu.dot_dimension_numbers<[1], [0], [0], [1], [0, 0, 1, 1], [], []>} : vector<8x32xf32>, vector<32x96xf32>, vector<8x96xf32> -> vector<8x96xf32>
    %c0_19 = arith.constant 0 : index
    %c0_20 = arith.constant 0 : index
    %c0_21 = arith.constant 0 : index
    %19 = vector.load %arg8[%c0_19, %c0_20, %c0_21] : memref<2x1x96xf32, #tpu.memory_space<vmem>>, vector<1x1x96xf32>
    %20 = vector.shape_cast %19 : vector<1x1x96xf32> to vector<1x96xf32>
    %21 = vector.broadcast %20 : vector<1x96xf32> to vector<8x96xf32>
    %22 = arith.addf %18, %21 : vector<8x96xf32>
    %23 = vector.extract_strided_slice %22 {offsets = [0, 0], sizes = [8, 32], strides = [1, 1]} : vector<8x96xf32> to vector<8x32xf32>
    %24 = vector.extract_strided_slice %22 {offsets = [0, 32], sizes = [8, 64], strides = [1, 1]} : vector<8x96xf32> to vector<8x64xf32>
    %c0_22 = arith.constant 0 : index
    %c0_23 = arith.constant 0 : index
    %c0_24 = arith.constant 0 : index
    %25 = vector.load %arg9[%c0_22, %c0_23, %c0_24] : memref<2x32x32xf32, #tpu.memory_space<vmem>>, vector<1x32x32xf32>
    %26 = vector.shape_cast %25 : vector<1x32x32xf32> to vector<32x32xf32>
    %c0_25 = arith.constant 0 : index
    %c0_26 = arith.constant 0 : index
    %c0_27 = arith.constant 0 : index
    %27 = vector.load %arg10[%c0_25, %c0_26, %c0_27] : memref<2x1x32xf32, #tpu.memory_space<vmem>>, vector<1x1x32xf32>
    %28 = vector.shape_cast %27 : vector<1x1x32xf32> to vector<1x32xf32>
    %29 = vector.extract_strided_slice %23 {offsets = [0, 0], sizes = [8, 8], strides = [1, 1]} : vector<8x32xf32> to vector<8x8xf32>
    %30 = vector.extract_strided_slice %24 {offsets = [0, 0], sizes = [8, 8], strides = [1, 1]} : vector<8x64xf32> to vector<8x8xf32>
    %31 = vector.extract_strided_slice %24 {offsets = [0, 32], sizes = [8, 8], strides = [1, 1]} : vector<8x64xf32> to vector<8x8xf32>
    %cst_28 = arith.constant dense<0.000000e+00> : vector<8x8xf32>
    %32 = tpu.matmul %29, %30, %cst_28 {dimension_numbers = #tpu.dot_dimension_numbers<[1], [1], [0], [0], [0, 0, 1, 0], [], []>} : vector<8x8xf32>, vector<8x8xf32>, vector<8x8xf32> -> vector<8x8xf32>
    %cst_29 = arith.constant 0.353553385 : f32
    %33 = vector.broadcast %cst_29 : f32 to vector<8x8xf32>
    %34 = arith.mulf %32, %33 : vector<8x8xf32>
    %35 = arith.addf %34, %15 : vector<8x8xf32>
    %cst_30 = arith.constant dense<0xFF800000> : vector<8xf32>
    %36 = vector.multi_reduction <maximumf>, %35, %cst_30 [1] : vector<8x8xf32> to vector<8xf32>
    %37 = vector.shape_cast %36 : vector<8xf32> to vector<8x1xf32>
    %38 = vector.broadcast %37 : vector<8x1xf32> to vector<8x8xf32>
    %39 = arith.subf %35, %38 : vector<8x8xf32>
    %40 = math.exp %39 : vector<8x8xf32>
    %cst_31 = arith.constant dense<0.000000e+00> : vector<8xf32>
    %41 = vector.multi_reduction <add>, %40, %cst_31 [1] : vector<8x8xf32> to vector<8xf32>
    %42 = vector.shape_cast %41 : vector<8xf32> to vector<8x1xf32>
    %43 = vector.broadcast %42 : vector<8x1xf32> to vector<8x8xf32>
    %44 = arith.divf %40, %43 : vector<8x8xf32>
    %cst_32 = arith.constant dense<0.000000e+00> : vector<8x8xf32>
    %45 = tpu.matmul %44, %31, %cst_32 {dimension_numbers = #tpu.dot_dimension_numbers<[1], [0], [0], [1], [0, 0, 1, 1], [], []>} : vector<8x8xf32>, vector<8x8xf32>, vector<8x8xf32> -> vector<8x8xf32>
    %46 = vector.extract_strided_slice %26 {offsets = [0, 0], sizes = [8, 32], strides = [1, 1]} : vector<32x32xf32> to vector<8x32xf32>
    %cst_33 = arith.constant dense<0.000000e+00> : vector<8x32xf32>
    %47 = tpu.matmul %45, %46, %cst_33 {dimension_numbers = #tpu.dot_dimension_numbers<[1], [0], [0], [1], [0, 0, 1, 1], [], []>} : vector<8x8xf32>, vector<8x32xf32>, vector<8x32xf32> -> vector<8x32xf32>
    %48 = vector.extract_strided_slice %23 {offsets = [0, 8], sizes = [8, 8], strides = [1, 1]} : vector<8x32xf32> to vector<8x8xf32>
    %49 = vector.extract_strided_slice %24 {offsets = [0, 8], sizes = [8, 8], strides = [1, 1]} : vector<8x64xf32> to vector<8x8xf32>
    %50 = vector.extract_strided_slice %24 {offsets = [0, 40], sizes = [8, 8], strides = [1, 1]} : vector<8x64xf32> to vector<8x8xf32>
    %cst_34 = arith.constant dense<0.000000e+00> : vector<8x8xf32>
    %51 = tpu.matmul %48, %49, %cst_34 {dimension_numbers = #tpu.dot_dimension_numbers<[1], [1], [0], [0], [0, 0, 1, 0], [], []>} : vector<8x8xf32>, vector<8x8xf32>, vector<8x8xf32> -> vector<8x8xf32>
    %cst_35 = arith.constant 0.353553385 : f32
    %52 = vector.broadcast %cst_35 : f32 to vector<8x8xf32>
    %53 = arith.mulf %51, %52 : vector<8x8xf32>
    %54 = arith.addf %53, %15 : vector<8x8xf32>
    %cst_36 = arith.constant dense<0xFF800000> : vector<8xf32>
    %55 = vector.multi_reduction <maximumf>, %54, %cst_36 [1] : vector<8x8xf32> to vector<8xf32>
    %56 = vector.shape_cast %55 : vector<8xf32> to vector<8x1xf32>
    %57 = vector.broadcast %56 : vector<8x1xf32> to vector<8x8xf32>
    %58 = arith.subf %54, %57 : vector<8x8xf32>
    %59 = math.exp %58 : vector<8x8xf32>
    %cst_37 = arith.constant dense<0.000000e+00> : vector<8xf32>
    %60 = vector.multi_reduction <add>, %59, %cst_37 [1] : vector<8x8xf32> to vector<8xf32>
    %61 = vector.shape_cast %60 : vector<8xf32> to vector<8x1xf32>
    %62 = vector.broadcast %61 : vector<8x1xf32> to vector<8x8xf32>
    %63 = arith.divf %59, %62 : vector<8x8xf32>
    %cst_38 = arith.constant dense<0.000000e+00> : vector<8x8xf32>
    %64 = tpu.matmul %63, %50, %cst_38 {dimension_numbers = #tpu.dot_dimension_numbers<[1], [0], [0], [1], [0, 0, 1, 1], [], []>} : vector<8x8xf32>, vector<8x8xf32>, vector<8x8xf32> -> vector<8x8xf32>
    %65 = vector.extract_strided_slice %26 {offsets = [8, 0], sizes = [8, 32], strides = [1, 1]} : vector<32x32xf32> to vector<8x32xf32>
    %cst_39 = arith.constant dense<0.000000e+00> : vector<8x32xf32>
    %66 = tpu.matmul %64, %65, %cst_39 {dimension_numbers = #tpu.dot_dimension_numbers<[1], [0], [0], [1], [0, 0, 1, 1], [], []>} : vector<8x8xf32>, vector<8x32xf32>, vector<8x32xf32> -> vector<8x32xf32>
    %67 = arith.addf %47, %66 : vector<8x32xf32>
    %68 = vector.extract_strided_slice %23 {offsets = [0, 16], sizes = [8, 8], strides = [1, 1]} : vector<8x32xf32> to vector<8x8xf32>
    %69 = vector.extract_strided_slice %24 {offsets = [0, 16], sizes = [8, 8], strides = [1, 1]} : vector<8x64xf32> to vector<8x8xf32>
    %70 = vector.extract_strided_slice %24 {offsets = [0, 48], sizes = [8, 8], strides = [1, 1]} : vector<8x64xf32> to vector<8x8xf32>
    %cst_40 = arith.constant dense<0.000000e+00> : vector<8x8xf32>
    %71 = tpu.matmul %68, %69, %cst_40 {dimension_numbers = #tpu.dot_dimension_numbers<[1], [1], [0], [0], [0, 0, 1, 0], [], []>} : vector<8x8xf32>, vector<8x8xf32>, vector<8x8xf32> -> vector<8x8xf32>
    %cst_41 = arith.constant 0.353553385 : f32
    %72 = vector.broadcast %cst_41 : f32 to vector<8x8xf32>
    %73 = arith.mulf %71, %72 : vector<8x8xf32>
    %74 = arith.addf %73, %15 : vector<8x8xf32>
    %cst_42 = arith.constant dense<0xFF800000> : vector<8xf32>
    %75 = vector.multi_reduction <maximumf>, %74, %cst_42 [1] : vector<8x8xf32> to vector<8xf32>
    %76 = vector.shape_cast %75 : vector<8xf32> to vector<8x1xf32>
    %77 = vector.broadcast %76 : vector<8x1xf32> to vector<8x8xf32>
    %78 = arith.subf %74, %77 : vector<8x8xf32>
    %79 = math.exp %78 : vector<8x8xf32>
    %cst_43 = arith.constant dense<0.000000e+00> : vector<8xf32>
    %80 = vector.multi_reduction <add>, %79, %cst_43 [1] : vector<8x8xf32> to vector<8xf32>
    %81 = vector.shape_cast %80 : vector<8xf32> to vector<8x1xf32>
    %82 = vector.broadcast %81 : vector<8x1xf32> to vector<8x8xf32>
    %83 = arith.divf %79, %82 : vector<8x8xf32>
    %cst_44 = arith.constant dense<0.000000e+00> : vector<8x8xf32>
    %84 = tpu.matmul %83, %70, %cst_44 {dimension_numbers = #tpu.dot_dimension_numbers<[1], [0], [0], [1], [0, 0, 1, 1], [], []>} : vector<8x8xf32>, vector<8x8xf32>, vector<8x8xf32> -> vector<8x8xf32>
    %85 = vector.extract_strided_slice %26 {offsets = [16, 0], sizes = [8, 32], strides = [1, 1]} : vector<32x32xf32> to vector<8x32xf32>
    %cst_45 = arith.constant dense<0.000000e+00> : vector<8x32xf32>
    %86 = tpu.matmul %84, %85, %cst_45 {dimension_numbers = #tpu.dot_dimension_numbers<[1], [0], [0], [1], [0, 0, 1, 1], [], []>} : vector<8x8xf32>, vector<8x32xf32>, vector<8x32xf32> -> vector<8x32xf32>
    %87 = arith.addf %67, %86 : vector<8x32xf32>
    %88 = vector.extract_strided_slice %23 {offsets = [0, 24], sizes = [8, 8], strides = [1, 1]} : vector<8x32xf32> to vector<8x8xf32>
    %89 = vector.extract_strided_slice %24 {offsets = [0, 24], sizes = [8, 8], strides = [1, 1]} : vector<8x64xf32> to vector<8x8xf32>
    %90 = vector.extract_strided_slice %24 {offsets = [0, 56], sizes = [8, 8], strides = [1, 1]} : vector<8x64xf32> to vector<8x8xf32>
    %cst_46 = arith.constant dense<0.000000e+00> : vector<8x8xf32>
    %91 = tpu.matmul %88, %89, %cst_46 {dimension_numbers = #tpu.dot_dimension_numbers<[1], [1], [0], [0], [0, 0, 1, 0], [], []>} : vector<8x8xf32>, vector<8x8xf32>, vector<8x8xf32> -> vector<8x8xf32>
    %cst_47 = arith.constant 0.353553385 : f32
    %92 = vector.broadcast %cst_47 : f32 to vector<8x8xf32>
    %93 = arith.mulf %91, %92 : vector<8x8xf32>
    %94 = arith.addf %93, %15 : vector<8x8xf32>
    %cst_48 = arith.constant dense<0xFF800000> : vector<8xf32>
    %95 = vector.multi_reduction <maximumf>, %94, %cst_48 [1] : vector<8x8xf32> to vector<8xf32>
    %96 = vector.shape_cast %95 : vector<8xf32> to vector<8x1xf32>
    %97 = vector.broadcast %96 : vector<8x1xf32> to vector<8x8xf32>
    %98 = arith.subf %94, %97 : vector<8x8xf32>
    %99 = math.exp %98 : vector<8x8xf32>
    %cst_49 = arith.constant dense<0.000000e+00> : vector<8xf32>
    %100 = vector.multi_reduction <add>, %99, %cst_49 [1] : vector<8x8xf32> to vector<8xf32>
    %101 = vector.shape_cast %100 : vector<8xf32> to vector<8x1xf32>
    %102 = vector.broadcast %101 : vector<8x1xf32> to vector<8x8xf32>
    %103 = arith.divf %99, %102 : vector<8x8xf32>
    %cst_50 = arith.constant dense<0.000000e+00> : vector<8x8xf32>
    %104 = tpu.matmul %103, %90, %cst_50 {dimension_numbers = #tpu.dot_dimension_numbers<[1], [0], [0], [1], [0, 0, 1, 1], [], []>} : vector<8x8xf32>, vector<8x8xf32>, vector<8x8xf32> -> vector<8x8xf32>
    %105 = vector.extract_strided_slice %26 {offsets = [24, 0], sizes = [8, 32], strides = [1, 1]} : vector<32x32xf32> to vector<8x32xf32>
    %cst_51 = arith.constant dense<0.000000e+00> : vector<8x32xf32>
    %106 = tpu.matmul %104, %105, %cst_51 {dimension_numbers = #tpu.dot_dimension_numbers<[1], [0], [0], [1], [0, 0, 1, 1], [], []>} : vector<8x8xf32>, vector<8x32xf32>, vector<8x32xf32> -> vector<8x32xf32>
    %107 = arith.addf %87, %106 : vector<8x32xf32>
    %108 = vector.broadcast %28 : vector<1x32xf32> to vector<8x32xf32>
    %109 = arith.addf %107, %108 : vector<8x32xf32>
    %c0_52 = arith.constant 0 : index
    %c0_53 = arith.constant 0 : index
    %c0_54 = arith.constant 0 : index
    %110 = vector.load %arg17[%c0_52, %c0_53, %c0_54] : memref<2x1x32xf32, #tpu.memory_space<vmem>>, vector<1x1x32xf32>
    %111 = vector.shape_cast %110 : vector<1x1x32xf32> to vector<1x32xf32>
    %c0_55 = arith.constant 0 : index
    %c0_56 = arith.constant 0 : index
    %c0_57 = arith.constant 0 : index
    %112 = vector.load %arg18[%c0_55, %c0_56, %c0_57] : memref<2x1x32xf32, #tpu.memory_space<vmem>>, vector<1x1x32xf32>
    %113 = vector.shape_cast %112 : vector<1x1x32xf32> to vector<1x32xf32>
    %114 = arith.addf %14, %109 : vector<8x32xf32>
    %cst_58 = arith.constant dense<0.000000e+00> : vector<8xf32>
    %115 = vector.multi_reduction <add>, %114, %cst_58 [1] : vector<8x32xf32> to vector<8xf32>
    %116 = vector.shape_cast %115 : vector<8xf32> to vector<8x1xf32>
    %cst_59 = arith.constant 3.200000e+01 : f32
    %117 = vector.broadcast %cst_59 : f32 to vector<8x1xf32>
    %118 = arith.divf %116, %117 : vector<8x1xf32>
    %119 = vector.broadcast %118 : vector<8x1xf32> to vector<8x32xf32>
    %120 = arith.subf %114, %119 : vector<8x32xf32>
    %121 = arith.mulf %120, %120 : vector<8x32xf32>
    %cst_60 = arith.constant dense<0.000000e+00> : vector<8xf32>
    %122 = vector.multi_reduction <add>, %121, %cst_60 [1] : vector<8x32xf32> to vector<8xf32>
    %123 = vector.shape_cast %122 : vector<8xf32> to vector<8x1xf32>
    %cst_61 = arith.constant 3.200000e+01 : f32
    %124 = vector.broadcast %cst_61 : f32 to vector<8x1xf32>
    %125 = arith.divf %123, %124 : vector<8x1xf32>
    %126 = vector.broadcast %118 : vector<8x1xf32> to vector<8x32xf32>
    %127 = arith.subf %114, %126 : vector<8x32xf32>
    %cst_62 = arith.constant 9.99999974E-6 : f32
    %128 = vector.broadcast %cst_62 : f32 to vector<8x1xf32>
    %129 = arith.addf %125, %128 : vector<8x1xf32>
    %130 = math.rsqrt %129 : vector<8x1xf32>
    %131 = vector.broadcast %130 : vector<8x1xf32> to vector<8x32xf32>
    %132 = arith.mulf %127, %131 : vector<8x32xf32>
    %133 = vector.broadcast %111 : vector<1x32xf32> to vector<8x32xf32>
    %134 = arith.mulf %132, %133 : vector<8x32xf32>
    %135 = vector.broadcast %113 : vector<1x32xf32> to vector<8x32xf32>
    %136 = arith.addf %134, %135 : vector<8x32xf32>
    %c0_63 = arith.constant 0 : index
    %c0_64 = arith.constant 0 : index
    %c0_65 = arith.constant 0 : index
    %137 = vector.load %arg11[%c0_63, %c0_64, %c0_65] : memref<2x32x32xf32, #tpu.memory_space<vmem>>, vector<1x32x32xf32>
    %138 = vector.shape_cast %137 : vector<1x32x32xf32> to vector<32x32xf32>
    %cst_66 = arith.constant dense<0.000000e+00> : vector<8x32xf32>
    %139 = tpu.matmul %136, %138, %cst_66 {dimension_numbers = #tpu.dot_dimension_numbers<[1], [0], [0], [1], [0, 0, 1, 1], [], []>} : vector<8x32xf32>, vector<32x32xf32>, vector<8x32xf32> -> vector<8x32xf32>
    %c0_67 = arith.constant 0 : index
    %c0_68 = arith.constant 0 : index
    %c0_69 = arith.constant 0 : index
    %140 = vector.load %arg12[%c0_67, %c0_68, %c0_69] : memref<2x1x32xf32, #tpu.memory_space<vmem>>, vector<1x1x32xf32>
    %141 = vector.shape_cast %140 : vector<1x1x32xf32> to vector<1x32xf32>
    %142 = vector.broadcast %141 : vector<1x32xf32> to vector<8x32xf32>
    %143 = arith.addf %139, %142 : vector<8x32xf32>
    %c0_70 = arith.constant 0 : index
    %c0_71 = arith.constant 0 : index
    %c0_72 = arith.constant 0 : index
    %144 = vector.load %arg13[%c0_70, %c0_71, %c0_72] : memref<2x32x64xf32, #tpu.memory_space<vmem>>, vector<1x32x64xf32>
    %145 = vector.shape_cast %144 : vector<1x32x64xf32> to vector<32x64xf32>
    %cst_73 = arith.constant dense<0.000000e+00> : vector<8x64xf32>
    %146 = tpu.matmul %8, %145, %cst_73 {dimension_numbers = #tpu.dot_dimension_numbers<[1], [0], [0], [1], [0, 0, 1, 1], [], []>} : vector<8x32xf32>, vector<32x64xf32>, vector<8x64xf32> -> vector<8x64xf32>
    %c0_74 = arith.constant 0 : index
    %c0_75 = arith.constant 0 : index
    %c0_76 = arith.constant 0 : index
    %147 = vector.load %arg14[%c0_74, %c0_75, %c0_76] : memref<2x1x64xf32, #tpu.memory_space<vmem>>, vector<1x1x64xf32>
    %148 = vector.shape_cast %147 : vector<1x1x64xf32> to vector<1x64xf32>
    %149 = vector.broadcast %148 : vector<1x64xf32> to vector<8x64xf32>
    %150 = arith.addf %146, %149 : vector<8x64xf32>
    %c0_77 = arith.constant 0 : index
    %c0_78 = arith.constant 0 : index
    %c0_79 = arith.constant 0 : index
    %151 = vector.load %arg15[%c0_77, %c0_78, %c0_79] : memref<2x32x32xf32, #tpu.memory_space<vmem>>, vector<1x32x32xf32>
    %152 = vector.shape_cast %151 : vector<1x32x32xf32> to vector<32x32xf32>
    %c0_80 = arith.constant 0 : index
    %c0_81 = arith.constant 0 : index
    %c0_82 = arith.constant 0 : index
    %153 = vector.load %arg16[%c0_80, %c0_81, %c0_82] : memref<2x1x32xf32, #tpu.memory_space<vmem>>, vector<1x1x32xf32>
    %154 = vector.shape_cast %153 : vector<1x1x32xf32> to vector<1x32xf32>
    %155 = vector.extract_strided_slice %143 {offsets = [0, 0], sizes = [8, 8], strides = [1, 1]} : vector<8x32xf32> to vector<8x8xf32>
    %156 = vector.extract_strided_slice %150 {offsets = [0, 0], sizes = [8, 8], strides = [1, 1]} : vector<8x64xf32> to vector<8x8xf32>
    %157 = vector.extract_strided_slice %150 {offsets = [0, 32], sizes = [8, 8], strides = [1, 1]} : vector<8x64xf32> to vector<8x8xf32>
    %cst_83 = arith.constant dense<0.000000e+00> : vector<8x8xf32>
    %158 = tpu.matmul %155, %156, %cst_83 {dimension_numbers = #tpu.dot_dimension_numbers<[1], [1], [0], [0], [0, 0, 1, 0], [], []>} : vector<8x8xf32>, vector<8x8xf32>, vector<8x8xf32> -> vector<8x8xf32>
    %cst_84 = arith.constant 0.353553385 : f32
    %159 = vector.broadcast %cst_84 : f32 to vector<8x8xf32>
    %160 = arith.mulf %158, %159 : vector<8x8xf32>
    %cst_85 = arith.constant dense<0xFF800000> : vector<8xf32>
    %161 = vector.multi_reduction <maximumf>, %160, %cst_85 [1] : vector<8x8xf32> to vector<8xf32>
    %162 = vector.shape_cast %161 : vector<8xf32> to vector<8x1xf32>
    %163 = vector.broadcast %162 : vector<8x1xf32> to vector<8x8xf32>
    %164 = arith.subf %160, %163 : vector<8x8xf32>
    %165 = math.exp %164 : vector<8x8xf32>
    %cst_86 = arith.constant dense<0.000000e+00> : vector<8xf32>
    %166 = vector.multi_reduction <add>, %165, %cst_86 [1] : vector<8x8xf32> to vector<8xf32>
    %167 = vector.shape_cast %166 : vector<8xf32> to vector<8x1xf32>
    %168 = vector.broadcast %167 : vector<8x1xf32> to vector<8x8xf32>
    %169 = arith.divf %165, %168 : vector<8x8xf32>
    %cst_87 = arith.constant dense<0.000000e+00> : vector<8x8xf32>
    %170 = tpu.matmul %169, %157, %cst_87 {dimension_numbers = #tpu.dot_dimension_numbers<[1], [0], [0], [1], [0, 0, 1, 1], [], []>} : vector<8x8xf32>, vector<8x8xf32>, vector<8x8xf32> -> vector<8x8xf32>
    %171 = vector.extract_strided_slice %152 {offsets = [0, 0], sizes = [8, 32], strides = [1, 1]} : vector<32x32xf32> to vector<8x32xf32>
    %cst_88 = arith.constant dense<0.000000e+00> : vector<8x32xf32>
    %172 = tpu.matmul %170, %171, %cst_88 {dimension_numbers = #tpu.dot_dimension_numbers<[1], [0], [0], [1], [0, 0, 1, 1], [], []>} : vector<8x8xf32>, vector<8x32xf32>, vector<8x32xf32> -> vector<8x32xf32>
    %173 = vector.extract_strided_slice %143 {offsets = [0, 8], sizes = [8, 8], strides = [1, 1]} : vector<8x32xf32> to vector<8x8xf32>
    %174 = vector.extract_strided_slice %150 {offsets = [0, 8], sizes = [8, 8], strides = [1, 1]} : vector<8x64xf32> to vector<8x8xf32>
    %175 = vector.extract_strided_slice %150 {offsets = [0, 40], sizes = [8, 8], strides = [1, 1]} : vector<8x64xf32> to vector<8x8xf32>
    %cst_89 = arith.constant dense<0.000000e+00> : vector<8x8xf32>
    %176 = tpu.matmul %173, %174, %cst_89 {dimension_numbers = #tpu.dot_dimension_numbers<[1], [1], [0], [0], [0, 0, 1, 0], [], []>} : vector<8x8xf32>, vector<8x8xf32>, vector<8x8xf32> -> vector<8x8xf32>
    %cst_90 = arith.constant 0.353553385 : f32
    %177 = vector.broadcast %cst_90 : f32 to vector<8x8xf32>
    %178 = arith.mulf %176, %177 : vector<8x8xf32>
    %cst_91 = arith.constant dense<0xFF800000> : vector<8xf32>
    %179 = vector.multi_reduction <maximumf>, %178, %cst_91 [1] : vector<8x8xf32> to vector<8xf32>
    %180 = vector.shape_cast %179 : vector<8xf32> to vector<8x1xf32>
    %181 = vector.broadcast %180 : vector<8x1xf32> to vector<8x8xf32>
    %182 = arith.subf %178, %181 : vector<8x8xf32>
    %183 = math.exp %182 : vector<8x8xf32>
    %cst_92 = arith.constant dense<0.000000e+00> : vector<8xf32>
    %184 = vector.multi_reduction <add>, %183, %cst_92 [1] : vector<8x8xf32> to vector<8xf32>
    %185 = vector.shape_cast %184 : vector<8xf32> to vector<8x1xf32>
    %186 = vector.broadcast %185 : vector<8x1xf32> to vector<8x8xf32>
    %187 = arith.divf %183, %186 : vector<8x8xf32>
    %cst_93 = arith.constant dense<0.000000e+00> : vector<8x8xf32>
    %188 = tpu.matmul %187, %175, %cst_93 {dimension_numbers = #tpu.dot_dimension_numbers<[1], [0], [0], [1], [0, 0, 1, 1], [], []>} : vector<8x8xf32>, vector<8x8xf32>, vector<8x8xf32> -> vector<8x8xf32>
    %189 = vector.extract_strided_slice %152 {offsets = [8, 0], sizes = [8, 32], strides = [1, 1]} : vector<32x32xf32> to vector<8x32xf32>
    %cst_94 = arith.constant dense<0.000000e+00> : vector<8x32xf32>
    %190 = tpu.matmul %188, %189, %cst_94 {dimension_numbers = #tpu.dot_dimension_numbers<[1], [0], [0], [1], [0, 0, 1, 1], [], []>} : vector<8x8xf32>, vector<8x32xf32>, vector<8x32xf32> -> vector<8x32xf32>
    %191 = arith.addf %172, %190 : vector<8x32xf32>
    %192 = vector.extract_strided_slice %143 {offsets = [0, 16], sizes = [8, 8], strides = [1, 1]} : vector<8x32xf32> to vector<8x8xf32>
    %193 = vector.extract_strided_slice %150 {offsets = [0, 16], sizes = [8, 8], strides = [1, 1]} : vector<8x64xf32> to vector<8x8xf32>
    %194 = vector.extract_strided_slice %150 {offsets = [0, 48], sizes = [8, 8], strides = [1, 1]} : vector<8x64xf32> to vector<8x8xf32>
    %cst_95 = arith.constant dense<0.000000e+00> : vector<8x8xf32>
    %195 = tpu.matmul %192, %193, %cst_95 {dimension_numbers = #tpu.dot_dimension_numbers<[1], [1], [0], [0], [0, 0, 1, 0], [], []>} : vector<8x8xf32>, vector<8x8xf32>, vector<8x8xf32> -> vector<8x8xf32>
    %cst_96 = arith.constant 0.353553385 : f32
    %196 = vector.broadcast %cst_96 : f32 to vector<8x8xf32>
    %197 = arith.mulf %195, %196 : vector<8x8xf32>
    %cst_97 = arith.constant dense<0xFF800000> : vector<8xf32>
    %198 = vector.multi_reduction <maximumf>, %197, %cst_97 [1] : vector<8x8xf32> to vector<8xf32>
    %199 = vector.shape_cast %198 : vector<8xf32> to vector<8x1xf32>
    %200 = vector.broadcast %199 : vector<8x1xf32> to vector<8x8xf32>
    %201 = arith.subf %197, %200 : vector<8x8xf32>
    %202 = math.exp %201 : vector<8x8xf32>
    %cst_98 = arith.constant dense<0.000000e+00> : vector<8xf32>
    %203 = vector.multi_reduction <add>, %202, %cst_98 [1] : vector<8x8xf32> to vector<8xf32>
    %204 = vector.shape_cast %203 : vector<8xf32> to vector<8x1xf32>
    %205 = vector.broadcast %204 : vector<8x1xf32> to vector<8x8xf32>
    %206 = arith.divf %202, %205 : vector<8x8xf32>
    %cst_99 = arith.constant dense<0.000000e+00> : vector<8x8xf32>
    %207 = tpu.matmul %206, %194, %cst_99 {dimension_numbers = #tpu.dot_dimension_numbers<[1], [0], [0], [1], [0, 0, 1, 1], [], []>} : vector<8x8xf32>, vector<8x8xf32>, vector<8x8xf32> -> vector<8x8xf32>
    %208 = vector.extract_strided_slice %152 {offsets = [16, 0], sizes = [8, 32], strides = [1, 1]} : vector<32x32xf32> to vector<8x32xf32>
    %cst_100 = arith.constant dense<0.000000e+00> : vector<8x32xf32>
    %209 = tpu.matmul %207, %208, %cst_100 {dimension_numbers = #tpu.dot_dimension_numbers<[1], [0], [0], [1], [0, 0, 1, 1], [], []>} : vector<8x8xf32>, vector<8x32xf32>, vector<8x32xf32> -> vector<8x32xf32>
    %210 = arith.addf %191, %209 : vector<8x32xf32>
    %211 = vector.extract_strided_slice %143 {offsets = [0, 24], sizes = [8, 8], strides = [1, 1]} : vector<8x32xf32> to vector<8x8xf32>
    %212 = vector.extract_strided_slice %150 {offsets = [0, 24], sizes = [8, 8], strides = [1, 1]} : vector<8x64xf32> to vector<8x8xf32>
    %213 = vector.extract_strided_slice %150 {offsets = [0, 56], sizes = [8, 8], strides = [1, 1]} : vector<8x64xf32> to vector<8x8xf32>
    %cst_101 = arith.constant dense<0.000000e+00> : vector<8x8xf32>
    %214 = tpu.matmul %211, %212, %cst_101 {dimension_numbers = #tpu.dot_dimension_numbers<[1], [1], [0], [0], [0, 0, 1, 0], [], []>} : vector<8x8xf32>, vector<8x8xf32>, vector<8x8xf32> -> vector<8x8xf32>
    %cst_102 = arith.constant 0.353553385 : f32
    %215 = vector.broadcast %cst_102 : f32 to vector<8x8xf32>
    %216 = arith.mulf %214, %215 : vector<8x8xf32>
    %cst_103 = arith.constant dense<0xFF800000> : vector<8xf32>
    %217 = vector.multi_reduction <maximumf>, %216, %cst_103 [1] : vector<8x8xf32> to vector<8xf32>
    %218 = vector.shape_cast %217 : vector<8xf32> to vector<8x1xf32>
    %219 = vector.broadcast %218 : vector<8x1xf32> to vector<8x8xf32>
    %220 = arith.subf %216, %219 : vector<8x8xf32>
    %221 = math.exp %220 : vector<8x8xf32>
    %cst_104 = arith.constant dense<0.000000e+00> : vector<8xf32>
    %222 = vector.multi_reduction <add>, %221, %cst_104 [1] : vector<8x8xf32> to vector<8xf32>
    %223 = vector.shape_cast %222 : vector<8xf32> to vector<8x1xf32>
    %224 = vector.broadcast %223 : vector<8x1xf32> to vector<8x8xf32>
    %225 = arith.divf %221, %224 : vector<8x8xf32>
    %cst_105 = arith.constant dense<0.000000e+00> : vector<8x8xf32>
    %226 = tpu.matmul %225, %213, %cst_105 {dimension_numbers = #tpu.dot_dimension_numbers<[1], [0], [0], [1], [0, 0, 1, 1], [], []>} : vector<8x8xf32>, vector<8x8xf32>, vector<8x8xf32> -> vector<8x8xf32>
    %227 = vector.extract_strided_slice %152 {offsets = [24, 0], sizes = [8, 32], strides = [1, 1]} : vector<32x32xf32> to vector<8x32xf32>
    %cst_106 = arith.constant dense<0.000000e+00> : vector<8x32xf32>
    %228 = tpu.matmul %226, %227, %cst_106 {dimension_numbers = #tpu.dot_dimension_numbers<[1], [0], [0], [1], [0, 0, 1, 1], [], []>} : vector<8x8xf32>, vector<8x32xf32>, vector<8x32xf32> -> vector<8x32xf32>
    %229 = arith.addf %210, %228 : vector<8x32xf32>
    %230 = vector.broadcast %154 : vector<1x32xf32> to vector<8x32xf32>
    %231 = arith.addf %229, %230 : vector<8x32xf32>
    %c0_107 = arith.constant 0 : index
    %c0_108 = arith.constant 0 : index
    %c0_109 = arith.constant 0 : index
    %232 = vector.load %arg19[%c0_107, %c0_108, %c0_109] : memref<2x1x32xf32, #tpu.memory_space<vmem>>, vector<1x1x32xf32>
    %233 = vector.shape_cast %232 : vector<1x1x32xf32> to vector<1x32xf32>
    %c0_110 = arith.constant 0 : index
    %c0_111 = arith.constant 0 : index
    %c0_112 = arith.constant 0 : index
    %234 = vector.load %arg20[%c0_110, %c0_111, %c0_112] : memref<2x1x32xf32, #tpu.memory_space<vmem>>, vector<1x1x32xf32>
    %235 = vector.shape_cast %234 : vector<1x1x32xf32> to vector<1x32xf32>
    %236 = arith.addf %136, %231 : vector<8x32xf32>
    %cst_113 = arith.constant dense<0.000000e+00> : vector<8xf32>
    %237 = vector.multi_reduction <add>, %236, %cst_113 [1] : vector<8x32xf32> to vector<8xf32>
    %238 = vector.shape_cast %237 : vector<8xf32> to vector<8x1xf32>
    %cst_114 = arith.constant 3.200000e+01 : f32
    %239 = vector.broadcast %cst_114 : f32 to vector<8x1xf32>
    %240 = arith.divf %238, %239 : vector<8x1xf32>
    %241 = vector.broadcast %240 : vector<8x1xf32> to vector<8x32xf32>
    %242 = arith.subf %236, %241 : vector<8x32xf32>
    %243 = arith.mulf %242, %242 : vector<8x32xf32>
    %cst_115 = arith.constant dense<0.000000e+00> : vector<8xf32>
    %244 = vector.multi_reduction <add>, %243, %cst_115 [1] : vector<8x32xf32> to vector<8xf32>
    %245 = vector.shape_cast %244 : vector<8xf32> to vector<8x1xf32>
    %cst_116 = arith.constant 3.200000e+01 : f32
    %246 = vector.broadcast %cst_116 : f32 to vector<8x1xf32>
    %247 = arith.divf %245, %246 : vector<8x1xf32>
    %248 = vector.broadcast %240 : vector<8x1xf32> to vector<8x32xf32>
    %249 = arith.subf %236, %248 : vector<8x32xf32>
    %cst_117 = arith.constant 9.99999974E-6 : f32
    %250 = vector.broadcast %cst_117 : f32 to vector<8x1xf32>
    %251 = arith.addf %247, %250 : vector<8x1xf32>
    %252 = math.rsqrt %251 : vector<8x1xf32>
    %253 = vector.broadcast %252 : vector<8x1xf32> to vector<8x32xf32>
    %254 = arith.mulf %249, %253 : vector<8x32xf32>
    %255 = vector.broadcast %233 : vector<1x32xf32> to vector<8x32xf32>
    %256 = arith.mulf %254, %255 : vector<8x32xf32>
    %257 = vector.broadcast %235 : vector<1x32xf32> to vector<8x32xf32>
    %258 = arith.addf %256, %257 : vector<8x32xf32>
    %c0_118 = arith.constant 0 : index
    %c0_119 = arith.constant 0 : index
    %c0_120 = arith.constant 0 : index
    %259 = vector.load %arg23[%c0_118, %c0_119, %c0_120] : memref<2x32x64xf32, #tpu.memory_space<vmem>>, vector<1x32x64xf32>
    %260 = vector.shape_cast %259 : vector<1x32x64xf32> to vector<32x64xf32>
    %cst_121 = arith.constant dense<0.000000e+00> : vector<8x64xf32>
    %261 = tpu.matmul %258, %260, %cst_121 {dimension_numbers = #tpu.dot_dimension_numbers<[1], [0], [0], [1], [0, 0, 1, 1], [], []>} : vector<8x32xf32>, vector<32x64xf32>, vector<8x64xf32> -> vector<8x64xf32>
    %c0_122 = arith.constant 0 : index
    %c0_123 = arith.constant 0 : index
    %c0_124 = arith.constant 0 : index
    %262 = vector.load %arg24[%c0_122, %c0_123, %c0_124] : memref<2x1x64xf32, #tpu.memory_space<vmem>>, vector<1x1x64xf32>
    %263 = vector.shape_cast %262 : vector<1x1x64xf32> to vector<1x64xf32>
    %264 = vector.broadcast %263 : vector<1x64xf32> to vector<8x64xf32>
    %265 = arith.addf %261, %264 : vector<8x64xf32>
    %cst_125 = arith.constant 0.000000e+00 : f32
    %266 = vector.broadcast %cst_125 : f32 to vector<8x64xf32>
    %267 = arith.maximumf %265, %266 : vector<8x64xf32>
    %c0_126 = arith.constant 0 : index
    %c0_127 = arith.constant 0 : index
    %c0_128 = arith.constant 0 : index
    %268 = vector.load %arg25[%c0_126, %c0_127, %c0_128] : memref<2x64x32xf32, #tpu.memory_space<vmem>>, vector<1x64x32xf32>
    %269 = vector.shape_cast %268 : vector<1x64x32xf32> to vector<64x32xf32>
    %cst_129 = arith.constant dense<0.000000e+00> : vector<8x32xf32>
    %270 = tpu.matmul %267, %269, %cst_129 {dimension_numbers = #tpu.dot_dimension_numbers<[1], [0], [0], [1], [0, 0, 1, 1], [], []>} : vector<8x64xf32>, vector<64x32xf32>, vector<8x32xf32> -> vector<8x32xf32>
    %c0_130 = arith.constant 0 : index
    %c0_131 = arith.constant 0 : index
    %c0_132 = arith.constant 0 : index
    %271 = vector.load %arg26[%c0_130, %c0_131, %c0_132] : memref<2x1x32xf32, #tpu.memory_space<vmem>>, vector<1x1x32xf32>
    %272 = vector.shape_cast %271 : vector<1x1x32xf32> to vector<1x32xf32>
    %273 = vector.broadcast %272 : vector<1x32xf32> to vector<8x32xf32>
    %274 = arith.addf %270, %273 : vector<8x32xf32>
    %c0_133 = arith.constant 0 : index
    %c0_134 = arith.constant 0 : index
    %c0_135 = arith.constant 0 : index
    %275 = vector.load %arg21[%c0_133, %c0_134, %c0_135] : memref<2x1x32xf32, #tpu.memory_space<vmem>>, vector<1x1x32xf32>
    %276 = vector.shape_cast %275 : vector<1x1x32xf32> to vector<1x32xf32>
    %c0_136 = arith.constant 0 : index
    %c0_137 = arith.constant 0 : index
    %c0_138 = arith.constant 0 : index
    %277 = vector.load %arg22[%c0_136, %c0_137, %c0_138] : memref<2x1x32xf32, #tpu.memory_space<vmem>>, vector<1x1x32xf32>
    %278 = vector.shape_cast %277 : vector<1x1x32xf32> to vector<1x32xf32>
    %279 = arith.addf %258, %274 : vector<8x32xf32>
    %cst_139 = arith.constant dense<0.000000e+00> : vector<8xf32>
    %280 = vector.multi_reduction <add>, %279, %cst_139 [1] : vector<8x32xf32> to vector<8xf32>
    %281 = vector.shape_cast %280 : vector<8xf32> to vector<8x1xf32>
    %cst_140 = arith.constant 3.200000e+01 : f32
    %282 = vector.broadcast %cst_140 : f32 to vector<8x1xf32>
    %283 = arith.divf %281, %282 : vector<8x1xf32>
    %284 = vector.broadcast %283 : vector<8x1xf32> to vector<8x32xf32>
    %285 = arith.subf %279, %284 : vector<8x32xf32>
    %286 = arith.mulf %285, %285 : vector<8x32xf32>
    %cst_141 = arith.constant dense<0.000000e+00> : vector<8xf32>
    %287 = vector.multi_reduction <add>, %286, %cst_141 [1] : vector<8x32xf32> to vector<8xf32>
    %288 = vector.shape_cast %287 : vector<8xf32> to vector<8x1xf32>
    %cst_142 = arith.constant 3.200000e+01 : f32
    %289 = vector.broadcast %cst_142 : f32 to vector<8x1xf32>
    %290 = arith.divf %288, %289 : vector<8x1xf32>
    %291 = vector.broadcast %283 : vector<8x1xf32> to vector<8x32xf32>
    %292 = arith.subf %279, %291 : vector<8x32xf32>
    %cst_143 = arith.constant 9.99999974E-6 : f32
    %293 = vector.broadcast %cst_143 : f32 to vector<8x1xf32>
    %294 = arith.addf %290, %293 : vector<8x1xf32>
    %295 = math.rsqrt %294 : vector<8x1xf32>
    %296 = vector.broadcast %295 : vector<8x1xf32> to vector<8x32xf32>
    %297 = arith.mulf %292, %296 : vector<8x32xf32>
    %298 = vector.broadcast %276 : vector<1x32xf32> to vector<8x32xf32>
    %299 = arith.mulf %297, %298 : vector<8x32xf32>
    %300 = vector.broadcast %278 : vector<1x32xf32> to vector<8x32xf32>
    %301 = arith.addf %299, %300 : vector<8x32xf32>
    %c1 = arith.constant 1 : index
    %c0_144 = arith.constant 0 : index
    %c0_145 = arith.constant 0 : index
    %302 = vector.load %arg7[%c1, %c0_144, %c0_145] : memref<2x32x96xf32, #tpu.memory_space<vmem>>, vector<1x32x96xf32>
    %303 = vector.shape_cast %302 : vector<1x32x96xf32> to vector<32x96xf32>
    %cst_146 = arith.constant dense<0.000000e+00> : vector<8x96xf32>
    %304 = tpu.matmul %301, %303, %cst_146 {dimension_numbers = #tpu.dot_dimension_numbers<[1], [0], [0], [1], [0, 0, 1, 1], [], []>} : vector<8x32xf32>, vector<32x96xf32>, vector<8x96xf32> -> vector<8x96xf32>
    %c1_147 = arith.constant 1 : index
    %c0_148 = arith.constant 0 : index
    %c0_149 = arith.constant 0 : index
    %305 = vector.load %arg8[%c1_147, %c0_148, %c0_149] : memref<2x1x96xf32, #tpu.memory_space<vmem>>, vector<1x1x96xf32>
    %306 = vector.shape_cast %305 : vector<1x1x96xf32> to vector<1x96xf32>
    %307 = vector.broadcast %306 : vector<1x96xf32> to vector<8x96xf32>
    %308 = arith.addf %304, %307 : vector<8x96xf32>
    %309 = vector.extract_strided_slice %308 {offsets = [0, 0], sizes = [8, 32], strides = [1, 1]} : vector<8x96xf32> to vector<8x32xf32>
    %310 = vector.extract_strided_slice %308 {offsets = [0, 32], sizes = [8, 64], strides = [1, 1]} : vector<8x96xf32> to vector<8x64xf32>
    %c1_150 = arith.constant 1 : index
    %c0_151 = arith.constant 0 : index
    %c0_152 = arith.constant 0 : index
    %311 = vector.load %arg9[%c1_150, %c0_151, %c0_152] : memref<2x32x32xf32, #tpu.memory_space<vmem>>, vector<1x32x32xf32>
    %312 = vector.shape_cast %311 : vector<1x32x32xf32> to vector<32x32xf32>
    %c1_153 = arith.constant 1 : index
    %c0_154 = arith.constant 0 : index
    %c0_155 = arith.constant 0 : index
    %313 = vector.load %arg10[%c1_153, %c0_154, %c0_155] : memref<2x1x32xf32, #tpu.memory_space<vmem>>, vector<1x1x32xf32>
    %314 = vector.shape_cast %313 : vector<1x1x32xf32> to vector<1x32xf32>
    %315 = vector.extract_strided_slice %309 {offsets = [0, 0], sizes = [8, 8], strides = [1, 1]} : vector<8x32xf32> to vector<8x8xf32>
    %316 = vector.extract_strided_slice %310 {offsets = [0, 0], sizes = [8, 8], strides = [1, 1]} : vector<8x64xf32> to vector<8x8xf32>
    %317 = vector.extract_strided_slice %310 {offsets = [0, 32], sizes = [8, 8], strides = [1, 1]} : vector<8x64xf32> to vector<8x8xf32>
    %cst_156 = arith.constant dense<0.000000e+00> : vector<8x8xf32>
    %318 = tpu.matmul %315, %316, %cst_156 {dimension_numbers = #tpu.dot_dimension_numbers<[1], [1], [0], [0], [0, 0, 1, 0], [], []>} : vector<8x8xf32>, vector<8x8xf32>, vector<8x8xf32> -> vector<8x8xf32>
    %cst_157 = arith.constant 0.353553385 : f32
    %319 = vector.broadcast %cst_157 : f32 to vector<8x8xf32>
    %320 = arith.mulf %318, %319 : vector<8x8xf32>
    %321 = arith.addf %320, %15 : vector<8x8xf32>
    %cst_158 = arith.constant dense<0xFF800000> : vector<8xf32>
    %322 = vector.multi_reduction <maximumf>, %321, %cst_158 [1] : vector<8x8xf32> to vector<8xf32>
    %323 = vector.shape_cast %322 : vector<8xf32> to vector<8x1xf32>
    %324 = vector.broadcast %323 : vector<8x1xf32> to vector<8x8xf32>
    %325 = arith.subf %321, %324 : vector<8x8xf32>
    %326 = math.exp %325 : vector<8x8xf32>
    %cst_159 = arith.constant dense<0.000000e+00> : vector<8xf32>
    %327 = vector.multi_reduction <add>, %326, %cst_159 [1] : vector<8x8xf32> to vector<8xf32>
    %328 = vector.shape_cast %327 : vector<8xf32> to vector<8x1xf32>
    %329 = vector.broadcast %328 : vector<8x1xf32> to vector<8x8xf32>
    %330 = arith.divf %326, %329 : vector<8x8xf32>
    %cst_160 = arith.constant dense<0.000000e+00> : vector<8x8xf32>
    %331 = tpu.matmul %330, %317, %cst_160 {dimension_numbers = #tpu.dot_dimension_numbers<[1], [0], [0], [1], [0, 0, 1, 1], [], []>} : vector<8x8xf32>, vector<8x8xf32>, vector<8x8xf32> -> vector<8x8xf32>
    %332 = vector.extract_strided_slice %312 {offsets = [0, 0], sizes = [8, 32], strides = [1, 1]} : vector<32x32xf32> to vector<8x32xf32>
    %cst_161 = arith.constant dense<0.000000e+00> : vector<8x32xf32>
    %333 = tpu.matmul %331, %332, %cst_161 {dimension_numbers = #tpu.dot_dimension_numbers<[1], [0], [0], [1], [0, 0, 1, 1], [], []>} : vector<8x8xf32>, vector<8x32xf32>, vector<8x32xf32> -> vector<8x32xf32>
    %334 = vector.extract_strided_slice %309 {offsets = [0, 8], sizes = [8, 8], strides = [1, 1]} : vector<8x32xf32> to vector<8x8xf32>
    %335 = vector.extract_strided_slice %310 {offsets = [0, 8], sizes = [8, 8], strides = [1, 1]} : vector<8x64xf32> to vector<8x8xf32>
    %336 = vector.extract_strided_slice %310 {offsets = [0, 40], sizes = [8, 8], strides = [1, 1]} : vector<8x64xf32> to vector<8x8xf32>
    %cst_162 = arith.constant dense<0.000000e+00> : vector<8x8xf32>
    %337 = tpu.matmul %334, %335, %cst_162 {dimension_numbers = #tpu.dot_dimension_numbers<[1], [1], [0], [0], [0, 0, 1, 0], [], []>} : vector<8x8xf32>, vector<8x8xf32>, vector<8x8xf32> -> vector<8x8xf32>
    %cst_163 = arith.constant 0.353553385 : f32
    %338 = vector.broadcast %cst_163 : f32 to vector<8x8xf32>
    %339 = arith.mulf %337, %338 : vector<8x8xf32>
    %340 = arith.addf %339, %15 : vector<8x8xf32>
    %cst_164 = arith.constant dense<0xFF800000> : vector<8xf32>
    %341 = vector.multi_reduction <maximumf>, %340, %cst_164 [1] : vector<8x8xf32> to vector<8xf32>
    %342 = vector.shape_cast %341 : vector<8xf32> to vector<8x1xf32>
    %343 = vector.broadcast %342 : vector<8x1xf32> to vector<8x8xf32>
    %344 = arith.subf %340, %343 : vector<8x8xf32>
    %345 = math.exp %344 : vector<8x8xf32>
    %cst_165 = arith.constant dense<0.000000e+00> : vector<8xf32>
    %346 = vector.multi_reduction <add>, %345, %cst_165 [1] : vector<8x8xf32> to vector<8xf32>
    %347 = vector.shape_cast %346 : vector<8xf32> to vector<8x1xf32>
    %348 = vector.broadcast %347 : vector<8x1xf32> to vector<8x8xf32>
    %349 = arith.divf %345, %348 : vector<8x8xf32>
    %cst_166 = arith.constant dense<0.000000e+00> : vector<8x8xf32>
    %350 = tpu.matmul %349, %336, %cst_166 {dimension_numbers = #tpu.dot_dimension_numbers<[1], [0], [0], [1], [0, 0, 1, 1], [], []>} : vector<8x8xf32>, vector<8x8xf32>, vector<8x8xf32> -> vector<8x8xf32>
    %351 = vector.extract_strided_slice %312 {offsets = [8, 0], sizes = [8, 32], strides = [1, 1]} : vector<32x32xf32> to vector<8x32xf32>
    %cst_167 = arith.constant dense<0.000000e+00> : vector<8x32xf32>
    %352 = tpu.matmul %350, %351, %cst_167 {dimension_numbers = #tpu.dot_dimension_numbers<[1], [0], [0], [1], [0, 0, 1, 1], [], []>} : vector<8x8xf32>, vector<8x32xf32>, vector<8x32xf32> -> vector<8x32xf32>
    %353 = arith.addf %333, %352 : vector<8x32xf32>
    %354 = vector.extract_strided_slice %309 {offsets = [0, 16], sizes = [8, 8], strides = [1, 1]} : vector<8x32xf32> to vector<8x8xf32>
    %355 = vector.extract_strided_slice %310 {offsets = [0, 16], sizes = [8, 8], strides = [1, 1]} : vector<8x64xf32> to vector<8x8xf32>
    %356 = vector.extract_strided_slice %310 {offsets = [0, 48], sizes = [8, 8], strides = [1, 1]} : vector<8x64xf32> to vector<8x8xf32>
    %cst_168 = arith.constant dense<0.000000e+00> : vector<8x8xf32>
    %357 = tpu.matmul %354, %355, %cst_168 {dimension_numbers = #tpu.dot_dimension_numbers<[1], [1], [0], [0], [0, 0, 1, 0], [], []>} : vector<8x8xf32>, vector<8x8xf32>, vector<8x8xf32> -> vector<8x8xf32>
    %cst_169 = arith.constant 0.353553385 : f32
    %358 = vector.broadcast %cst_169 : f32 to vector<8x8xf32>
    %359 = arith.mulf %357, %358 : vector<8x8xf32>
    %360 = arith.addf %359, %15 : vector<8x8xf32>
    %cst_170 = arith.constant dense<0xFF800000> : vector<8xf32>
    %361 = vector.multi_reduction <maximumf>, %360, %cst_170 [1] : vector<8x8xf32> to vector<8xf32>
    %362 = vector.shape_cast %361 : vector<8xf32> to vector<8x1xf32>
    %363 = vector.broadcast %362 : vector<8x1xf32> to vector<8x8xf32>
    %364 = arith.subf %360, %363 : vector<8x8xf32>
    %365 = math.exp %364 : vector<8x8xf32>
    %cst_171 = arith.constant dense<0.000000e+00> : vector<8xf32>
    %366 = vector.multi_reduction <add>, %365, %cst_171 [1] : vector<8x8xf32> to vector<8xf32>
    %367 = vector.shape_cast %366 : vector<8xf32> to vector<8x1xf32>
    %368 = vector.broadcast %367 : vector<8x1xf32> to vector<8x8xf32>
    %369 = arith.divf %365, %368 : vector<8x8xf32>
    %cst_172 = arith.constant dense<0.000000e+00> : vector<8x8xf32>
    %370 = tpu.matmul %369, %356, %cst_172 {dimension_numbers = #tpu.dot_dimension_numbers<[1], [0], [0], [1], [0, 0, 1, 1], [], []>} : vector<8x8xf32>, vector<8x8xf32>, vector<8x8xf32> -> vector<8x8xf32>
    %371 = vector.extract_strided_slice %312 {offsets = [16, 0], sizes = [8, 32], strides = [1, 1]} : vector<32x32xf32> to vector<8x32xf32>
    %cst_173 = arith.constant dense<0.000000e+00> : vector<8x32xf32>
    %372 = tpu.matmul %370, %371, %cst_173 {dimension_numbers = #tpu.dot_dimension_numbers<[1], [0], [0], [1], [0, 0, 1, 1], [], []>} : vector<8x8xf32>, vector<8x32xf32>, vector<8x32xf32> -> vector<8x32xf32>
    %373 = arith.addf %353, %372 : vector<8x32xf32>
    %374 = vector.extract_strided_slice %309 {offsets = [0, 24], sizes = [8, 8], strides = [1, 1]} : vector<8x32xf32> to vector<8x8xf32>
    %375 = vector.extract_strided_slice %310 {offsets = [0, 24], sizes = [8, 8], strides = [1, 1]} : vector<8x64xf32> to vector<8x8xf32>
    %376 = vector.extract_strided_slice %310 {offsets = [0, 56], sizes = [8, 8], strides = [1, 1]} : vector<8x64xf32> to vector<8x8xf32>
    %cst_174 = arith.constant dense<0.000000e+00> : vector<8x8xf32>
    %377 = tpu.matmul %374, %375, %cst_174 {dimension_numbers = #tpu.dot_dimension_numbers<[1], [1], [0], [0], [0, 0, 1, 0], [], []>} : vector<8x8xf32>, vector<8x8xf32>, vector<8x8xf32> -> vector<8x8xf32>
    %cst_175 = arith.constant 0.353553385 : f32
    %378 = vector.broadcast %cst_175 : f32 to vector<8x8xf32>
    %379 = arith.mulf %377, %378 : vector<8x8xf32>
    %380 = arith.addf %379, %15 : vector<8x8xf32>
    %cst_176 = arith.constant dense<0xFF800000> : vector<8xf32>
    %381 = vector.multi_reduction <maximumf>, %380, %cst_176 [1] : vector<8x8xf32> to vector<8xf32>
    %382 = vector.shape_cast %381 : vector<8xf32> to vector<8x1xf32>
    %383 = vector.broadcast %382 : vector<8x1xf32> to vector<8x8xf32>
    %384 = arith.subf %380, %383 : vector<8x8xf32>
    %385 = math.exp %384 : vector<8x8xf32>
    %cst_177 = arith.constant dense<0.000000e+00> : vector<8xf32>
    %386 = vector.multi_reduction <add>, %385, %cst_177 [1] : vector<8x8xf32> to vector<8xf32>
    %387 = vector.shape_cast %386 : vector<8xf32> to vector<8x1xf32>
    %388 = vector.broadcast %387 : vector<8x1xf32> to vector<8x8xf32>
    %389 = arith.divf %385, %388 : vector<8x8xf32>
    %cst_178 = arith.constant dense<0.000000e+00> : vector<8x8xf32>
    %390 = tpu.matmul %389, %376, %cst_178 {dimension_numbers = #tpu.dot_dimension_numbers<[1], [0], [0], [1], [0, 0, 1, 1], [], []>} : vector<8x8xf32>, vector<8x8xf32>, vector<8x8xf32> -> vector<8x8xf32>
    %391 = vector.extract_strided_slice %312 {offsets = [24, 0], sizes = [8, 32], strides = [1, 1]} : vector<32x32xf32> to vector<8x32xf32>
    %cst_179 = arith.constant dense<0.000000e+00> : vector<8x32xf32>
    %392 = tpu.matmul %390, %391, %cst_179 {dimension_numbers = #tpu.dot_dimension_numbers<[1], [0], [0], [1], [0, 0, 1, 1], [], []>} : vector<8x8xf32>, vector<8x32xf32>, vector<8x32xf32> -> vector<8x32xf32>
    %393 = arith.addf %373, %392 : vector<8x32xf32>
    %394 = vector.broadcast %314 : vector<1x32xf32> to vector<8x32xf32>
    %395 = arith.addf %393, %394 : vector<8x32xf32>
    %c1_180 = arith.constant 1 : index
    %c0_181 = arith.constant 0 : index
    %c0_182 = arith.constant 0 : index
    %396 = vector.load %arg17[%c1_180, %c0_181, %c0_182] : memref<2x1x32xf32, #tpu.memory_space<vmem>>, vector<1x1x32xf32>
    %397 = vector.shape_cast %396 : vector<1x1x32xf32> to vector<1x32xf32>
    %c1_183 = arith.constant 1 : index
    %c0_184 = arith.constant 0 : index
    %c0_185 = arith.constant 0 : index
    %398 = vector.load %arg18[%c1_183, %c0_184, %c0_185] : memref<2x1x32xf32, #tpu.memory_space<vmem>>, vector<1x1x32xf32>
    %399 = vector.shape_cast %398 : vector<1x1x32xf32> to vector<1x32xf32>
    %400 = arith.addf %301, %395 : vector<8x32xf32>
    %cst_186 = arith.constant dense<0.000000e+00> : vector<8xf32>
    %401 = vector.multi_reduction <add>, %400, %cst_186 [1] : vector<8x32xf32> to vector<8xf32>
    %402 = vector.shape_cast %401 : vector<8xf32> to vector<8x1xf32>
    %cst_187 = arith.constant 3.200000e+01 : f32
    %403 = vector.broadcast %cst_187 : f32 to vector<8x1xf32>
    %404 = arith.divf %402, %403 : vector<8x1xf32>
    %405 = vector.broadcast %404 : vector<8x1xf32> to vector<8x32xf32>
    %406 = arith.subf %400, %405 : vector<8x32xf32>
    %407 = arith.mulf %406, %406 : vector<8x32xf32>
    %cst_188 = arith.constant dense<0.000000e+00> : vector<8xf32>
    %408 = vector.multi_reduction <add>, %407, %cst_188 [1] : vector<8x32xf32> to vector<8xf32>
    %409 = vector.shape_cast %408 : vector<8xf32> to vector<8x1xf32>
    %cst_189 = arith.constant 3.200000e+01 : f32
    %410 = vector.broadcast %cst_189 : f32 to vector<8x1xf32>
    %411 = arith.divf %409, %410 : vector<8x1xf32>
    %412 = vector.broadcast %404 : vector<8x1xf32> to vector<8x32xf32>
    %413 = arith.subf %400, %412 : vector<8x32xf32>
    %cst_190 = arith.constant 9.99999974E-6 : f32
    %414 = vector.broadcast %cst_190 : f32 to vector<8x1xf32>
    %415 = arith.addf %411, %414 : vector<8x1xf32>
    %416 = math.rsqrt %415 : vector<8x1xf32>
    %417 = vector.broadcast %416 : vector<8x1xf32> to vector<8x32xf32>
    %418 = arith.mulf %413, %417 : vector<8x32xf32>
    %419 = vector.broadcast %397 : vector<1x32xf32> to vector<8x32xf32>
    %420 = arith.mulf %418, %419 : vector<8x32xf32>
    %421 = vector.broadcast %399 : vector<1x32xf32> to vector<8x32xf32>
    %422 = arith.addf %420, %421 : vector<8x32xf32>
    %c1_191 = arith.constant 1 : index
    %c0_192 = arith.constant 0 : index
    %c0_193 = arith.constant 0 : index
    %423 = vector.load %arg11[%c1_191, %c0_192, %c0_193] : memref<2x32x32xf32, #tpu.memory_space<vmem>>, vector<1x32x32xf32>
    %424 = vector.shape_cast %423 : vector<1x32x32xf32> to vector<32x32xf32>
    %cst_194 = arith.constant dense<0.000000e+00> : vector<8x32xf32>
    %425 = tpu.matmul %422, %424, %cst_194 {dimension_numbers = #tpu.dot_dimension_numbers<[1], [0], [0], [1], [0, 0, 1, 1], [], []>} : vector<8x32xf32>, vector<32x32xf32>, vector<8x32xf32> -> vector<8x32xf32>
    %c1_195 = arith.constant 1 : index
    %c0_196 = arith.constant 0 : index
    %c0_197 = arith.constant 0 : index
    %426 = vector.load %arg12[%c1_195, %c0_196, %c0_197] : memref<2x1x32xf32, #tpu.memory_space<vmem>>, vector<1x1x32xf32>
    %427 = vector.shape_cast %426 : vector<1x1x32xf32> to vector<1x32xf32>
    %428 = vector.broadcast %427 : vector<1x32xf32> to vector<8x32xf32>
    %429 = arith.addf %425, %428 : vector<8x32xf32>
    %c1_198 = arith.constant 1 : index
    %c0_199 = arith.constant 0 : index
    %c0_200 = arith.constant 0 : index
    %430 = vector.load %arg13[%c1_198, %c0_199, %c0_200] : memref<2x32x64xf32, #tpu.memory_space<vmem>>, vector<1x32x64xf32>
    %431 = vector.shape_cast %430 : vector<1x32x64xf32> to vector<32x64xf32>
    %cst_201 = arith.constant dense<0.000000e+00> : vector<8x64xf32>
    %432 = tpu.matmul %8, %431, %cst_201 {dimension_numbers = #tpu.dot_dimension_numbers<[1], [0], [0], [1], [0, 0, 1, 1], [], []>} : vector<8x32xf32>, vector<32x64xf32>, vector<8x64xf32> -> vector<8x64xf32>
    %c1_202 = arith.constant 1 : index
    %c0_203 = arith.constant 0 : index
    %c0_204 = arith.constant 0 : index
    %433 = vector.load %arg14[%c1_202, %c0_203, %c0_204] : memref<2x1x64xf32, #tpu.memory_space<vmem>>, vector<1x1x64xf32>
    %434 = vector.shape_cast %433 : vector<1x1x64xf32> to vector<1x64xf32>
    %435 = vector.broadcast %434 : vector<1x64xf32> to vector<8x64xf32>
    %436 = arith.addf %432, %435 : vector<8x64xf32>
    %c1_205 = arith.constant 1 : index
    %c0_206 = arith.constant 0 : index
    %c0_207 = arith.constant 0 : index
    %437 = vector.load %arg15[%c1_205, %c0_206, %c0_207] : memref<2x32x32xf32, #tpu.memory_space<vmem>>, vector<1x32x32xf32>
    %438 = vector.shape_cast %437 : vector<1x32x32xf32> to vector<32x32xf32>
    %c1_208 = arith.constant 1 : index
    %c0_209 = arith.constant 0 : index
    %c0_210 = arith.constant 0 : index
    %439 = vector.load %arg16[%c1_208, %c0_209, %c0_210] : memref<2x1x32xf32, #tpu.memory_space<vmem>>, vector<1x1x32xf32>
    %440 = vector.shape_cast %439 : vector<1x1x32xf32> to vector<1x32xf32>
    %441 = vector.extract_strided_slice %429 {offsets = [0, 0], sizes = [8, 8], strides = [1, 1]} : vector<8x32xf32> to vector<8x8xf32>
    %442 = vector.extract_strided_slice %436 {offsets = [0, 0], sizes = [8, 8], strides = [1, 1]} : vector<8x64xf32> to vector<8x8xf32>
    %443 = vector.extract_strided_slice %436 {offsets = [0, 32], sizes = [8, 8], strides = [1, 1]} : vector<8x64xf32> to vector<8x8xf32>
    %cst_211 = arith.constant dense<0.000000e+00> : vector<8x8xf32>
    %444 = tpu.matmul %441, %442, %cst_211 {dimension_numbers = #tpu.dot_dimension_numbers<[1], [1], [0], [0], [0, 0, 1, 0], [], []>} : vector<8x8xf32>, vector<8x8xf32>, vector<8x8xf32> -> vector<8x8xf32>
    %cst_212 = arith.constant 0.353553385 : f32
    %445 = vector.broadcast %cst_212 : f32 to vector<8x8xf32>
    %446 = arith.mulf %444, %445 : vector<8x8xf32>
    %cst_213 = arith.constant dense<0xFF800000> : vector<8xf32>
    %447 = vector.multi_reduction <maximumf>, %446, %cst_213 [1] : vector<8x8xf32> to vector<8xf32>
    %448 = vector.shape_cast %447 : vector<8xf32> to vector<8x1xf32>
    %449 = vector.broadcast %448 : vector<8x1xf32> to vector<8x8xf32>
    %450 = arith.subf %446, %449 : vector<8x8xf32>
    %451 = math.exp %450 : vector<8x8xf32>
    %cst_214 = arith.constant dense<0.000000e+00> : vector<8xf32>
    %452 = vector.multi_reduction <add>, %451, %cst_214 [1] : vector<8x8xf32> to vector<8xf32>
    %453 = vector.shape_cast %452 : vector<8xf32> to vector<8x1xf32>
    %454 = vector.broadcast %453 : vector<8x1xf32> to vector<8x8xf32>
    %455 = arith.divf %451, %454 : vector<8x8xf32>
    %cst_215 = arith.constant dense<0.000000e+00> : vector<8x8xf32>
    %456 = tpu.matmul %455, %443, %cst_215 {dimension_numbers = #tpu.dot_dimension_numbers<[1], [0], [0], [1], [0, 0, 1, 1], [], []>} : vector<8x8xf32>, vector<8x8xf32>, vector<8x8xf32> -> vector<8x8xf32>
    %457 = vector.extract_strided_slice %438 {offsets = [0, 0], sizes = [8, 32], strides = [1, 1]} : vector<32x32xf32> to vector<8x32xf32>
    %cst_216 = arith.constant dense<0.000000e+00> : vector<8x32xf32>
    %458 = tpu.matmul %456, %457, %cst_216 {dimension_numbers = #tpu.dot_dimension_numbers<[1], [0], [0], [1], [0, 0, 1, 1], [], []>} : vector<8x8xf32>, vector<8x32xf32>, vector<8x32xf32> -> vector<8x32xf32>
    %459 = vector.extract_strided_slice %429 {offsets = [0, 8], sizes = [8, 8], strides = [1, 1]} : vector<8x32xf32> to vector<8x8xf32>
    %460 = vector.extract_strided_slice %436 {offsets = [0, 8], sizes = [8, 8], strides = [1, 1]} : vector<8x64xf32> to vector<8x8xf32>
    %461 = vector.extract_strided_slice %436 {offsets = [0, 40], sizes = [8, 8], strides = [1, 1]} : vector<8x64xf32> to vector<8x8xf32>
    %cst_217 = arith.constant dense<0.000000e+00> : vector<8x8xf32>
    %462 = tpu.matmul %459, %460, %cst_217 {dimension_numbers = #tpu.dot_dimension_numbers<[1], [1], [0], [0], [0, 0, 1, 0], [], []>} : vector<8x8xf32>, vector<8x8xf32>, vector<8x8xf32> -> vector<8x8xf32>
    %cst_218 = arith.constant 0.353553385 : f32
    %463 = vector.broadcast %cst_218 : f32 to vector<8x8xf32>
    %464 = arith.mulf %462, %463 : vector<8x8xf32>
    %cst_219 = arith.constant dense<0xFF800000> : vector<8xf32>
    %465 = vector.multi_reduction <maximumf>, %464, %cst_219 [1] : vector<8x8xf32> to vector<8xf32>
    %466 = vector.shape_cast %465 : vector<8xf32> to vector<8x1xf32>
    %467 = vector.broadcast %466 : vector<8x1xf32> to vector<8x8xf32>
    %468 = arith.subf %464, %467 : vector<8x8xf32>
    %469 = math.exp %468 : vector<8x8xf32>
    %cst_220 = arith.constant dense<0.000000e+00> : vector<8xf32>
    %470 = vector.multi_reduction <add>, %469, %cst_220 [1] : vector<8x8xf32> to vector<8xf32>
    %471 = vector.shape_cast %470 : vector<8xf32> to vector<8x1xf32>
    %472 = vector.broadcast %471 : vector<8x1xf32> to vector<8x8xf32>
    %473 = arith.divf %469, %472 : vector<8x8xf32>
    %cst_221 = arith.constant dense<0.000000e+00> : vector<8x8xf32>
    %474 = tpu.matmul %473, %461, %cst_221 {dimension_numbers = #tpu.dot_dimension_numbers<[1], [0], [0], [1], [0, 0, 1, 1], [], []>} : vector<8x8xf32>, vector<8x8xf32>, vector<8x8xf32> -> vector<8x8xf32>
    %475 = vector.extract_strided_slice %438 {offsets = [8, 0], sizes = [8, 32], strides = [1, 1]} : vector<32x32xf32> to vector<8x32xf32>
    %cst_222 = arith.constant dense<0.000000e+00> : vector<8x32xf32>
    %476 = tpu.matmul %474, %475, %cst_222 {dimension_numbers = #tpu.dot_dimension_numbers<[1], [0], [0], [1], [0, 0, 1, 1], [], []>} : vector<8x8xf32>, vector<8x32xf32>, vector<8x32xf32> -> vector<8x32xf32>
    %477 = arith.addf %458, %476 : vector<8x32xf32>
    %478 = vector.extract_strided_slice %429 {offsets = [0, 16], sizes = [8, 8], strides = [1, 1]} : vector<8x32xf32> to vector<8x8xf32>
    %479 = vector.extract_strided_slice %436 {offsets = [0, 16], sizes = [8, 8], strides = [1, 1]} : vector<8x64xf32> to vector<8x8xf32>
    %480 = vector.extract_strided_slice %436 {offsets = [0, 48], sizes = [8, 8], strides = [1, 1]} : vector<8x64xf32> to vector<8x8xf32>
    %cst_223 = arith.constant dense<0.000000e+00> : vector<8x8xf32>
    %481 = tpu.matmul %478, %479, %cst_223 {dimension_numbers = #tpu.dot_dimension_numbers<[1], [1], [0], [0], [0, 0, 1, 0], [], []>} : vector<8x8xf32>, vector<8x8xf32>, vector<8x8xf32> -> vector<8x8xf32>
    %cst_224 = arith.constant 0.353553385 : f32
    %482 = vector.broadcast %cst_224 : f32 to vector<8x8xf32>
    %483 = arith.mulf %481, %482 : vector<8x8xf32>
    %cst_225 = arith.constant dense<0xFF800000> : vector<8xf32>
    %484 = vector.multi_reduction <maximumf>, %483, %cst_225 [1] : vector<8x8xf32> to vector<8xf32>
    %485 = vector.shape_cast %484 : vector<8xf32> to vector<8x1xf32>
    %486 = vector.broadcast %485 : vector<8x1xf32> to vector<8x8xf32>
    %487 = arith.subf %483, %486 : vector<8x8xf32>
    %488 = math.exp %487 : vector<8x8xf32>
    %cst_226 = arith.constant dense<0.000000e+00> : vector<8xf32>
    %489 = vector.multi_reduction <add>, %488, %cst_226 [1] : vector<8x8xf32> to vector<8xf32>
    %490 = vector.shape_cast %489 : vector<8xf32> to vector<8x1xf32>
    %491 = vector.broadcast %490 : vector<8x1xf32> to vector<8x8xf32>
    %492 = arith.divf %488, %491 : vector<8x8xf32>
    %cst_227 = arith.constant dense<0.000000e+00> : vector<8x8xf32>
    %493 = tpu.matmul %492, %480, %cst_227 {dimension_numbers = #tpu.dot_dimension_numbers<[1], [0], [0], [1], [0, 0, 1, 1], [], []>} : vector<8x8xf32>, vector<8x8xf32>, vector<8x8xf32> -> vector<8x8xf32>
    %494 = vector.extract_strided_slice %438 {offsets = [16, 0], sizes = [8, 32], strides = [1, 1]} : vector<32x32xf32> to vector<8x32xf32>
    %cst_228 = arith.constant dense<0.000000e+00> : vector<8x32xf32>
    %495 = tpu.matmul %493, %494, %cst_228 {dimension_numbers = #tpu.dot_dimension_numbers<[1], [0], [0], [1], [0, 0, 1, 1], [], []>} : vector<8x8xf32>, vector<8x32xf32>, vector<8x32xf32> -> vector<8x32xf32>
    %496 = arith.addf %477, %495 : vector<8x32xf32>
    %497 = vector.extract_strided_slice %429 {offsets = [0, 24], sizes = [8, 8], strides = [1, 1]} : vector<8x32xf32> to vector<8x8xf32>
    %498 = vector.extract_strided_slice %436 {offsets = [0, 24], sizes = [8, 8], strides = [1, 1]} : vector<8x64xf32> to vector<8x8xf32>
    %499 = vector.extract_strided_slice %436 {offsets = [0, 56], sizes = [8, 8], strides = [1, 1]} : vector<8x64xf32> to vector<8x8xf32>
    %cst_229 = arith.constant dense<0.000000e+00> : vector<8x8xf32>
    %500 = tpu.matmul %497, %498, %cst_229 {dimension_numbers = #tpu.dot_dimension_numbers<[1], [1], [0], [0], [0, 0, 1, 0], [], []>} : vector<8x8xf32>, vector<8x8xf32>, vector<8x8xf32> -> vector<8x8xf32>
    %cst_230 = arith.constant 0.353553385 : f32
    %501 = vector.broadcast %cst_230 : f32 to vector<8x8xf32>
    %502 = arith.mulf %500, %501 : vector<8x8xf32>
    %cst_231 = arith.constant dense<0xFF800000> : vector<8xf32>
    %503 = vector.multi_reduction <maximumf>, %502, %cst_231 [1] : vector<8x8xf32> to vector<8xf32>
    %504 = vector.shape_cast %503 : vector<8xf32> to vector<8x1xf32>
    %505 = vector.broadcast %504 : vector<8x1xf32> to vector<8x8xf32>
    %506 = arith.subf %502, %505 : vector<8x8xf32>
    %507 = math.exp %506 : vector<8x8xf32>
    %cst_232 = arith.constant dense<0.000000e+00> : vector<8xf32>
    %508 = vector.multi_reduction <add>, %507, %cst_232 [1] : vector<8x8xf32> to vector<8xf32>
    %509 = vector.shape_cast %508 : vector<8xf32> to vector<8x1xf32>
    %510 = vector.broadcast %509 : vector<8x1xf32> to vector<8x8xf32>
    %511 = arith.divf %507, %510 : vector<8x8xf32>
    %cst_233 = arith.constant dense<0.000000e+00> : vector<8x8xf32>
    %512 = tpu.matmul %511, %499, %cst_233 {dimension_numbers = #tpu.dot_dimension_numbers<[1], [0], [0], [1], [0, 0, 1, 1], [], []>} : vector<8x8xf32>, vector<8x8xf32>, vector<8x8xf32> -> vector<8x8xf32>
    %513 = vector.extract_strided_slice %438 {offsets = [24, 0], sizes = [8, 32], strides = [1, 1]} : vector<32x32xf32> to vector<8x32xf32>
    %cst_234 = arith.constant dense<0.000000e+00> : vector<8x32xf32>
    %514 = tpu.matmul %512, %513, %cst_234 {dimension_numbers = #tpu.dot_dimension_numbers<[1], [0], [0], [1], [0, 0, 1, 1], [], []>} : vector<8x8xf32>, vector<8x32xf32>, vector<8x32xf32> -> vector<8x32xf32>
    %515 = arith.addf %496, %514 : vector<8x32xf32>
    %516 = vector.broadcast %440 : vector<1x32xf32> to vector<8x32xf32>
    %517 = arith.addf %515, %516 : vector<8x32xf32>
    %c1_235 = arith.constant 1 : index
    %c0_236 = arith.constant 0 : index
    %c0_237 = arith.constant 0 : index
    %518 = vector.load %arg19[%c1_235, %c0_236, %c0_237] : memref<2x1x32xf32, #tpu.memory_space<vmem>>, vector<1x1x32xf32>
    %519 = vector.shape_cast %518 : vector<1x1x32xf32> to vector<1x32xf32>
    %c1_238 = arith.constant 1 : index
    %c0_239 = arith.constant 0 : index
    %c0_240 = arith.constant 0 : index
    %520 = vector.load %arg20[%c1_238, %c0_239, %c0_240] : memref<2x1x32xf32, #tpu.memory_space<vmem>>, vector<1x1x32xf32>
    %521 = vector.shape_cast %520 : vector<1x1x32xf32> to vector<1x32xf32>
    %522 = arith.addf %422, %517 : vector<8x32xf32>
    %cst_241 = arith.constant dense<0.000000e+00> : vector<8xf32>
    %523 = vector.multi_reduction <add>, %522, %cst_241 [1] : vector<8x32xf32> to vector<8xf32>
    %524 = vector.shape_cast %523 : vector<8xf32> to vector<8x1xf32>
    %cst_242 = arith.constant 3.200000e+01 : f32
    %525 = vector.broadcast %cst_242 : f32 to vector<8x1xf32>
    %526 = arith.divf %524, %525 : vector<8x1xf32>
    %527 = vector.broadcast %526 : vector<8x1xf32> to vector<8x32xf32>
    %528 = arith.subf %522, %527 : vector<8x32xf32>
    %529 = arith.mulf %528, %528 : vector<8x32xf32>
    %cst_243 = arith.constant dense<0.000000e+00> : vector<8xf32>
    %530 = vector.multi_reduction <add>, %529, %cst_243 [1] : vector<8x32xf32> to vector<8xf32>
    %531 = vector.shape_cast %530 : vector<8xf32> to vector<8x1xf32>
    %cst_244 = arith.constant 3.200000e+01 : f32
    %532 = vector.broadcast %cst_244 : f32 to vector<8x1xf32>
    %533 = arith.divf %531, %532 : vector<8x1xf32>
    %534 = vector.broadcast %526 : vector<8x1xf32> to vector<8x32xf32>
    %535 = arith.subf %522, %534 : vector<8x32xf32>
    %cst_245 = arith.constant 9.99999974E-6 : f32
    %536 = vector.broadcast %cst_245 : f32 to vector<8x1xf32>
    %537 = arith.addf %533, %536 : vector<8x1xf32>
    %538 = math.rsqrt %537 : vector<8x1xf32>
    %539 = vector.broadcast %538 : vector<8x1xf32> to vector<8x32xf32>
    %540 = arith.mulf %535, %539 : vector<8x32xf32>
    %541 = vector.broadcast %519 : vector<1x32xf32> to vector<8x32xf32>
    %542 = arith.mulf %540, %541 : vector<8x32xf32>
    %543 = vector.broadcast %521 : vector<1x32xf32> to vector<8x32xf32>
    %544 = arith.addf %542, %543 : vector<8x32xf32>
    %c1_246 = arith.constant 1 : index
    %c0_247 = arith.constant 0 : index
    %c0_248 = arith.constant 0 : index
    %545 = vector.load %arg23[%c1_246, %c0_247, %c0_248] : memref<2x32x64xf32, #tpu.memory_space<vmem>>, vector<1x32x64xf32>
    %546 = vector.shape_cast %545 : vector<1x32x64xf32> to vector<32x64xf32>
    %cst_249 = arith.constant dense<0.000000e+00> : vector<8x64xf32>
    %547 = tpu.matmul %544, %546, %cst_249 {dimension_numbers = #tpu.dot_dimension_numbers<[1], [0], [0], [1], [0, 0, 1, 1], [], []>} : vector<8x32xf32>, vector<32x64xf32>, vector<8x64xf32> -> vector<8x64xf32>
    %c1_250 = arith.constant 1 : index
    %c0_251 = arith.constant 0 : index
    %c0_252 = arith.constant 0 : index
    %548 = vector.load %arg24[%c1_250, %c0_251, %c0_252] : memref<2x1x64xf32, #tpu.memory_space<vmem>>, vector<1x1x64xf32>
    %549 = vector.shape_cast %548 : vector<1x1x64xf32> to vector<1x64xf32>
    %550 = vector.broadcast %549 : vector<1x64xf32> to vector<8x64xf32>
    %551 = arith.addf %547, %550 : vector<8x64xf32>
    %cst_253 = arith.constant 0.000000e+00 : f32
    %552 = vector.broadcast %cst_253 : f32 to vector<8x64xf32>
    %553 = arith.maximumf %551, %552 : vector<8x64xf32>
    %c1_254 = arith.constant 1 : index
    %c0_255 = arith.constant 0 : index
    %c0_256 = arith.constant 0 : index
    %554 = vector.load %arg25[%c1_254, %c0_255, %c0_256] : memref<2x64x32xf32, #tpu.memory_space<vmem>>, vector<1x64x32xf32>
    %555 = vector.shape_cast %554 : vector<1x64x32xf32> to vector<64x32xf32>
    %cst_257 = arith.constant dense<0.000000e+00> : vector<8x32xf32>
    %556 = tpu.matmul %553, %555, %cst_257 {dimension_numbers = #tpu.dot_dimension_numbers<[1], [0], [0], [1], [0, 0, 1, 1], [], []>} : vector<8x64xf32>, vector<64x32xf32>, vector<8x32xf32> -> vector<8x32xf32>
    %c1_258 = arith.constant 1 : index
    %c0_259 = arith.constant 0 : index
    %c0_260 = arith.constant 0 : index
    %557 = vector.load %arg26[%c1_258, %c0_259, %c0_260] : memref<2x1x32xf32, #tpu.memory_space<vmem>>, vector<1x1x32xf32>
    %558 = vector.shape_cast %557 : vector<1x1x32xf32> to vector<1x32xf32>
    %559 = vector.broadcast %558 : vector<1x32xf32> to vector<8x32xf32>
    %560 = arith.addf %556, %559 : vector<8x32xf32>
    %c1_261 = arith.constant 1 : index
    %c0_262 = arith.constant 0 : index
    %c0_263 = arith.constant 0 : index
    %561 = vector.load %arg21[%c1_261, %c0_262, %c0_263] : memref<2x1x32xf32, #tpu.memory_space<vmem>>, vector<1x1x32xf32>
    %562 = vector.shape_cast %561 : vector<1x1x32xf32> to vector<1x32xf32>
    %c1_264 = arith.constant 1 : index
    %c0_265 = arith.constant 0 : index
    %c0_266 = arith.constant 0 : index
    %563 = vector.load %arg22[%c1_264, %c0_265, %c0_266] : memref<2x1x32xf32, #tpu.memory_space<vmem>>, vector<1x1x32xf32>
    %564 = vector.shape_cast %563 : vector<1x1x32xf32> to vector<1x32xf32>
    %565 = arith.addf %544, %560 : vector<8x32xf32>
    %cst_267 = arith.constant dense<0.000000e+00> : vector<8xf32>
    %566 = vector.multi_reduction <add>, %565, %cst_267 [1] : vector<8x32xf32> to vector<8xf32>
    %567 = vector.shape_cast %566 : vector<8xf32> to vector<8x1xf32>
    %cst_268 = arith.constant 3.200000e+01 : f32
    %568 = vector.broadcast %cst_268 : f32 to vector<8x1xf32>
    %569 = arith.divf %567, %568 : vector<8x1xf32>
    %570 = vector.broadcast %569 : vector<8x1xf32> to vector<8x32xf32>
    %571 = arith.subf %565, %570 : vector<8x32xf32>
    %572 = arith.mulf %571, %571 : vector<8x32xf32>
    %cst_269 = arith.constant dense<0.000000e+00> : vector<8xf32>
    %573 = vector.multi_reduction <add>, %572, %cst_269 [1] : vector<8x32xf32> to vector<8xf32>
    %574 = vector.shape_cast %573 : vector<8xf32> to vector<8x1xf32>
    %cst_270 = arith.constant 3.200000e+01 : f32
    %575 = vector.broadcast %cst_270 : f32 to vector<8x1xf32>
    %576 = arith.divf %574, %575 : vector<8x1xf32>
    %577 = vector.broadcast %569 : vector<8x1xf32> to vector<8x32xf32>
    %578 = arith.subf %565, %577 : vector<8x32xf32>
    %cst_271 = arith.constant 9.99999974E-6 : f32
    %579 = vector.broadcast %cst_271 : f32 to vector<8x1xf32>
    %580 = arith.addf %576, %579 : vector<8x1xf32>
    %581 = math.rsqrt %580 : vector<8x1xf32>
    %582 = vector.broadcast %581 : vector<8x1xf32> to vector<8x32xf32>
    %583 = arith.mulf %578, %582 : vector<8x32xf32>
    %584 = vector.broadcast %562 : vector<1x32xf32> to vector<8x32xf32>
    %585 = arith.mulf %583, %584 : vector<8x32xf32>
    %586 = vector.broadcast %564 : vector<1x32xf32> to vector<8x32xf32>
    %587 = arith.addf %585, %586 : vector<8x32xf32>
    %c0_272 = arith.constant 0 : index
    %c0_273 = arith.constant 0 : index
    %588 = vector.load %arg27[%c0_272, %c0_273] : memref<32x128xf32, #tpu.memory_space<vmem>>, vector<32x128xf32>
    %cst_274 = arith.constant dense<0.000000e+00> : vector<8x128xf32>
    %589 = tpu.matmul %587, %588, %cst_274 {dimension_numbers = #tpu.dot_dimension_numbers<[1], [0], [0], [1], [0, 0, 1, 1], [], []>} : vector<8x32xf32>, vector<32x128xf32>, vector<8x128xf32> -> vector<8x128xf32>
    %c0_275 = arith.constant 0 : index
    %c0_276 = arith.constant 0 : index
    %590 = vector.load %arg28[%c0_275, %c0_276] : memref<1x128xf32, #tpu.memory_space<vmem>>, vector<1x128xf32>
    %591 = vector.broadcast %590 : vector<1x128xf32> to vector<8x128xf32>
    %592 = arith.addf %589, %591 : vector<8x128xf32>
    %c0_277 = arith.constant 0 : index
    %c0_278 = arith.constant 0 : index
    %c0_279 = arith.constant 0 : index
    %593 = vector.load %arg29[%c0_277, %c0_278, %c0_279] : memref<1x8x128xf32, #tpu.memory_space<vmem>>, vector<1x8x128xf32>
    %594 = vector.shape_cast %593 : vector<1x8x128xf32> to vector<8x128xf32>
    %595 = vector.shape_cast %592 : vector<8x128xf32> to vector<1x8x128xf32>
    tpu.vector_store %arg29[%c0_277, %c0_278, %c0_279], %595 {strides = array<i32>} : memref<1x8x128xf32, #tpu.memory_space<vmem>>, vector<1x8x128xf32>,
    return
  }
  func.func @transform_0(%arg0: i32) -> (i32, i32, i32) {
    %c0_i32 = arith.constant 0 : i32
    %c0_i32_0 = arith.constant 0 : i32
    %c0_i32_1 = arith.constant 0 : i32
    return %arg0, %c0_i32, %c0_i32_0 : i32, i32, i32
  }
  func.func @transform_1(%arg0: i32) -> (i32, i32, i32) {
    %c0_i32 = arith.constant 0 : i32
    %c0_i32_0 = arith.constant 0 : i32
    %c0_i32_1 = arith.constant 0 : i32
    return %arg0, %c0_i32, %c0_i32_0 : i32, i32, i32
  }
  func.func @transform_2(%arg0: i32) -> (i32, i32) {
    %c0_i32 = arith.constant 0 : i32
    %c0_i32_0 = arith.constant 0 : i32
    %c0_i32_1 = arith.constant 0 : i32
    return %c0_i32, %c0_i32_0 : i32, i32
  }
  func.func @transform_3(%arg0: i32) -> (i32, i32) {
    %c0_i32 = arith.constant 0 : i32
    %c0_i32_0 = arith.constant 0 : i32
    %c0_i32_1 = arith.constant 0 : i32
    return %c0_i32, %c0_i32_0 : i32, i32
  }
  func.func @transform_4(%arg0: i32) -> (i32, i32) {
    %c0_i32 = arith.constant 0 : i32
    %c0_i32_0 = arith.constant 0 : i32
    %c0_i32_1 = arith.constant 0 : i32
    return %c0_i32, %c0_i32_0 : i32, i32
  }
  func.func @transform_5(%arg0: i32) -> (i32, i32) {
    %c0_i32 = arith.constant 0 : i32
    %c0_i32_0 = arith.constant 0 : i32
    %c0_i32_1 = arith.constant 0 : i32
    return %c0_i32, %c0_i32_0 : i32, i32
  }
  func.func @transform_6(%arg0: i32) -> (i32, i32, i32) {
    %c0_i32 = arith.constant 0 : i32
    %c0_i32_0 = arith.constant 0 : i32
    %c0_i32_1 = arith.constant 0 : i32
    %c0_i32_2 = arith.constant 0 : i32
    return %c0_i32, %c0_i32_0, %c0_i32_1 : i32, i32, i32
  }
  func.func @transform_7(%arg0: i32) -> (i32, i32, i32) {
    %c0_i32 = arith.constant 0 : i32
    %c0_i32_0 = arith.constant 0 : i32
    %c0_i32_1 = arith.constant 0 : i32
    %c0_i32_2 = arith.constant 0 : i32
    return %c0_i32, %c0_i32_0, %c0_i32_1 : i32, i32, i32
  }
  func.func @transform_8(%arg0: i32) -> (i32, i32, i32) {
    %c0_i32 = arith.constant 0 : i32
    %c0_i32_0 = arith.constant 0 : i32
    %c0_i32_1 = arith.constant 0 : i32
    %c0_i32_2 = arith.constant 0 : i32
    return %c0_i32, %c0_i32_0, %c0_i32_1 : i32, i32, i32
  }
  func.func @transform_9(%arg0: i32) -> (i32, i32, i32) {
    %c0_i32 = arith.constant 0 : i32
    %c0_i32_0 = arith.constant 0 : i32
    %c0_i32_1 = arith.constant 0 : i32
    %c0_i32_2 = arith.constant 0 : i32
    return %c0_i32, %c0_i32_0, %c0_i32_1 : i32, i32, i32
  }
  func.func @transform_10(%arg0: i32) -> (i32, i32, i32) {
    %c0_i32 = arith.constant 0 : i32
    %c0_i32_0 = arith.constant 0 : i32
    %c0_i32_1 = arith.constant 0 : i32
    %c0_i32_2 = arith.constant 0 : i32
    return %c0_i32, %c0_i32_0, %c0_i32_1 : i32, i32, i32
  }
  func.func @transform_11(%arg0: i32) -> (i32, i32, i32) {
    %c0_i32 = arith.constant 0 : i32
    %c0_i32_0 = arith.constant 0 : i32
    %c0_i32_1 = arith.constant 0 : i32
    %c0_i32_2 = arith.constant 0 : i32
    return %c0_i32, %c0_i32_0, %c0_i32_1 : i32, i32, i32
  }
  func.func @transform_12(%arg0: i32) -> (i32, i32, i32) {
    %c0_i32 = arith.constant 0 : i32
    %c0_i32_0 = arith.constant 0 : i32
    %c0_i32_1 = arith.constant 0 : i32
    %c0_i32_2 = arith.constant 0 : i32
    return %c0_i32, %c0_i32_0, %c0_i32_1 : i32, i32, i32
  }
  func.func @transform_13(%arg0: i32) -> (i32, i32, i32) {
    %c0_i32 = arith.constant 0 : i32
    %c0_i32_0 = arith.constant 0 : i32
    %c0_i32_1 = arith.constant 0 : i32
    %c0_i32_2 = arith.constant 0 : i32
    return %c0_i32, %c0_i32_0, %c0_i32_1 : i32, i32, i32
  }
  func.func @transform_14(%arg0: i32) -> (i32, i32, i32) {
    %c0_i32 = arith.constant 0 : i32
    %c0_i32_0 = arith.constant 0 : i32
    %c0_i32_1 = arith.constant 0 : i32
    %c0_i32_2 = arith.constant 0 : i32
    return %c0_i32, %c0_i32_0, %c0_i32_1 : i32, i32, i32
  }
  func.func @transform_15(%arg0: i32) -> (i32, i32, i32) {
    %c0_i32 = arith.constant 0 : i32
    %c0_i32_0 = arith.constant 0 : i32
    %c0_i32_1 = arith.constant 0 : i32
    %c0_i32_2 = arith.constant 0 : i32
    return %c0_i32, %c0_i32_0, %c0_i32_1 : i32, i32, i32
  }
  func.func @transform_16(%arg0: i32) -> (i32, i32, i32) {
    %c0_i32 = arith.constant 0 : i32
    %c0_i32_0 = arith.constant 0 : i32
    %c0_i32_1 = arith.constant 0 : i32
    %c0_i32_2 = arith.constant 0 : i32
    return %c0_i32, %c0_i32_0, %c0_i32_1 : i32, i32, i32
  }
  func.func @transform_17(%arg0: i32) -> (i32, i32, i32) {
    %c0_i32 = arith.constant 0 : i32
    %c0_i32_0 = arith.constant 0 : i32
    %c0_i32_1 = arith.constant 0 : i32
    %c0_i32_2 = arith.constant 0 : i32
    return %c0_i32, %c0_i32_0, %c0_i32_1 : i32, i32, i32
  }
  func.func @transform_18(%arg0: i32) -> (i32, i32, i32) {
    %c0_i32 = arith.constant 0 : i32
    %c0_i32_0 = arith.constant 0 : i32
    %c0_i32_1 = arith.constant 0 : i32
    %c0_i32_2 = arith.constant 0 : i32
    return %c0_i32, %c0_i32_0, %c0_i32_1 : i32, i32, i32
  }
  func.func @transform_19(%arg0: i32) -> (i32, i32, i32) {
    %c0_i32 = arith.constant 0 : i32
    %c0_i32_0 = arith.constant 0 : i32
    %c0_i32_1 = arith.constant 0 : i32
    %c0_i32_2 = arith.constant 0 : i32
    return %c0_i32, %c0_i32_0, %c0_i32_1 : i32, i32, i32
  }
  func.func @transform_20(%arg0: i32) -> (i32, i32, i32) {
    %c0_i32 = arith.constant 0 : i32
    %c0_i32_0 = arith.constant 0 : i32
    %c0_i32_1 = arith.constant 0 : i32
    %c0_i32_2 = arith.constant 0 : i32
    return %c0_i32, %c0_i32_0, %c0_i32_1 : i32, i32, i32
  }
  func.func @transform_21(%arg0: i32) -> (i32, i32, i32) {
    %c0_i32 = arith.constant 0 : i32
    %c0_i32_0 = arith.constant 0 : i32
    %c0_i32_1 = arith.constant 0 : i32
    %c0_i32_2 = arith.constant 0 : i32
    return %c0_i32, %c0_i32_0, %c0_i32_1 : i32, i32, i32
  }
  func.func @transform_22(%arg0: i32) -> (i32, i32, i32) {
    %c0_i32 = arith.constant 0 : i32
    %c0_i32_0 = arith.constant 0 : i32
    %c0_i32_1 = arith.constant 0 : i32
    %c0_i32_2 = arith.constant 0 : i32
    return %c0_i32, %c0_i32_0, %c0_i32_1 : i32, i32, i32
  }
  func.func @transform_23(%arg0: i32) -> (i32, i32, i32) {
    %c0_i32 = arith.constant 0 : i32
    %c0_i32_0 = arith.constant 0 : i32
    %c0_i32_1 = arith.constant 0 : i32
    %c0_i32_2 = arith.constant 0 : i32
    return %c0_i32, %c0_i32_0, %c0_i32_1 : i32, i32, i32
  }
  func.func @transform_24(%arg0: i32) -> (i32, i32, i32) {
    %c0_i32 = arith.constant 0 : i32
    %c0_i32_0 = arith.constant 0 : i32
    %c0_i32_1 = arith.constant 0 : i32
    %c0_i32_2 = arith.constant 0 : i32
    return %c0_i32, %c0_i32_0, %c0_i32_1 : i32, i32, i32
  }
  func.func @transform_25(%arg0: i32) -> (i32, i32, i32) {
    %c0_i32 = arith.constant 0 : i32
    %c0_i32_0 = arith.constant 0 : i32
    %c0_i32_1 = arith.constant 0 : i32
    %c0_i32_2 = arith.constant 0 : i32
    return %c0_i32, %c0_i32_0, %c0_i32_1 : i32, i32, i32
  }
  func.func @transform_26(%arg0: i32) -> (i32, i32) {
    %c0_i32 = arith.constant 0 : i32
    %c0_i32_0 = arith.constant 0 : i32
    %c0_i32_1 = arith.constant 0 : i32
    return %c0_i32, %c0_i32_0 : i32, i32
  }
  func.func @transform_27(%arg0: i32) -> (i32, i32) {
    %c0_i32 = arith.constant 0 : i32
    %c0_i32_0 = arith.constant 0 : i32
    %c0_i32_1 = arith.constant 0 : i32
    return %c0_i32, %c0_i32_0 : i32, i32
  }
  func.func @transform_28(%arg0: i32) -> (i32, i32, i32) {
    %c0_i32 = arith.constant 0 : i32
    %c0_i32_0 = arith.constant 0 : i32
    %c0_i32_1 = arith.constant 0 : i32
    return %arg0, %c0_i32, %c0_i32_0 : i32, i32, i32
  }
}

</mosaic_0001>

<llo_original>
// kernel: caption_passt_forward.1
$region0: #{caption_passt_forward.1}
  #allocation0 [shape = 'u32[]', space=smem, size = 0x4, offset = 0x4, fixed_abs, tag = 'smem constant byte address 0x4 - core index']
  #allocation1 [shape = 'u32[144,128]{1,0:T(1,128)}', space=vmem, size = 0x12000, scoped, tag = 'internal scratch']
  %s0 = inlined_call_operand.vmem [shape: f32[2,8,64], index: 0, kind: input, shape index: {}]
  %s1 = inlined_call_operand.vmem [shape: f32[2,8,32], index: 1, kind: input, shape index: {}]
  %s2 = inlined_call_operand.vmem [shape: f32[8,32], index: 2, kind: input, shape index: {}]
  %s3 = inlined_call_operand.vmem [shape: f32[8,8], index: 3, kind: input, shape index: {}]
  %s4 = inlined_call_operand.vmem [shape: f32[64,32], index: 4, kind: input, shape index: {}]
  %s5 = inlined_call_operand.vmem [shape: f32[1,32], index: 5, kind: input, shape index: {}]
  %s6 = inlined_call_operand.vmem [shape: f32[2,32,96], index: 6, kind: input, shape index: {}]
  %s7 = inlined_call_operand.vmem [shape: f32[2,1,96], index: 7, kind: input, shape index: {}]
  %s8 = inlined_call_operand.vmem [shape: f32[2,32,32], index: 8, kind: input, shape index: {}]
  %s9 = inlined_call_operand.vmem [shape: f32[2,1,32], index: 9, kind: input, shape index: {}]
  %s10 = inlined_call_operand.vmem [shape: f32[2,32,32], index: 10, kind: input, shape index: {}]
  %s11 = inlined_call_operand.vmem [shape: f32[2,1,32], index: 11, kind: input, shape index: {}]
  %s12 = inlined_call_operand.vmem [shape: f32[2,32,64], index: 12, kind: input, shape index: {}]
  %s13 = inlined_call_operand.vmem [shape: f32[2,1,64], index: 13, kind: input, shape index: {}]
  %s14 = inlined_call_operand.vmem [shape: f32[2,32,32], index: 14, kind: input, shape index: {}]
  %s15 = inlined_call_operand.vmem [shape: f32[2,1,32], index: 15, kind: input, shape index: {}]
  %s16 = inlined_call_operand.vmem [shape: f32[2,1,32], index: 16, kind: input, shape index: {}]
  %s17 = inlined_call_operand.vmem [shape: f32[2,1,32], index: 17, kind: input, shape index: {}]
  %s18 = inlined_call_operand.vmem [shape: f32[2,1,32], index: 18, kind: input, shape index: {}]
  %s19 = inlined_call_operand.vmem [shape: f32[2,1,32], index: 19, kind: input, shape index: {}]
  %s20 = inlined_call_operand.vmem [shape: f32[2,1,32], index: 20, kind: input, shape index: {}]
  %s21 = inlined_call_operand.vmem [shape: f32[2,1,32], index: 21, kind: input, shape index: {}]
  %s22 = inlined_call_operand.vmem [shape: f32[2,32,64], index: 22, kind: input, shape index: {}]
  %s23 = inlined_call_operand.vmem [shape: f32[2,1,64], index: 23, kind: input, shape index: {}]
  %s24 = inlined_call_operand.vmem [shape: f32[2,64,32], index: 24, kind: input, shape index: {}]
  %s25 = inlined_call_operand.vmem [shape: f32[2,1,32], index: 25, kind: input, shape index: {}]
  %s26 = inlined_call_operand.vmem [shape: f32[32,128], index: 26, kind: input, shape index: {}]
  %s27 = inlined_call_operand.vmem [shape: f32[1,128], index: 27, kind: input, shape index: {}]
  %s28 = inlined_call_operand.vmem [shape: f32[2,8,128], index: 28, kind: output, shape index: {}]
  %s29 = sld [smem:[#allocation0]]
  $region145: #{caption_passt_forward.1} parent=0
    _
  %s31 = ssub.s32 1, %s29
  %s32 = scalar_select 0, %s31, %s29
  loop: start=0, step=1, limit=4
  $region2: #{caption_passt_forward.1} parent=0 // loop_pre_header
    _
  $region3: #{caption_passt_forward.1} parent=0 // loop_header
    %s34 = sphi 0, %s38
    %p35 = scmp.ge.s32.totalorder %s34, 4
    %s44 = sphi 0, %s46
    %s47 = sphi 0, %s44
    %s48 = sphi 0, %s47
    %s64 = sphi 0, %s48
    %s70 = sphi 0, %s72
    %s73 = sphi 0, %s70
    %s74 = sphi 0, %s73
    %s90 = sphi 0, %s74
    %s94 = sphi 0, %s94
    %s96 = sphi 0, %s94
    %s97 = sphi 0, %s96
    %s111 = sphi 0, %s97
    %s115 = sphi 0, %s115
    %s117 = sphi 0, %s115
    %s118 = sphi 0, %s117
    %s132 = sphi 0, %s118
    %s136 = sphi 0, %s136
    %s138 = sphi 0, %s136
    %s139 = sphi 0, %s138
    %s153 = sphi 0, %s139
    %s157 = sphi 0, %s157
    %s159 = sphi 0, %s157
    %s160 = sphi 0, %s159
    %s174 = sphi 0, %s160
    %s178 = sphi 0, %s178
    %s180 = sphi 0, %s178
    %s181 = sphi 0, %s180
    %s195 = sphi 0, %s181
    %s199 = sphi 0, %s199
    %s201 = sphi 0, %s199
    %s202 = sphi 0, %s201
    %s216 = sphi 0, %s202
    %s220 = sphi 0, %s220
    %s222 = sphi 0, %s220
    %s223 = sphi 0, %s222
    %s237 = sphi 0, %s223
    %s241 = sphi 0, %s241
    %s243 = sphi 0, %s241
    %s244 = sphi 0, %s243
    %s258 = sphi 0, %s244
    %s262 = sphi 0, %s262
    %s264 = sphi 0, %s262
    %s265 = sphi 0, %s264
    %s279 = sphi 0, %s265
    %s283 = sphi 0, %s283
    %s285 = sphi 0, %s283
    %s286 = sphi 0, %s285
    %s300 = sphi 0, %s286
    %s304 = sphi 0, %s304
    %s306 = sphi 0, %s304
    %s307 = sphi 0, %s306
    %s321 = sphi 0, %s307
    %s325 = sphi 0, %s325
    %s327 = sphi 0, %s325
    %s328 = sphi 0, %s327
    %s342 = sphi 0, %s328
    %s346 = sphi 0, %s346
    %s348 = sphi 0, %s346
    %s349 = sphi 0, %s348
    %s363 = sphi 0, %s349
    %s367 = sphi 0, %s367
    %s369 = sphi 0, %s367
    %s370 = sphi 0, %s369
    %s384 = sphi 0, %s370
    %s388 = sphi 0, %s388
    %s390 = sphi 0, %s388
    %s391 = sphi 0, %s390
    %s405 = sphi 0, %s391
    %s409 = sphi 0, %s409
    %s411 = sphi 0, %s409
    %s412 = sphi 0, %s411
    %s426 = sphi 0, %s412
    %s430 = sphi 0, %s430
    %s432 = sphi 0, %s430
    %s433 = sphi 0, %s432
    %s447 = sphi 0, %s433
    %s451 = sphi 0, %s451
    %s453 = sphi 0, %s451
    %s454 = sphi 0, %s453
    %s468 = sphi 0, %s454
    %s472 = sphi 0, %s472
    %s474 = sphi 0, %s472
    %s475 = sphi 0, %s474
    %s489 = sphi 0, %s475
    %s493 = sphi 0, %s493
    %s495 = sphi 0, %s493
    %s496 = sphi 0, %s495
    %s510 = sphi 0, %s496
    %s514 = sphi 0, %s514
    %s516 = sphi 0, %s514
    %s517 = sphi 0, %s516
    %s531 = sphi 0, %s517
    %s535 = sphi 0, %s535
    %s537 = sphi 0, %s535
    %s538 = sphi 0, %s537
    %s552 = sphi 0, %s538
    %s556 = sphi 0, %s556
    %s558 = sphi 0, %s556
    %s559 = sphi 0, %s558
    %s573 = sphi 0, %s559
    %s577 = sphi 0, %s577
    %s579 = sphi 0, %s577
    %s580 = sphi 0, %s579
    %s594 = sphi 0, %s580
    %s598 = sphi 0, %s598
    %s600 = sphi 0, %s598
    %s601 = sphi 0, %s600
    %s615 = sphi 0, %s601
    %s619 = sphi 0, %s619
    %s621 = sphi 0, %s619
    %s622 = sphi 0, %s621
    %s636 = sphi 0, %s622
    %s642 = sphi 0, %s644
    %s645 = sphi 0, %s642
    %s646 = sphi 0, %s645
    %s662 = sphi 0, %s646
  $region4: #{caption_passt_forward.1} parent=0 // loop_header_branch
    %37 = sbr.rel (%p35) target = $region8
  $region5: #{caption_passt_forward.1} parent=0 // loop_body
    %s39 = ssub.s32 %s34, 1
    %s40 = ssub.s32 %s34, 2
    %s41 = sadd.s32 %s34, 1
    %s42 = ssub.s32 %s34, %s41
    %p43 = scmp.eq.s32.totalorder %s42, 0
    %s45 = sadd.s32 %s44, 1
    %s46 = scalar_select %p43, %s44, %s45
    %p49 = pneg %p43
    %p50 = scmp.eq.s32.totalorder %s34, 1
    %p51 = por %p49, %p50
    %p52 = scmp.ne.s32.totalorder %s44, %s47
    %p53 = scmp.eq.s32.totalorder %s34, 0
    %p54 = por %p52, %p53
    %p55 = scmp.ne.s32.totalorder %s44, %s47
    %p56 = scmp.eq.s32.totalorder %s39, 1
    %p57 = por %p55, %p56
    %p58 = scmp.ne.s32.totalorder %s47, %s48
    %p59 = scmp.eq.s32.totalorder %s39, 0
    %p60 = por %p58, %p59
    %p61 = scmp.ne.s32.totalorder %s47, %s48
    %p62 = scmp.eq.s32.totalorder %s40, 1
    %p63 = por %p61, %p62
    %p65 = scmp.ne.s32.totalorder %s48, %s64
    %p66 = scmp.eq.s32.totalorder %s40, 0
    %p67 = por %p65, %p66
    %s68 = ssub.s32 %s34, %s41
    %p69 = scmp.eq.s32.totalorder %s68, 0
    %s71 = sadd.s32 %s70, 1
    %s72 = scalar_select %p69, %s70, %s71
    %p75 = pneg %p69
    %p76 = scmp.eq.s32.totalorder %s34, 1
    %p77 = por %p75, %p76
    %p78 = scmp.ne.s32.totalorder %s70, %s73
    %p79 = scmp.eq.s32.totalorder %s34, 0
    %p80 = por %p78, %p79
    %p81 = scmp.ne.s32.totalorder %s70, %s73
    %p82 = scmp.eq.s32.totalorder %s39, 1
    %p83 = por %p81, %p82
    %p84 = scmp.ne.s32.totalorder %s73, %s74
    %p85 = scmp.eq.s32.totalorder %s39, 0
    %p86 = por %p84, %p85
    %p87 = scmp.ne.s32.totalorder %s73, %s74
    %p88 = scmp.eq.s32.totalorder %s40, 1
    %p89 = por %p87, %p88
    %p91 = scmp.ne.s32.totalorder %s74, %s90
    %p92 = scmp.eq.s32.totalorder %s40, 0
    %p93 = por %p91, %p92
    %s95 = sadd.s32 %s94, 1
    %p98 = scmp.eq.s32.totalorder %s34, 1
    %p99 = scmp.ne.s32.totalorder %s94, %s96
    %p100 = scmp.eq.s32.totalorder %s34, 0
    %p101 = por %p99, %p100
    %p102 = scmp.ne.s32.totalorder %s94, %s96
    %p103 = scmp.eq.s32.totalorder %s39, 1
    %p104 = por %p102, %p103
    %p105 = scmp.ne.s32.totalorder %s96, %s97
    %p106 = scmp.eq.s32.totalorder %s39, 0
    %p107 = por %p105, %p106
    %p108 = scmp.ne.s32.totalorder %s96, %s97
    %p109 = scmp.eq.s32.totalorder %s40, 1
    %p110 = por %p108, %p109
    %p112 = scmp.ne.s32.totalorder %s97, %s111
    %p113 = scmp.eq.s32.totalorder %s40, 0
    %p114 = por %p112, %p113
    %s116 = sadd.s32 %s115, 1
    %p119 = scmp.eq.s32.totalorder %s34, 1
    %p120 = scmp.ne.s32.totalorder %s115, %s117
    %p121 = scmp.eq.s32.totalorder %s34, 0
    %p122 = por %p120, %p121
    %p123 = scmp.ne.s32.totalorder %s115, %s117
    %p124 = scmp.eq.s32.totalorder %s39, 1
    %p125 = por %p123, %p124
    %p126 = scmp.ne.s32.totalorder %s117, %s118
    %p127 = scmp.eq.s32.totalorder %s39, 0
    %p128 = por %p126, %p127
    %p129 = scmp.ne.s32.totalorder %s117, %s118
    %p130 = scmp.eq.s32.totalorder %s40, 1
    %p131 = por %p129, %p130
    %p133 = scmp.ne.s32.totalorder %s118, %s132
    %p134 = scmp.eq.s32.totalorder %s40, 0
    %p135 = por %p133, %p134
    %s137 = sadd.s32 %s136, 1
    %p140 = scmp.eq.s32.totalorder %s34, 1
    %p141 = scmp.ne.s32.totalorder %s136, %s138
    %p142 = scmp.eq.s32.totalorder %s34, 0
    %p143 = por %p141, %p142
    %p144 = scmp.ne.s32.totalorder %s136, %s138
    %p145 = scmp.eq.s32.totalorder %s39, 1
    %p146 = por %p144, %p145
    %p147 = scmp.ne.s32.totalorder %s138, %s139
    %p148 = scmp.eq.s32.totalorder %s39, 0
    %p149 = por %p147, %p148
    %p150 = scmp.ne.s32.totalorder %s138, %s139
    %p151 = scmp.eq.s32.totalorder %s40, 1
    %p152 = por %p150, %p151
    %p154 = scmp.ne.s32.totalorder %s139, %s153
    %p155 = scmp.eq.s32.totalorder %s40, 0
    %p156 = por %p154, %p155
    %s158 = sadd.s32 %s157, 1
    %p161 = scmp.eq.s32.totalorder %s34, 1
    %p162 = scmp.ne.s32.totalorder %s157, %s159
    %p163 = scmp.eq.s32.totalorder %s34, 0
    %p164 = por %p162, %p163
    %p165 = scmp.ne.s32.totalorder %s157, %s159
    %p166 = scmp.eq.s32.totalorder %s39, 1
    %p167 = por %p165, %p166
    %p168 = scmp.ne.s32.totalorder %s159, %s160
    %p169 = scmp.eq.s32.totalorder %s39, 0
    %p170 = por %p168, %p169
    %p171 = scmp.ne.s32.totalorder %s159, %s160
    %p172 = scmp.eq.s32.totalorder %s40, 1
    %p173 = por %p171, %p172
    %p175 = scmp.ne.s32.totalorder %s160, %s174
    %p176 = scmp.eq.s32.totalorder %s40, 0
    %p177 = por %p175, %p176
    %s179 = sadd.s32 %s178, 1
    %p182 = scmp.eq.s32.totalorder %s34, 1
    %p183 = scmp.ne.s32.totalorder %s178, %s180
    %p184 = scmp.eq.s32.totalorder %s34, 0
    %p185 = por %p183, %p184
    %p186 = scmp.ne.s32.totalorder %s178, %s180
    %p187 = scmp.eq.s32.totalorder %s39, 1
    %p188 = por %p186, %p187
    %p189 = scmp.ne.s32.totalorder %s180, %s181
    %p190 = scmp.eq.s32.totalorder %s39, 0
    %p191 = por %p189, %p190
    %p192 = scmp.ne.s32.totalorder %s180, %s181
    %p193 = scmp.eq.s32.totalorder %s40, 1
    %p194 = por %p192, %p193
    %p196 = scmp.ne.s32.totalorder %s181, %s195
    %p197 = scmp.eq.s32.totalorder %s40, 0
    %p198 = por %p196, %p197
    %s200 = sadd.s32 %s199, 1
    %p203 = scmp.eq.s32.totalorder %s34, 1
    %p204 = scmp.ne.s32.totalorder %s199, %s201
    %p205 = scmp.eq.s32.totalorder %s34, 0
    %p206 = por %p204, %p205
    %p207 = scmp.ne.s32.totalorder %s199, %s201
    %p208 = scmp.eq.s32.totalorder %s39, 1
    %p209 = por %p207, %p208
    %p210 = scmp.ne.s32.totalorder %s201, %s202
    %p211 = scmp.eq.s32.totalorder %s39, 0
    %p212 = por %p210, %p211
    %p213 = scmp.ne.s32.totalorder %s201, %s202
    %p214 = scmp.eq.s32.totalorder %s40, 1
    %p215 = por %p213, %p214
    %p217 = scmp.ne.s32.totalorder %s202, %s216
    %p218 = scmp.eq.s32.totalorder %s40, 0
    %p219 = por %p217, %p218
    %s221 = sadd.s32 %s220, 1
    %p224 = scmp.eq.s32.totalorder %s34, 1
    %p225 = scmp.ne.s32.totalorder %s220, %s222
    %p226 = scmp.eq.s32.totalorder %s34, 0
    %p227 = por %p225, %p226
    %p228 = scmp.ne.s32.totalorder %s220, %s222
    %p229 = scmp.eq.s32.totalorder %s39, 1
    %p230 = por %p228, %p229
    %p231 = scmp.ne.s32.totalorder %s222, %s223
    %p232 = scmp.eq.s32.totalorder %s39, 0
    %p233 = por %p231, %p232
    %p234 = scmp.ne.s32.totalorder %s222, %s223
    %p235 = scmp.eq.s32.totalorder %s40, 1
    %p236 = por %p234, %p235
    %p238 = scmp.ne.s32.totalorder %s223, %s237
    %p239 = scmp.eq.s32.totalorder %s40, 0
    %p240 = por %p238, %p239
    %s242 = sadd.s32 %s241, 1
    %p245 = scmp.eq.s32.totalorder %s34, 1
    %p246 = scmp.ne.s32.totalorder %s241, %s243
    %p247 = scmp.eq.s32.totalorder %s34, 0
    %p248 = por %p246, %p247
    %p249 = scmp.ne.s32.totalorder %s241, %s243
    %p250 = scmp.eq.s32.totalorder %s39, 1
    %p251 = por %p249, %p250
    %p252 = scmp.ne.s32.totalorder %s243, %s244
    %p253 = scmp.eq.s32.totalorder %s39, 0
    %p254 = por %p252, %p253
    %p255 = scmp.ne.s32.totalorder %s243, %s244
    %p256 = scmp.eq.s32.totalorder %s40, 1
    %p257 = por %p255, %p256
    %p259 = scmp.ne.s32.totalorder %s244, %s258
    %p260 = scmp.eq.s32.totalorder %s40, 0
    %p261 = por %p259, %p260
    %s263 = sadd.s32 %s262, 1
    %p266 = scmp.eq.s32.totalorder %s34, 1
    %p267 = scmp.ne.s32.totalorder %s262, %s264
    %p268 = scmp.eq.s32.totalorder %s34, 0
    %p269 = por %p267, %p268
    %p270 = scmp.ne.s32.totalorder %s262, %s264
    %p271 = scmp.eq.s32.totalorder %s39, 1
    %p272 = por %p270, %p271
    %p273 = scmp.ne.s32.totalorder %s264, %s265
    %p274 = scmp.eq.s32.totalorder %s39, 0
    %p275 = por %p273, %p274
    %p276 = scmp.ne.s32.totalorder %s264, %s265
    %p277 = scmp.eq.s32.totalorder %s40, 1
    %p278 = por %p276, %p277
    %p280 = scmp.ne.s32.totalorder %s265, %s279
    %p281 = scmp.eq.s32.totalorder %s40, 0
    %p282 = por %p280, %p281
    %s284 = sadd.s32 %s283, 1
    %p287 = scmp.eq.s32.totalorder %s34, 1
    %p288 = scmp.ne.s32.totalorder %s283, %s285
    %p289 = scmp.eq.s32.totalorder %s34, 0
    %p290 = por %p288, %p289
    %p291 = scmp.ne.s32.totalorder %s283, %s285
    %p292 = scmp.eq.s32.totalorder %s39, 1
    %p293 = por %p291, %p292
    %p294 = scmp.ne.s32.totalorder %s285, %s286
    %p295 = scmp.eq.s32.totalorder %s39, 0
    %p296 = por %p294, %p295
    %p297 = scmp.ne.s32.totalorder %s285, %s286
    %p298 = scmp.eq.s32.totalorder %s40, 1
    %p299 = por %p297, %p298
    %p301 = scmp.ne.s32.totalorder %s286, %s300
    %p302 = scmp.eq.s32.totalorder %s40, 0
    %p303 = por %p301, %p302
    %s305 = sadd.s32 %s304, 1
    %p308 = scmp.eq.s32.totalorder %s34, 1
    %p309 = scmp.ne.s32.totalorder %s304, %s306
    %p310 = scmp.eq.s32.totalorder %s34, 0
    %p311 = por %p309, %p310
    %p312 = scmp.ne.s32.totalorder %s304, %s306
    %p313 = scmp.eq.s32.totalorder %s39, 1
    %p314 = por %p312, %p313
    %p315 = scmp.ne.s32.totalorder %s306, %s307
    %p316 = scmp.eq.s32.totalorder %s39, 0
    %p317 = por %p315, %p316
    %p318 = scmp.ne.s32.totalorder %s306, %s307
    %p319 = scmp.eq.s32.totalorder %s40, 1
    %p320 = por %p318, %p319
    %p322 = scmp.ne.s32.totalorder %s307, %s321
    %p323 = scmp.eq.s32.totalorder %s40, 0
    %p324 = por %p322, %p323
    %s326 = sadd.s32 %s325, 1
    %p329 = scmp.eq.s32.totalorder %s34, 1
    %p330 = scmp.ne.s32.totalorder %s325, %s327
    %p331 = scmp.eq.s32.totalorder %s34, 0
    %p332 = por %p330, %p331
    %p333 = scmp.ne.s32.totalorder %s325, %s327
    %p334 = scmp.eq.s32.totalorder %s39, 1
    %p335 = por %p333, %p334
    %p336 = scmp.ne.s32.totalorder %s327, %s328
    %p337 = scmp.eq.s32.totalorder %s39, 0
    %p338 = por %p336, %p337
    %p339 = scmp.ne.s32.totalorder %s327, %s328
    %p340 = scmp.eq.s32.totalorder %s40, 1
    %p341 = por %p339, %p340
    %p343 = scmp.ne.s32.totalorder %s328, %s342
    %p344 = scmp.eq.s32.totalorder %s40, 0
    %p345 = por %p343, %p344
    %s347 = sadd.s32 %s346, 1
    %p350 = scmp.eq.s32.totalorder %s34, 1
    %p351 = scmp.ne.s32.totalorder %s346, %s348
    %p352 = scmp.eq.s32.totalorder %s34, 0
    %p353 = por %p351, %p352
    %p354 = scmp.ne.s32.totalorder %s346, %s348
    %p355 = scmp.eq.s32.totalorder %s39, 1
    %p356 = por %p354, %p355
    %p357 = scmp.ne.s32.totalorder %s348, %s349
    %p358 = scmp.eq.s32.totalorder %s39, 0
    %p359 = por %p357, %p358
    %p360 = scmp.ne.s32.totalorder %s348, %s349
    %p361 = scmp.eq.s32.totalorder %s40, 1
    %p362 = por %p360, %p361
    %p364 = scmp.ne.s32.totalorder %s349, %s363
    %p365 = scmp.eq.s32.totalorder %s40, 0
    %p366 = por %p364, %p365
    %s368 = sadd.s32 %s367, 1
    %p371 = scmp.eq.s32.totalorder %s34, 1
    %p372 = scmp.ne.s32.totalorder %s367, %s369
    %p373 = scmp.eq.s32.totalorder %s34, 0
    %p374 = por %p372, %p373
    %p375 = scmp.ne.s32.totalorder %s367, %s369
    %p376 = scmp.eq.s32.totalorder %s39, 1
    %p377 = por %p375, %p376
    %p378 = scmp.ne.s32.totalorder %s369, %s370
    %p379 = scmp.eq.s32.totalorder %s39, 0
    %p380 = por %p378, %p379
    %p381 = scmp.ne.s32.totalorder %s369, %s370
    %p382 = scmp.eq.s32.totalorder %s40, 1
    %p383 = por %p381, %p382
    %p385 = scmp.ne.s32.totalorder %s370, %s384
    %p386 = scmp.eq.s32.totalorder %s40, 0
    %p387 = por %p385, %p386
    %s389 = sadd.s32 %s388, 1
    %p392 = scmp.eq.s32.totalorder %s34, 1
    %p393 = scmp.ne.s32.totalorder %s388, %s390
    %p394 = scmp.eq.s32.totalorder %s34, 0
    %p395 = por %p393, %p394
    %p396 = scmp.ne.s32.totalorder %s388, %s390
    %p397 = scmp.eq.s32.totalorder %s39, 1
    %p398 = por %p396, %p397
    %p399 = scmp.ne.s32.totalorder %s390, %s391
    %p400 = scmp.eq.s32.totalorder %s39, 0
    %p401 = por %p399, %p400
    %p402 = scmp.ne.s32.totalorder %s390, %s391
    %p403 = scmp.eq.s32.totalorder %s40, 1
    %p404 = por %p402, %p403
    %p406 = scmp.ne.s32.totalorder %s391, %s405
    %p407 = scmp.eq.s32.totalorder %s40, 0
    %p408 = por %p406, %p407
    %s410 = sadd.s32 %s409, 1
    %p413 = scmp.eq.s32.totalorder %s34, 1
    %p414 = scmp.ne.s32.totalorder %s409, %s411
    %p415 = scmp.eq.s32.totalorder %s34, 0
    %p416 = por %p414, %p415
    %p417 = scmp.ne.s32.totalorder %s409, %s411
    %p418 = scmp.eq.s32.totalorder %s39, 1
    %p419 = por %p417, %p418
    %p420 = scmp.ne.s32.totalorder %s411, %s412
    %p421 = scmp.eq.s32.totalorder %s39, 0
    %p422 = por %p420, %p421
    %p423 = scmp.ne.s32.totalorder %s411, %s412
    %p424 = scmp.eq.s32.totalorder %s40, 1
    %p425 = por %p423, %p424
    %p427 = scmp.ne.s32.totalorder %s412, %s426
    %p428 = scmp.eq.s32.totalorder %s40, 0
    %p429 = por %p427, %p428
    %s431 = sadd.s32 %s430, 1
    %p434 = scmp.eq.s32.totalorder %s34, 1
    %p435 = scmp.ne.s32.totalorder %s430, %s432
    %p436 = scmp.eq.s32.totalorder %s34, 0
    %p437 = por %p435, %p436
    %p438 = scmp.ne.s32.totalorder %s430, %s432
    %p439 = scmp.eq.s32.totalorder %s39, 1
    %p440 = por %p438, %p439
    %p441 = scmp.ne.s32.totalorder %s432, %s433
    %p442 = scmp.eq.s32.totalorder %s39, 0
    %p443 = por %p441, %p442
    %p444 = scmp.ne.s32.totalorder %s432, %s433
    %p445 = scmp.eq.s32.totalorder %s40, 1
    %p446 = por %p444, %p445
    %p448 = scmp.ne.s32.totalorder %s433, %s447
    %p449 = scmp.eq.s32.totalorder %s40, 0
    %p450 = por %p448, %p449
    %s452 = sadd.s32 %s451, 1
    %p455 = scmp.eq.s32.totalorder %s34, 1
    %p456 = scmp.ne.s32.totalorder %s451, %s453
    %p457 = scmp.eq.s32.totalorder %s34, 0
    %p458 = por %p456, %p457
    %p459 = scmp.ne.s32.totalorder %s451, %s453
    %p460 = scmp.eq.s32.totalorder %s39, 1
    %p461 = por %p459, %p460
    %p462 = scmp.ne.s32.totalorder %s453, %s454
    %p463 = scmp.eq.s32.totalorder %s39, 0
    %p464 = por %p462, %p463
    %p465 = scmp.ne.s32.totalorder %s453, %s454
    %p466 = scmp.eq.s32.totalorder %s40, 1
    %p467 = por %p465, %p466
    %p469 = scmp.ne.s32.totalorder %s454, %s468
    %p470 = scmp.eq.s32.totalorder %s40, 0
    %p471 = por %p469, %p470
    %s473 = sadd.s32 %s472, 1
    %p476 = scmp.eq.s32.totalorder %s34, 1
    %p477 = scmp.ne.s32.totalorder %s472, %s474
    %p478 = scmp.eq.s32.totalorder %s34, 0
    %p479 = por %p477, %p478
    %p480 = scmp.ne.s32.totalorder %s472, %s474
    %p481 = scmp.eq.s32.totalorder %s39, 1
    %p482 = por %p480, %p481
    %p483 = scmp.ne.s32.totalorder %s474, %s475
    %p484 = scmp.eq.s32.totalorder %s39, 0
    %p485 = por %p483, %p484
    %p486 = scmp.ne.s32.totalorder %s474, %s475
    %p487 = scmp.eq.s32.totalorder %s40, 1
    %p488 = por %p486, %p487
    %p490 = scmp.ne.s32.totalorder %s475, %s489
    %p491 = scmp.eq.s32.totalorder %s40, 0
    %p492 = por %p490, %p491
    %s494 = sadd.s32 %s493, 1
    %p497 = scmp.eq.s32.totalorder %s34, 1
    %p498 = scmp.ne.s32.totalorder %s493, %s495
    %p499 = scmp.eq.s32.totalorder %s34, 0
    %p500 = por %p498, %p499
    %p501 = scmp.ne.s32.totalorder %s493, %s495
    %p502 = scmp.eq.s32.totalorder %s39, 1
    %p503 = por %p501, %p502
    %p504 = scmp.ne.s32.totalorder %s495, %s496
    %p505 = scmp.eq.s32.totalorder %s39, 0
    %p506 = por %p504, %p505
    %p507 = scmp.ne.s32.totalorder %s495, %s496
    %p508 = scmp.eq.s32.totalorder %s40, 1
    %p509 = por %p507, %p508
    %p511 = scmp.ne.s32.totalorder %s496, %s510
    %p512 = scmp.eq.s32.totalorder %s40, 0
    %p513 = por %p511, %p512
    %s515 = sadd.s32 %s514, 1
    %p518 = scmp.eq.s32.totalorder %s34, 1
    %p519 = scmp.ne.s32.totalorder %s514, %s516
    %p520 = scmp.eq.s32.totalorder %s34, 0
    %p521 = por %p519, %p520
    %p522 = scmp.ne.s32.totalorder %s514, %s516
    %p523 = scmp.eq.s32.totalorder %s39, 1
    %p524 = por %p522, %p523
    %p525 = scmp.ne.s32.totalorder %s516, %s517
    %p526 = scmp.eq.s32.totalorder %s39, 0
    %p527 = por %p525, %p526
    %p528 = scmp.ne.s32.totalorder %s516, %s517
    %p529 = scmp.eq.s32.totalorder %s40, 1
    %p530 = por %p528, %p529
    %p532 = scmp.ne.s32.totalorder %s517, %s531
    %p533 = scmp.eq.s32.totalorder %s40, 0
    %p534 = por %p532, %p533
    %s536 = sadd.s32 %s535, 1
    %p539 = scmp.eq.s32.totalorder %s34, 1
    %p540 = scmp.ne.s32.totalorder %s535, %s537
    %p541 = scmp.eq.s32.totalorder %s34, 0
    %p542 = por %p540, %p541
    %p543 = scmp.ne.s32.totalorder %s535, %s537
    %p544 = scmp.eq.s32.totalorder %s39, 1
    %p545 = por %p543, %p544
    %p546 = scmp.ne.s32.totalorder %s537, %s538
    %p547 = scmp.eq.s32.totalorder %s39, 0
    %p548 = por %p546, %p547
    %p549 = scmp.ne.s32.totalorder %s537, %s538
    %p550 = scmp.eq.s32.totalorder %s40, 1
    %p551 = por %p549, %p550
    %p553 = scmp.ne.s32.totalorder %s538, %s552
    %p554 = scmp.eq.s32.totalorder %s40, 0
    %p555 = por %p553, %p554
    %s557 = sadd.s32 %s556, 1
    %p560 = scmp.eq.s32.totalorder %s34, 1
    %p561 = scmp.ne.s32.totalorder %s556, %s558
    %p562 = scmp.eq.s32.totalorder %s34, 0
    %p563 = por %p561, %p562
    %p564 = scmp.ne.s32.totalorder %s556, %s558
    %p565 = scmp.eq.s32.totalorder %s39, 1
    %p566 = por %p564, %p565
    %p567 = scmp.ne.s32.totalorder %s558, %s559
    %p568 = scmp.eq.s32.totalorder %s39, 0
    %p569 = por %p567, %p568
    %p570 = scmp.ne.s32.totalorder %s558, %s559
    %p571 = scmp.eq.s32.totalorder %s40, 1
    %p572 = por %p570, %p571
    %p574 = scmp.ne.s32.totalorder %s559, %s573
    %p575 = scmp.eq.s32.totalorder %s40, 0
    %p576 = por %p574, %p575
    %s578 = sadd.s32 %s577, 1
    %p581 = scmp.eq.s32.totalorder %s34, 1
    %p582 = scmp.ne.s32.totalorder %s577, %s579
    %p583 = scmp.eq.s32.totalorder %s34, 0
    %p584 = por %p582, %p583
    %p585 = scmp.ne.s32.totalorder %s577, %s579
    %p586 = scmp.eq.s32.totalorder %s39, 1
    %p587 = por %p585, %p586
    %p588 = scmp.ne.s32.totalorder %s579, %s580
    %p589 = scmp.eq.s32.totalorder %s39, 0
    %p590 = por %p588, %p589
    %p591 = scmp.ne.s32.totalorder %s579, %s580
    %p592 = scmp.eq.s32.totalorder %s40, 1
    %p593 = por %p591, %p592
    %p595 = scmp.ne.s32.totalorder %s580, %s594
    %p596 = scmp.eq.s32.totalorder %s40, 0
    %p597 = por %p595, %p596
    %s599 = sadd.s32 %s598, 1
    %p602 = scmp.eq.s32.totalorder %s34, 1
    %p603 = scmp.ne.s32.totalorder %s598, %s600
    %p604 = scmp.eq.s32.totalorder %s34, 0
    %p605 = por %p603, %p604
    %p606 = scmp.ne.s32.totalorder %s598, %s600
    %p607 = scmp.eq.s32.totalorder %s39, 1
    %p608 = por %p606, %p607
    %p609 = scmp.ne.s32.totalorder %s600, %s601
    %p610 = scmp.eq.s32.totalorder %s39, 0
    %p611 = por %p609, %p610
    %p612 = scmp.ne.s32.totalorder %s600, %s601
    %p613 = scmp.eq.s32.totalorder %s40, 1
    %p614 = por %p612, %p613
    %p616 = scmp.ne.s32.totalorder %s601, %s615
    %p617 = scmp.eq.s32.totalorder %s40, 0
    %p618 = por %p616, %p617
    %s620 = sadd.s32 %s619, 1
    %p623 = scmp.eq.s32.totalorder %s34, 1
    %p624 = scmp.ne.s32.totalorder %s619, %s621
    %p625 = scmp.eq.s32.totalorder %s34, 0
    %p626 = por %p624, %p625
    %p627 = scmp.ne.s32.totalorder %s619, %s621
    %p628 = scmp.eq.s32.totalorder %s39, 1
    %p629 = por %p627, %p628
    %p630 = scmp.ne.s32.totalorder %s621, %s622
    %p631 = scmp.eq.s32.totalorder %s39, 0
    %p632 = por %p630, %p631
    %p633 = scmp.ne.s32.totalorder %s621, %s622
    %p634 = scmp.eq.s32.totalorder %s40, 1
    %p635 = por %p633, %p634
    %p637 = scmp.ne.s32.totalorder %s622, %s636
    %p638 = scmp.eq.s32.totalorder %s40, 0
    %p639 = por %p637, %p638
    %s640 = ssub.s32 %s34, %s41
    %p641 = scmp.eq.s32.totalorder %s640, 0
    %s643 = sadd.s32 %s642, 1
    %s644 = scalar_select %p641, %s642, %s643
    %p647 = pneg %p641
    %p648 = scmp.eq.s32.totalorder %s34, 1
    %p649 = por %p647, %p648
    %p650 = scmp.ne.s32.totalorder %s642, %s645
    %p651 = scmp.eq.s32.totalorder %s34, 0
    %p652 = por %p650, %p651
    %p653 = scmp.ne.s32.totalorder %s642, %s645
    %p654 = scmp.eq.s32.totalorder %s39, 1
    %p655 = por %p653, %p654
    %p656 = scmp.ne.s32.totalorder %s645, %s646
    %p657 = scmp.eq.s32.totalorder %s39, 0
    %p658 = por %p656, %p657
    %p659 = scmp.ne.s32.totalorder %s645, %s646
    %p660 = scmp.eq.s32.totalorder %s40, 1
    %p661 = por %p659, %p660
    %p663 = scmp.ne.s32.totalorder %s646, %s662
    %p664 = scmp.eq.s32.totalorder %s40, 0
    %p665 = por %p663, %p664
    %p666 = scmp.le.s32.totalorder 1, %s34
    %p667 = scmp.lt.s32.totalorder %s34, 3
    %p668 = pnand %p666, %p667
    %p669 = pneg %p668
    // Predicated region
    $region9: #{caption_passt_forward.1} parent=5 // pred_check
      _
    $region10: #{caption_passt_forward.1} parent=5 // pred_check_branch
      %671 = sbr.rel (%p668) target = $region12
    $region11: #{caption_passt_forward.1} parent=5 // pred_region
      %s672 = ssub.s32 %s34, 1
      // Predicated region
      $region13: #{caption_passt_forward.1} parent=11 // pred_check
        %p673 = pneg %p107
      $region14: #{caption_passt_forward.1} parent=11 // pred_check_branch
        %675 = sbr.rel (%p673) target = $region16
      $region15: #{caption_passt_forward.1} parent=11 // pred_region
        _
      $region16: #{caption_passt_forward.1} parent=11 // pred_fallthru
        _
      // Predicated region
      $region17: #{caption_passt_forward.1} parent=11 // pred_check
        %p676 = pneg %p128
      $region18: #{caption_passt_forward.1} parent=11 // pred_check_branch
        %678 = sbr.rel (%p676) target = $region20
      $region19: #{caption_passt_forward.1} parent=11 // pred_region
        _
      $region20: #{caption_passt_forward.1} parent=11 // pred_fallthru
        _
      // Predicated region
      $region21: #{caption_passt_forward.1} parent=11 // pred_check
        %p679 = pneg %p149
      $region22: #{caption_passt_forward.1} parent=11 // pred_check_branch
        %681 = sbr.rel (%p679) target = $region24
      $region23: #{caption_passt_forward.1} parent=11 // pred_region
        _
      $region24: #{caption_passt_forward.1} parent=11 // pred_fallthru
        _
      // Predicated region
      $region25: #{caption_passt_forward.1} parent=11 // pred_check
        %p682 = pneg %p170
      $region26: #{caption_passt_forward.1} parent=11 // pred_check_branch
        %684 = sbr.rel (%p682) target = $region28
      $region27: #{caption_passt_forward.1} parent=11 // pred_region
        _
      $region28: #{caption_passt_forward.1} parent=11 // pred_fallthru
        _
      // Predicated region
      $region29: #{caption_passt_forward.1} parent=11 // pred_check
        %p685 = pneg %p191
      $region30: #{caption_passt_forward.1} parent=11 // pred_check_branch
        %687 = sbr.rel (%p685) target = $region32
      $region31: #{caption_passt_forward.1} parent=11 // pred_region
        _
      $region32: #{caption_passt_forward.1} parent=11 // pred_fallthru
        _
      // Predicated region
      $region33: #{caption_passt_forward.1} parent=11 // pred_check
        %p688 = pneg %p212
      $region34: #{caption_passt_forward.1} parent=11 // pred_check_branch
        %690 = sbr.rel (%p688) target = $region36
      $region35: #{caption_passt_forward.1} parent=11 // pred_region
        _
      $region36: #{caption_passt_forward.1} parent=11 // pred_fallthru
        _
      // Predicated region
      $region37: #{caption_passt_forward.1} parent=11 // pred_check
        %p691 = pneg %p233
      $region38: #{caption_passt_forward.1} parent=11 // pred_check_branch
        %693 = sbr.rel (%p691) target = $region40
      $region39: #{caption_passt_forward.1} parent=11 // pred_region
        _
      $region40: #{caption_passt_forward.1} parent=11 // pred_fallthru
        _
      // Predicated region
      $region41: #{caption_passt_forward.1} parent=11 // pred_check
        %p694 = pneg %p254
      $region42: #{caption_passt_forward.1} parent=11 // pred_check_branch
        %696 = sbr.rel (%p694) target = $region44
      $region43: #{caption_passt_forward.1} parent=11 // pred_region
        _
      $region44: #{caption_passt_forward.1} parent=11 // pred_fallthru
        _
      // Predicated region
      $region45: #{caption_passt_forward.1} parent=11 // pred_check
        %p697 = pneg %p275
      $region46: #{caption_passt_forward.1} parent=11 // pred_check_branch
        %699 = sbr.rel (%p697) target = $region48
      $region47: #{caption_passt_forward.1} parent=11 // pred_region
        _
      $region48: #{caption_passt_forward.1} parent=11 // pred_fallthru
        _
      // Predicated region
      $region49: #{caption_passt_forward.1} parent=11 // pred_check
        %p700 = pneg %p296
      $region50: #{caption_passt_forward.1} parent=11 // pred_check_branch
        %702 = sbr.rel (%p700) target = $region52
      $region51: #{caption_passt_forward.1} parent=11 // pred_region
        _
      $region52: #{caption_passt_forward.1} parent=11 // pred_fallthru
        _
      // Predicated region
      $region53: #{caption_passt_forward.1} parent=11 // pred_check
        %p703 = pneg %p317
      $region54: #{caption_passt_forward.1} parent=11 // pred_check_branch
        %705 = sbr.rel (%p703) target = $region56
      $region55: #{caption_passt_forward.1} parent=11 // pred_region
        _
      $region56: #{caption_passt_forward.1} parent=11 // pred_fallthru
        _
      // Predicated region
      $region57: #{caption_passt_forward.1} parent=11 // pred_check
        %p706 = pneg %p338
      $region58: #{caption_passt_forward.1} parent=11 // pred_check_branch
        %708 = sbr.rel (%p706) target = $region60
      $region59: #{caption_passt_forward.1} parent=11 // pred_region
        _
      $region60: #{caption_passt_forward.1} parent=11 // pred_fallthru
        _
      // Predicated region
      $region61: #{caption_passt_forward.1} parent=11 // pred_check
        %p709 = pneg %p359
      $region62: #{caption_passt_forward.1} parent=11 // pred_check_branch
        %711 = sbr.rel (%p709) target = $region64
      $region63: #{caption_passt_forward.1} parent=11 // pred_region
        _
      $region64: #{caption_passt_forward.1} parent=11 // pred_fallthru
        _
      // Predicated region
      $region65: #{caption_passt_forward.1} parent=11 // pred_check
        %p712 = pneg %p380
      $region66: #{caption_passt_forward.1} parent=11 // pred_check_branch
        %714 = sbr.rel (%p712) target = $region68
      $region67: #{caption_passt_forward.1} parent=11 // pred_region
        _
      $region68: #{caption_passt_forward.1} parent=11 // pred_fallthru
        _
      // Predicated region
      $region69: #{caption_passt_forward.1} parent=11 // pred_check
        %p715 = pneg %p401
      $region70: #{caption_passt_forward.1} parent=11 // pred_check_branch
        %717 = sbr.rel (%p715) target = $region72
      $region71: #{caption_passt_forward.1} parent=11 // pred_region
        _
      $region72: #{caption_passt_forward.1} parent=11 // pred_fallthru
        _
      // Predicated region
      $region73: #{caption_passt_forward.1} parent=11 // pred_check
        %p718 = pneg %p422
      $region74: #{caption_passt_forward.1} parent=11 // pred_check_branch
        %720 = sbr.rel (%p718) target = $region76
      $region75: #{caption_passt_forward.1} parent=11 // pred_region
        _
      $region76: #{caption_passt_forward.1} parent=11 // pred_fallthru
        _
      // Predicated region
      $region77: #{caption_passt_forward.1} parent=11 // pred_check
        %p721 = pneg %p443
      $region78: #{caption_passt_forward.1} parent=11 // pred_check_branch
        %723 = sbr.rel (%p721) target = $region80
      $region79: #{caption_passt_forward.1} parent=11 // pred_region
        _
      $region80: #{caption_passt_forward.1} parent=11 // pred_fallthru
        _
      // Predicated region
      $region81: #{caption_passt_forward.1} parent=11 // pred_check
        %p724 = pneg %p464
      $region82: #{caption_passt_forward.1} parent=11 // pred_check_branch
        %726 = sbr.rel (%p724) target = $region84
      $region83: #{caption_passt_forward.1} parent=11 // pred_region
        _
      $region84: #{caption_passt_forward.1} parent=11 // pred_fallthru
        _
      // Predicated region
      $region85: #{caption_passt_forward.1} parent=11 // pred_check
        %p727 = pneg %p485
      $region86: #{caption_passt_forward.1} parent=11 // pred_check_branch
        %729 = sbr.rel (%p727) target = $region88
      $region87: #{caption_passt_forward.1} parent=11 // pred_region
        _
      $region88: #{caption_passt_forward.1} parent=11 // pred_fallthru
        _
      // Predicated region
      $region89: #{caption_passt_forward.1} parent=11 // pred_check
        %p730 = pneg %p506
      $region90: #{caption_passt_forward.1} parent=11 // pred_check_branch
        %732 = sbr.rel (%p730) target = $region92
      $region91: #{caption_passt_forward.1} parent=11 // pred_region
        _
      $region92: #{caption_passt_forward.1} parent=11 // pred_fallthru
        _
      // Predicated region
      $region93: #{caption_passt_forward.1} parent=11 // pred_check
        %p733 = pneg %p527
      $region94: #{caption_passt_forward.1} parent=11 // pred_check_branch
        %735 = sbr.rel (%p733) target = $region96
      $region95: #{caption_passt_forward.1} parent=11 // pred_region
        _
      $region96: #{caption_passt_forward.1} parent=11 // pred_fallthru
        _
      // Predicated region
      $region97: #{caption_passt_forward.1} parent=11 // pred_check
        %p736 = pneg %p548
      $region98: #{caption_passt_forward.1} parent=11 // pred_check_branch
        %738 = sbr.rel (%p736) target = $region100
      $region99: #{caption_passt_forward.1} parent=11 // pred_region
        _
      $region100: #{caption_passt_forward.1} parent=11 // pred_fallthru
        _
      // Predicated region
      $region101: #{caption_passt_forward.1} parent=11 // pred_check
        %p739 = pneg %p569
      $region102: #{caption_passt_forward.1} parent=11 // pred_check_branch
        %741 = sbr.rel (%p739) target = $region104
      $region103: #{caption_passt_forward.1} parent=11 // pred_region
        _
      $region104: #{caption_passt_forward.1} parent=11 // pred_fallthru
        _
      // Predicated region
      $region105: #{caption_passt_forward.1} parent=11 // pred_check
        %p742 = pneg %p590
      $region106: #{caption_passt_forward.1} parent=11 // pred_check_branch
        %744 = sbr.rel (%p742) target = $region108
      $region107: #{caption_passt_forward.1} parent=11 // pred_region
        _
      $region108: #{caption_passt_forward.1} parent=11 // pred_fallthru
        _
      // Predicated region
      $region109: #{caption_passt_forward.1} parent=11 // pred_check
        %p745 = pneg %p611
      $region110: #{caption_passt_forward.1} parent=11 // pred_check_branch
        %747 = sbr.rel (%p745) target = $region112
      $region111: #{caption_passt_forward.1} parent=11 // pred_region
        _
      $region112: #{caption_passt_forward.1} parent=11 // pred_fallthru
        _
      // Predicated region
      $region113: #{caption_passt_forward.1} parent=11 // pred_check
        %p748 = pneg %p632
      $region114: #{caption_passt_forward.1} parent=11 // pred_check_branch
        %750 = sbr.rel (%p748) target = $region116
      $region115: #{caption_passt_forward.1} parent=11 // pred_region
        _
      $region116: #{caption_passt_forward.1} parent=11 // pred_fallthru
        _
    $region12: #{caption_passt_forward.1} parent=5 // pred_fallthru
      _
    %p751 = scmp.lt.s32.totalorder %s34, 2
    // Predicated region
    $region117: #{caption_passt_forward.1} parent=5 // pred_check
      %p752 = pneg %p751
    $region118: #{caption_passt_forward.1} parent=5 // pred_check_branch
      %754 = sbr.rel (%p752) target = $region120
    $region119: #{caption_passt_forward.1} parent=5 // pred_region
      // Predicated region
      $region121: #{caption_passt_forward.1} parent=119 // pred_check
        %p755 = pneg %p54
      $region122: #{caption_passt_forward.1} parent=119 // pred_check_branch
        %757 = sbr.rel (%p755) target = $region124
      $region123: #{caption_passt_forward.1} parent=119 // pred_region
        %p758 = scmp.lt.s32.totalorder %s34, 1
        %s759 = scalar_select %p758, %s34, 1
        %s760 = smul.addr %s759, 8
        %s761 = scalar_lea.vmem %s0, %s760
      $region124: #{caption_passt_forward.1} parent=119 // pred_fallthru
        _
      // Predicated region
      $region125: #{caption_passt_forward.1} parent=119 // pred_check
        %p762 = pneg %p80
      $region126: #{caption_passt_forward.1} parent=119 // pred_check_branch
        %764 = sbr.rel (%p762) target = $region128
      $region127: #{caption_passt_forward.1} parent=119 // pred_region
        %p765 = scmp.lt.s32.totalorder %s34, 1
        %s766 = scalar_select %p765, %s34, 1
        %s767 = smul.addr %s766, 8
        %s768 = scalar_lea.vmem %s1, %s767
      $region128: #{caption_passt_forward.1} parent=119 // pred_fallthru
        _
    $region120: #{caption_passt_forward.1} parent=5 // pred_fallthru
      _
    %p769 = scmp.le.s32.totalorder 1, %s34
    %p770 = scmp.lt.s32.totalorder %s34, 3
    %p771 = pnand %p769, %p770
    %p772 = pneg %p771
    // Predicated region
    $region129: #{caption_passt_forward.1} parent=5 // pred_check
      _
    $region130: #{caption_passt_forward.1} parent=5 // pred_check_branch
      %774 = sbr.rel (%p771) target = $region132
    $region131: #{caption_passt_forward.1} parent=5 // pred_region
      %s775 = ssub.s32 %s34, 1
      %p776 = scmp.lt.s32.totalorder %s39, 1
      %s777 = scalar_select %p776, %s39, 1
      %s778 = smul.addr %s777, 8
      %s779 = scalar_lea.vmem %s0, %s778
      %p780 = pneg %p60
      %p781 = pneg %p57
      %p782 = scmp.lt.s32.totalorder %s39, 1
      %s783 = scalar_select %p782, %s39, 1
      %s784 = smul.addr %s783, 8
      %s785 = scalar_lea.vmem %s1, %s784
      %p786 = pneg %p86
      %p787 = pneg %p83
      %p788 = pneg %p107
      %p789 = pneg %p104
      %p790 = pneg %p128
      %p791 = pneg %p125
      %p792 = pneg %p149
      %p793 = pneg %p146
      %p794 = pneg %p170
      %p795 = pneg %p167
      %p796 = pneg %p191
      %p797 = pneg %p188
      %p798 = pneg %p212
      %p799 = pneg %p209
      %p800 = pneg %p233
      %p801 = pneg %p230
      %p802 = pneg %p254
      %p803 = pneg %p251
      %p804 = pneg %p275
      %p805 = pneg %p272
      %p806 = pneg %p296
      %p807 = pneg %p293
      %p808 = pneg %p317
      %p809 = pneg %p314
      %p810 = pneg %p338
      %p811 = pneg %p335
      %p812 = pneg %p359
      %p813 = pneg %p356
      %p814 = pneg %p380
      %p815 = pneg %p377
      %p816 = pneg %p401
      %p817 = pneg %p398
      %p818 = pneg %p422
      %p819 = pneg %p419
      %p820 = pneg %p443
      %p821 = pneg %p440
      %p822 = pneg %p464
      %p823 = pneg %p461
      %p824 = pneg %p485
      %p825 = pneg %p482
      %p826 = pneg %p506
      %p827 = pneg %p503
      %p828 = pneg %p527
      %p829 = pneg %p524
      %p830 = pneg %p548
      %p831 = pneg %p545
      %p832 = pneg %p569
      %p833 = pneg %p566
      %p834 = pneg %p590
      %p835 = pneg %p587
      %p836 = pneg %p611
      %p837 = pneg %p608
      %p838 = pneg %p632
      %p839 = pneg %p629
      %p840 = pneg %p658
      %p841 = pneg %p655
      %p842 = scmp.lt.s32.totalorder %s39, 1
      %s843 = scalar_select %p842, %s39, 1
      %s844 = smul.addr %s843, 8
      %s845 = scalar_lea.vmem %s28, %s844
      %p846 = scmp.lt.s32.totalorder %s39, 1
      %s847 = scalar_select %p846, %s39, 1
      %s848 = smul.addr %s847, 8
      %s849 = scalar_lea.vmem %s0, %s848
      %p850 = scmp.lt.s32.totalorder %s39, 1
      %s851 = scalar_select %p850, %s39, 1
      %s852 = smul.addr %s851, 8
      %s853 = scalar_lea.vmem %s1, %s852
      %p854 = scmp.lt.s32.totalorder %s39, 1
      %s855 = scalar_select %p854, %s39, 1
      %s856 = smul.addr %s855, 8
      %s857 = scalar_lea.vmem %s28, %s856
      %v858 = vld [vmem:[%s849] sm:$0xff]
      %v859 = vld [vmem:[%s4] sm:$0xff]
      %v860 = vld [vmem:[%s4 + $0x8] sm:$0xff]
      %v861 = vld [vmem:[%s4 + $0x10] sm:$0xff]
      %v862 = vld [vmem:[%s4 + $0x18] sm:$0xff]
      %v863 = vld [vmem:[%s4 + $0x20] sm:$0xff]
      %v864 = vld [vmem:[%s4 + $0x28] sm:$0xff]
      %v865 = vld [vmem:[%s4 + $0x30] sm:$0xff]
      %v866 = vld [vmem:[%s4 + $0x38] sm:$0xff]
      %v867 = vld [vmem:[%s5] sm:$0x1]
      %v869 = vlaneseq
      %v870 = vshrl.u32 %v869, 7
      %v871 = vsub.s32 0, %v870
      %v872 = vrot.slane %v867, %v871
      %vm874 = vcmask 523264
      %v876 = vsel %vm874, %v858, 0
      %878 = vmatprep.subr.mxu0 0.0
      %879 = vmatpush1.msra.mxu0 %v859
      %880 = vmatprep.subr.mxu0 0.0
      %881 = vmatpush1.msra.mxu0 %v860
      %882 = vmatprep.subr.mxu0 0.0
      %883 = vmatpush1.msra.mxu0 %v861
      %884 = vmatprep.subr.mxu0 0.0
      %885 = vmatpush1.msra.mxu0 %v862
      %886 = vmatprep.subr.mxu0 0.0
      %887 = vmatpush1.msra.mxu0 %v863
      %888 = vmatprep.subr.mxu0 0.0
      %889 = vmatpush1.msra.mxu0 %v864
      %890 = vmatprep.subr.mxu0 0.0
      %891 = vmatpush1.msra.mxu0 %v865
      %892 = vmatprep.subr.mxu0 0.0
      %893 = vmatpush1.msra.mxu0 %v866
      %894 = vmatprep.subr.mxu0 0.0
      %895 = vmatpush1.msra.mxu0 0.0
      %896 = vmatprep.subr.mxu0 0.0
      %897 = vmatpush1.msra.mxu0 0.0
      %898 = vmatprep.subr.mxu0 0.0
      %899 = vmatpush1.msra.mxu0 0.0
      %900 = vmatprep.subr.mxu0 0.0
      %901 = vmatpush1.msra.mxu0 0.0
      %902 = vmatprep.subr.mxu0 0.0
      %903 = vmatpush1.msra.mxu0 0.0
      %904 = vmatprep.subr.mxu0 0.0
      %905 = vmatpush1.msra.mxu0 0.0
      %906 = vmatprep.subr.mxu0 0.0
      %907 = vmatpush1.msra.mxu0 0.0
      %908 = vmatprep.subr.mxu0 0.0
      %909 = vmatpush1.msra.mxu0 0.0
      %910 = vmatprep.subr.mxu0 0.0
      %911 = vmatpush1.msra.mxu0 0.0
      %912 = vmatprep.subr.mxu0 0.0
      %913 = vmatpush1.msra.mxu0 0.0
      %914 = vmatprep.subr.mxu0 0.0
      %915 = vmatpush1.msra.mxu0 0.0
      %916 = vmatprep.subr.mxu0 0.0
      %917 = vmatpush1.msra.mxu0 0.0
      %918 = vmatprep.subr.mxu0 0.0
      %919 = vmatpush1.msra.mxu0 0.0
      %920 = vmatprep.subr.mxu0 0.0
      %921 = vmatpush1.msra.mxu0 0.0
      %922 = vmatprep.subr.mxu0 0.0
      %923 = vmatpush1.msra.mxu0 0.0
      %924 = vmatprep.subr.mxu0 0.0
      %925 = vmatpush1.msra.mxu0 0.0
      %926 = vmatprep.subr.mxu0 0.0
      %927 = vmatpush1.msra.mxu0 0.0
      %928 = vmatprep.subr.mxu0 0.0
      %929 = vmatpush1.msra.mxu0 0.0
      %930 = vmatprep.subr.mxu0 0.0
      %931 = vmatpush1.msra.mxu0 0.0
      %932 = vmatprep.subr.mxu0 0.0
      %933 = vmatpush1.msra.mxu0 0.0
      %934 = vmatprep.subr.mxu0 0.0
      %935 = vmatpush1.msra.mxu0 0.0
      %936 = vmatprep.subr.mxu0 0.0
      %937 = vmatpush1.msra.mxu0 0.0
      %938 = vmatprep.subr.mxu0 0.0
      %939 = vmatpush1.msra.mxu0 0.0
      %940 = vmatprep.subr.mxu0 0.0
      %941 = vmatpush1.msra.mxu0 0.0
      %942 = vmatprep.mubr.f32.mxu0 0.0
      %943 = vmatmul.mubr.f32.gmra.mrb[0].mxu0 %v876
      %v944 = vpop.f32.mrb[0].mxu0
      %v945 = vadd.f32 %v872, %v944
      %v946 = vpop.f32.mrb[0].mxu0
      %947 = vdwg.mxu0
      %v948 = vmax.f32 %v945, 0.0
      %v949 = vld [vmem:[%s853] sm:$0xff]
      %v950 = vmul.f32 %v949, 5.656854
      %v951 = vld [vmem:[%s2] sm:$0xff]
      %v952 = vadd.f32 %v950, %v951
      %v953 = vld [vmem:[%s3] sm:$0xff]
      %v954 = vld [vmem:[%s6] sm:$0xff]
      %v955 = vld [vmem:[%s6 + $0x8] sm:$0xff]
      %v956 = vld [vmem:[%s6 + $0x10] sm:$0xff]
      %v957 = vld [vmem:[%s6 + $0x18] sm:$0xff]
      %v958 = vld [vmem:[%s7] sm:$0x1]
      %v960 = vlaneseq
      %v961 = vshrl.u32 %v960, 7
      %v962 = vsub.s32 0, %v961
      %v963 = vrot.slane %v958, %v962
      %vm965 = vcmask 261120
      %v967 = vsel %vm965, %v952, 0
      %969 = vmatprep.subr.mxu0 0.0
      %970 = vmatpush1.msra.mxu0 %v954
      %971 = vmatprep.subr.mxu0 0.0
      %972 = vmatpush1.msra.mxu0 %v955
      %973 = vmatprep.subr.mxu0 0.0
      %974 = vmatpush1.msra.mxu0 %v956
      %975 = vmatprep.subr.mxu0 0.0
      %976 = vmatpush1.msra.mxu0 %v957
      %977 = vmatprep.subr.mxu0 0.0
      %978 = vmatpush1.msra.mxu0 0.0
      %979 = vmatprep.subr.mxu0 0.0
      %980 = vmatpush1.msra.mxu0 0.0
      %981 = vmatprep.subr.mxu0 0.0
      %982 = vmatpush1.msra.mxu0 0.0
      %983 = vmatprep.subr.mxu0 0.0
      %984 = vmatpush1.msra.mxu0 0.0
      %985 = vmatprep.subr.mxu0 0.0
      %986 = vmatpush1.msra.mxu0 0.0
      %987 = vmatprep.subr.mxu0 0.0
      %988 = vmatpush1.msra.mxu0 0.0
      %989 = vmatprep.subr.mxu0 0.0
      %990 = vmatpush1.msra.mxu0 0.0
      %991 = vmatprep.subr.mxu0 0.0
      %992 = vmatpush1.msra.mxu0 0.0
      %993 = vmatprep.subr.mxu0 0.0
      %994 = vmatpush1.msra.mxu0 0.0
      %995 = vmatprep.subr.mxu0 0.0
      %996 = vmatpush1.msra.mxu0 0.0
      %997 = vmatprep.subr.mxu0 0.0
      %998 = vmatpush1.msra.mxu0 0.0
      %999 = vmatprep.subr.mxu0 0.0
      %1000 = vmatpush1.msra.mxu0 0.0
      %1001 = vmatprep.subr.mxu0 0.0
      %1002 = vmatpush1.msra.mxu0 0.0
      %1003 = vmatprep.subr.mxu0 0.0
      %1004 = vmatpush1.msra.mxu0 0.0
      %1005 = vmatprep.subr.mxu0 0.0
      %1006 = vmatpush1.msra.mxu0 0.0
      %1007 = vmatprep.subr.mxu0 0.0
      %1008 = vmatpush1.msra.mxu0 0.0
      %1009 = vmatprep.subr.mxu0 0.0
      %1010 = vmatpush1.msra.mxu0 0.0
      %1011 = vmatprep.subr.mxu0 0.0
      %1012 = vmatpush1.msra.mxu0 0.0
      %1013 = vmatprep.subr.mxu0 0.0
      %1014 = vmatpush1.msra.mxu0 0.0
      %1015 = vmatprep.subr.mxu0 0.0
      %1016 = vmatpush1.msra.mxu0 0.0
      %1017 = vmatprep.subr.mxu0 0.0
      %1018 = vmatpush1.msra.mxu0 0.0
      %1019 = vmatprep.subr.mxu0 0.0
      %1020 = vmatpush1.msra.mxu0 0.0
      %1021 = vmatprep.subr.mxu0 0.0
      %1022 = vmatpush1.msra.mxu0 0.0
      %1023 = vmatprep.subr.mxu0 0.0
      %1024 = vmatpush1.msra.mxu0 0.0
      %1025 = vmatprep.subr.mxu0 0.0
      %1026 = vmatpush1.msra.mxu0 0.0
      %1027 = vmatprep.subr.mxu0 0.0
      %1028 = vmatpush1.msra.mxu0 0.0
      %1029 = vmatprep.subr.mxu0 0.0
      %1030 = vmatpush1.msra.mxu0 0.0
      %1031 = vmatprep.subr.mxu0 0.0
      %1032 = vmatpush1.msra.mxu0 0.0
      %1033 = vmatprep.mubr.f32.mxu0 0.0
      %1034 = vmatmul.mubr.f32.gmra.mrb[0].mxu0 %v967
      %v1035 = vpop.f32.mrb[0].mxu0
      %v1036 = vadd.f32 %v963, %v1035
      %v1037 = vpop.f32.mrb[0].mxu0
      %1038 = vdwg.mxu0
      %v1039 = vld [vmem:[%s8] sm:$0xff]
      %v1040 = vld [vmem:[%s8 + $0x8] sm:$0xff]
      %v1041 = vld [vmem:[%s8 + $0x10] sm:$0xff]
      %v1042 = vld [vmem:[%s8 + $0x18] sm:$0xff]
      %v1043 = vld [vmem:[%s9] sm:$0x1]
      %1045 = vrot.lane.b32.xlu0 %v1036, 96
      %v1046 = vpop.permute.xlu0 %1045
      %vm1047 = vcmask 64512
      %v1048 = vsel %vm1047, %v1036, 0
      %v1050 = vsel %vm1047, %v1046, 0
      %1052 = vmatprep.subr.mxu0 0.0
      %1053 = vmatpush1.xpose.msra.mxu0 %v1050
      %1054 = vmatprep.subr.mxu0 0.0
      %1055 = vmatpush1.xpose.msra.mxu0 0.0
      %1056 = vmatprep.subr.mxu0 0.0
      %1057 = vmatpush1.xpose.msra.mxu0 0.0
      %1058 = vmatprep.subr.mxu0 0.0
      %1059 = vmatpush1.xpose.msra.mxu0 0.0
      %1060 = vmatprep.subr.mxu0 0.0
      %1061 = vmatpush1.xpose.msra.mxu0 0.0
      %1062 = vmatprep.subr.mxu0 0.0
      %1063 = vmatpush1.xpose.msra.mxu0 0.0
      %1064 = vmatprep.subr.mxu0 0.0
      %1065 = vmatpush1.xpose.msra.mxu0 0.0
      %1066 = vmatprep.subr.mxu0 0.0
      %1067 = vmatpush1.xpose.msra.mxu0 0.0
      %1068 = vmatprep.subr.mxu0 0.0
      %1069 = vmatpush1.xpose.msra.mxu0 0.0
      %1070 = vmatprep.subr.mxu0 0.0
      %1071 = vmatpush1.xpose.msra.mxu0 0.0
      %1072 = vmatprep.subr.mxu0 0.0
      %1073 = vmatpush1.xpose.msra.mxu0 0.0
      %1074 = vmatprep.subr.mxu0 0.0
      %1075 = vmatpush1.xpose.msra.mxu0 0.0
      %1076 = vmatprep.subr.mxu0 0.0
      %1077 = vmatpush1.xpose.msra.mxu0 0.0
      %1078 = vmatprep.subr.mxu0 0.0
      %1079 = vmatpush1.xpose.msra.mxu0 0.0
      %1080 = vmatprep.subr.mxu0 0.0
      %1081 = vmatpush1.xpose.msra.mxu0 0.0
      %1082 = vmatprep.subr.mxu0 0.0
      %1083 = vmatpush1.xpose.msra.mxu0 0.0
      %1084 = vmatprep.subr.mxu0 0.0
      %1085 = vmatpush1.xpose.msra.mxu0 0.0
      %1086 = vmatprep.subr.mxu0 0.0
      %1087 = vmatpush1.xpose.msra.mxu0 0.0
      %1088 = vmatprep.subr.mxu0 0.0
      %1089 = vmatpush1.xpose.msra.mxu0 0.0
      %1090 = vmatprep.subr.mxu0 0.0
      %1091 = vmatpush1.xpose.msra.mxu0 0.0
      %1092 = vmatprep.subr.mxu0 0.0
      %1093 = vmatpush1.xpose.msra.mxu0 0.0
      %1094 = vmatprep.subr.mxu0 0.0
      %1095 = vmatpush1.xpose.msra.mxu0 0.0
      %1096 = vmatprep.subr.mxu0 0.0
      %1097 = vmatpush1.xpose.msra.mxu0 0.0
      %1098 = vmatprep.subr.mxu0 0.0
      %1099 = vmatpush1.xpose.msra.mxu0 0.0
      %1100 = vmatprep.subr.mxu0 0.0
      %1101 = vmatpush1.xpose.msra.mxu0 0.0
      %1102 = vmatprep.subr.mxu0 0.0
      %1103 = vmatpush1.xpose.msra.mxu0 0.0
      %1104 = vmatprep.subr.mxu0 0.0
      %1105 = vmatpush1.xpose.msra.mxu0 0.0
      %1106 = vmatprep.subr.mxu0 0.0
      %1107 = vmatpush1.xpose.msra.mxu0 0.0
      %1108 = vmatprep.subr.mxu0 0.0
      %1109 = vmatpush1.xpose.msra.mxu0 0.0
      %1110 = vmatprep.subr.mxu0 0.0
      %1111 = vmatpush1.xpose.msra.mxu0 0.0
      %1112 = vmatprep.subr.mxu0 0.0
      %1113 = vmatpush1.xpose.msra.mxu0 0.0
      %1114 = vmatprep.subr.mxu0 0.0
      %1115 = vmatpush1.xpose.msra.mxu0 0.0
      %1116 = vmatprep.mubr.f32.mxu0 0.0
      %1117 = vmatmul.mubr.f32.gmra.mrb[0].mxu0 %v1048
      %v1118 = vpop.f32.mrb[0].mxu0
      %v1119 = vadd.f32 0.0, %v1118
      %v1120 = vpop.f32.mrb[0].mxu0
      %1121 = vdwg.mxu0
      %v1122 = vmul.f32 %v1119, 0.35355338
      %v1123 = vadd.f32 %v1122, %v953
      %v1124 = vsel %vm1047, %v1123, -inf
      %1125 = vmax.xlane.f32.xlu0 %v1124
      %v1126 = vpop.xlane.xlu0 %1125
      %v1127 = vsub.f32 %v1123, %v1126
      %v1128 = vmul.f32 %v1127, 1.442695
      %v1129 = vpow.pop %v1128
      %v1130 = vsel %vm1047, %v1129, 0.0
      %1131 = vadd.xlane.f32.xlu0 %v1130
      %v1132 = vpop.xlane.xlu0 %1131
      %v1133 = vrcp.pop %v1132
      %v1134 = vmul.f32 %v1129, %v1133
      %1135 = vrot.lane.b32.xlu0 %v1036, 64
      %v1136 = vpop.permute.xlu0 %1135
      %v1139 = vsel %vm1047, %v1134, 0
      %1141 = vmatprep.subr.mxu0 0.0
      %1142 = vmatpush1.msra.mxu0 %v1136
      %1143 = vmatprep.subr.mxu0 0.0
      %1144 = vmatpush1.msra.mxu0 0.0
      %1145 = vmatprep.subr.mxu0 0.0
      %1146 = vmatpush1.msra.mxu0 0.0
      %1147 = vmatprep.subr.mxu0 0.0
      %1148 = vmatpush1.msra.mxu0 0.0
      %1149 = vmatprep.subr.mxu0 0.0
      %1150 = vmatpush1.msra.mxu0 0.0
      %1151 = vmatprep.subr.mxu0 0.0
      %1152 = vmatpush1.msra.mxu0 0.0
      %1153 = vmatprep.subr.mxu0 0.0
      %1154 = vmatpush1.msra.mxu0 0.0
      %1155 = vmatprep.subr.mxu0 0.0
      %1156 = vmatpush1.msra.mxu0 0.0
      %1157 = vmatprep.subr.mxu0 0.0
      %1158 = vmatpush1.msra.mxu0 0.0
      %1159 = vmatprep.subr.mxu0 0.0
      %1160 = vmatpush1.msra.mxu0 0.0
      %1161 = vmatprep.subr.mxu0 0.0
      %1162 = vmatpush1.msra.mxu0 0.0
      %1163 = vmatprep.subr.mxu0 0.0
      %1164 = vmatpush1.msra.mxu0 0.0
      %1165 = vmatprep.subr.mxu0 0.0
      %1166 = vmatpush1.msra.mxu0 0.0
      %1167 = vmatprep.subr.mxu0 0.0
      %1168 = vmatpush1.msra.mxu0 0.0
      %1169 = vmatprep.subr.mxu0 0.0
      %1170 = vmatpush1.msra.mxu0 0.0
      %1171 = vmatprep.subr.mxu0 0.0
      %1172 = vmatpush1.msra.mxu0 0.0
      %1173 = vmatprep.subr.mxu0 0.0
      %1174 = vmatpush1.msra.mxu0 0.0
      %1175 = vmatprep.subr.mxu0 0.0
      %1176 = vmatpush1.msra.mxu0 0.0
      %1177 = vmatprep.subr.mxu0 0.0
      %1178 = vmatpush1.msra.mxu0 0.0
      %1179 = vmatprep.subr.mxu0 0.0
      %1180 = vmatpush1.msra.mxu0 0.0
      %1181 = vmatprep.subr.mxu0 0.0
      %1182 = vmatpush1.msra.mxu0 0.0
      %1183 = vmatprep.subr.mxu0 0.0
      %1184 = vmatpush1.msra.mxu0 0.0
      %1185 = vmatprep.subr.mxu0 0.0
      %1186 = vmatpush1.msra.mxu0 0.0
      %1187 = vmatprep.subr.mxu0 0.0
      %1188 = vmatpush1.msra.mxu0 0.0
      %1189 = vmatprep.subr.mxu0 0.0
      %1190 = vmatpush1.msra.mxu0 0.0
      %1191 = vmatprep.subr.mxu0 0.0
      %1192 = vmatpush1.msra.mxu0 0.0
      %1193 = vmatprep.subr.mxu0 0.0
      %1194 = vmatpush1.msra.mxu0 0.0
      %1195 = vmatprep.subr.mxu0 0.0
      %1196 = vmatpush1.msra.mxu0 0.0
      %1197 = vmatprep.subr.mxu0 0.0
      %1198 = vmatpush1.msra.mxu0 0.0
      %1199 = vmatprep.subr.mxu0 0.0
      %1200 = vmatpush1.msra.mxu0 0.0
      %1201 = vmatprep.subr.mxu0 0.0
      %1202 = vmatpush1.msra.mxu0 0.0
      %1203 = vmatprep.subr.mxu0 0.0
      %1204 = vmatpush1.msra.mxu0 0.0
      %1205 = vmatprep.mubr.f32.mxu0 0.0
      %1206 = vmatmul.mubr.f32.gmra.mrb[0].mxu0 %v1139
      %v1207 = vpop.f32.mrb[0].mxu0
      %v1208 = vadd.f32 0.0, %v1207
      %v1209 = vpop.f32.mrb[0].mxu0
      %1210 = vdwg.mxu0
      %1211 = vrot.lane.b32.xlu0 %v1036, 120
      %v1212 = vpop.permute.xlu0 %1211
      %1213 = vrot.lane.b32.xlu0 %v1036, 88
      %v1214 = vpop.permute.xlu0 %1213
      %v1215 = vsel %vm1047, %v1212, 0
      %v1217 = vsel %vm1047, %v1214, 0
      %1219 = vmatprep.subr.mxu0 0.0
      %1220 = vmatpush1.xpose.msra.mxu0 %v1217
      %1221 = vmatprep.subr.mxu0 0.0
      %1222 = vmatpush1.xpose.msra.mxu0 0.0
      %1223 = vmatprep.subr.mxu0 0.0
      %1224 = vmatpush1.xpose.msra.mxu0 0.0
      %1225 = vmatprep.subr.mxu0 0.0
      %1226 = vmatpush1.xpose.msra.mxu0 0.0
      %1227 = vmatprep.subr.mxu0 0.0
      %1228 = vmatpush1.xpose.msra.mxu0 0.0
      %1229 = vmatprep.subr.mxu0 0.0
      %1230 = vmatpush1.xpose.msra.mxu0 0.0
      %1231 = vmatprep.subr.mxu0 0.0
      %1232 = vmatpush1.xpose.msra.mxu0 0.0
      %1233 = vmatprep.subr.mxu0 0.0
      %1234 = vmatpush1.xpose.msra.mxu0 0.0
      %1235 = vmatprep.subr.mxu0 0.0
      %1236 = vmatpush1.xpose.msra.mxu0 0.0
      %1237 = vmatprep.subr.mxu0 0.0
      %1238 = vmatpush1.xpose.msra.mxu0 0.0
      %1239 = vmatprep.subr.mxu0 0.0
      %1240 = vmatpush1.xpose.msra.mxu0 0.0
      %1241 = vmatprep.subr.mxu0 0.0
      %1242 = vmatpush1.xpose.msra.mxu0 0.0
      %1243 = vmatprep.subr.mxu0 0.0
      %1244 = vmatpush1.xpose.msra.mxu0 0.0
      %1245 = vmatprep.subr.mxu0 0.0
      %1246 = vmatpush1.xpose.msra.mxu0 0.0
      %1247 = vmatprep.subr.mxu0 0.0
      %1248 = vmatpush1.xpose.msra.mxu0 0.0
      %1249 = vmatprep.subr.mxu0 0.0
      %1250 = vmatpush1.xpose.msra.mxu0 0.0
      %1251 = vmatprep.subr.mxu0 0.0
      %1252 = vmatpush1.xpose.msra.mxu0 0.0
      %1253 = vmatprep.subr.mxu0 0.0
      %1254 = vmatpush1.xpose.msra.mxu0 0.0
      %1255 = vmatprep.subr.mxu0 0.0
      %1256 = vmatpush1.xpose.msra.mxu0 0.0
      %1257 = vmatprep.subr.mxu0 0.0
      %1258 = vmatpush1.xpose.msra.mxu0 0.0
      %1259 = vmatprep.subr.mxu0 0.0
      %1260 = vmatpush1.xpose.msra.mxu0 0.0
      %1261 = vmatprep.subr.mxu0 0.0
      %1262 = vmatpush1.xpose.msra.mxu0 0.0
      %1263 = vmatprep.subr.mxu0 0.0
      %1264 = vmatpush1.xpose.msra.mxu0 0.0
      %1265 = vmatprep.subr.mxu0 0.0
      %1266 = vmatpush1.xpose.msra.mxu0 0.0
      %1267 = vmatprep.subr.mxu0 0.0
      %1268 = vmatpush1.xpose.msra.mxu0 0.0
      %1269 = vmatprep.subr.mxu0 0.0
      %1270 = vmatpush1.xpose.msra.mxu0 0.0
      %1271 = vmatprep.subr.mxu0 0.0
      %1272 = vmatpush1.xpose.msra.mxu0 0.0
      %1273 = vmatprep.subr.mxu0 0.0
      %1274 = vmatpush1.xpose.msra.mxu0 0.0
      %1275 = vmatprep.subr.mxu0 0.0
      %1276 = vmatpush1.xpose.msra.mxu0 0.0
      %1277 = vmatprep.subr.mxu0 0.0
      %1278 = vmatpush1.xpose.msra.mxu0 0.0
      %1279 = vmatprep.subr.mxu0 0.0
      %1280 = vmatpush1.xpose.msra.mxu0 0.0
      %1281 = vmatprep.subr.mxu0 0.0
      %1282 = vmatpush1.xpose.msra.mxu0 0.0
      %1283 = vmatprep.mubr.f32.mxu0 0.0
      %1284 = vmatmul.mubr.f32.gmra.mrb[0].mxu0 %v1215
      %v1285 = vpop.f32.mrb[0].mxu0
      %v1286 = vadd.f32 0.0, %v1285
      %v1287 = vpop.f32.mrb[0].mxu0
      %1288 = vdwg.mxu0
      %v1289 = vmul.f32 %v1286, 0.35355338
      %v1290 = vadd.f32 %v1289, %v953
      %v1291 = vsel %vm1047, %v1290, -inf
      %1292 = vmax.xlane.f32.xlu0 %v1291
      %v1293 = vpop.xlane.xlu0 %1292
      %v1294 = vsub.f32 %v1290, %v1293
      %v1295 = vmul.f32 %v1294, 1.442695
      %v1296 = vpow.pop %v1295
      %v1297 = vsel %vm1047, %v1296, 0.0
      %1298 = vadd.xlane.f32.xlu0 %v1297
      %v1299 = vpop.xlane.xlu0 %1298
      %v1300 = vrcp.pop %v1299
      %v1301 = vmul.f32 %v1296, %v1300
      %1302 = vrot.lane.b32.xlu0 %v1036, 56
      %v1303 = vpop.permute.xlu0 %1302
      %v1306 = vsel %vm1047, %v1301, 0
      %1308 = vmatprep.subr.mxu0 0.0
      %1309 = vmatpush1.msra.mxu0 %v1303
      %1310 = vmatprep.subr.mxu0 0.0
      %1311 = vmatpush1.msra.mxu0 0.0
      %1312 = vmatprep.subr.mxu0 0.0
      %1313 = vmatpush1.msra.mxu0 0.0
      %1314 = vmatprep.subr.mxu0 0.0
      %1315 = vmatpush1.msra.mxu0 0.0
      %1316 = vmatprep.subr.mxu0 0.0
      %1317 = vmatpush1.msra.mxu0 0.0
      %1318 = vmatprep.subr.mxu0 0.0
      %1319 = vmatpush1.msra.mxu0 0.0
      %1320 = vmatprep.subr.mxu0 0.0
      %1321 = vmatpush1.msra.mxu0 0.0
      %1322 = vmatprep.subr.mxu0 0.0
      %1323 = vmatpush1.msra.mxu0 0.0
      %1324 = vmatprep.subr.mxu0 0.0
      %1325 = vmatpush1.msra.mxu0 0.0
      %1326 = vmatprep.subr.mxu0 0.0
      %1327 = vmatpush1.msra.mxu0 0.0
      %1328 = vmatprep.subr.mxu0 0.0
      %1329 = vmatpush1.msra.mxu0 0.0
      %1330 = vmatprep.subr.mxu0 0.0
      %1331 = vmatpush1.msra.mxu0 0.0
      %1332 = vmatprep.subr.mxu0 0.0
      %1333 = vmatpush1.msra.mxu0 0.0
      %1334 = vmatprep.subr.mxu0 0.0
      %1335 = vmatpush1.msra.mxu0 0.0
      %1336 = vmatprep.subr.mxu0 0.0
      %1337 = vmatpush1.msra.mxu0 0.0
      %1338 = vmatprep.subr.mxu0 0.0
      %1339 = vmatpush1.msra.mxu0 0.0
      %1340 = vmatprep.subr.mxu0 0.0
      %1341 = vmatpush1.msra.mxu0 0.0
      %1342 = vmatprep.subr.mxu0 0.0
      %1343 = vmatpush1.msra.mxu0 0.0
      %1344 = vmatprep.subr.mxu0 0.0
      %1345 = vmatpush1.msra.mxu0 0.0
      %1346 = vmatprep.subr.mxu0 0.0
      %1347 = vmatpush1.msra.mxu0 0.0
      %1348 = vmatprep.subr.mxu0 0.0
      %1349 = vmatpush1.msra.mxu0 0.0
      %1350 = vmatprep.subr.mxu0 0.0
      %1351 = vmatpush1.msra.mxu0 0.0
      %1352 = vmatprep.subr.mxu0 0.0
      %1353 = vmatpush1.msra.mxu0 0.0
      %1354 = vmatprep.subr.mxu0 0.0
      %1355 = vmatpush1.msra.mxu0 0.0
      %1356 = vmatprep.subr.mxu0 0.0
      %1357 = vmatpush1.msra.mxu0 0.0
      %1358 = vmatprep.subr.mxu0 0.0
      %1359 = vmatpush1.msra.mxu0 0.0
      %1360 = vmatprep.subr.mxu0 0.0
      %1361 = vmatpush1.msra.mxu0 0.0
      %1362 = vmatprep.subr.mxu0 0.0
      %1363 = vmatpush1.msra.mxu0 0.0
      %1364 = vmatprep.subr.mxu0 0.0
      %1365 = vmatpush1.msra.mxu0 0.0
      %1366 = vmatprep.subr.mxu0 0.0
      %1367 = vmatpush1.msra.mxu0 0.0
      %1368 = vmatprep.subr.mxu0 0.0
      %1369 = vmatpush1.msra.mxu0 0.0
      %1370 = vmatprep.subr.mxu0 0.0
      %1371 = vmatpush1.msra.mxu0 0.0
      %1372 = vmatprep.mubr.f32.mxu0 0.0
      %1373 = vmatmul.mubr.f32.gmra.mrb[0].mxu0 %v1306
      %v1374 = vpop.f32.mrb[0].mxu0
      %v1375 = vadd.f32 0.0, %v1374
      %v1376 = vpop.f32.mrb[0].mxu0
      %1377 = vdwg.mxu0
      %v1379 = vsel %vm1047, %v1375, 0
      %1381 = vmatprep.subr.mxu0 0.0
      %1382 = vmatpush1.msra.mxu0 %v1040
      %1383 = vmatprep.subr.mxu0 0.0
      %1384 = vmatpush1.msra.mxu0 0.0
      %1385 = vmatprep.subr.mxu0 0.0
      %1386 = vmatpush1.msra.mxu0 0.0
      %1387 = vmatprep.subr.mxu0 0.0
      %1388 = vmatpush1.msra.mxu0 0.0
      %1389 = vmatprep.subr.mxu0 0.0
      %1390 = vmatpush1.msra.mxu0 0.0
      %1391 = vmatprep.subr.mxu0 0.0
      %1392 = vmatpush1.msra.mxu0 0.0
      %1393 = vmatprep.subr.mxu0 0.0
      %1394 = vmatpush1.msra.mxu0 0.0
      %1395 = vmatprep.subr.mxu0 0.0
      %1396 = vmatpush1.msra.mxu0 0.0
      %1397 = vmatprep.subr.mxu0 0.0
      %1398 = vmatpush1.msra.mxu0 0.0
      %1399 = vmatprep.subr.mxu0 0.0
      %1400 = vmatpush1.msra.mxu0 0.0
      %1401 = vmatprep.subr.mxu0 0.0
      %1402 = vmatpush1.msra.mxu0 0.0
      %1403 = vmatprep.subr.mxu0 0.0
      %1404 = vmatpush1.msra.mxu0 0.0
      %1405 = vmatprep.subr.mxu0 0.0
      %1406 = vmatpush1.msra.mxu0 0.0
      %1407 = vmatprep.subr.mxu0 0.0
      %1408 = vmatpush1.msra.mxu0 0.0
      %1409 = vmatprep.subr.mxu0 0.0
      %1410 = vmatpush1.msra.mxu0 0.0
      %1411 = vmatprep.subr.mxu0 0.0
      %1412 = vmatpush1.msra.mxu0 0.0
      %1413 = vmatprep.subr.mxu0 0.0
      %1414 = vmatpush1.msra.mxu0 0.0
      %1415 = vmatprep.subr.mxu0 0.0
      %1416 = vmatpush1.msra.mxu0 0.0
      %1417 = vmatprep.subr.mxu0 0.0
      %1418 = vmatpush1.msra.mxu0 0.0
      %1419 = vmatprep.subr.mxu0 0.0
      %1420 = vmatpush1.msra.mxu0 0.0
      %1421 = vmatprep.subr.mxu0 0.0
      %1422 = vmatpush1.msra.mxu0 0.0
      %1423 = vmatprep.subr.mxu0 0.0
      %1424 = vmatpush1.msra.mxu0 0.0
      %1425 = vmatprep.subr.mxu0 0.0
      %1426 = vmatpush1.msra.mxu0 0.0
      %1427 = vmatprep.subr.mxu0 0.0
      %1428 = vmatpush1.msra.mxu0 0.0
      %1429 = vmatprep.subr.mxu0 0.0
      %1430 = vmatpush1.msra.mxu0 0.0
      %1431 = vmatprep.subr.mxu0 0.0
      %1432 = vmatpush1.msra.mxu0 0.0
      %1433 = vmatprep.subr.mxu0 0.0
      %1434 = vmatpush1.msra.mxu0 0.0
      %1435 = vmatprep.subr.mxu0 0.0
      %1436 = vmatpush1.msra.mxu0 0.0
      %1437 = vmatprep.subr.mxu0 0.0
      %1438 = vmatpush1.msra.mxu0 0.0
      %1439 = vmatprep.subr.mxu0 0.0
      %1440 = vmatpush1.msra.mxu0 0.0
      %1441 = vmatprep.subr.mxu0 0.0
      %1442 = vmatpush1.msra.mxu0 0.0
      %1443 = vmatprep.subr.mxu0 0.0
      %1444 = vmatpush1.msra.mxu0 0.0
      %1445 = vmatprep.mubr.f32.mxu0 0.0
      %1446 = vmatmul.mubr.f32.gmra.mrb[0].mxu0 %v1379
      %v1447 = vpop.f32.mrb[0].mxu0
      %v1448 = vadd.f32 0.0, %v1447
      %v1449 = vpop.f32.mrb[0].mxu0
      %1450 = vdwg.mxu0
      %v1452 = vsel %vm1047, %v1208, 0
      %1454 = vmatprep.subr.mxu0 0.0
      %1455 = vmatpush1.msra.mxu0 %v1039
      %1456 = vmatprep.subr.mxu0 0.0
      %1457 = vmatpush1.msra.mxu0 0.0
      %1458 = vmatprep.subr.mxu0 0.0
      %1459 = vmatpush1.msra.mxu0 0.0
      %1460 = vmatprep.subr.mxu0 0.0
      %1461 = vmatpush1.msra.mxu0 0.0
      %1462 = vmatprep.subr.mxu0 0.0
      %1463 = vmatpush1.msra.mxu0 0.0
      %1464 = vmatprep.subr.mxu0 0.0
      %1465 = vmatpush1.msra.mxu0 0.0
      %1466 = vmatprep.subr.mxu0 0.0
      %1467 = vmatpush1.msra.mxu0 0.0
      %1468 = vmatprep.subr.mxu0 0.0
      %1469 = vmatpush1.msra.mxu0 0.0
      %1470 = vmatprep.subr.mxu0 0.0
      %1471 = vmatpush1.msra.mxu0 0.0
      %1472 = vmatprep.subr.mxu0 0.0
      %1473 = vmatpush1.msra.mxu0 0.0
      %1474 = vmatprep.subr.mxu0 0.0
      %1475 = vmatpush1.msra.mxu0 0.0
      %1476 = vmatprep.subr.mxu0 0.0
      %1477 = vmatpush1.msra.mxu0 0.0
      %1478 = vmatprep.subr.mxu0 0.0
      %1479 = vmatpush1.msra.mxu0 0.0
      %1480 = vmatprep.subr.mxu0 0.0
      %1481 = vmatpush1.msra.mxu0 0.0
      %1482 = vmatprep.subr.mxu0 0.0
      %1483 = vmatpush1.msra.mxu0 0.0
      %1484 = vmatprep.subr.mxu0 0.0
      %1485 = vmatpush1.msra.mxu0 0.0
      %1486 = vmatprep.subr.mxu0 0.0
      %1487 = vmatpush1.msra.mxu0 0.0
      %1488 = vmatprep.subr.mxu0 0.0
      %1489 = vmatpush1.msra.mxu0 0.0
      %1490 = vmatprep.subr.mxu0 0.0
      %1491 = vmatpush1.msra.mxu0 0.0
      %1492 = vmatprep.subr.mxu0 0.0
      %1493 = vmatpush1.msra.mxu0 0.0
      %1494 = vmatprep.subr.mxu0 0.0
      %1495 = vmatpush1.msra.mxu0 0.0
      %1496 = vmatprep.subr.mxu0 0.0
      %1497 = vmatpush1.msra.mxu0 0.0
      %1498 = vmatprep.subr.mxu0 0.0
      %1499 = vmatpush1.msra.mxu0 0.0
      %1500 = vmatprep.subr.mxu0 0.0
      %1501 = vmatpush1.msra.mxu0 0.0
      %1502 = vmatprep.subr.mxu0 0.0
      %1503 = vmatpush1.msra.mxu0 0.0
      %1504 = vmatprep.subr.mxu0 0.0
      %1505 = vmatpush1.msra.mxu0 0.0
      %1506 = vmatprep.subr.mxu0 0.0
      %1507 = vmatpush1.msra.mxu0 0.0
      %1508 = vmatprep.subr.mxu0 0.0
      %1509 = vmatpush1.msra.mxu0 0.0
      %1510 = vmatprep.subr.mxu0 0.0
      %1511 = vmatpush1.msra.mxu0 0.0
      %1512 = vmatprep.subr.mxu0 0.0
      %1513 = vmatpush1.msra.mxu0 0.0
      %1514 = vmatprep.subr.mxu0 0.0
      %1515 = vmatpush1.msra.mxu0 0.0
      %1516 = vmatprep.subr.mxu0 0.0
      %1517 = vmatpush1.msra.mxu0 0.0
      %1518 = vmatprep.mubr.f32.mxu0 0.0
      %1519 = vmatmul.mubr.f32.gmra.mrb[0].mxu0 %v1452
      %v1520 = vpop.f32.mrb[0].mxu0
      %v1521 = vadd.f32 %v1448, %v1520
      %v1522 = vpop.f32.mrb[0].mxu0
      %1523 = vdwg.mxu0
      %1524 = vrot.lane.b32.xlu0 %v1036, 112
      %v1525 = vpop.permute.xlu0 %1524
      %1526 = vrot.lane.b32.xlu0 %v1036, 80
      %v1527 = vpop.permute.xlu0 %1526
      %v1528 = vsel %vm1047, %v1525, 0
      %v1530 = vsel %vm1047, %v1527, 0
      %1532 = vmatprep.subr.mxu0 0.0
      %1533 = vmatpush1.xpose.msra.mxu0 %v1530
      %1534 = vmatprep.subr.mxu0 0.0
      %1535 = vmatpush1.xpose.msra.mxu0 0.0
      %1536 = vmatprep.subr.mxu0 0.0
      %1537 = vmatpush1.xpose.msra.mxu0 0.0
      %1538 = vmatprep.subr.mxu0 0.0
      %1539 = vmatpush1.xpose.msra.mxu0 0.0
      %1540 = vmatprep.subr.mxu0 0.0
      %1541 = vmatpush1.xpose.msra.mxu0 0.0
      %1542 = vmatprep.subr.mxu0 0.0
      %1543 = vmatpush1.xpose.msra.mxu0 0.0
      %1544 = vmatprep.subr.mxu0 0.0
      %1545 = vmatpush1.xpose.msra.mxu0 0.0
      %1546 = vmatprep.subr.mxu0 0.0
      %1547 = vmatpush1.xpose.msra.mxu0 0.0
      %1548 = vmatprep.subr.mxu0 0.0
      %1549 = vmatpush1.xpose.msra.mxu0 0.0
      %1550 = vmatprep.subr.mxu0 0.0
      %1551 = vmatpush1.xpose.msra.mxu0 0.0
      %1552 = vmatprep.subr.mxu0 0.0
      %1553 = vmatpush1.xpose.msra.mxu0 0.0
      %1554 = vmatprep.subr.mxu0 0.0
      %1555 = vmatpush1.xpose.msra.mxu0 0.0
      %1556 = vmatprep.subr.mxu0 0.0
      %1557 = vmatpush1.xpose.msra.mxu0 0.0
      %1558 = vmatprep.subr.mxu0 0.0
      %1559 = vmatpush1.xpose.msra.mxu0 0.0
      %1560 = vmatprep.subr.mxu0 0.0
      %1561 = vmatpush1.xpose.msra.mxu0 0.0
      %1562 = vmatprep.subr.mxu0 0.0
      %1563 = vmatpush1.xpose.msra.mxu0 0.0
      %1564 = vmatprep.subr.mxu0 0.0
      %1565 = vmatpush1.xpose.msra.mxu0 0.0
      %1566 = vmatprep.subr.mxu0 0.0
      %1567 = vmatpush1.xpose.msra.mxu0 0.0
      %1568 = vmatprep.subr.mxu0 0.0
      %1569 = vmatpush1.xpose.msra.mxu0 0.0
      %1570 = vmatprep.subr.mxu0 0.0
      %1571 = vmatpush1.xpose.msra.mxu0 0.0
      %1572 = vmatprep.subr.mxu0 0.0
      %1573 = vmatpush1.xpose.msra.mxu0 0.0
      %1574 = vmatprep.subr.mxu0 0.0
      %1575 = vmatpush1.xpose.msra.mxu0 0.0
      %1576 = vmatprep.subr.mxu0 0.0
      %1577 = vmatpush1.xpose.msra.mxu0 0.0
      %1578 = vmatprep.subr.mxu0 0.0
      %1579 = vmatpush1.xpose.msra.mxu0 0.0
      %1580 = vmatprep.subr.mxu0 0.0
      %1581 = vmatpush1.xpose.msra.mxu0 0.0
      %1582 = vmatprep.subr.mxu0 0.0
      %1583 = vmatpush1.xpose.msra.mxu0 0.0
      %1584 = vmatprep.subr.mxu0 0.0
      %1585 = vmatpush1.xpose.msra.mxu0 0.0
      %1586 = vmatprep.subr.mxu0 0.0
      %1587 = vmatpush1.xpose.msra.mxu0 0.0
      %1588 = vmatprep.subr.mxu0 0.0
      %1589 = vmatpush1.xpose.msra.mxu0 0.0
      %1590 = vmatprep.subr.mxu0 0.0
      %1591 = vmatpush1.xpose.msra.mxu0 0.0
      %1592 = vmatprep.subr.mxu0 0.0
      %1593 = vmatpush1.xpose.msra.mxu0 0.0
      %1594 = vmatprep.subr.mxu0 0.0
      %1595 = vmatpush1.xpose.msra.mxu0 0.0
      %1596 = vmatprep.mubr.f32.mxu0 0.0
      %1597 = vmatmul.mubr.f32.gmra.mrb[0].mxu0 %v1528
      %v1598 = vpop.f32.mrb[0].mxu0
      %v1599 = vadd.f32 0.0, %v1598
      %v1600 = vpop.f32.mrb[0].mxu0
      %1601 = vdwg.mxu0
      %v1602 = vmul.f32 %v1599, 0.35355338
      %v1603 = vadd.f32 %v1602, %v953
      %v1604 = vsel %vm1047, %v1603, -inf
      %1605 = vmax.xlane.f32.xlu0 %v1604
      %v1606 = vpop.xlane.xlu0 %1605
      %v1607 = vsub.f32 %v1603, %v1606
      %v1608 = vmul.f32 %v1607, 1.442695
      %v1609 = vpow.pop %v1608
      %v1610 = vsel %vm1047, %v1609, 0.0
      %1611 = vadd.xlane.f32.xlu0 %v1610
      %v1612 = vpop.xlane.xlu0 %1611
      %v1613 = vrcp.pop %v1612
      %v1614 = vmul.f32 %v1609, %v1613
      %1615 = vrot.lane.b32.xlu0 %v1036, 48
      %v1616 = vpop.permute.xlu0 %1615
      %v1619 = vsel %vm1047, %v1614, 0
      %1621 = vmatprep.subr.mxu0 0.0
      %1622 = vmatpush1.msra.mxu0 %v1616
      %1623 = vmatprep.subr.mxu0 0.0
      %1624 = vmatpush1.msra.mxu0 0.0
      %1625 = vmatprep.subr.mxu0 0.0
      %1626 = vmatpush1.msra.mxu0 0.0
      %1627 = vmatprep.subr.mxu0 0.0
      %1628 = vmatpush1.msra.mxu0 0.0
      %1629 = vmatprep.subr.mxu0 0.0
      %1630 = vmatpush1.msra.mxu0 0.0
      %1631 = vmatprep.subr.mxu0 0.0
      %1632 = vmatpush1.msra.mxu0 0.0
      %1633 = vmatprep.subr.mxu0 0.0
      %1634 = vmatpush1.msra.mxu0 0.0
      %1635 = vmatprep.subr.mxu0 0.0
      %1636 = vmatpush1.msra.mxu0 0.0
      %1637 = vmatprep.subr.mxu0 0.0
      %1638 = vmatpush1.msra.mxu0 0.0
      %1639 = vmatprep.subr.mxu0 0.0
      %1640 = vmatpush1.msra.mxu0 0.0
      %1641 = vmatprep.subr.mxu0 0.0
      %1642 = vmatpush1.msra.mxu0 0.0
      %1643 = vmatprep.subr.mxu0 0.0
      %1644 = vmatpush1.msra.mxu0 0.0
      %1645 = vmatprep.subr.mxu0 0.0
      %1646 = vmatpush1.msra.mxu0 0.0
      %1647 = vmatprep.subr.mxu0 0.0
      %1648 = vmatpush1.msra.mxu0 0.0
      %1649 = vmatprep.subr.mxu0 0.0
      %1650 = vmatpush1.msra.mxu0 0.0
      %1651 = vmatprep.subr.mxu0 0.0
      %1652 = vmatpush1.msra.mxu0 0.0
      %1653 = vmatprep.subr.mxu0 0.0
      %1654 = vmatpush1.msra.mxu0 0.0
      %1655 = vmatprep.subr.mxu0 0.0
      %1656 = vmatpush1.msra.mxu0 0.0
      %1657 = vmatprep.subr.mxu0 0.0
      %1658 = vmatpush1.msra.mxu0 0.0
      %1659 = vmatprep.subr.mxu0 0.0
      %1660 = vmatpush1.msra.mxu0 0.0
      %1661 = vmatprep.subr.mxu0 0.0
      %1662 = vmatpush1.msra.mxu0 0.0
      %1663 = vmatprep.subr.mxu0 0.0
      %1664 = vmatpush1.msra.mxu0 0.0
      %1665 = vmatprep.subr.mxu0 0.0
      %1666 = vmatpush1.msra.mxu0 0.0
      %1667 = vmatprep.subr.mxu0 0.0
      %1668 = vmatpush1.msra.mxu0 0.0
      %1669 = vmatprep.subr.mxu0 0.0
      %1670 = vmatpush1.msra.mxu0 0.0
      %1671 = vmatprep.subr.mxu0 0.0
      %1672 = vmatpush1.msra.mxu0 0.0
      %1673 = vmatprep.subr.mxu0 0.0
      %1674 = vmatpush1.msra.mxu0 0.0
      %1675 = vmatprep.subr.mxu0 0.0
      %1676 = vmatpush1.msra.mxu0 0.0
      %1677 = vmatprep.subr.mxu0 0.0
      %1678 = vmatpush1.msra.mxu0 0.0
      %1679 = vmatprep.subr.mxu0 0.0
      %1680 = vmatpush1.msra.mxu0 0.0
      %1681 = vmatprep.subr.mxu0 0.0
      %1682 = vmatpush1.msra.mxu0 0.0
      %1683 = vmatprep.subr.mxu0 0.0
      %1684 = vmatpush1.msra.mxu0 0.0
      %1685 = vmatprep.mubr.f32.mxu0 0.0
      %1686 = vmatmul.mubr.f32.gmra.mrb[0].mxu0 %v1619
      %v1687 = vpop.f32.mrb[0].mxu0
      %v1688 = vadd.f32 0.0, %v1687
      %v1689 = vpop.f32.mrb[0].mxu0
      %1690 = vdwg.mxu0
      %v1692 = vsel %vm1047, %v1688, 0
      %1694 = vmatprep.subr.mxu0 0.0
      %1695 = vmatpush1.msra.mxu0 %v1041
      %1696 = vmatprep.subr.mxu0 0.0
      %1697 = vmatpush1.msra.mxu0 0.0
      %1698 = vmatprep.subr.mxu0 0.0
      %1699 = vmatpush1.msra.mxu0 0.0
      %1700 = vmatprep.subr.mxu0 0.0
      %1701 = vmatpush1.msra.mxu0 0.0
      %1702 = vmatprep.subr.mxu0 0.0
      %1703 = vmatpush1.msra.mxu0 0.0
      %1704 = vmatprep.subr.mxu0 0.0
      %1705 = vmatpush1.msra.mxu0 0.0
      %1706 = vmatprep.subr.mxu0 0.0
      %1707 = vmatpush1.msra.mxu0 0.0
      %1708 = vmatprep.subr.mxu0 0.0
      %1709 = vmatpush1.msra.mxu0 0.0
      %1710 = vmatprep.subr.mxu0 0.0
      %1711 = vmatpush1.msra.mxu0 0.0
      %1712 = vmatprep.subr.mxu0 0.0
      %1713 = vmatpush1.msra.mxu0 0.0
      %1714 = vmatprep.subr.mxu0 0.0
      %1715 = vmatpush1.msra.mxu0 0.0
      %1716 = vmatprep.subr.mxu0 0.0
      %1717 = vmatpush1.msra.mxu0 0.0
      %1718 = vmatprep.subr.mxu0 0.0
      %1719 = vmatpush1.msra.mxu0 0.0
      %1720 = vmatprep.subr.mxu0 0.0
      %1721 = vmatpush1.msra.mxu0 0.0
      %1722 = vmatprep.subr.mxu0 0.0
      %1723 = vmatpush1.msra.mxu0 0.0
      %1724 = vmatprep.subr.mxu0 0.0
      %1725 = vmatpush1.msra.mxu0 0.0
      %1726 = vmatprep.subr.mxu0 0.0
      %1727 = vmatpush1.msra.mxu0 0.0
      %1728 = vmatprep.subr.mxu0 0.0
      %1729 = vmatpush1.msra.mxu0 0.0
      %1730 = vmatprep.subr.mxu0 0.0
      %1731 = vmatpush1.msra.mxu0 0.0
      %1732 = vmatprep.subr.mxu0 0.0
      %1733 = vmatpush1.msra.mxu0 0.0
      %1734 = vmatprep.subr.mxu0 0.0
      %1735 = vmatpush1.msra.mxu0 0.0
      %1736 = vmatprep.subr.mxu0 0.0
      %1737 = vmatpush1.msra.mxu0 0.0
      %1738 = vmatprep.subr.mxu0 0.0
      %1739 = vmatpush1.msra.mxu0 0.0
      %1740 = vmatprep.subr.mxu0 0.0
      %1741 = vmatpush1.msra.mxu0 0.0
      %1742 = vmatprep.subr.mxu0 0.0
      %1743 = vmatpush1.msra.mxu0 0.0
      %1744 = vmatprep.subr.mxu0 0.0
      %1745 = vmatpush1.msra.mxu0 0.0
      %1746 = vmatprep.subr.mxu0 0.0
      %1747 = vmatpush1.msra.mxu0 0.0
      %1748 = vmatprep.subr.mxu0 0.0
      %1749 = vmatpush1.msra.mxu0 0.0
      %1750 = vmatprep.subr.mxu0 0.0
      %1751 = vmatpush1.msra.mxu0 0.0
      %1752 = vmatprep.subr.mxu0 0.0
      %1753 = vmatpush1.msra.mxu0 0.0
      %1754 = vmatprep.subr.mxu0 0.0
      %1755 = vmatpush1.msra.mxu0 0.0
      %1756 = vmatprep.subr.mxu0 0.0
      %1757 = vmatpush1.msra.mxu0 0.0
      %1758 = vmatprep.mubr.f32.mxu0 0.0
      %1759 = vmatmul.mubr.f32.gmra.mrb[0].mxu0 %v1692
      %v1760 = vpop.f32.mrb[0].mxu0
      %v1761 = vadd.f32 0.0, %v1760
      %v1762 = vpop.f32.mrb[0].mxu0
      %1763 = vdwg.mxu0
      %v1764 = vadd.f32 %v1521, %v1761
      %1765 = vrot.lane.b32.xlu0 %v1036, 104
      %v1766 = vpop.permute.xlu0 %1765
      %1767 = vrot.lane.b32.xlu0 %v1036, 72
      %v1768 = vpop.permute.xlu0 %1767
      %v1769 = vsel %vm1047, %v1766, 0
      %v1771 = vsel %vm1047, %v1768, 0
      %1773 = vmatprep.subr.mxu0 0.0
      %1774 = vmatpush1.xpose.msra.mxu0 %v1771
      %1775 = vmatprep.subr.mxu0 0.0
      %1776 = vmatpush1.xpose.msra.mxu0 0.0
      %1777 = vmatprep.subr.mxu0 0.0
      %1778 = vmatpush1.xpose.msra.mxu0 0.0
      %1779 = vmatprep.subr.mxu0 0.0
      %1780 = vmatpush1.xpose.msra.mxu0 0.0
      %1781 = vmatprep.subr.mxu0 0.0
      %1782 = vmatpush1.xpose.msra.mxu0 0.0
      %1783 = vmatprep.subr.mxu0 0.0
      %1784 = vmatpush1.xpose.msra.mxu0 0.0
      %1785 = vmatprep.subr.mxu0 0.0
      %1786 = vmatpush1.xpose.msra.mxu0 0.0
      %1787 = vmatprep.subr.mxu0 0.0
      %1788 = vmatpush1.xpose.msra.mxu0 0.0
      %1789 = vmatprep.subr.mxu0 0.0
      %1790 = vmatpush1.xpose.msra.mxu0 0.0
      %1791 = vmatprep.subr.mxu0 0.0
      %1792 = vmatpush1.xpose.msra.mxu0 0.0
      %1793 = vmatprep.subr.mxu0 0.0
      %1794 = vmatpush1.xpose.msra.mxu0 0.0
      %1795 = vmatprep.subr.mxu0 0.0
      %1796 = vmatpush1.xpose.msra.mxu0 0.0
      %1797 = vmatprep.subr.mxu0 0.0
      %1798 = vmatpush1.xpose.msra.mxu0 0.0
      %1799 = vmatprep.subr.mxu0 0.0
      %1800 = vmatpush1.xpose.msra.mxu0 0.0
      %1801 = vmatprep.subr.mxu0 0.0
      %1802 = vmatpush1.xpose.msra.mxu0 0.0
      %1803 = vmatprep.subr.mxu0 0.0
      %1804 = vmatpush1.xpose.msra.mxu0 0.0
      %1805 = vmatprep.subr.mxu0 0.0
      %1806 = vmatpush1.xpose.msra.mxu0 0.0
      %1807 = vmatprep.subr.mxu0 0.0
      %1808 = vmatpush1.xpose.msra.mxu0 0.0
      %1809 = vmatprep.subr.mxu0 0.0
      %1810 = vmatpush1.xpose.msra.mxu0 0.0
      %1811 = vmatprep.subr.mxu0 0.0
      %1812 = vmatpush1.xpose.msra.mxu0 0.0
      %1813 = vmatprep.subr.mxu0 0.0
      %1814 = vmatpush1.xpose.msra.mxu0 0.0
      %1815 = vmatprep.subr.mxu0 0.0
      %1816 = vmatpush1.xpose.msra.mxu0 0.0
      %1817 = vmatprep.subr.mxu0 0.0
      %1818 = vmatpush1.xpose.msra.mxu0 0.0
      %1819 = vmatprep.subr.mxu0 0.0
      %1820 = vmatpush1.xpose.msra.mxu0 0.0
      %1821 = vmatprep.subr.mxu0 0.0
      %1822 = vmatpush1.xpose.msra.mxu0 0.0
      %1823 = vmatprep.subr.mxu0 0.0
      %1824 = vmatpush1.xpose.msra.mxu0 0.0
      %1825 = vmatprep.subr.mxu0 0.0
      %1826 = vmatpush1.xpose.msra.mxu0 0.0
      %1827 = vmatprep.subr.mxu0 0.0
      %1828 = vmatpush1.xpose.msra.mxu0 0.0
      %1829 = vmatprep.subr.mxu0 0.0
      %1830 = vmatpush1.xpose.msra.mxu0 0.0
      %1831 = vmatprep.subr.mxu0 0.0
      %1832 = vmatpush1.xpose.msra.mxu0 0.0
      %1833 = vmatprep.subr.mxu0 0.0
      %1834 = vmatpush1.xpose.msra.mxu0 0.0
      %1835 = vmatprep.subr.mxu0 0.0
      %1836 = vmatpush1.xpose.msra.mxu0 0.0
      %1837 = vmatprep.mubr.f32.mxu0 0.0
      %1838 = vmatmul.mubr.f32.gmra.mrb[0].mxu0 %v1769
      %v1839 = vpop.f32.mrb[0].mxu0
      %v1840 = vadd.f32 0.0, %v1839
      %v1841 = vpop.f32.mrb[0].mxu0
      %1842 = vdwg.mxu0
      %v1843 = vmul.f32 %v1840, 0.35355338
      %v1844 = vadd.f32 %v1843, %v953
      %v1845 = vsel %vm1047, %v1844, -inf
      %1846 = vmax.xlane.f32.xlu0 %v1845
      %v1847 = vpop.xlane.xlu0 %1846
      %v1848 = vsub.f32 %v1844, %v1847
      %v1849 = vmul.f32 %v1848, 1.442695
      %v1850 = vpow.pop %v1849
      %v1851 = vsel %vm1047, %v1850, 0.0
      %1852 = vadd.xlane.f32.xlu0 %v1851
      %v1853 = vpop.xlane.xlu0 %1852
      %v1854 = vrcp.pop %v1853
      %v1855 = vmul.f32 %v1850, %v1854
      %1856 = vrot.lane.b32.xlu0 %v1036, 40
      %v1857 = vpop.permute.xlu0 %1856
      %v1860 = vsel %vm1047, %v1855, 0
      %1862 = vmatprep.subr.mxu0 0.0
      %1863 = vmatpush1.msra.mxu0 %v1857
      %1864 = vmatprep.subr.mxu0 0.0
      %1865 = vmatpush1.msra.mxu0 0.0
      %1866 = vmatprep.subr.mxu0 0.0
      %1867 = vmatpush1.msra.mxu0 0.0
      %1868 = vmatprep.subr.mxu0 0.0
      %1869 = vmatpush1.msra.mxu0 0.0
      %1870 = vmatprep.subr.mxu0 0.0
      %1871 = vmatpush1.msra.mxu0 0.0
      %1872 = vmatprep.subr.mxu0 0.0
      %1873 = vmatpush1.msra.mxu0 0.0
      %1874 = vmatprep.subr.mxu0 0.0
      %1875 = vmatpush1.msra.mxu0 0.0
      %1876 = vmatprep.subr.mxu0 0.0
      %1877 = vmatpush1.msra.mxu0 0.0
      %1878 = vmatprep.subr.mxu0 0.0
      %1879 = vmatpush1.msra.mxu0 0.0
      %1880 = vmatprep.subr.mxu0 0.0
      %1881 = vmatpush1.msra.mxu0 0.0
      %1882 = vmatprep.subr.mxu0 0.0
      %1883 = vmatpush1.msra.mxu0 0.0
      %1884 = vmatprep.subr.mxu0 0.0
      %1885 = vmatpush1.msra.mxu0 0.0
      %1886 = vmatprep.subr.mxu0 0.0
      %1887 = vmatpush1.msra.mxu0 0.0
      %1888 = vmatprep.subr.mxu0 0.0
      %1889 = vmatpush1.msra.mxu0 0.0
      %1890 = vmatprep.subr.mxu0 0.0
      %1891 = vmatpush1.msra.mxu0 0.0
      %1892 = vmatprep.subr.mxu0 0.0
      %1893 = vmatpush1.msra.mxu0 0.0
      %1894 = vmatprep.subr.mxu0 0.0
      %1895 = vmatpush1.msra.mxu0 0.0
      %1896 = vmatprep.subr.mxu0 0.0
      %1897 = vmatpush1.msra.mxu0 0.0
      %1898 = vmatprep.subr.mxu0 0.0
      %1899 = vmatpush1.msra.mxu0 0.0
      %1900 = vmatprep.subr.mxu0 0.0
      %1901 = vmatpush1.msra.mxu0 0.0
      %1902 = vmatprep.subr.mxu0 0.0
      %1903 = vmatpush1.msra.mxu0 0.0
      %1904 = vmatprep.subr.mxu0 0.0
      %1905 = vmatpush1.msra.mxu0 0.0
      %1906 = vmatprep.subr.mxu0 0.0
      %1907 = vmatpush1.msra.mxu0 0.0
      %1908 = vmatprep.subr.mxu0 0.0
      %1909 = vmatpush1.msra.mxu0 0.0
      %1910 = vmatprep.subr.mxu0 0.0
      %1911 = vmatpush1.msra.mxu0 0.0
      %1912 = vmatprep.subr.mxu0 0.0
      %1913 = vmatpush1.msra.mxu0 0.0
      %1914 = vmatprep.subr.mxu0 0.0
      %1915 = vmatpush1.msra.mxu0 0.0
      %1916 = vmatprep.subr.mxu0 0.0
      %1917 = vmatpush1.msra.mxu0 0.0
      %1918 = vmatprep.subr.mxu0 0.0
      %1919 = vmatpush1.msra.mxu0 0.0
      %1920 = vmatprep.subr.mxu0 0.0
      %1921 = vmatpush1.msra.mxu0 0.0
      %1922 = vmatprep.subr.mxu0 0.0
      %1923 = vmatpush1.msra.mxu0 0.0
      %1924 = vmatprep.subr.mxu0 0.0
      %1925 = vmatpush1.msra.mxu0 0.0
      %1926 = vmatprep.mubr.f32.mxu0 0.0
      %1927 = vmatmul.mubr.f32.gmra.mrb[0].mxu0 %v1860
      %v1928 = vpop.f32.mrb[0].mxu0
      %v1929 = vadd.f32 0.0, %v1928
      %v1930 = vpop.f32.mrb[0].mxu0
      %1931 = vdwg.mxu0
      %v1933 = vsel %vm1047, %v1929, 0
      %1935 = vmatprep.subr.mxu0 0.0
      %1936 = vmatpush1.msra.mxu0 %v1042
      %1937 = vmatprep.subr.mxu0 0.0
      %1938 = vmatpush1.msra.mxu0 0.0
      %1939 = vmatprep.subr.mxu0 0.0
      %1940 = vmatpush1.msra.mxu0 0.0
      %1941 = vmatprep.subr.mxu0 0.0
      %1942 = vmatpush1.msra.mxu0 0.0
      %1943 = vmatprep.subr.mxu0 0.0
      %1944 = vmatpush1.msra.mxu0 0.0
      %1945 = vmatprep.subr.mxu0 0.0
      %1946 = vmatpush1.msra.mxu0 0.0
      %1947 = vmatprep.subr.mxu0 0.0
      %1948 = vmatpush1.msra.mxu0 0.0
      %1949 = vmatprep.subr.mxu0 0.0
      %1950 = vmatpush1.msra.mxu0 0.0
      %1951 = vmatprep.subr.mxu0 0.0
      %1952 = vmatpush1.msra.mxu0 0.0
      %1953 = vmatprep.subr.mxu0 0.0
      %1954 = vmatpush1.msra.mxu0 0.0
      %1955 = vmatprep.subr.mxu0 0.0
      %1956 = vmatpush1.msra.mxu0 0.0
      %1957 = vmatprep.subr.mxu0 0.0
      %1958 = vmatpush1.msra.mxu0 0.0
      %1959 = vmatprep.subr.mxu0 0.0
      %1960 = vmatpush1.msra.mxu0 0.0
      %1961 = vmatprep.subr.mxu0 0.0
      %1962 = vmatpush1.msra.mxu0 0.0
      %1963 = vmatprep.subr.mxu0 0.0
      %1964 = vmatpush1.msra.mxu0 0.0
      %1965 = vmatprep.subr.mxu0 0.0
      %1966 = vmatpush1.msra.mxu0 0.0
      %1967 = vmatprep.subr.mxu0 0.0
      %1968 = vmatpush1.msra.mxu0 0.0
      %1969 = vmatprep.subr.mxu0 0.0
      %1970 = vmatpush1.msra.mxu0 0.0
      %1971 = vmatprep.subr.mxu0 0.0
      %1972 = vmatpush1.msra.mxu0 0.0
      %1973 = vmatprep.subr.mxu0 0.0
      %1974 = vmatpush1.msra.mxu0 0.0
      %1975 = vmatprep.subr.mxu0 0.0
      %1976 = vmatpush1.msra.mxu0 0.0
      %1977 = vmatprep.subr.mxu0 0.0
      %1978 = vmatpush1.msra.mxu0 0.0
      %1979 = vmatprep.subr.mxu0 0.0
      %1980 = vmatpush1.msra.mxu0 0.0
      %1981 = vmatprep.subr.mxu0 0.0
      %1982 = vmatpush1.msra.mxu0 0.0
      %1983 = vmatprep.subr.mxu0 0.0
      %1984 = vmatpush1.msra.mxu0 0.0
      %1985 = vmatprep.subr.mxu0 0.0
      %1986 = vmatpush1.msra.mxu0 0.0
      %1987 = vmatprep.subr.mxu0 0.0
      %1988 = vmatpush1.msra.mxu0 0.0
      %1989 = vmatprep.subr.mxu0 0.0
      %1990 = vmatpush1.msra.mxu0 0.0
      %1991 = vmatprep.subr.mxu0 0.0
      %1992 = vmatpush1.msra.mxu0 0.0
      %1993 = vmatprep.subr.mxu0 0.0
      %1994 = vmatpush1.msra.mxu0 0.0
      %1995 = vmatprep.subr.mxu0 0.0
      %1996 = vmatpush1.msra.mxu0 0.0
      %1997 = vmatprep.subr.mxu0 0.0
      %1998 = vmatpush1.msra.mxu0 0.0
      %1999 = vmatprep.mubr.f32.mxu0 0.0
      %2000 = vmatmul.mubr.f32.gmra.mrb[0].mxu0 %v1933
      %v2001 = vpop.f32.mrb[0].mxu0
      %v2002 = vadd.f32 0.0, %v2001
      %v2003 = vpop.f32.mrb[0].mxu0
      %2004 = vdwg.mxu0
      %v2005 = vadd.f32 %v1764, %v2002
      %v2007 = vlaneseq
      %v2008 = vshrl.u32 %v2007, 7
      %v2009 = vsub.s32 0, %v2008
      %v2010 = vrot.slane %v1043, %v2009
      %v2012 = vadd.f32 %v2005, %v2010
      %v2013 = vld [vmem:[%s16] sm:$0x1]
      %v2014 = vld [vmem:[%s17] sm:$0x1]
      %v2015 = vadd.f32 %v952, %v2012
      %v2016 = vsel %vm965, %v2015, 0.0
      %2017 = vadd.xlane.f32.xlu0 %v2016
      %v2018 = vpop.xlane.xlu0 %2017
      %v2019 = vrcp.pop 32.0
      %v2020 = vmul.f32 %v2018, %v2019
      %v2021 = vsub.f32 %v2015, %v2020
      %v2022 = vmul.f32 %v2021, %v2021
      %v2023 = vsel %vm965, %v2022, 0.0
      %2024 = vadd.xlane.f32.xlu0 %v2023
      %v2025 = vpop.xlane.xlu0 %2024
      %v2026 = vmul.f32 %v2025, %v2019
      %v2027 = vadd.f32 %v2026, 1e-05
      %v2028 = vrsqrt.pop %v2027
      %v2029 = vmul.f32 %v2021, %v2028
      %v2031 = vlaneseq
      %v2032 = vshrl.u32 %v2031, 7
      %v2033 = vsub.s32 0, %v2032
      %v2034 = vrot.slane %v2013, %v2033
      %v2036 = vmul.f32 %v2029, %v2034
      %v2038 = vlaneseq
      %v2039 = vshrl.u32 %v2038, 7
      %v2040 = vsub.s32 0, %v2039
      %v2041 = vrot.slane %v2014, %v2040
      %v2043 = vadd.f32 %v2036, %v2041
      %v2044 = vld [vmem:[%s10] sm:$0xff]
      %v2045 = vld [vmem:[%s10 + $0x8] sm:$0xff]
      %v2046 = vld [vmem:[%s10 + $0x10] sm:$0xff]
      %v2047 = vld [vmem:[%s10 + $0x18] sm:$0xff]
      %v2048 = vld [vmem:[%s11] sm:$0x1]
      %v2050 = vlaneseq
      %v2051 = vshrl.u32 %v2050, 7
      %v2052 = vsub.s32 0, %v2051
      %v2053 = vrot.slane %v2048, %v2052
      %v2056 = vsel %vm965, %v2043, 0
      %2058 = vmatprep.subr.mxu0 0.0
      %2059 = vmatpush1.msra.mxu0 %v2044
      %2060 = vmatprep.subr.mxu0 0.0
      %2061 = vmatpush1.msra.mxu0 %v2045
      %2062 = vmatprep.subr.mxu0 0.0
      %2063 = vmatpush1.msra.mxu0 %v2046
      %2064 = vmatprep.subr.mxu0 0.0
      %2065 = vmatpush1.msra.mxu0 %v2047
      %2066 = vmatprep.subr.mxu0 0.0
      %2067 = vmatpush1.msra.mxu0 0.0
      %2068 = vmatprep.subr.mxu0 0.0
      %2069 = vmatpush1.msra.mxu0 0.0
      %2070 = vmatprep.subr.mxu0 0.0
      %2071 = vmatpush1.msra.mxu0 0.0
      %2072 = vmatprep.subr.mxu0 0.0
      %2073 = vmatpush1.msra.mxu0 0.0
      %2074 = vmatprep.subr.mxu0 0.0
      %2075 = vmatpush1.msra.mxu0 0.0
      %2076 = vmatprep.subr.mxu0 0.0
      %2077 = vmatpush1.msra.mxu0 0.0
      %2078 = vmatprep.subr.mxu0 0.0
      %2079 = vmatpush1.msra.mxu0 0.0
      %2080 = vmatprep.subr.mxu0 0.0
      %2081 = vmatpush1.msra.mxu0 0.0
      %2082 = vmatprep.subr.mxu0 0.0
      %2083 = vmatpush1.msra.mxu0 0.0
      %2084 = vmatprep.subr.mxu0 0.0
      %2085 = vmatpush1.msra.mxu0 0.0
      %2086 = vmatprep.subr.mxu0 0.0
      %2087 = vmatpush1.msra.mxu0 0.0
      %2088 = vmatprep.subr.mxu0 0.0
      %2089 = vmatpush1.msra.mxu0 0.0
      %2090 = vmatprep.subr.mxu0 0.0
      %2091 = vmatpush1.msra.mxu0 0.0
      %2092 = vmatprep.subr.mxu0 0.0
      %2093 = vmatpush1.msra.mxu0 0.0
      %2094 = vmatprep.subr.mxu0 0.0
      %2095 = vmatpush1.msra.mxu0 0.0
      %2096 = vmatprep.subr.mxu0 0.0
      %2097 = vmatpush1.msra.mxu0 0.0
      %2098 = vmatprep.subr.mxu0 0.0
      %2099 = vmatpush1.msra.mxu0 0.0
      %2100 = vmatprep.subr.mxu0 0.0
      %2101 = vmatpush1.msra.mxu0 0.0
      %2102 = vmatprep.subr.mxu0 0.0
      %2103 = vmatpush1.msra.mxu0 0.0
      %2104 = vmatprep.subr.mxu0 0.0
      %2105 = vmatpush1.msra.mxu0 0.0
      %2106 = vmatprep.subr.mxu0 0.0
      %2107 = vmatpush1.msra.mxu0 0.0
      %2108 = vmatprep.subr.mxu0 0.0
      %2109 = vmatpush1.msra.mxu0 0.0
      %2110 = vmatprep.subr.mxu0 0.0
      %2111 = vmatpush1.msra.mxu0 0.0
      %2112 = vmatprep.subr.mxu0 0.0
      %2113 = vmatpush1.msra.mxu0 0.0
      %2114 = vmatprep.subr.mxu0 0.0
      %2115 = vmatpush1.msra.mxu0 0.0
      %2116 = vmatprep.subr.mxu0 0.0
      %2117 = vmatpush1.msra.mxu0 0.0
      %2118 = vmatprep.subr.mxu0 0.0
      %2119 = vmatpush1.msra.mxu0 0.0
      %2120 = vmatprep.subr.mxu0 0.0
      %2121 = vmatpush1.msra.mxu0 0.0
      %2122 = vmatprep.mubr.f32.mxu0 0.0
      %2123 = vmatmul.mubr.f32.gmra.mrb[0].mxu0 %v2056
      %v2124 = vpop.f32.mrb[0].mxu0
      %v2125 = vadd.f32 %v2053, %v2124
      %v2126 = vpop.f32.mrb[0].mxu0
      %2127 = vdwg.mxu0
      %v2128 = vld [vmem:[%s12] sm:$0xff]
      %v2129 = vld [vmem:[%s12 + $0x8] sm:$0xff]
      %v2130 = vld [vmem:[%s12 + $0x10] sm:$0xff]
      %v2131 = vld [vmem:[%s12 + $0x18] sm:$0xff]
      %v2132 = vld [vmem:[%s13] sm:$0x1]
      %v2134 = vlaneseq
      %v2135 = vshrl.u32 %v2134, 7
      %v2136 = vsub.s32 0, %v2135
      %v2137 = vrot.slane %v2132, %v2136
      %v2140 = vsel %vm965, %v948, 0
      %2142 = vmatprep.subr.mxu0 0.0
      %2143 = vmatpush1.msra.mxu0 %v2128
      %2144 = vmatprep.subr.mxu0 0.0
      %2145 = vmatpush1.msra.mxu0 %v2129
      %2146 = vmatprep.subr.mxu0 0.0
      %2147 = vmatpush1.msra.mxu0 %v2130
      %2148 = vmatprep.subr.mxu0 0.0
      %2149 = vmatpush1.msra.mxu0 %v2131
      %2150 = vmatprep.subr.mxu0 0.0
      %2151 = vmatpush1.msra.mxu0 0.0
      %2152 = vmatprep.subr.mxu0 0.0
      %2153 = vmatpush1.msra.mxu0 0.0
      %2154 = vmatprep.subr.mxu0 0.0
      %2155 = vmatpush1.msra.mxu0 0.0
      %2156 = vmatprep.subr.mxu0 0.0
      %2157 = vmatpush1.msra.mxu0 0.0
      %2158 = vmatprep.subr.mxu0 0.0
      %2159 = vmatpush1.msra.mxu0 0.0
      %2160 = vmatprep.subr.mxu0 0.0
      %2161 = vmatpush1.msra.mxu0 0.0
      %2162 = vmatprep.subr.mxu0 0.0
      %2163 = vmatpush1.msra.mxu0 0.0
      %2164 = vmatprep.subr.mxu0 0.0
      %2165 = vmatpush1.msra.mxu0 0.0
      %2166 = vmatprep.subr.mxu0 0.0
      %2167 = vmatpush1.msra.mxu0 0.0
      %2168 = vmatprep.subr.mxu0 0.0
      %2169 = vmatpush1.msra.mxu0 0.0
      %2170 = vmatprep.subr.mxu0 0.0
      %2171 = vmatpush1.msra.mxu0 0.0
      %2172 = vmatprep.subr.mxu0 0.0
      %2173 = vmatpush1.msra.mxu0 0.0
      %2174 = vmatprep.subr.mxu0 0.0
      %2175 = vmatpush1.msra.mxu0 0.0
      %2176 = vmatprep.subr.mxu0 0.0
      %2177 = vmatpush1.msra.mxu0 0.0
      %2178 = vmatprep.subr.mxu0 0.0
      %2179 = vmatpush1.msra.mxu0 0.0
      %2180 = vmatprep.subr.mxu0 0.0
      %2181 = vmatpush1.msra.mxu0 0.0
      %2182 = vmatprep.subr.mxu0 0.0
      %2183 = vmatpush1.msra.mxu0 0.0
      %2184 = vmatprep.subr.mxu0 0.0
      %2185 = vmatpush1.msra.mxu0 0.0
      %2186 = vmatprep.subr.mxu0 0.0
      %2187 = vmatpush1.msra.mxu0 0.0
      %2188 = vmatprep.subr.mxu0 0.0
      %2189 = vmatpush1.msra.mxu0 0.0
      %2190 = vmatprep.subr.mxu0 0.0
      %2191 = vmatpush1.msra.mxu0 0.0
      %2192 = vmatprep.subr.mxu0 0.0
      %2193 = vmatpush1.msra.mxu0 0.0
      %2194 = vmatprep.subr.mxu0 0.0
      %2195 = vmatpush1.msra.mxu0 0.0
      %2196 = vmatprep.subr.mxu0 0.0
      %2197 = vmatpush1.msra.mxu0 0.0
      %2198 = vmatprep.subr.mxu0 0.0
      %2199 = vmatpush1.msra.mxu0 0.0
      %2200 = vmatprep.subr.mxu0 0.0
      %2201 = vmatpush1.msra.mxu0 0.0
      %2202 = vmatprep.subr.mxu0 0.0
      %2203 = vmatpush1.msra.mxu0 0.0
      %2204 = vmatprep.subr.mxu0 0.0
      %2205 = vmatpush1.msra.mxu0 0.0
      %2206 = vmatprep.mubr.f32.mxu0 0.0
      %2207 = vmatmul.mubr.f32.gmra.mrb[0].mxu0 %v2140
      %v2208 = vpop.f32.mrb[0].mxu0
      %v2209 = vadd.f32 %v2137, %v2208
      %v2210 = vpop.f32.mrb[0].mxu0
      %2211 = vdwg.mxu0
      %v2212 = vld [vmem:[%s14] sm:$0xff]
      %v2213 = vld [vmem:[%s14 + $0x8] sm:$0xff]
      %v2214 = vld [vmem:[%s14 + $0x10] sm:$0xff]
      %v2215 = vld [vmem:[%s14 + $0x18] sm:$0xff]
      %v2216 = vld [vmem:[%s15] sm:$0x1]
      %v2218 = vsel %vm1047, %v2125, 0
      %v2221 = vsel %vm1047, %v2209, 0
      %2223 = vmatprep.subr.mxu0 0.0
      %2224 = vmatpush1.xpose.msra.mxu0 %v2221
      %2225 = vmatprep.subr.mxu0 0.0
      %2226 = vmatpush1.xpose.msra.mxu0 0.0
      %2227 = vmatprep.subr.mxu0 0.0
      %2228 = vmatpush1.xpose.msra.mxu0 0.0
      %2229 = vmatprep.subr.mxu0 0.0
      %2230 = vmatpush1.xpose.msra.mxu0 0.0
      %2231 = vmatprep.subr.mxu0 0.0
      %2232 = vmatpush1.xpose.msra.mxu0 0.0
      %2233 = vmatprep.subr.mxu0 0.0
      %2234 = vmatpush1.xpose.msra.mxu0 0.0
      %2235 = vmatprep.subr.mxu0 0.0
      %2236 = vmatpush1.xpose.msra.mxu0 0.0
      %2237 = vmatprep.subr.mxu0 0.0
      %2238 = vmatpush1.xpose.msra.mxu0 0.0
      %2239 = vmatprep.subr.mxu0 0.0
      %2240 = vmatpush1.xpose.msra.mxu0 0.0
      %2241 = vmatprep.subr.mxu0 0.0
      %2242 = vmatpush1.xpose.msra.mxu0 0.0
      %2243 = vmatprep.subr.mxu0 0.0
      %2244 = vmatpush1.xpose.msra.mxu0 0.0
      %2245 = vmatprep.subr.mxu0 0.0
      %2246 = vmatpush1.xpose.msra.mxu0 0.0
      %2247 = vmatprep.subr.mxu0 0.0
      %2248 = vmatpush1.xpose.msra.mxu0 0.0
      %2249 = vmatprep.subr.mxu0 0.0
      %2250 = vmatpush1.xpose.msra.mxu0 0.0
      %2251 = vmatprep.subr.mxu0 0.0
      %2252 = vmatpush1.xpose.msra.mxu0 0.0
      %2253 = vmatprep.subr.mxu0 0.0
      %2254 = vmatpush1.xpose.msra.mxu0 0.0
      %2255 = vmatprep.subr.mxu0 0.0
      %2256 = vmatpush1.xpose.msra.mxu0 0.0
      %2257 = vmatprep.subr.mxu0 0.0
      %2258 = vmatpush1.xpose.msra.mxu0 0.0
      %2259 = vmatprep.subr.mxu0 0.0
      %2260 = vmatpush1.xpose.msra.mxu0 0.0
      %2261 = vmatprep.subr.mxu0 0.0
      %2262 = vmatpush1.xpose.msra.mxu0 0.0
      %2263 = vmatprep.subr.mxu0 0.0
      %2264 = vmatpush1.xpose.msra.mxu0 0.0
      %2265 = vmatprep.subr.mxu0 0.0
      %2266 = vmatpush1.xpose.msra.mxu0 0.0
      %2267 = vmatprep.subr.mxu0 0.0
      %2268 = vmatpush1.xpose.msra.mxu0 0.0
      %2269 = vmatprep.subr.mxu0 0.0
      %2270 = vmatpush1.xpose.msra.mxu0 0.0
      %2271 = vmatprep.subr.mxu0 0.0
      %2272 = vmatpush1.xpose.msra.mxu0 0.0
      %2273 = vmatprep.subr.mxu0 0.0
      %2274 = vmatpush1.xpose.msra.mxu0 0.0
      %2275 = vmatprep.subr.mxu0 0.0
      %2276 = vmatpush1.xpose.msra.mxu0 0.0
      %2277 = vmatprep.subr.mxu0 0.0
      %2278 = vmatpush1.xpose.msra.mxu0 0.0
      %2279 = vmatprep.subr.mxu0 0.0
      %2280 = vmatpush1.xpose.msra.mxu0 0.0
      %2281 = vmatprep.subr.mxu0 0.0
      %2282 = vmatpush1.xpose.msra.mxu0 0.0
      %2283 = vmatprep.subr.mxu0 0.0
      %2284 = vmatpush1.xpose.msra.mxu0 0.0
      %2285 = vmatprep.subr.mxu0 0.0
      %2286 = vmatpush1.xpose.msra.mxu0 0.0
      %2287 = vmatprep.mubr.f32.mxu0 0.0
      %2288 = vmatmul.mubr.f32.gmra.mrb[0].mxu0 %v2218
      %v2289 = vpop.f32.mrb[0].mxu0
      %v2290 = vadd.f32 0.0, %v2289
      %v2291 = vpop.f32.mrb[0].mxu0
      %2292 = vdwg.mxu0
      %v2293 = vmul.f32 %v2290, 0.35355338
      %v2294 = vsel %vm1047, %v2293, -inf
      %2295 = vmax.xlane.f32.xlu0 %v2294
      %v2296 = vpop.xlane.xlu0 %2295
      %v2297 = vsub.f32 %v2293, %v2296
      %v2298 = vmul.f32 %v2297, 1.442695
      %v2299 = vpow.pop %v2298
      %v2300 = vsel %vm1047, %v2299, 0.0
      %2301 = vadd.xlane.f32.xlu0 %v2300
      %v2302 = vpop.xlane.xlu0 %2301
      %v2303 = vrcp.pop %v2302
      %v2304 = vmul.f32 %v2299, %v2303
      %2305 = vrot.lane.b32.xlu0 %v2209, 96
      %v2306 = vpop.permute.xlu0 %2305
      %v2309 = vsel %vm1047, %v2304, 0
      %2311 = vmatprep.subr.mxu0 0.0
      %2312 = vmatpush1.msra.mxu0 %v2306
      %2313 = vmatprep.subr.mxu0 0.0
      %2314 = vmatpush1.msra.mxu0 0.0
      %2315 = vmatprep.subr.mxu0 0.0
      %2316 = vmatpush1.msra.mxu0 0.0
      %2317 = vmatprep.subr.mxu0 0.0
      %2318 = vmatpush1.msra.mxu0 0.0
      %2319 = vmatprep.subr.mxu0 0.0
      %2320 = vmatpush1.msra.mxu0 0.0
      %2321 = vmatprep.subr.mxu0 0.0
      %2322 = vmatpush1.msra.mxu0 0.0
      %2323 = vmatprep.subr.mxu0 0.0
      %2324 = vmatpush1.msra.mxu0 0.0
      %2325 = vmatprep.subr.mxu0 0.0
      %2326 = vmatpush1.msra.mxu0 0.0
      %2327 = vmatprep.subr.mxu0 0.0
      %2328 = vmatpush1.msra.mxu0 0.0
      %2329 = vmatprep.subr.mxu0 0.0
      %2330 = vmatpush1.msra.mxu0 0.0
      %2331 = vmatprep.subr.mxu0 0.0
      %2332 = vmatpush1.msra.mxu0 0.0
      %2333 = vmatprep.subr.mxu0 0.0
      %2334 = vmatpush1.msra.mxu0 0.0
      %2335 = vmatprep.subr.mxu0 0.0
      %2336 = vmatpush1.msra.mxu0 0.0
      %2337 = vmatprep.subr.mxu0 0.0
      %2338 = vmatpush1.msra.mxu0 0.0
      %2339 = vmatprep.subr.mxu0 0.0
      %2340 = vmatpush1.msra.mxu0 0.0
      %2341 = vmatprep.subr.mxu0 0.0
      %2342 = vmatpush1.msra.mxu0 0.0
      %2343 = vmatprep.subr.mxu0 0.0
      %2344 = vmatpush1.msra.mxu0 0.0
      %2345 = vmatprep.subr.mxu0 0.0
      %2346 = vmatpush1.msra.mxu0 0.0
      %2347 = vmatprep.subr.mxu0 0.0
      %2348 = vmatpush1.msra.mxu0 0.0
      %2349 = vmatprep.subr.mxu0 0.0
      %2350 = vmatpush1.msra.mxu0 0.0
      %2351 = vmatprep.subr.mxu0 0.0
      %2352 = vmatpush1.msra.mxu0 0.0
      %2353 = vmatprep.subr.mxu0 0.0
      %2354 = vmatpush1.msra.mxu0 0.0
      %2355 = vmatprep.subr.mxu0 0.0
      %2356 = vmatpush1.msra.mxu0 0.0
      %2357 = vmatprep.subr.mxu0 0.0
      %2358 = vmatpush1.msra.mxu0 0.0
      %2359 = vmatprep.subr.mxu0 0.0
      %2360 = vmatpush1.msra.mxu0 0.0
      %2361 = vmatprep.subr.mxu0 0.0
      %2362 = vmatpush1.msra.mxu0 0.0
      %2363 = vmatprep.subr.mxu0 0.0
      %2364 = vmatpush1.msra.mxu0 0.0
      %2365 = vmatprep.subr.mxu0 0.0
      %2366 = vmatpush1.msra.mxu0 0.0
      %2367 = vmatprep.subr.mxu0 0.0
      %2368 = vmatpush1.msra.mxu0 0.0
      %2369 = vmatprep.subr.mxu0 0.0
      %2370 = vmatpush1.msra.mxu0 0.0
      %2371 = vmatprep.subr.mxu0 0.0
      %2372 = vmatpush1.msra.mxu0 0.0
      %2373 = vmatprep.subr.mxu0 0.0
      %2374 = vmatpush1.msra.mxu0 0.0
      %2375 = vmatprep.mubr.f32.mxu0 0.0
      %2376 = vmatmul.mubr.f32.gmra.mrb[0].mxu0 %v2309
      %v2377 = vpop.f32.mrb[0].mxu0
      %v2378 = vadd.f32 0.0, %v2377
      %v2379 = vpop.f32.mrb[0].mxu0
      %2380 = vdwg.mxu0
      %2381 = vrot.lane.b32.xlu0 %v2125, 120
      %v2382 = vpop.permute.xlu0 %2381
      %2383 = vrot.lane.b32.xlu0 %v2209, 120
      %v2384 = vpop.permute.xlu0 %2383
      %v2385 = vsel %vm1047, %v2382, 0
      %v2387 = vsel %vm1047, %v2384, 0
      %2389 = vmatprep.subr.mxu0 0.0
      %2390 = vmatpush1.xpose.msra.mxu0 %v2387
      %2391 = vmatprep.subr.mxu0 0.0
      %2392 = vmatpush1.xpose.msra.mxu0 0.0
      %2393 = vmatprep.subr.mxu0 0.0
      %2394 = vmatpush1.xpose.msra.mxu0 0.0
      %2395 = vmatprep.subr.mxu0 0.0
      %2396 = vmatpush1.xpose.msra.mxu0 0.0
      %2397 = vmatprep.subr.mxu0 0.0
      %2398 = vmatpush1.xpose.msra.mxu0 0.0
      %2399 = vmatprep.subr.mxu0 0.0
      %2400 = vmatpush1.xpose.msra.mxu0 0.0
      %2401 = vmatprep.subr.mxu0 0.0
      %2402 = vmatpush1.xpose.msra.mxu0 0.0
      %2403 = vmatprep.subr.mxu0 0.0
      %2404 = vmatpush1.xpose.msra.mxu0 0.0
      %2405 = vmatprep.subr.mxu0 0.0
      %2406 = vmatpush1.xpose.msra.mxu0 0.0
      %2407 = vmatprep.subr.mxu0 0.0
      %2408 = vmatpush1.xpose.msra.mxu0 0.0
      %2409 = vmatprep.subr.mxu0 0.0
      %2410 = vmatpush1.xpose.msra.mxu0 0.0
      %2411 = vmatprep.subr.mxu0 0.0
      %2412 = vmatpush1.xpose.msra.mxu0 0.0
      %2413 = vmatprep.subr.mxu0 0.0
      %2414 = vmatpush1.xpose.msra.mxu0 0.0
      %2415 = vmatprep.subr.mxu0 0.0
      %2416 = vmatpush1.xpose.msra.mxu0 0.0
      %2417 = vmatprep.subr.mxu0 0.0
      %2418 = vmatpush1.xpose.msra.mxu0 0.0
      %2419 = vmatprep.subr.mxu0 0.0
      %2420 = vmatpush1.xpose.msra.mxu0 0.0
      %2421 = vmatprep.subr.mxu0 0.0
      %2422 = vmatpush1.xpose.msra.mxu0 0.0
      %2423 = vmatprep.subr.mxu0 0.0
      %2424 = vmatpush1.xpose.msra.mxu0 0.0
      %2425 = vmatprep.subr.mxu0 0.0
      %2426 = vmatpush1.xpose.msra.mxu0 0.0
      %2427 = vmatprep.subr.mxu0 0.0
      %2428 = vmatpush1.xpose.msra.mxu0 0.0
      %2429 = vmatprep.subr.mxu0 0.0
      %2430 = vmatpush1.xpose.msra.mxu0 0.0
      %2431 = vmatprep.subr.mxu0 0.0
      %2432 = vmatpush1.xpose.msra.mxu0 0.0
      %2433 = vmatprep.subr.mxu0 0.0
      %2434 = vmatpush1.xpose.msra.mxu0 0.0
      %2435 = vmatprep.subr.mxu0 0.0
      %2436 = vmatpush1.xpose.msra.mxu0 0.0
      %2437 = vmatprep.subr.mxu0 0.0
      %2438 = vmatpush1.xpose.msra.mxu0 0.0
      %2439 = vmatprep.subr.mxu0 0.0
      %2440 = vmatpush1.xpose.msra.mxu0 0.0
      %2441 = vmatprep.subr.mxu0 0.0
      %2442 = vmatpush1.xpose.msra.mxu0 0.0
      %2443 = vmatprep.subr.mxu0 0.0
      %2444 = vmatpush1.xpose.msra.mxu0 0.0
      %2445 = vmatprep.subr.mxu0 0.0
      %2446 = vmatpush1.xpose.msra.mxu0 0.0
      %2447 = vmatprep.subr.mxu0 0.0
      %2448 = vmatpush1.xpose.msra.mxu0 0.0
      %2449 = vmatprep.subr.mxu0 0.0
      %2450 = vmatpush1.xpose.msra.mxu0 0.0
      %2451 = vmatprep.subr.mxu0 0.0
      %2452 = vmatpush1.xpose.msra.mxu0 0.0
      %2453 = vmatprep.mubr.f32.mxu0 0.0
      %2454 = vmatmul.mubr.f32.gmra.mrb[0].mxu0 %v2385
      %v2455 = vpop.f32.mrb[0].mxu0
      %v2456 = vadd.f32 0.0, %v2455
      %v2457 = vpop.f32.mrb[0].mxu0
      %2458 = vdwg.mxu0
      %v2459 = vmul.f32 %v2456, 0.35355338
      %v2460 = vsel %vm1047, %v2459, -inf
      %2461 = vmax.xlane.f32.xlu0 %v2460
      %v2462 = vpop.xlane.xlu0 %2461
      %v2463 = vsub.f32 %v2459, %v2462
      %v2464 = vmul.f32 %v2463, 1.442695
      %v2465 = vpow.pop %v2464
      %v2466 = vsel %vm1047, %v2465, 0.0
      %2467 = vadd.xlane.f32.xlu0 %v2466
      %v2468 = vpop.xlane.xlu0 %2467
      %v2469 = vrcp.pop %v2468
      %v2470 = vmul.f32 %v2465, %v2469
      %2471 = vrot.lane.b32.xlu0 %v2209, 88
      %v2472 = vpop.permute.xlu0 %2471
      %v2475 = vsel %vm1047, %v2470, 0
      %2477 = vmatprep.subr.mxu0 0.0
      %2478 = vmatpush1.msra.mxu0 %v2472
      %2479 = vmatprep.subr.mxu0 0.0
      %2480 = vmatpush1.msra.mxu0 0.0
      %2481 = vmatprep.subr.mxu0 0.0
      %2482 = vmatpush1.msra.mxu0 0.0
      %2483 = vmatprep.subr.mxu0 0.0
      %2484 = vmatpush1.msra.mxu0 0.0
      %2485 = vmatprep.subr.mxu0 0.0
      %2486 = vmatpush1.msra.mxu0 0.0
      %2487 = vmatprep.subr.mxu0 0.0
      %2488 = vmatpush1.msra.mxu0 0.0
      %2489 = vmatprep.subr.mxu0 0.0
      %2490 = vmatpush1.msra.mxu0 0.0
      %2491 = vmatprep.subr.mxu0 0.0
      %2492 = vmatpush1.msra.mxu0 0.0
      %2493 = vmatprep.subr.mxu0 0.0
      %2494 = vmatpush1.msra.mxu0 0.0
      %2495 = vmatprep.subr.mxu0 0.0
      %2496 = vmatpush1.msra.mxu0 0.0
      %2497 = vmatprep.subr.mxu0 0.0
      %2498 = vmatpush1.msra.mxu0 0.0
      %2499 = vmatprep.subr.mxu0 0.0
      %2500 = vmatpush1.msra.mxu0 0.0
      %2501 = vmatprep.subr.mxu0 0.0
      %2502 = vmatpush1.msra.mxu0 0.0
      %2503 = vmatprep.subr.mxu0 0.0
      %2504 = vmatpush1.msra.mxu0 0.0
      %2505 = vmatprep.subr.mxu0 0.0
      %2506 = vmatpush1.msra.mxu0 0.0
      %2507 = vmatprep.subr.mxu0 0.0
      %2508 = vmatpush1.msra.mxu0 0.0
      %2509 = vmatprep.subr.mxu0 0.0
      %2510 = vmatpush1.msra.mxu0 0.0
      %2511 = vmatprep.subr.mxu0 0.0
      %2512 = vmatpush1.msra.mxu0 0.0
      %2513 = vmatprep.subr.mxu0 0.0
      %2514 = vmatpush1.msra.mxu0 0.0
      %2515 = vmatprep.subr.mxu0 0.0
      %2516 = vmatpush1.msra.mxu0 0.0
      %2517 = vmatprep.subr.mxu0 0.0
      %2518 = vmatpush1.msra.mxu0 0.0
      %2519 = vmatprep.subr.mxu0 0.0
      %2520 = vmatpush1.msra.mxu0 0.0
      %2521 = vmatprep.subr.mxu0 0.0
      %2522 = vmatpush1.msra.mxu0 0.0
      %2523 = vmatprep.subr.mxu0 0.0
      %2524 = vmatpush1.msra.mxu0 0.0
      %2525 = vmatprep.subr.mxu0 0.0
      %2526 = vmatpush1.msra.mxu0 0.0
      %2527 = vmatprep.subr.mxu0 0.0
      %2528 = vmatpush1.msra.mxu0 0.0
      %2529 = vmatprep.subr.mxu0 0.0
      %2530 = vmatpush1.msra.mxu0 0.0
      %2531 = vmatprep.subr.mxu0 0.0
      %2532 = vmatpush1.msra.mxu0 0.0
      %2533 = vmatprep.subr.mxu0 0.0
      %2534 = vmatpush1.msra.mxu0 0.0
      %2535 = vmatprep.subr.mxu0 0.0
      %2536 = vmatpush1.msra.mxu0 0.0
      %2537 = vmatprep.subr.mxu0 0.0
      %2538 = vmatpush1.msra.mxu0 0.0
      %2539 = vmatprep.subr.mxu0 0.0
      %2540 = vmatpush1.msra.mxu0 0.0
      %2541 = vmatprep.mubr.f32.mxu0 0.0
      %2542 = vmatmul.mubr.f32.gmra.mrb[0].mxu0 %v2475
      %v2543 = vpop.f32.mrb[0].mxu0
      %v2544 = vadd.f32 0.0, %v2543
      %v2545 = vpop.f32.mrb[0].mxu0
      %2546 = vdwg.mxu0
      %v2548 = vsel %vm1047, %v2544, 0
      %2550 = vmatprep.subr.mxu0 0.0
      %2551 = vmatpush1.msra.mxu0 %v2213
      %2552 = vmatprep.subr.mxu0 0.0
      %2553 = vmatpush1.msra.mxu0 0.0
      %2554 = vmatprep.subr.mxu0 0.0
      %2555 = vmatpush1.msra.mxu0 0.0
      %2556 = vmatprep.subr.mxu0 0.0
      %2557 = vmatpush1.msra.mxu0 0.0
      %2558 = vmatprep.subr.mxu0 0.0
      %2559 = vmatpush1.msra.mxu0 0.0
      %2560 = vmatprep.subr.mxu0 0.0
      %2561 = vmatpush1.msra.mxu0 0.0
      %2562 = vmatprep.subr.mxu0 0.0
      %2563 = vmatpush1.msra.mxu0 0.0
      %2564 = vmatprep.subr.mxu0 0.0
      %2565 = vmatpush1.msra.mxu0 0.0
      %2566 = vmatprep.subr.mxu0 0.0
      %2567 = vmatpush1.msra.mxu0 0.0
      %2568 = vmatprep.subr.mxu0 0.0
      %2569 = vmatpush1.msra.mxu0 0.0
      %2570 = vmatprep.subr.mxu0 0.0
      %2571 = vmatpush1.msra.mxu0 0.0
      %2572 = vmatprep.subr.mxu0 0.0
      %2573 = vmatpush1.msra.mxu0 0.0
      %2574 = vmatprep.subr.mxu0 0.0
      %2575 = vmatpush1.msra.mxu0 0.0
      %2576 = vmatprep.subr.mxu0 0.0
      %2577 = vmatpush1.msra.mxu0 0.0
      %2578 = vmatprep.subr.mxu0 0.0
      %2579 = vmatpush1.msra.mxu0 0.0
      %2580 = vmatprep.subr.mxu0 0.0
      %2581 = vmatpush1.msra.mxu0 0.0
      %2582 = vmatprep.subr.mxu0 0.0
      %2583 = vmatpush1.msra.mxu0 0.0
      %2584 = vmatprep.subr.mxu0 0.0
      %2585 = vmatpush1.msra.mxu0 0.0
      %2586 = vmatprep.subr.mxu0 0.0
      %2587 = vmatpush1.msra.mxu0 0.0
      %2588 = vmatprep.subr.mxu0 0.0
      %2589 = vmatpush1.msra.mxu0 0.0
      %2590 = vmatprep.subr.mxu0 0.0
      %2591 = vmatpush1.msra.mxu0 0.0
      %2592 = vmatprep.subr.mxu0 0.0
      %2593 = vmatpush1.msra.mxu0 0.0
      %2594 = vmatprep.subr.mxu0 0.0
      %2595 = vmatpush1.msra.mxu0 0.0
      %2596 = vmatprep.subr.mxu0 0.0
      %2597 = vmatpush1.msra.mxu0 0.0
      %2598 = vmatprep.subr.mxu0 0.0
      %2599 = vmatpush1.msra.mxu0 0.0
      %2600 = vmatprep.subr.mxu0 0.0
      %2601 = vmatpush1.msra.mxu0 0.0
      %2602 = vmatprep.subr.mxu0 0.0
      %2603 = vmatpush1.msra.mxu0 0.0
      %2604 = vmatprep.subr.mxu0 0.0
      %2605 = vmatpush1.msra.mxu0 0.0
      %2606 = vmatprep.subr.mxu0 0.0
      %2607 = vmatpush1.msra.mxu0 0.0
      %2608 = vmatprep.subr.mxu0 0.0
      %2609 = vmatpush1.msra.mxu0 0.0
      %2610 = vmatprep.subr.mxu0 0.0
      %2611 = vmatpush1.msra.mxu0 0.0
      %2612 = vmatprep.subr.mxu0 0.0
      %2613 = vmatpush1.msra.mxu0 0.0
      %2614 = vmatprep.mubr.f32.mxu0 0.0
      %2615 = vmatmul.mubr.f32.gmra.mrb[0].mxu0 %v2548
      %v2616 = vpop.f32.mrb[0].mxu0
      %v2617 = vadd.f32 0.0, %v2616
      %v2618 = vpop.f32.mrb[0].mxu0
      %2619 = vdwg.mxu0
      %v2621 = vsel %vm1047, %v2378, 0
      %2623 = vmatprep.subr.mxu0 0.0
      %2624 = vmatpush1.msra.mxu0 %v2212
      %2625 = vmatprep.subr.mxu0 0.0
      %2626 = vmatpush1.msra.mxu0 0.0
      %2627 = vmatprep.subr.mxu0 0.0
      %2628 = vmatpush1.msra.mxu0 0.0
      %2629 = vmatprep.subr.mxu0 0.0
      %2630 = vmatpush1.msra.mxu0 0.0
      %2631 = vmatprep.subr.mxu0 0.0
      %2632 = vmatpush1.msra.mxu0 0.0
      %2633 = vmatprep.subr.mxu0 0.0
      %2634 = vmatpush1.msra.mxu0 0.0
      %2635 = vmatprep.subr.mxu0 0.0
      %2636 = vmatpush1.msra.mxu0 0.0
      %2637 = vmatprep.subr.mxu0 0.0
      %2638 = vmatpush1.msra.mxu0 0.0
      %2639 = vmatprep.subr.mxu0 0.0
      %2640 = vmatpush1.msra.mxu0 0.0
      %2641 = vmatprep.subr.mxu0 0.0
      %2642 = vmatpush1.msra.mxu0 0.0
      %2643 = vmatprep.subr.mxu0 0.0
      %2644 = vmatpush1.msra.mxu0 0.0
      %2645 = vmatprep.subr.mxu0 0.0
      %2646 = vmatpush1.msra.mxu0 0.0
      %2647 = vmatprep.subr.mxu0 0.0
      %2648 = vmatpush1.msra.mxu0 0.0
      %2649 = vmatprep.subr.mxu0 0.0
      %2650 = vmatpush1.msra.mxu0 0.0
      %2651 = vmatprep.subr.mxu0 0.0
      %2652 = vmatpush1.msra.mxu0 0.0
      %2653 = vmatprep.subr.mxu0 0.0
      %2654 = vmatpush1.msra.mxu0 0.0
      %2655 = vmatprep.subr.mxu0 0.0
      %2656 = vmatpush1.msra.mxu0 0.0
      %2657 = vmatprep.subr.mxu0 0.0
      %2658 = vmatpush1.msra.mxu0 0.0
      %2659 = vmatprep.subr.mxu0 0.0
      %2660 = vmatpush1.msra.mxu0 0.0
      %2661 = vmatprep.subr.mxu0 0.0
      %2662 = vmatpush1.msra.mxu0 0.0
      %2663 = vmatprep.subr.mxu0 0.0
      %2664 = vmatpush1.msra.mxu0 0.0
      %2665 = vmatprep.subr.mxu0 0.0
      %2666 = vmatpush1.msra.mxu0 0.0
      %2667 = vmatprep.subr.mxu0 0.0
      %2668 = vmatpush1.msra.mxu0 0.0
      %2669 = vmatprep.subr.mxu0 0.0
      %2670 = vmatpush1.msra.mxu0 0.0
      %2671 = vmatprep.subr.mxu0 0.0
      %2672 = vmatpush1.msra.mxu0 0.0
      %2673 = vmatprep.subr.mxu0 0.0
      %2674 = vmatpush1.msra.mxu0 0.0
      %2675 = vmatprep.subr.mxu0 0.0
      %2676 = vmatpush1.msra.mxu0 0.0
      %2677 = vmatprep.subr.mxu0 0.0
      %2678 = vmatpush1.msra.mxu0 0.0
      %2679 = vmatprep.subr.mxu0 0.0
      %2680 = vmatpush1.msra.mxu0 0.0
      %2681 = vmatprep.subr.mxu0 0.0
      %2682 = vmatpush1.msra.mxu0 0.0
      %2683 = vmatprep.subr.mxu0 0.0
      %2684 = vmatpush1.msra.mxu0 0.0
      %2685 = vmatprep.subr.mxu0 0.0
      %2686 = vmatpush1.msra.mxu0 0.0
      %2687 = vmatprep.mubr.f32.mxu0 0.0
      %2688 = vmatmul.mubr.f32.gmra.mrb[0].mxu0 %v2621
      %v2689 = vpop.f32.mrb[0].mxu0
      %v2690 = vadd.f32 %v2617, %v2689
      %v2691 = vpop.f32.mrb[0].mxu0
      %2692 = vdwg.mxu0
      %2693 = vrot.lane.b32.xlu0 %v2125, 112
      %v2694 = vpop.permute.xlu0 %2693
      %2695 = vrot.lane.b32.xlu0 %v2209, 112
      %v2696 = vpop.permute.xlu0 %2695
      %v2697 = vsel %vm1047, %v2694, 0
      %v2699 = vsel %vm1047, %v2696, 0
      %2701 = vmatprep.subr.mxu0 0.0
      %2702 = vmatpush1.xpose.msra.mxu0 %v2699
      %2703 = vmatprep.subr.mxu0 0.0
      %2704 = vmatpush1.xpose.msra.mxu0 0.0
      %2705 = vmatprep.subr.mxu0 0.0
      %2706 = vmatpush1.xpose.msra.mxu0 0.0
      %2707 = vmatprep.subr.mxu0 0.0
      %2708 = vmatpush1.xpose.msra.mxu0 0.0
      %2709 = vmatprep.subr.mxu0 0.0
      %2710 = vmatpush1.xpose.msra.mxu0 0.0
      %2711 = vmatprep.subr.mxu0 0.0
      %2712 = vmatpush1.xpose.msra.mxu0 0.0
      %2713 = vmatprep.subr.mxu0 0.0
      %2714 = vmatpush1.xpose.msra.mxu0 0.0
      %2715 = vmatprep.subr.mxu0 0.0
      %2716 = vmatpush1.xpose.msra.mxu0 0.0
      %2717 = vmatprep.subr.mxu0 0.0
      %2718 = vmatpush1.xpose.msra.mxu0 0.0
      %2719 = vmatprep.subr.mxu0 0.0
      %2720 = vmatpush1.xpose.msra.mxu0 0.0
      %2721 = vmatprep.subr.mxu0 0.0
      %2722 = vmatpush1.xpose.msra.mxu0 0.0
      %2723 = vmatprep.subr.mxu0 0.0
      %2724 = vmatpush1.xpose.msra.mxu0 0.0
      %2725 = vmatprep.subr.mxu0 0.0
      %2726 = vmatpush1.xpose.msra.mxu0 0.0
      %2727 = vmatprep.subr.mxu0 0.0
      %2728 = vmatpush1.xpose.msra.mxu0 0.0
      %2729 = vmatprep.subr.mxu0 0.0
      %2730 = vmatpush1.xpose.msra.mxu0 0.0
      %2731 = vmatprep.subr.mxu0 0.0
      %2732 = vmatpush1.xpose.msra.mxu0 0.0
      %2733 = vmatprep.subr.mxu0 0.0
      %2734 = vmatpush1.xpose.msra.mxu0 0.0
      %2735 = vmatprep.subr.mxu0 0.0
      %2736 = vmatpush1.xpose.msra.mxu0 0.0
      %2737 = vmatprep.subr.mxu0 0.0
      %2738 = vmatpush1.xpose.msra.mxu0 0.0
      %2739 = vmatprep.subr.mxu0 0.0
      %2740 = vmatpush1.xpose.msra.mxu0 0.0
      %2741 = vmatprep.subr.mxu0 0.0
      %2742 = vmatpush1.xpose.msra.mxu0 0.0
      %2743 = vmatprep.subr.mxu0 0.0
      %2744 = vmatpush1.xpose.msra.mxu0 0.0
      %2745 = vmatprep.subr.mxu0 0.0
      %2746 = vmatpush1.xpose.msra.mxu0 0.0
      %2747 = vmatprep.subr.mxu0 0.0
      %2748 = vmatpush1.xpose.msra.mxu0 0.0
      %2749 = vmatprep.subr.mxu0 0.0
      %2750 = vmatpush1.xpose.msra.mxu0 0.0
      %2751 = vmatprep.subr.mxu0 0.0
      %2752 = vmatpush1.xpose.msra.mxu0 0.0
      %2753 = vmatprep.subr.mxu0 0.0
      %2754 = vmatpush1.xpose.msra.mxu0 0.0
      %2755 = vmatprep.subr.mxu0 0.0
      %2756 = vmatpush1.xpose.msra.mxu0 0.0
      %2757 = vmatprep.subr.mxu0 0.0
      %2758 = vmatpush1.xpose.msra.mxu0 0.0
      %2759 = vmatprep.subr.mxu0 0.0
      %2760 = vmatpush1.xpose.msra.mxu0 0.0
      %2761 = vmatprep.subr.mxu0 0.0
      %2762 = vmatpush1.xpose.msra.mxu0 0.0
      %2763 = vmatprep.subr.mxu0 0.0
      %2764 = vmatpush1.xpose.msra.mxu0 0.0
      %2765 = vmatprep.mubr.f32.mxu0 0.0
      %2766 = vmatmul.mubr.f32.gmra.mrb[0].mxu0 %v2697
      %v2767 = vpop.f32.mrb[0].mxu0
      %v2768 = vadd.f32 0.0, %v2767
      %v2769 = vpop.f32.mrb[0].mxu0
      %2770 = vdwg.mxu0
      %v2771 = vmul.f32 %v2768, 0.35355338
      %v2772 = vsel %vm1047, %v2771, -inf
      %2773 = vmax.xlane.f32.xlu0 %v2772
      %v2774 = vpop.xlane.xlu0 %2773
      %v2775 = vsub.f32 %v2771, %v2774
      %v2776 = vmul.f32 %v2775, 1.442695
      %v2777 = vpow.pop %v2776
      %v2778 = vsel %vm1047, %v2777, 0.0
      %2779 = vadd.xlane.f32.xlu0 %v2778
      %v2780 = vpop.xlane.xlu0 %2779
      %v2781 = vrcp.pop %v2780
      %v2782 = vmul.f32 %v2777, %v2781
      %2783 = vrot.lane.b32.xlu0 %v2209, 80
      %v2784 = vpop.permute.xlu0 %2783
      %v2787 = vsel %vm1047, %v2782, 0
      %2789 = vmatprep.subr.mxu0 0.0
      %2790 = vmatpush1.msra.mxu0 %v2784
      %2791 = vmatprep.subr.mxu0 0.0
      %2792 = vmatpush1.msra.mxu0 0.0
      %2793 = vmatprep.subr.mxu0 0.0
      %2794 = vmatpush1.msra.mxu0 0.0
      %2795 = vmatprep.subr.mxu0 0.0
      %2796 = vmatpush1.msra.mxu0 0.0
      %2797 = vmatprep.subr.mxu0 0.0
      %2798 = vmatpush1.msra.mxu0 0.0
      %2799 = vmatprep.subr.mxu0 0.0
      %2800 = vmatpush1.msra.mxu0 0.0
      %2801 = vmatprep.subr.mxu0 0.0
      %2802 = vmatpush1.msra.mxu0 0.0
      %2803 = vmatprep.subr.mxu0 0.0
      %2804 = vmatpush1.msra.mxu0 0.0
      %2805 = vmatprep.subr.mxu0 0.0
      %2806 = vmatpush1.msra.mxu0 0.0
      %2807 = vmatprep.subr.mxu0 0.0
      %2808 = vmatpush1.msra.mxu0 0.0
      %2809 = vmatprep.subr.mxu0 0.0
      %2810 = vmatpush1.msra.mxu0 0.0
      %2811 = vmatprep.subr.mxu0 0.0
      %2812 = vmatpush1.msra.mxu0 0.0
      %2813 = vmatprep.subr.mxu0 0.0
      %2814 = vmatpush1.msra.mxu0 0.0
      %2815 = vmatprep.subr.mxu0 0.0
      %2816 = vmatpush1.msra.mxu0 0.0
      %2817 = vmatprep.subr.mxu0 0.0
      %2818 = vmatpush1.msra.mxu0 0.0
      %2819 = vmatprep.subr.mxu0 0.0
      %2820 = vmatpush1.msra.mxu0 0.0
      %2821 = vmatprep.subr.mxu0 0.0
      %2822 = vmatpush1.msra.mxu0 0.0
      %2823 = vmatprep.subr.mxu0 0.0
      %2824 = vmatpush1.msra.mxu0 0.0
      %2825 = vmatprep.subr.mxu0 0.0
      %2826 = vmatpush1.msra.mxu0 0.0
      %2827 = vmatprep.subr.mxu0 0.0
      %2828 = vmatpush1.msra.mxu0 0.0
      %2829 = vmatprep.subr.mxu0 0.0
      %2830 = vmatpush1.msra.mxu0 0.0
      %2831 = vmatprep.subr.mxu0 0.0
      %2832 = vmatpush1.msra.mxu0 0.0
      %2833 = vmatprep.subr.mxu0 0.0
      %2834 = vmatpush1.msra.mxu0 0.0
      %2835 = vmatprep.subr.mxu0 0.0
      %2836 = vmatpush1.msra.mxu0 0.0
      %2837 = vmatprep.subr.mxu0 0.0
      %2838 = vmatpush1.msra.mxu0 0.0
      %2839 = vmatprep.subr.mxu0 0.0
      %2840 = vmatpush1.msra.mxu0 0.0
      %2841 = vmatprep.subr.mxu0 0.0
      %2842 = vmatpush1.msra.mxu0 0.0
      %2843 = vmatprep.subr.mxu0 0.0
      %2844 = vmatpush1.msra.mxu0 0.0
      %2845 = vmatprep.subr.mxu0 0.0
      %2846 = vmatpush1.msra.mxu0 0.0
      %2847 = vmatprep.subr.mxu0 0.0
      %2848 = vmatpush1.msra.mxu0 0.0
      %2849 = vmatprep.subr.mxu0 0.0
      %2850 = vmatpush1.msra.mxu0 0.0
      %2851 = vmatprep.subr.mxu0 0.0
      %2852 = vmatpush1.msra.mxu0 0.0
      %2853 = vmatprep.mubr.f32.mxu0 0.0
      %2854 = vmatmul.mubr.f32.gmra.mrb[0].mxu0 %v2787
      %v2855 = vpop.f32.mrb[0].mxu0
      %v2856 = vadd.f32 0.0, %v2855
      %v2857 = vpop.f32.mrb[0].mxu0
      %2858 = vdwg.mxu0
      %v2860 = vsel %vm1047, %v2856, 0
      %2862 = vmatprep.subr.mxu0 0.0
      %2863 = vmatpush1.msra.mxu0 %v2214
      %2864 = vmatprep.subr.mxu0 0.0
      %2865 = vmatpush1.msra.mxu0 0.0
      %2866 = vmatprep.subr.mxu0 0.0
      %2867 = vmatpush1.msra.mxu0 0.0
      %2868 = vmatprep.subr.mxu0 0.0
      %2869 = vmatpush1.msra.mxu0 0.0
      %2870 = vmatprep.subr.mxu0 0.0
      %2871 = vmatpush1.msra.mxu0 0.0
      %2872 = vmatprep.subr.mxu0 0.0
      %2873 = vmatpush1.msra.mxu0 0.0
      %2874 = vmatprep.subr.mxu0 0.0
      %2875 = vmatpush1.msra.mxu0 0.0
      %2876 = vmatprep.subr.mxu0 0.0
      %2877 = vmatpush1.msra.mxu0 0.0
      %2878 = vmatprep.subr.mxu0 0.0
      %2879 = vmatpush1.msra.mxu0 0.0
      %2880 = vmatprep.subr.mxu0 0.0
      %2881 = vmatpush1.msra.mxu0 0.0
      %2882 = vmatprep.subr.mxu0 0.0
      %2883 = vmatpush1.msra.mxu0 0.0
      %2884 = vmatprep.subr.mxu0 0.0
      %2885 = vmatpush1.msra.mxu0 0.0
      %2886 = vmatprep.subr.mxu0 0.0
      %2887 = vmatpush1.msra.mxu0 0.0
      %2888 = vmatprep.subr.mxu0 0.0
      %2889 = vmatpush1.msra.mxu0 0.0
      %2890 = vmatprep.subr.mxu0 0.0
      %2891 = vmatpush1.msra.mxu0 0.0
      %2892 = vmatprep.subr.mxu0 0.0
      %2893 = vmatpush1.msra.mxu0 0.0
      %2894 = vmatprep.subr.mxu0 0.0
      %2895 = vmatpush1.msra.mxu0 0.0
      %2896 = vmatprep.subr.mxu0 0.0
      %2897 = vmatpush1.msra.mxu0 0.0
      %2898 = vmatprep.subr.mxu0 0.0
      %2899 = vmatpush1.msra.mxu0 0.0
      %2900 = vmatprep.subr.mxu0 0.0
      %2901 = vmatpush1.msra.mxu0 0.0
      %2902 = vmatprep.subr.mxu0 0.0
      %2903 = vmatpush1.msra.mxu0 0.0
      %2904 = vmatprep.subr.mxu0 0.0
      %2905 = vmatpush1.msra.mxu0 0.0
      %2906 = vmatprep.subr.mxu0 0.0
      %2907 = vmatpush1.msra.mxu0 0.0
      %2908 = vmatprep.subr.mxu0 0.0
      %2909 = vmatpush1.msra.mxu0 0.0
      %2910 = vmatprep.subr.mxu0 0.0
      %2911 = vmatpush1.msra.mxu0 0.0
      %2912 = vmatprep.subr.mxu0 0.0
      %2913 = vmatpush1.msra.mxu0 0.0
      %2914 = vmatprep.subr.mxu0 0.0
      %2915 = vmatpush1.msra.mxu0 0.0
      %2916 = vmatprep.subr.mxu0 0.0
      %2917 = vmatpush1.msra.mxu0 0.0
      %2918 = vmatprep.subr.mxu0 0.0
      %2919 = vmatpush1.msra.mxu0 0.0
      %2920 = vmatprep.subr.mxu0 0.0
      %2921 = vmatpush1.msra.mxu0 0.0
      %2922 = vmatprep.subr.mxu0 0.0
      %2923 = vmatpush1.msra.mxu0 0.0
      %2924 = vmatprep.subr.mxu0 0.0
      %2925 = vmatpush1.msra.mxu0 0.0
      %2926 = vmatprep.mubr.f32.mxu0 0.0
      %2927 = vmatmul.mubr.f32.gmra.mrb[0].mxu0 %v2860
      %v2928 = vpop.f32.mrb[0].mxu0
      %v2929 = vadd.f32 0.0, %v2928
      %v2930 = vpop.f32.mrb[0].mxu0
      %2931 = vdwg.mxu0
      %v2932 = vadd.f32 %v2690, %v2929
      %2933 = vrot.lane.b32.xlu0 %v2125, 104
      %v2934 = vpop.permute.xlu0 %2933
      %2935 = vrot.lane.b32.xlu0 %v2209, 104
      %v2936 = vpop.permute.xlu0 %2935
      %v2937 = vsel %vm1047, %v2934, 0
      %v2939 = vsel %vm1047, %v2936, 0
      %2941 = vmatprep.subr.mxu0 0.0
      %2942 = vmatpush1.xpose.msra.mxu0 %v2939
      %2943 = vmatprep.subr.mxu0 0.0
      %2944 = vmatpush1.xpose.msra.mxu0 0.0
      %2945 = vmatprep.subr.mxu0 0.0
      %2946 = vmatpush1.xpose.msra.mxu0 0.0
      %2947 = vmatprep.subr.mxu0 0.0
      %2948 = vmatpush1.xpose.msra.mxu0 0.0
      %2949 = vmatprep.subr.mxu0 0.0
      %2950 = vmatpush1.xpose.msra.mxu0 0.0
      %2951 = vmatprep.subr.mxu0 0.0
      %2952 = vmatpush1.xpose.msra.mxu0 0.0
      %2953 = vmatprep.subr.mxu0 0.0
      %2954 = vmatpush1.xpose.msra.mxu0 0.0
      %2955 = vmatprep.subr.mxu0 0.0
      %2956 = vmatpush1.xpose.msra.mxu0 0.0
      %2957 = vmatprep.subr.mxu0 0.0
      %2958 = vmatpush1.xpose.msra.mxu0 0.0
      %2959 = vmatprep.subr.mxu0 0.0
      %2960 = vmatpush1.xpose.msra.mxu0 0.0
      %2961 = vmatprep.subr.mxu0 0.0
      %2962 = vmatpush1.xpose.msra.mxu0 0.0
      %2963 = vmatprep.subr.mxu0 0.0
      %2964 = vmatpush1.xpose.msra.mxu0 0.0
      %2965 = vmatprep.subr.mxu0 0.0
      %2966 = vmatpush1.xpose.msra.mxu0 0.0
      %2967 = vmatprep.subr.mxu0 0.0
      %2968 = vmatpush1.xpose.msra.mxu0 0.0
      %2969 = vmatprep.subr.mxu0 0.0
      %2970 = vmatpush1.xpose.msra.mxu0 0.0
      %2971 = vmatprep.subr.mxu0 0.0
      %2972 = vmatpush1.xpose.msra.mxu0 0.0
      %2973 = vmatprep.subr.mxu0 0.0
      %2974 = vmatpush1.xpose.msra.mxu0 0.0
      %2975 = vmatprep.subr.mxu0 0.0
      %2976 = vmatpush1.xpose.msra.mxu0 0.0
      %2977 = vmatprep.subr.mxu0 0.0
      %2978 = vmatpush1.xpose.msra.mxu0 0.0
      %2979 = vmatprep.subr.mxu0 0.0
      %2980 = vmatpush1.xpose.msra.mxu0 0.0
      %2981 = vmatprep.subr.mxu0 0.0
      %2982 = vmatpush1.xpose.msra.mxu0 0.0
      %2983 = vmatprep.subr.mxu0 0.0
      %2984 = vmatpush1.xpose.msra.mxu0 0.0
      %2985 = vmatprep.subr.mxu0 0.0
      %2986 = vmatpush1.xpose.msra.mxu0 0.0
      %2987 = vmatprep.subr.mxu0 0.0
      %2988 = vmatpush1.xpose.msra.mxu0 0.0
      %2989 = vmatprep.subr.mxu0 0.0
      %2990 = vmatpush1.xpose.msra.mxu0 0.0
      %2991 = vmatprep.subr.mxu0 0.0
      %2992 = vmatpush1.xpose.msra.mxu0 0.0
      %2993 = vmatprep.subr.mxu0 0.0
      %2994 = vmatpush1.xpose.msra.mxu0 0.0
      %2995 = vmatprep.subr.mxu0 0.0
      %2996 = vmatpush1.xpose.msra.mxu0 0.0
      %2997 = vmatprep.subr.mxu0 0.0
      %2998 = vmatpush1.xpose.msra.mxu0 0.0
      %2999 = vmatprep.subr.mxu0 0.0
      %3000 = vmatpush1.xpose.msra.mxu0 0.0
      %3001 = vmatprep.subr.mxu0 0.0
      %3002 = vmatpush1.xpose.msra.mxu0 0.0
      %3003 = vmatprep.subr.mxu0 0.0
      %3004 = vmatpush1.xpose.msra.mxu0 0.0
      %3005 = vmatprep.mubr.f32.mxu0 0.0
      %3006 = vmatmul.mubr.f32.gmra.mrb[0].mxu0 %v2937
      %v3007 = vpop.f32.mrb[0].mxu0
      %v3008 = vadd.f32 0.0, %v3007
      %v3009 = vpop.f32.mrb[0].mxu0
      %3010 = vdwg.mxu0
      %v3011 = vmul.f32 %v3008, 0.35355338
      %v3012 = vsel %vm1047, %v3011, -inf
      %3013 = vmax.xlane.f32.xlu0 %v3012
      %v3014 = vpop.xlane.xlu0 %3013
      %v3015 = vsub.f32 %v3011, %v3014
      %v3016 = vmul.f32 %v3015, 1.442695
      %v3017 = vpow.pop %v3016
      %v3018 = vsel %vm1047, %v3017, 0.0
      %3019 = vadd.xlane.f32.xlu0 %v3018
      %v3020 = vpop.xlane.xlu0 %3019
      %v3021 = vrcp.pop %v3020
      %v3022 = vmul.f32 %v3017, %v3021
      %3023 = vrot.lane.b32.xlu0 %v2209, 72
      %v3024 = vpop.permute.xlu0 %3023
      %v3027 = vsel %vm1047, %v3022, 0
      %3029 = vmatprep.subr.mxu0 0.0
      %3030 = vmatpush1.msra.mxu0 %v3024
      %3031 = vmatprep.subr.mxu0 0.0
      %3032 = vmatpush1.msra.mxu0 0.0
      %3033 = vmatprep.subr.mxu0 0.0
      %3034 = vmatpush1.msra.mxu0 0.0
      %3035 = vmatprep.subr.mxu0 0.0
      %3036 = vmatpush1.msra.mxu0 0.0
      %3037 = vmatprep.subr.mxu0 0.0
      %3038 = vmatpush1.msra.mxu0 0.0
      %3039 = vmatprep.subr.mxu0 0.0
      %3040 = vmatpush1.msra.mxu0 0.0
      %3041 = vmatprep.subr.mxu0 0.0
      %3042 = vmatpush1.msra.mxu0 0.0
      %3043 = vmatprep.subr.mxu0 0.0
      %3044 = vmatpush1.msra.mxu0 0.0
      %3045 = vmatprep.subr.mxu0 0.0
      %3046 = vmatpush1.msra.mxu0 0.0
      %3047 = vmatprep.subr.mxu0 0.0
      %3048 = vmatpush1.msra.mxu0 0.0
      %3049 = vmatprep.subr.mxu0 0.0
      %3050 = vmatpush1.msra.mxu0 0.0
      %3051 = vmatprep.subr.mxu0 0.0
      %3052 = vmatpush1.msra.mxu0 0.0
      %3053 = vmatprep.subr.mxu0 0.0
      %3054 = vmatpush1.msra.mxu0 0.0
      %3055 = vmatprep.subr.mxu0 0.0
      %3056 = vmatpush1.msra.mxu0 0.0
      %3057 = vmatprep.subr.mxu0 0.0
      %3058 = vmatpush1.msra.mxu0 0.0
      %3059 = vmatprep.subr.mxu0 0.0
      %3060 = vmatpush1.msra.mxu0 0.0
      %3061 = vmatprep.subr.mxu0 0.0
      %3062 = vmatpush1.msra.mxu0 0.0
      %3063 = vmatprep.subr.mxu0 0.0
      %3064 = vmatpush1.msra.mxu0 0.0
      %3065 = vmatprep.subr.mxu0 0.0
      %3066 = vmatpush1.msra.mxu0 0.0
      %3067 = vmatprep.subr.mxu0 0.0
      %3068 = vmatpush1.msra.mxu0 0.0
      %3069 = vmatprep.subr.mxu0 0.0
      %3070 = vmatpush1.msra.mxu0 0.0
      %3071 = vmatprep.subr.mxu0 0.0
      %3072 = vmatpush1.msra.mxu0 0.0
      %3073 = vmatprep.subr.mxu0 0.0
      %3074 = vmatpush1.msra.mxu0 0.0
      %3075 = vmatprep.subr.mxu0 0.0
      %3076 = vmatpush1.msra.mxu0 0.0
      %3077 = vmatprep.subr.mxu0 0.0
      %3078 = vmatpush1.msra.mxu0 0.0
      %3079 = vmatprep.subr.mxu0 0.0
      %3080 = vmatpush1.msra.mxu0 0.0
      %3081 = vmatprep.subr.mxu0 0.0
      %3082 = vmatpush1.msra.mxu0 0.0
      %3083 = vmatprep.subr.mxu0 0.0
      %3084 = vmatpush1.msra.mxu0 0.0
      %3085 = vmatprep.subr.mxu0 0.0
      %3086 = vmatpush1.msra.mxu0 0.0
      %3087 = vmatprep.subr.mxu0 0.0
      %3088 = vmatpush1.msra.mxu0 0.0
      %3089 = vmatprep.subr.mxu0 0.0
      %3090 = vmatpush1.msra.mxu0 0.0
      %3091 = vmatprep.subr.mxu0 0.0
      %3092 = vmatpush1.msra.mxu0 0.0
      %3093 = vmatprep.mubr.f32.mxu0 0.0
      %3094 = vmatmul.mubr.f32.gmra.mrb[0].mxu0 %v3027
      %v3095 = vpop.f32.mrb[0].mxu0
      %v3096 = vadd.f32 0.0, %v3095
      %v3097 = vpop.f32.mrb[0].mxu0
      %3098 = vdwg.mxu0
      %v3100 = vsel %vm1047, %v3096, 0
      %3102 = vmatprep.subr.mxu0 0.0
      %3103 = vmatpush1.msra.mxu0 %v2215
      %3104 = vmatprep.subr.mxu0 0.0
      %3105 = vmatpush1.msra.mxu0 0.0
      %3106 = vmatprep.subr.mxu0 0.0
      %3107 = vmatpush1.msra.mxu0 0.0
      %3108 = vmatprep.subr.mxu0 0.0
      %3109 = vmatpush1.msra.mxu0 0.0
      %3110 = vmatprep.subr.mxu0 0.0
      %3111 = vmatpush1.msra.mxu0 0.0
      %3112 = vmatprep.subr.mxu0 0.0
      %3113 = vmatpush1.msra.mxu0 0.0
      %3114 = vmatprep.subr.mxu0 0.0
      %3115 = vmatpush1.msra.mxu0 0.0
      %3116 = vmatprep.subr.mxu0 0.0
      %3117 = vmatpush1.msra.mxu0 0.0
      %3118 = vmatprep.subr.mxu0 0.0
      %3119 = vmatpush1.msra.mxu0 0.0
      %3120 = vmatprep.subr.mxu0 0.0
      %3121 = vmatpush1.msra.mxu0 0.0
      %3122 = vmatprep.subr.mxu0 0.0
      %3123 = vmatpush1.msra.mxu0 0.0
      %3124 = vmatprep.subr.mxu0 0.0
      %3125 = vmatpush1.msra.mxu0 0.0
      %3126 = vmatprep.subr.mxu0 0.0
      %3127 = vmatpush1.msra.mxu0 0.0
      %3128 = vmatprep.subr.mxu0 0.0
      %3129 = vmatpush1.msra.mxu0 0.0
      %3130 = vmatprep.subr.mxu0 0.0
      %3131 = vmatpush1.msra.mxu0 0.0
      %3132 = vmatprep.subr.mxu0 0.0
      %3133 = vmatpush1.msra.mxu0 0.0
      %3134 = vmatprep.subr.mxu0 0.0
      %3135 = vmatpush1.msra.mxu0 0.0
      %3136 = vmatprep.subr.mxu0 0.0
      %3137 = vmatpush1.msra.mxu0 0.0
      %3138 = vmatprep.subr.mxu0 0.0
      %3139 = vmatpush1.msra.mxu0 0.0
      %3140 = vmatprep.subr.mxu0 0.0
      %3141 = vmatpush1.msra.mxu0 0.0
      %3142 = vmatprep.subr.mxu0 0.0
      %3143 = vmatpush1.msra.mxu0 0.0
      %3144 = vmatprep.subr.mxu0 0.0
      %3145 = vmatpush1.msra.mxu0 0.0
      %3146 = vmatprep.subr.mxu0 0.0
      %3147 = vmatpush1.msra.mxu0 0.0
      %3148 = vmatprep.subr.mxu0 0.0
      %3149 = vmatpush1.msra.mxu0 0.0
      %3150 = vmatprep.subr.mxu0 0.0
      %3151 = vmatpush1.msra.mxu0 0.0
      %3152 = vmatprep.subr.mxu0 0.0
      %3153 = vmatpush1.msra.mxu0 0.0
      %3154 = vmatprep.subr.mxu0 0.0
      %3155 = vmatpush1.msra.mxu0 0.0
      %3156 = vmatprep.subr.mxu0 0.0
      %3157 = vmatpush1.msra.mxu0 0.0
      %3158 = vmatprep.subr.mxu0 0.0
      %3159 = vmatpush1.msra.mxu0 0.0
      %3160 = vmatprep.subr.mxu0 0.0
      %3161 = vmatpush1.msra.mxu0 0.0
      %3162 = vmatprep.subr.mxu0 0.0
      %3163 = vmatpush1.msra.mxu0 0.0
      %3164 = vmatprep.subr.mxu0 0.0
      %3165 = vmatpush1.msra.mxu0 0.0
      %3166 = vmatprep.mubr.f32.mxu0 0.0
      %3167 = vmatmul.mubr.f32.gmra.mrb[0].mxu0 %v3100
      %v3168 = vpop.f32.mrb[0].mxu0
      %v3169 = vadd.f32 0.0, %v3168
      %v3170 = vpop.f32.mrb[0].mxu0
      %3171 = vdwg.mxu0
      %v3172 = vadd.f32 %v2932, %v3169
      %v3174 = vlaneseq
      %v3175 = vshrl.u32 %v3174, 7
      %v3176 = vsub.s32 0, %v3175
      %v3177 = vrot.slane %v2216, %v3176
      %v3179 = vadd.f32 %v3172, %v3177
      %v3180 = vld [vmem:[%s18] sm:$0x1]
      %v3181 = vld [vmem:[%s19] sm:$0x1]
      %v3182 = vadd.f32 %v2043, %v3179
      %v3183 = vsel %vm965, %v3182, 0.0
      %3184 = vadd.xlane.f32.xlu0 %v3183
      %v3185 = vpop.xlane.xlu0 %3184
      %v3186 = vmul.f32 %v3185, %v2019
      %v3187 = vsub.f32 %v3182, %v3186
      %v3188 = vmul.f32 %v3187, %v3187
      %v3189 = vsel %vm965, %v3188, 0.0
      %3190 = vadd.xlane.f32.xlu0 %v3189
      %v3191 = vpop.xlane.xlu0 %3190
      %v3192 = vmul.f32 %v3191, %v2019
      %v3193 = vadd.f32 %v3192, 1e-05
      %v3194 = vrsqrt.pop %v3193
      %v3195 = vmul.f32 %v3187, %v3194
      %v3197 = vlaneseq
      %v3198 = vshrl.u32 %v3197, 7
      %v3199 = vsub.s32 0, %v3198
      %v3200 = vrot.slane %v3180, %v3199
      %v3202 = vmul.f32 %v3195, %v3200
      %v3204 = vlaneseq
      %v3205 = vshrl.u32 %v3204, 7
      %v3206 = vsub.s32 0, %v3205
      %v3207 = vrot.slane %v3181, %v3206
      %v3209 = vadd.f32 %v3202, %v3207
      %v3210 = vld [vmem:[%s22] sm:$0xff]
      %v3211 = vld [vmem:[%s22 + $0x8] sm:$0xff]
      %v3212 = vld [vmem:[%s22 + $0x10] sm:$0xff]
      %v3213 = vld [vmem:[%s22 + $0x18] sm:$0xff]
      %v3214 = vld [vmem:[%s23] sm:$0x1]
      %v3216 = vlaneseq
      %v3217 = vshrl.u32 %v3216, 7
      %v3218 = vsub.s32 0, %v3217
      %v3219 = vrot.slane %v3214, %v3218
      %v3222 = vsel %vm965, %v3209, 0
      %3224 = vmatprep.subr.mxu0 0.0
      %3225 = vmatpush1.msra.mxu0 %v3210
      %3226 = vmatprep.subr.mxu0 0.0
      %3227 = vmatpush1.msra.mxu0 %v3211
      %3228 = vmatprep.subr.mxu0 0.0
      %3229 = vmatpush1.msra.mxu0 %v3212
      %3230 = vmatprep.subr.mxu0 0.0
      %3231 = vmatpush1.msra.mxu0 %v3213
      %3232 = vmatprep.subr.mxu0 0.0
      %3233 = vmatpush1.msra.mxu0 0.0
      %3234 = vmatprep.subr.mxu0 0.0
      %3235 = vmatpush1.msra.mxu0 0.0
      %3236 = vmatprep.subr.mxu0 0.0
      %3237 = vmatpush1.msra.mxu0 0.0
      %3238 = vmatprep.subr.mxu0 0.0
      %3239 = vmatpush1.msra.mxu0 0.0
      %3240 = vmatprep.subr.mxu0 0.0
      %3241 = vmatpush1.msra.mxu0 0.0
      %3242 = vmatprep.subr.mxu0 0.0
      %3243 = vmatpush1.msra.mxu0 0.0
      %3244 = vmatprep.subr.mxu0 0.0
      %3245 = vmatpush1.msra.mxu0 0.0
      %3246 = vmatprep.subr.mxu0 0.0
      %3247 = vmatpush1.msra.mxu0 0.0
      %3248 = vmatprep.subr.mxu0 0.0
      %3249 = vmatpush1.msra.mxu0 0.0
      %3250 = vmatprep.subr.mxu0 0.0
      %3251 = vmatpush1.msra.mxu0 0.0
      %3252 = vmatprep.subr.mxu0 0.0
      %3253 = vmatpush1.msra.mxu0 0.0
      %3254 = vmatprep.subr.mxu0 0.0
      %3255 = vmatpush1.msra.mxu0 0.0
      %3256 = vmatprep.subr.mxu0 0.0
      %3257 = vmatpush1.msra.mxu0 0.0
      %3258 = vmatprep.subr.mxu0 0.0
      %3259 = vmatpush1.msra.mxu0 0.0
      %3260 = vmatprep.subr.mxu0 0.0
      %3261 = vmatpush1.msra.mxu0 0.0
      %3262 = vmatprep.subr.mxu0 0.0
      %3263 = vmatpush1.msra.mxu0 0.0
      %3264 = vmatprep.subr.mxu0 0.0
      %3265 = vmatpush1.msra.mxu0 0.0
      %3266 = vmatprep.subr.mxu0 0.0
      %3267 = vmatpush1.msra.mxu0 0.0
      %3268 = vmatprep.subr.mxu0 0.0
      %3269 = vmatpush1.msra.mxu0 0.0
      %3270 = vmatprep.subr.mxu0 0.0
      %3271 = vmatpush1.msra.mxu0 0.0
      %3272 = vmatprep.subr.mxu0 0.0
      %3273 = vmatpush1.msra.mxu0 0.0
      %3274 = vmatprep.subr.mxu0 0.0
      %3275 = vmatpush1.msra.mxu0 0.0
      %3276 = vmatprep.subr.mxu0 0.0
      %3277 = vmatpush1.msra.mxu0 0.0
      %3278 = vmatprep.subr.mxu0 0.0
      %3279 = vmatpush1.msra.mxu0 0.0
      %3280 = vmatprep.subr.mxu0 0.0
      %3281 = vmatpush1.msra.mxu0 0.0
      %3282 = vmatprep.subr.mxu0 0.0
      %3283 = vmatpush1.msra.mxu0 0.0
      %3284 = vmatprep.subr.mxu0 0.0
      %3285 = vmatpush1.msra.mxu0 0.0
      %3286 = vmatprep.subr.mxu0 0.0
      %3287 = vmatpush1.msra.mxu0 0.0
      %3288 = vmatprep.mubr.f32.mxu0 0.0
      %3289 = vmatmul.mubr.f32.gmra.mrb[0].mxu0 %v3222
      %v3290 = vpop.f32.mrb[0].mxu0
      %v3291 = vadd.f32 %v3219, %v3290
      %v3292 = vpop.f32.mrb[0].mxu0
      %3293 = vdwg.mxu0
      %v3294 = vmax.f32 %v3291, 0.0
      %v3295 = vld [vmem:[%s24] sm:$0xff]
      %v3296 = vld [vmem:[%s24 + $0x8] sm:$0xff]
      %v3297 = vld [vmem:[%s24 + $0x10] sm:$0xff]
      %v3298 = vld [vmem:[%s24 + $0x18] sm:$0xff]
      %v3299 = vld [vmem:[%s24 + $0x20] sm:$0xff]
      %v3300 = vld [vmem:[%s24 + $0x28] sm:$0xff]
      %v3301 = vld [vmem:[%s24 + $0x30] sm:$0xff]
      %v3302 = vld [vmem:[%s24 + $0x38] sm:$0xff]
      %v3303 = vld [vmem:[%s25] sm:$0x1]
      %v3305 = vlaneseq
      %v3306 = vshrl.u32 %v3305, 7
      %v3307 = vsub.s32 0, %v3306
      %v3308 = vrot.slane %v3303, %v3307
      %v3311 = vsel %vm874, %v3294, 0
      %3313 = vmatprep.subr.mxu0 0.0
      %3314 = vmatpush1.msra.mxu0 %v3295
      %3315 = vmatprep.subr.mxu0 0.0
      %3316 = vmatpush1.msra.mxu0 %v3296
      %3317 = vmatprep.subr.mxu0 0.0
      %3318 = vmatpush1.msra.mxu0 %v3297
      %3319 = vmatprep.subr.mxu0 0.0
      %3320 = vmatpush1.msra.mxu0 %v3298
      %3321 = vmatprep.subr.mxu0 0.0
      %3322 = vmatpush1.msra.mxu0 %v3299
      %3323 = vmatprep.subr.mxu0 0.0
      %3324 = vmatpush1.msra.mxu0 %v3300
      %3325 = vmatprep.subr.mxu0 0.0
      %3326 = vmatpush1.msra.mxu0 %v3301
      %3327 = vmatprep.subr.mxu0 0.0
      %3328 = vmatpush1.msra.mxu0 %v3302
      %3329 = vmatprep.subr.mxu0 0.0
      %3330 = vmatpush1.msra.mxu0 0.0
      %3331 = vmatprep.subr.mxu0 0.0
      %3332 = vmatpush1.msra.mxu0 0.0
      %3333 = vmatprep.subr.mxu0 0.0
      %3334 = vmatpush1.msra.mxu0 0.0
      %3335 = vmatprep.subr.mxu0 0.0
      %3336 = vmatpush1.msra.mxu0 0.0
      %3337 = vmatprep.subr.mxu0 0.0
      %3338 = vmatpush1.msra.mxu0 0.0
      %3339 = vmatprep.subr.mxu0 0.0
      %3340 = vmatpush1.msra.mxu0 0.0
      %3341 = vmatprep.subr.mxu0 0.0
      %3342 = vmatpush1.msra.mxu0 0.0
      %3343 = vmatprep.subr.mxu0 0.0
      %3344 = vmatpush1.msra.mxu0 0.0
      %3345 = vmatprep.subr.mxu0 0.0
      %3346 = vmatpush1.msra.mxu0 0.0
      %3347 = vmatprep.subr.mxu0 0.0
      %3348 = vmatpush1.msra.mxu0 0.0
      %3349 = vmatprep.subr.mxu0 0.0
      %3350 = vmatpush1.msra.mxu0 0.0
      %3351 = vmatprep.subr.mxu0 0.0
      %3352 = vmatpush1.msra.mxu0 0.0
      %3353 = vmatprep.subr.mxu0 0.0
      %3354 = vmatpush1.msra.mxu0 0.0
      %3355 = vmatprep.subr.mxu0 0.0
      %3356 = vmatpush1.msra.mxu0 0.0
      %3357 = vmatprep.subr.mxu0 0.0
      %3358 = vmatpush1.msra.mxu0 0.0
      %3359 = vmatprep.subr.mxu0 0.0
      %3360 = vmatpush1.msra.mxu0 0.0
      %3361 = vmatprep.subr.mxu0 0.0
      %3362 = vmatpush1.msra.mxu0 0.0
      %3363 = vmatprep.subr.mxu0 0.0
      %3364 = vmatpush1.msra.mxu0 0.0
      %3365 = vmatprep.subr.mxu0 0.0
      %3366 = vmatpush1.msra.mxu0 0.0
      %3367 = vmatprep.subr.mxu0 0.0
      %3368 = vmatpush1.msra.mxu0 0.0
      %3369 = vmatprep.subr.mxu0 0.0
      %3370 = vmatpush1.msra.mxu0 0.0
      %3371 = vmatprep.subr.mxu0 0.0
      %3372 = vmatpush1.msra.mxu0 0.0
      %3373 = vmatprep.subr.mxu0 0.0
      %3374 = vmatpush1.msra.mxu0 0.0
      %3375 = vmatprep.subr.mxu0 0.0
      %3376 = vmatpush1.msra.mxu0 0.0
      %3377 = vmatprep.mubr.f32.mxu0 0.0
      %3378 = vmatmul.mubr.f32.gmra.mrb[0].mxu0 %v3311
      %v3379 = vpop.f32.mrb[0].mxu0
      %v3380 = vadd.f32 %v3308, %v3379
      %v3381 = vpop.f32.mrb[0].mxu0
      %3382 = vdwg.mxu0
      %v3383 = vld [vmem:[%s20] sm:$0x1]
      %v3384 = vld [vmem:[%s21] sm:$0x1]
      %v3385 = vadd.f32 %v3209, %v3380
      %v3386 = vsel %vm965, %v3385, 0.0
      %3387 = vadd.xlane.f32.xlu0 %v3386
      %v3388 = vpop.xlane.xlu0 %3387
      %v3389 = vmul.f32 %v3388, %v2019
      %v3390 = vsub.f32 %v3385, %v3389
      %v3391 = vmul.f32 %v3390, %v3390
      %v3392 = vsel %vm965, %v3391, 0.0
      %3393 = vadd.xlane.f32.xlu0 %v3392
      %v3394 = vpop.xlane.xlu0 %3393
      %v3395 = vmul.f32 %v3394, %v2019
      %v3396 = vadd.f32 %v3395, 1e-05
      %v3397 = vrsqrt.pop %v3396
      %v3398 = vmul.f32 %v3390, %v3397
      %v3400 = vlaneseq
      %v3401 = vshrl.u32 %v3400, 7
      %v3402 = vsub.s32 0, %v3401
      %v3403 = vrot.slane %v3383, %v3402
      %v3405 = vmul.f32 %v3398, %v3403
      %v3407 = vlaneseq
      %v3408 = vshrl.u32 %v3407, 7
      %v3409 = vsub.s32 0, %v3408
      %v3410 = vrot.slane %v3384, %v3409
      %v3412 = vadd.f32 %v3405, %v3410
      %s3413 = scalar_lea.vmem %s6, 32
      %v3414 = vld [vmem:[%s3413] sm:$0xff]
      %v3415 = vld [vmem:[%s3413 + $0x8] sm:$0xff]
      %v3416 = vld [vmem:[%s3413 + $0x10] sm:$0xff]
      %v3417 = vld [vmem:[%s3413 + $0x18] sm:$0xff]
      %s3418 = scalar_lea.vmem %s7, 1
      %v3419 = vld [vmem:[%s3418] sm:$0x1]
      %v3421 = vlaneseq
      %v3422 = vshrl.u32 %v3421, 7
      %v3423 = vsub.s32 0, %v3422
      %v3424 = vrot.slane %v3419, %v3423
      %v3427 = vsel %vm965, %v3412, 0
      %3429 = vmatprep.subr.mxu0 0.0
      %3430 = vmatpush1.msra.mxu0 %v3414
      %3431 = vmatprep.subr.mxu0 0.0
      %3432 = vmatpush1.msra.mxu0 %v3415
      %3433 = vmatprep.subr.mxu0 0.0
      %3434 = vmatpush1.msra.mxu0 %v3416
      %3435 = vmatprep.subr.mxu0 0.0
      %3436 = vmatpush1.msra.mxu0 %v3417
      %3437 = vmatprep.subr.mxu0 0.0
      %3438 = vmatpush1.msra.mxu0 0.0
      %3439 = vmatprep.subr.mxu0 0.0
      %3440 = vmatpush1.msra.mxu0 0.0
      %3441 = vmatprep.subr.mxu0 0.0
      %3442 = vmatpush1.msra.mxu0 0.0
      %3443 = vmatprep.subr.mxu0 0.0
      %3444 = vmatpush1.msra.mxu0 0.0
      %3445 = vmatprep.subr.mxu0 0.0
      %3446 = vmatpush1.msra.mxu0 0.0
      %3447 = vmatprep.subr.mxu0 0.0
      %3448 = vmatpush1.msra.mxu0 0.0
      %3449 = vmatprep.subr.mxu0 0.0
      %3450 = vmatpush1.msra.mxu0 0.0
      %3451 = vmatprep.subr.mxu0 0.0
      %3452 = vmatpush1.msra.mxu0 0.0
      %3453 = vmatprep.subr.mxu0 0.0
      %3454 = vmatpush1.msra.mxu0 0.0
      %3455 = vmatprep.subr.mxu0 0.0
      %3456 = vmatpush1.msra.mxu0 0.0
      %3457 = vmatprep.subr.mxu0 0.0
      %3458 = vmatpush1.msra.mxu0 0.0
      %3459 = vmatprep.subr.mxu0 0.0
      %3460 = vmatpush1.msra.mxu0 0.0
      %3461 = vmatprep.subr.mxu0 0.0
      %3462 = vmatpush1.msra.mxu0 0.0
      %3463 = vmatprep.subr.mxu0 0.0
      %3464 = vmatpush1.msra.mxu0 0.0
      %3465 = vmatprep.subr.mxu0 0.0
      %3466 = vmatpush1.msra.mxu0 0.0
      %3467 = vmatprep.subr.mxu0 0.0
      %3468 = vmatpush1.msra.mxu0 0.0
      %3469 = vmatprep.subr.mxu0 0.0
      %3470 = vmatpush1.msra.mxu0 0.0
      %3471 = vmatprep.subr.mxu0 0.0
      %3472 = vmatpush1.msra.mxu0 0.0
      %3473 = vmatprep.subr.mxu0 0.0
      %3474 = vmatpush1.msra.mxu0 0.0
      %3475 = vmatprep.subr.mxu0 0.0
      %3476 = vmatpush1.msra.mxu0 0.0
      %3477 = vmatprep.subr.mxu0 0.0
      %3478 = vmatpush1.msra.mxu0 0.0
      %3479 = vmatprep.subr.mxu0 0.0
      %3480 = vmatpush1.msra.mxu0 0.0
      %3481 = vmatprep.subr.mxu0 0.0
      %3482 = vmatpush1.msra.mxu0 0.0
      %3483 = vmatprep.subr.mxu0 0.0
      %3484 = vmatpush1.msra.mxu0 0.0
      %3485 = vmatprep.subr.mxu0 0.0
      %3486 = vmatpush1.msra.mxu0 0.0
      %3487 = vmatprep.subr.mxu0 0.0
      %3488 = vmatpush1.msra.mxu0 0.0
      %3489 = vmatprep.subr.mxu0 0.0
      %3490 = vmatpush1.msra.mxu0 0.0
      %3491 = vmatprep.subr.mxu0 0.0
      %3492 = vmatpush1.msra.mxu0 0.0
      %3493 = vmatprep.mubr.f32.mxu0 0.0
      %3494 = vmatmul.mubr.f32.gmra.mrb[0].mxu0 %v3427
      %v3495 = vpop.f32.mrb[0].mxu0
      %v3496 = vadd.f32 %v3424, %v3495
      %v3497 = vpop.f32.mrb[0].mxu0
      %3498 = vdwg.mxu0
      %s3499 = scalar_lea.vmem %s8, 32
      %v3500 = vld [vmem:[%s3499] sm:$0xff]
      %v3501 = vld [vmem:[%s3499 + $0x8] sm:$0xff]
      %v3502 = vld [vmem:[%s3499 + $0x10] sm:$0xff]
      %v3503 = vld [vmem:[%s3499 + $0x18] sm:$0xff]
      %s3504 = scalar_lea.vmem %s9, 1
      %v3505 = vld [vmem:[%s3504] sm:$0x1]
      %3507 = vrot.lane.b32.xlu0 %v3496, 96
      %v3508 = vpop.permute.xlu0 %3507
      %v3509 = vsel %vm1047, %v3496, 0
      %v3511 = vsel %vm1047, %v3508, 0
      %3513 = vmatprep.subr.mxu0 0.0
      %3514 = vmatpush1.xpose.msra.mxu0 %v3511
      %3515 = vmatprep.subr.mxu0 0.0
      %3516 = vmatpush1.xpose.msra.mxu0 0.0
      %3517 = vmatprep.subr.mxu0 0.0
      %3518 = vmatpush1.xpose.msra.mxu0 0.0
      %3519 = vmatprep.subr.mxu0 0.0
      %3520 = vmatpush1.xpose.msra.mxu0 0.0
      %3521 = vmatprep.subr.mxu0 0.0
      %3522 = vmatpush1.xpose.msra.mxu0 0.0
      %3523 = vmatprep.subr.mxu0 0.0
      %3524 = vmatpush1.xpose.msra.mxu0 0.0
      %3525 = vmatprep.subr.mxu0 0.0
      %3526 = vmatpush1.xpose.msra.mxu0 0.0
      %3527 = vmatprep.subr.mxu0 0.0
      %3528 = vmatpush1.xpose.msra.mxu0 0.0
      %3529 = vmatprep.subr.mxu0 0.0
      %3530 = vmatpush1.xpose.msra.mxu0 0.0
      %3531 = vmatprep.subr.mxu0 0.0
      %3532 = vmatpush1.xpose.msra.mxu0 0.0
      %3533 = vmatprep.subr.mxu0 0.0
      %3534 = vmatpush1.xpose.msra.mxu0 0.0
      %3535 = vmatprep.subr.mxu0 0.0
      %3536 = vmatpush1.xpose.msra.mxu0 0.0
      %3537 = vmatprep.subr.mxu0 0.0
      %3538 = vmatpush1.xpose.msra.mxu0 0.0
      %3539 = vmatprep.subr.mxu0 0.0
      %3540 = vmatpush1.xpose.msra.mxu0 0.0
      %3541 = vmatprep.subr.mxu0 0.0
      %3542 = vmatpush1.xpose.msra.mxu0 0.0
      %3543 = vmatprep.subr.mxu0 0.0
      %3544 = vmatpush1.xpose.msra.mxu0 0.0
      %3545 = vmatprep.subr.mxu0 0.0
      %3546 = vmatpush1.xpose.msra.mxu0 0.0
      %3547 = vmatprep.subr.mxu0 0.0
      %3548 = vmatpush1.xpose.msra.mxu0 0.0
      %3549 = vmatprep.subr.mxu0 0.0
      %3550 = vmatpush1.xpose.msra.mxu0 0.0
      %3551 = vmatprep.subr.mxu0 0.0
      %3552 = vmatpush1.xpose.msra.mxu0 0.0
      %3553 = vmatprep.subr.mxu0 0.0
      %3554 = vmatpush1.xpose.msra.mxu0 0.0
      %3555 = vmatprep.subr.mxu0 0.0
      %3556 = vmatpush1.xpose.msra.mxu0 0.0
      %3557 = vmatprep.subr.mxu0 0.0
      %3558 = vmatpush1.xpose.msra.mxu0 0.0
      %3559 = vmatprep.subr.mxu0 0.0
      %3560 = vmatpush1.xpose.msra.mxu0 0.0
      %3561 = vmatprep.subr.mxu0 0.0
      %3562 = vmatpush1.xpose.msra.mxu0 0.0
      %3563 = vmatprep.subr.mxu0 0.0
      %3564 = vmatpush1.xpose.msra.mxu0 0.0
      %3565 = vmatprep.subr.mxu0 0.0
      %3566 = vmatpush1.xpose.msra.mxu0 0.0
      %3567 = vmatprep.subr.mxu0 0.0
      %3568 = vmatpush1.xpose.msra.mxu0 0.0
      %3569 = vmatprep.subr.mxu0 0.0
      %3570 = vmatpush1.xpose.msra.mxu0 0.0
      %3571 = vmatprep.subr.mxu0 0.0
      %3572 = vmatpush1.xpose.msra.mxu0 0.0
      %3573 = vmatprep.subr.mxu0 0.0
      %3574 = vmatpush1.xpose.msra.mxu0 0.0
      %3575 = vmatprep.subr.mxu0 0.0
      %3576 = vmatpush1.xpose.msra.mxu0 0.0
      %3577 = vmatprep.mubr.f32.mxu0 0.0
      %3578 = vmatmul.mubr.f32.gmra.mrb[0].mxu0 %v3509
      %v3579 = vpop.f32.mrb[0].mxu0
      %v3580 = vadd.f32 0.0, %v3579
      %v3581 = vpop.f32.mrb[0].mxu0
      %3582 = vdwg.mxu0
      %v3583 = vmul.f32 %v3580, 0.35355338
      %v3584 = vadd.f32 %v3583, %v953
      %v3585 = vsel %vm1047, %v3584, -inf
      %3586 = vmax.xlane.f32.xlu0 %v3585
      %v3587 = vpop.xlane.xlu0 %3586
      %v3588 = vsub.f32 %v3584, %v3587
      %v3589 = vmul.f32 %v3588, 1.442695
      %v3590 = vpow.pop %v3589
      %v3591 = vsel %vm1047, %v3590, 0.0
      %3592 = vadd.xlane.f32.xlu0 %v3591
      %v3593 = vpop.xlane.xlu0 %3592
      %v3594 = vrcp.pop %v3593
      %v3595 = vmul.f32 %v3590, %v3594
      %3596 = vrot.lane.b32.xlu0 %v3496, 64
      %v3597 = vpop.permute.xlu0 %3596
      %v3600 = vsel %vm1047, %v3595, 0
      %3602 = vmatprep.subr.mxu0 0.0
      %3603 = vmatpush1.msra.mxu0 %v3597
      %3604 = vmatprep.subr.mxu0 0.0
      %3605 = vmatpush1.msra.mxu0 0.0
      %3606 = vmatprep.subr.mxu0 0.0
      %3607 = vmatpush1.msra.mxu0 0.0
      %3608 = vmatprep.subr.mxu0 0.0
      %3609 = vmatpush1.msra.mxu0 0.0
      %3610 = vmatprep.subr.mxu0 0.0
      %3611 = vmatpush1.msra.mxu0 0.0
      %3612 = vmatprep.subr.mxu0 0.0
      %3613 = vmatpush1.msra.mxu0 0.0
      %3614 = vmatprep.subr.mxu0 0.0
      %3615 = vmatpush1.msra.mxu0 0.0
      %3616 = vmatprep.subr.mxu0 0.0
      %3617 = vmatpush1.msra.mxu0 0.0
      %3618 = vmatprep.subr.mxu0 0.0
      %3619 = vmatpush1.msra.mxu0 0.0
      %3620 = vmatprep.subr.mxu0 0.0
      %3621 = vmatpush1.msra.mxu0 0.0
      %3622 = vmatprep.subr.mxu0 0.0
      %3623 = vmatpush1.msra.mxu0 0.0
      %3624 = vmatprep.subr.mxu0 0.0
      %3625 = vmatpush1.msra.mxu0 0.0
      %3626 = vmatprep.subr.mxu0 0.0
      %3627 = vmatpush1.msra.mxu0 0.0
      %3628 = vmatprep.subr.mxu0 0.0
      %3629 = vmatpush1.msra.mxu0 0.0
      %3630 = vmatprep.subr.mxu0 0.0
      %3631 = vmatpush1.msra.mxu0 0.0
      %3632 = vmatprep.subr.mxu0 0.0
      %3633 = vmatpush1.msra.mxu0 0.0
      %3634 = vmatprep.subr.mxu0 0.0
      %3635 = vmatpush1.msra.mxu0 0.0
      %3636 = vmatprep.subr.mxu0 0.0
      %3637 = vmatpush1.msra.mxu0 0.0
      %3638 = vmatprep.subr.mxu0 0.0
      %3639 = vmatpush1.msra.mxu0 0.0
      %3640 = vmatprep.subr.mxu0 0.0
      %3641 = vmatpush1.msra.mxu0 0.0
      %3642 = vmatprep.subr.mxu0 0.0
      %3643 = vmatpush1.msra.mxu0 0.0
      %3644 = vmatprep.subr.mxu0 0.0
      %3645 = vmatpush1.msra.mxu0 0.0
      %3646 = vmatprep.subr.mxu0 0.0
      %3647 = vmatpush1.msra.mxu0 0.0
      %3648 = vmatprep.subr.mxu0 0.0
      %3649 = vmatpush1.msra.mxu0 0.0
      %3650 = vmatprep.subr.mxu0 0.0
      %3651 = vmatpush1.msra.mxu0 0.0
      %3652 = vmatprep.subr.mxu0 0.0
      %3653 = vmatpush1.msra.mxu0 0.0
      %3654 = vmatprep.subr.mxu0 0.0
      %3655 = vmatpush1.msra.mxu0 0.0
      %3656 = vmatprep.subr.mxu0 0.0
      %3657 = vmatpush1.msra.mxu0 0.0
      %3658 = vmatprep.subr.mxu0 0.0
      %3659 = vmatpush1.msra.mxu0 0.0
      %3660 = vmatprep.subr.mxu0 0.0
      %3661 = vmatpush1.msra.mxu0 0.0
      %3662 = vmatprep.subr.mxu0 0.0
      %3663 = vmatpush1.msra.mxu0 0.0
      %3664 = vmatprep.subr.mxu0 0.0
      %3665 = vmatpush1.msra.mxu0 0.0
      %3666 = vmatprep.mubr.f32.mxu0 0.0
      %3667 = vmatmul.mubr.f32.gmra.mrb[0].mxu0 %v3600
      %v3668 = vpop.f32.mrb[0].mxu0
      %v3669 = vadd.f32 0.0, %v3668
      %v3670 = vpop.f32.mrb[0].mxu0
      %3671 = vdwg.mxu0
      %3672 = vrot.lane.b32.xlu0 %v3496, 120
      %v3673 = vpop.permute.xlu0 %3672
      %3674 = vrot.lane.b32.xlu0 %v3496, 88
      %v3675 = vpop.permute.xlu0 %3674
      %v3676 = vsel %vm1047, %v3673, 0
      %v3678 = vsel %vm1047, %v3675, 0
      %3680 = vmatprep.subr.mxu0 0.0
      %3681 = vmatpush1.xpose.msra.mxu0 %v3678
      %3682 = vmatprep.subr.mxu0 0.0
      %3683 = vmatpush1.xpose.msra.mxu0 0.0
      %3684 = vmatprep.subr.mxu0 0.0
      %3685 = vmatpush1.xpose.msra.mxu0 0.0
      %3686 = vmatprep.subr.mxu0 0.0
      %3687 = vmatpush1.xpose.msra.mxu0 0.0
      %3688 = vmatprep.subr.mxu0 0.0
      %3689 = vmatpush1.xpose.msra.mxu0 0.0
      %3690 = vmatprep.subr.mxu0 0.0
      %3691 = vmatpush1.xpose.msra.mxu0 0.0
      %3692 = vmatprep.subr.mxu0 0.0
      %3693 = vmatpush1.xpose.msra.mxu0 0.0
      %3694 = vmatprep.subr.mxu0 0.0
      %3695 = vmatpush1.xpose.msra.mxu0 0.0
      %3696 = vmatprep.subr.mxu0 0.0
      %3697 = vmatpush1.xpose.msra.mxu0 0.0
      %3698 = vmatprep.subr.mxu0 0.0
      %3699 = vmatpush1.xpose.msra.mxu0 0.0
      %3700 = vmatprep.subr.mxu0 0.0
      %3701 = vmatpush1.xpose.msra.mxu0 0.0
      %3702 = vmatprep.subr.mxu0 0.0
      %3703 = vmatpush1.xpose.msra.mxu0 0.0
      %3704 = vmatprep.subr.mxu0 0.0
      %3705 = vmatpush1.xpose.msra.mxu0 0.0
      %3706 = vmatprep.subr.mxu0 0.0
      %3707 = vmatpush1.xpose.msra.mxu0 0.0
      %3708 = vmatprep.subr.mxu0 0.0
      %3709 = vmatpush1.xpose.msra.mxu0 0.0
      %3710 = vmatprep.subr.mxu0 0.0
      %3711 = vmatpush1.xpose.msra.mxu0 0.0
      %3712 = vmatprep.subr.mxu0 0.0
      %3713 = vmatpush1.xpose.msra.mxu0 0.0
      %3714 = vmatprep.subr.mxu0 0.0
      %3715 = vmatpush1.xpose.msra.mxu0 0.0
      %3716 = vmatprep.subr.mxu0 0.0
      %3717 = vmatpush1.xpose.msra.mxu0 0.0
      %3718 = vmatprep.subr.mxu0 0.0
      %3719 = vmatpush1.xpose.msra.mxu0 0.0
      %3720 = vmatprep.subr.mxu0 0.0
      %3721 = vmatpush1.xpose.msra.mxu0 0.0
      %3722 = vmatprep.subr.mxu0 0.0
      %3723 = vmatpush1.xpose.msra.mxu0 0.0
      %3724 = vmatprep.subr.mxu0 0.0
      %3725 = vmatpush1.xpose.msra.mxu0 0.0
      %3726 = vmatprep.subr.mxu0 0.0
      %3727 = vmatpush1.xpose.msra.mxu0 0.0
      %3728 = vmatprep.subr.mxu0 0.0
      %3729 = vmatpush1.xpose.msra.mxu0 0.0
      %3730 = vmatprep.subr.mxu0 0.0
      %3731 = vmatpush1.xpose.msra.mxu0 0.0
      %3732 = vmatprep.subr.mxu0 0.0
      %3733 = vmatpush1.xpose.msra.mxu0 0.0
      %3734 = vmatprep.subr.mxu0 0.0
      %3735 = vmatpush1.xpose.msra.mxu0 0.0
      %3736 = vmatprep.subr.mxu0 0.0
      %3737 = vmatpush1.xpose.msra.mxu0 0.0
      %3738 = vmatprep.subr.mxu0 0.0
      %3739 = vmatpush1.xpose.msra.mxu0 0.0
      %3740 = vmatprep.subr.mxu0 0.0
      %3741 = vmatpush1.xpose.msra.mxu0 0.0
      %3742 = vmatprep.subr.mxu0 0.0
      %3743 = vmatpush1.xpose.msra.mxu0 0.0
      %3744 = vmatprep.mubr.f32.mxu0 0.0
      %3745 = vmatmul.mubr.f32.gmra.mrb[0].mxu0 %v3676
      %v3746 = vpop.f32.mrb[0].mxu0
      %v3747 = vadd.f32 0.0, %v3746
      %v3748 = vpop.f32.mrb[0].mxu0
      %3749 = vdwg.mxu0
      %v3750 = vmul.f32 %v3747, 0.35355338
      %v3751 = vadd.f32 %v3750, %v953
      %v3752 = vsel %vm1047, %v3751, -inf
      %3753 = vmax.xlane.f32.xlu0 %v3752
      %v3754 = vpop.xlane.xlu0 %3753
      %v3755 = vsub.f32 %v3751, %v3754
      %v3756 = vmul.f32 %v3755, 1.442695
      %v3757 = vpow.pop %v3756
      %v3758 = vsel %vm1047, %v3757, 0.0
      %3759 = vadd.xlane.f32.xlu0 %v3758
      %v3760 = vpop.xlane.xlu0 %3759
      %v3761 = vrcp.pop %v3760
      %v3762 = vmul.f32 %v3757, %v3761
      %3763 = vrot.lane.b32.xlu0 %v3496, 56
      %v3764 = vpop.permute.xlu0 %3763
      %v3767 = vsel %vm1047, %v3762, 0
      %3769 = vmatprep.subr.mxu0 0.0
      %3770 = vmatpush1.msra.mxu0 %v3764
      %3771 = vmatprep.subr.mxu0 0.0
      %3772 = vmatpush1.msra.mxu0 0.0
      %3773 = vmatprep.subr.mxu0 0.0
      %3774 = vmatpush1.msra.mxu0 0.0
      %3775 = vmatprep.subr.mxu0 0.0
      %3776 = vmatpush1.msra.mxu0 0.0
      %3777 = vmatprep.subr.mxu0 0.0
      %3778 = vmatpush1.msra.mxu0 0.0
      %3779 = vmatprep.subr.mxu0 0.0
      %3780 = vmatpush1.msra.mxu0 0.0
      %3781 = vmatprep.subr.mxu0 0.0
      %3782 = vmatpush1.msra.mxu0 0.0
      %3783 = vmatprep.subr.mxu0 0.0
      %3784 = vmatpush1.msra.mxu0 0.0
      %3785 = vmatprep.subr.mxu0 0.0
      %3786 = vmatpush1.msra.mxu0 0.0
      %3787 = vmatprep.subr.mxu0 0.0
      %3788 = vmatpush1.msra.mxu0 0.0
      %3789 = vmatprep.subr.mxu0 0.0
      %3790 = vmatpush1.msra.mxu0 0.0
      %3791 = vmatprep.subr.mxu0 0.0
      %3792 = vmatpush1.msra.mxu0 0.0
      %3793 = vmatprep.subr.mxu0 0.0
      %3794 = vmatpush1.msra.mxu0 0.0
      %3795 = vmatprep.subr.mxu0 0.0
      %3796 = vmatpush1.msra.mxu0 0.0
      %3797 = vmatprep.subr.mxu0 0.0
      %3798 = vmatpush1.msra.mxu0 0.0
      %3799 = vmatprep.subr.mxu0 0.0
      %3800 = vmatpush1.msra.mxu0 0.0
      %3801 = vmatprep.subr.mxu0 0.0
      %3802 = vmatpush1.msra.mxu0 0.0
      %3803 = vmatprep.subr.mxu0 0.0
      %3804 = vmatpush1.msra.mxu0 0.0
      %3805 = vmatprep.subr.mxu0 0.0
      %3806 = vmatpush1.msra.mxu0 0.0
      %3807 = vmatprep.subr.mxu0 0.0
      %3808 = vmatpush1.msra.mxu0 0.0
      %3809 = vmatprep.subr.mxu0 0.0
      %3810 = vmatpush1.msra.mxu0 0.0
      %3811 = vmatprep.subr.mxu0 0.0
      %3812 = vmatpush1.msra.mxu0 0.0
      %3813 = vmatprep.subr.mxu0 0.0
      %3814 = vmatpush1.msra.mxu0 0.0
      %3815 = vmatprep.subr.mxu0 0.0
      %3816 = vmatpush1.msra.mxu0 0.0
      %3817 = vmatprep.subr.mxu0 0.0
      %3818 = vmatpush1.msra.mxu0 0.0
      %3819 = vmatprep.subr.mxu0 0.0
      %3820 = vmatpush1.msra.mxu0 0.0
      %3821 = vmatprep.subr.mxu0 0.0
      %3822 = vmatpush1.msra.mxu0 0.0
      %3823 = vmatprep.subr.mxu0 0.0
      %3824 = vmatpush1.msra.mxu0 0.0
      %3825 = vmatprep.subr.mxu0 0.0
      %3826 = vmatpush1.msra.mxu0 0.0
      %3827 = vmatprep.subr.mxu0 0.0
      %3828 = vmatpush1.msra.mxu0 0.0
      %3829 = vmatprep.subr.mxu0 0.0
      %3830 = vmatpush1.msra.mxu0 0.0
      %3831 = vmatprep.subr.mxu0 0.0
      %3832 = vmatpush1.msra.mxu0 0.0
      %3833 = vmatprep.mubr.f32.mxu0 0.0
      %3834 = vmatmul.mubr.f32.gmra.mrb[0].mxu0 %v3767
      %v3835 = vpop.f32.mrb[0].mxu0
      %v3836 = vadd.f32 0.0, %v3835
      %v3837 = vpop.f32.mrb[0].mxu0
      %3838 = vdwg.mxu0
      %v3840 = vsel %vm1047, %v3836, 0
      %3842 = vmatprep.subr.mxu0 0.0
      %3843 = vmatpush1.msra.mxu0 %v3501
      %3844 = vmatprep.subr.mxu0 0.0
      %3845 = vmatpush1.msra.mxu0 0.0
      %3846 = vmatprep.subr.mxu0 0.0
      %3847 = vmatpush1.msra.mxu0 0.0
      %3848 = vmatprep.subr.mxu0 0.0
      %3849 = vmatpush1.msra.mxu0 0.0
      %3850 = vmatprep.subr.mxu0 0.0
      %3851 = vmatpush1.msra.mxu0 0.0
      %3852 = vmatprep.subr.mxu0 0.0
      %3853 = vmatpush1.msra.mxu0 0.0
      %3854 = vmatprep.subr.mxu0 0.0
      %3855 = vmatpush1.msra.mxu0 0.0
      %3856 = vmatprep.subr.mxu0 0.0
      %3857 = vmatpush1.msra.mxu0 0.0
      %3858 = vmatprep.subr.mxu0 0.0
      %3859 = vmatpush1.msra.mxu0 0.0
      %3860 = vmatprep.subr.mxu0 0.0
      %3861 = vmatpush1.msra.mxu0 0.0
      %3862 = vmatprep.subr.mxu0 0.0
      %3863 = vmatpush1.msra.mxu0 0.0
      %3864 = vmatprep.subr.mxu0 0.0
      %3865 = vmatpush1.msra.mxu0 0.0
      %3866 = vmatprep.subr.mxu0 0.0
      %3867 = vmatpush1.msra.mxu0 0.0
      %3868 = vmatprep.subr.mxu0 0.0
      %3869 = vmatpush1.msra.mxu0 0.0
      %3870 = vmatprep.subr.mxu0 0.0
      %3871 = vmatpush1.msra.mxu0 0.0
      %3872 = vmatprep.subr.mxu0 0.0
      %3873 = vmatpush1.msra.mxu0 0.0
      %3874 = vmatprep.subr.mxu0 0.0
      %3875 = vmatpush1.msra.mxu0 0.0
      %3876 = vmatprep.subr.mxu0 0.0
      %3877 = vmatpush1.msra.mxu0 0.0
      %3878 = vmatprep.subr.mxu0 0.0
      %3879 = vmatpush1.msra.mxu0 0.0
      %3880 = vmatprep.subr.mxu0 0.0
      %3881 = vmatpush1.msra.mxu0 0.0
      %3882 = vmatprep.subr.mxu0 0.0
      %3883 = vmatpush1.msra.mxu0 0.0
      %3884 = vmatprep.subr.mxu0 0.0
      %3885 = vmatpush1.msra.mxu0 0.0
      %3886 = vmatprep.subr.mxu0 0.0
      %3887 = vmatpush1.msra.mxu0 0.0
      %3888 = vmatprep.subr.mxu0 0.0
      %3889 = vmatpush1.msra.mxu0 0.0
      %3890 = vmatprep.subr.mxu0 0.0
      %3891 = vmatpush1.msra.mxu0 0.0
      %3892 = vmatprep.subr.mxu0 0.0
      %3893 = vmatpush1.msra.mxu0 0.0
      %3894 = vmatprep.subr.mxu0 0.0
      %3895 = vmatpush1.msra.mxu0 0.0
      %3896 = vmatprep.subr.mxu0 0.0
      %3897 = vmatpush1.msra.mxu0 0.0
      %3898 = vmatprep.subr.mxu0 0.0
      %3899 = vmatpush1.msra.mxu0 0.0
      %3900 = vmatprep.subr.mxu0 0.0
      %3901 = vmatpush1.msra.mxu0 0.0
      %3902 = vmatprep.subr.mxu0 0.0
      %3903 = vmatpush1.msra.mxu0 0.0
      %3904 = vmatprep.subr.mxu0 0.0
      %3905 = vmatpush1.msra.mxu0 0.0
      %3906 = vmatprep.mubr.f32.mxu0 0.0
      %3907 = vmatmul.mubr.f32.gmra.mrb[0].mxu0 %v3840
      %v3908 = vpop.f32.mrb[0].mxu0
      %v3909 = vadd.f32 0.0, %v3908
      %v3910 = vpop.f32.mrb[0].mxu0
      %3911 = vdwg.mxu0
      %v3913 = vsel %vm1047, %v3669, 0
      %3915 = vmatprep.subr.mxu0 0.0
      %3916 = vmatpush1.msra.mxu0 %v3500
      %3917 = vmatprep.subr.mxu0 0.0
      %3918 = vmatpush1.msra.mxu0 0.0
      %3919 = vmatprep.subr.mxu0 0.0
      %3920 = vmatpush1.msra.mxu0 0.0
      %3921 = vmatprep.subr.mxu0 0.0
      %3922 = vmatpush1.msra.mxu0 0.0
      %3923 = vmatprep.subr.mxu0 0.0
      %3924 = vmatpush1.msra.mxu0 0.0
      %3925 = vmatprep.subr.mxu0 0.0
      %3926 = vmatpush1.msra.mxu0 0.0
      %3927 = vmatprep.subr.mxu0 0.0
      %3928 = vmatpush1.msra.mxu0 0.0
      %3929 = vmatprep.subr.mxu0 0.0
      %3930 = vmatpush1.msra.mxu0 0.0
      %3931 = vmatprep.subr.mxu0 0.0
      %3932 = vmatpush1.msra.mxu0 0.0
      %3933 = vmatprep.subr.mxu0 0.0
      %3934 = vmatpush1.msra.mxu0 0.0
      %3935 = vmatprep.subr.mxu0 0.0
      %3936 = vmatpush1.msra.mxu0 0.0
      %3937 = vmatprep.subr.mxu0 0.0
      %3938 = vmatpush1.msra.mxu0 0.0
      %3939 = vmatprep.subr.mxu0 0.0
      %3940 = vmatpush1.msra.mxu0 0.0
      %3941 = vmatprep.subr.mxu0 0.0
      %3942 = vmatpush1.msra.mxu0 0.0
      %3943 = vmatprep.subr.mxu0 0.0
      %3944 = vmatpush1.msra.mxu0 0.0
      %3945 = vmatprep.subr.mxu0 0.0
      %3946 = vmatpush1.msra.mxu0 0.0
      %3947 = vmatprep.subr.mxu0 0.0
      %3948 = vmatpush1.msra.mxu0 0.0
      %3949 = vmatprep.subr.mxu0 0.0
      %3950 = vmatpush1.msra.mxu0 0.0
      %3951 = vmatprep.subr.mxu0 0.0
      %3952 = vmatpush1.msra.mxu0 0.0
      %3953 = vmatprep.subr.mxu0 0.0
      %3954 = vmatpush1.msra.mxu0 0.0
      %3955 = vmatprep.subr.mxu0 0.0
      %3956 = vmatpush1.msra.mxu0 0.0
      %3957 = vmatprep.subr.mxu0 0.0
      %3958 = vmatpush1.msra.mxu0 0.0
      %3959 = vmatprep.subr.mxu0 0.0
      %3960 = vmatpush1.msra.mxu0 0.0
      %3961 = vmatprep.subr.mxu0 0.0
      %3962 = vmatpush1.msra.mxu0 0.0
      %3963 = vmatprep.subr.mxu0 0.0
      %3964 = vmatpush1.msra.mxu0 0.0
      %3965 = vmatprep.subr.mxu0 0.0
      %3966 = vmatpush1.msra.mxu0 0.0
      %3967 = vmatprep.subr.mxu0 0.0
      %3968 = vmatpush1.msra.mxu0 0.0
      %3969 = vmatprep.subr.mxu0 0.0
      %3970 = vmatpush1.msra.mxu0 0.0
      %3971 = vmatprep.subr.mxu0 0.0
      %3972 = vmatpush1.msra.mxu0 0.0
      %3973 = vmatprep.subr.mxu0 0.0
      %3974 = vmatpush1.msra.mxu0 0.0
      %3975 = vmatprep.subr.mxu0 0.0
      %3976 = vmatpush1.msra.mxu0 0.0
      %3977 = vmatprep.subr.mxu0 0.0
      %3978 = vmatpush1.msra.mxu0 0.0
      %3979 = vmatprep.mubr.f32.mxu0 0.0
      %3980 = vmatmul.mubr.f32.gmra.mrb[0].mxu0 %v3913
      %v3981 = vpop.f32.mrb[0].mxu0
      %v3982 = vadd.f32 %v3909, %v3981
      %v3983 = vpop.f32.mrb[0].mxu0
      %3984 = vdwg.mxu0
      %3985 = vrot.lane.b32.xlu0 %v3496, 112
      %v3986 = vpop.permute.xlu0 %3985
      %3987 = vrot.lane.b32.xlu0 %v3496, 80
      %v3988 = vpop.permute.xlu0 %3987
      %v3989 = vsel %vm1047, %v3986, 0
      %v3991 = vsel %vm1047, %v3988, 0
      %3993 = vmatprep.subr.mxu0 0.0
      %3994 = vmatpush1.xpose.msra.mxu0 %v3991
      %3995 = vmatprep.subr.mxu0 0.0
      %3996 = vmatpush1.xpose.msra.mxu0 0.0
      %3997 = vmatprep.subr.mxu0 0.0
      %3998 = vmatpush1.xpose.msra.mxu0 0.0
      %3999 = vmatprep.subr.mxu0 0.0
      %4000 = vmatpush1.xpose.msra.mxu0 0.0
      %4001 = vmatprep.subr.mxu0 0.0
      %4002 = vmatpush1.xpose.msra.mxu0 0.0
      %4003 = vmatprep.subr.mxu0 0.0
      %4004 = vmatpush1.xpose.msra.mxu0 0.0
      %4005 = vmatprep.subr.mxu0 0.0
      %4006 = vmatpush1.xpose.msra.mxu0 0.0
      %4007 = vmatprep.subr.mxu0 0.0
      %4008 = vmatpush1.xpose.msra.mxu0 0.0
      %4009 = vmatprep.subr.mxu0 0.0
      %4010 = vmatpush1.xpose.msra.mxu0 0.0
      %4011 = vmatprep.subr.mxu0 0.0
      %4012 = vmatpush1.xpose.msra.mxu0 0.0
      %4013 = vmatprep.subr.mxu0 0.0
      %4014 = vmatpush1.xpose.msra.mxu0 0.0
      %4015 = vmatprep.subr.mxu0 0.0
      %4016 = vmatpush1.xpose.msra.mxu0 0.0
      %4017 = vmatprep.subr.mxu0 0.0
      %4018 = vmatpush1.xpose.msra.mxu0 0.0
      %4019 = vmatprep.subr.mxu0 0.0
      %4020 = vmatpush1.xpose.msra.mxu0 0.0
      %4021 = vmatprep.subr.mxu0 0.0
      %4022 = vmatpush1.xpose.msra.mxu0 0.0
      %4023 = vmatprep.subr.mxu0 0.0
      %4024 = vmatpush1.xpose.msra.mxu0 0.0
      %4025 = vmatprep.subr.mxu0 0.0
      %4026 = vmatpush1.xpose.msra.mxu0 0.0
      %4027 = vmatprep.subr.mxu0 0.0
      %4028 = vmatpush1.xpose.msra.mxu0 0.0
      %4029 = vmatprep.subr.mxu0 0.0
      %4030 = vmatpush1.xpose.msra.mxu0 0.0
      %4031 = vmatprep.subr.mxu0 0.0
      %4032 = vmatpush1.xpose.msra.mxu0 0.0
      %4033 = vmatprep.subr.mxu0 0.0
      %4034 = vmatpush1.xpose.msra.mxu0 0.0
      %4035 = vmatprep.subr.mxu0 0.0
      %4036 = vmatpush1.xpose.msra.mxu0 0.0
      %4037 = vmatprep.subr.mxu0 0.0
      %4038 = vmatpush1.xpose.msra.mxu0 0.0
      %4039 = vmatprep.subr.mxu0 0.0
      %4040 = vmatpush1.xpose.msra.mxu0 0.0
      %4041 = vmatprep.subr.mxu0 0.0
      %4042 = vmatpush1.xpose.msra.mxu0 0.0
      %4043 = vmatprep.subr.mxu0 0.0
      %4044 = vmatpush1.xpose.msra.mxu0 0.0
      %4045 = vmatprep.subr.mxu0 0.0
      %4046 = vmatpush1.xpose.msra.mxu0 0.0
      %4047 = vmatprep.subr.mxu0 0.0
      %4048 = vmatpush1.xpose.msra.mxu0 0.0
      %4049 = vmatprep.subr.mxu0 0.0
      %4050 = vmatpush1.xpose.msra.mxu0 0.0
      %4051 = vmatprep.subr.mxu0 0.0
      %4052 = vmatpush1.xpose.msra.mxu0 0.0
      %4053 = vmatprep.subr.mxu0 0.0
      %4054 = vmatpush1.xpose.msra.mxu0 0.0
      %4055 = vmatprep.subr.mxu0 0.0
      %4056 = vmatpush1.xpose.msra.mxu0 0.0
      %4057 = vmatprep.mubr.f32.mxu0 0.0
      %4058 = vmatmul.mubr.f32.gmra.mrb[0].mxu0 %v3989
      %v4059 = vpop.f32.mrb[0].mxu0
      %v4060 = vadd.f32 0.0, %v4059
      %v4061 = vpop.f32.mrb[0].mxu0
      %4062 = vdwg.mxu0
      %v4063 = vmul.f32 %v4060, 0.35355338
      %v4064 = vadd.f32 %v4063, %v953
      %v4065 = vsel %vm1047, %v4064, -inf
      %4066 = vmax.xlane.f32.xlu0 %v4065
      %v4067 = vpop.xlane.xlu0 %4066
      %v4068 = vsub.f32 %v4064, %v4067
      %v4069 = vmul.f32 %v4068, 1.442695
      %v4070 = vpow.pop %v4069
      %v4071 = vsel %vm1047, %v4070, 0.0
      %4072 = vadd.xlane.f32.xlu0 %v4071
      %v4073 = vpop.xlane.xlu0 %4072
      %v4074 = vrcp.pop %v4073
      %v4075 = vmul.f32 %v4070, %v4074
      %4076 = vrot.lane.b32.xlu0 %v3496, 48
      %v4077 = vpop.permute.xlu0 %4076
      %v4080 = vsel %vm1047, %v4075, 0
      %4082 = vmatprep.subr.mxu0 0.0
      %4083 = vmatpush1.msra.mxu0 %v4077
      %4084 = vmatprep.subr.mxu0 0.0
      %4085 = vmatpush1.msra.mxu0 0.0
      %4086 = vmatprep.subr.mxu0 0.0
      %4087 = vmatpush1.msra.mxu0 0.0
      %4088 = vmatprep.subr.mxu0 0.0
      %4089 = vmatpush1.msra.mxu0 0.0
      %4090 = vmatprep.subr.mxu0 0.0
      %4091 = vmatpush1.msra.mxu0 0.0
      %4092 = vmatprep.subr.mxu0 0.0
      %4093 = vmatpush1.msra.mxu0 0.0
      %4094 = vmatprep.subr.mxu0 0.0
      %4095 = vmatpush1.msra.mxu0 0.0
      %4096 = vmatprep.subr.mxu0 0.0
      %4097 = vmatpush1.msra.mxu0 0.0
      %4098 = vmatprep.subr.mxu0 0.0
      %4099 = vmatpush1.msra.mxu0 0.0
      %4100 = vmatprep.subr.mxu0 0.0
      %4101 = vmatpush1.msra.mxu0 0.0
      %4102 = vmatprep.subr.mxu0 0.0
      %4103 = vmatpush1.msra.mxu0 0.0
      %4104 = vmatprep.subr.mxu0 0.0
      %4105 = vmatpush1.msra.mxu0 0.0
      %4106 = vmatprep.subr.mxu0 0.0
      %4107 = vmatpush1.msra.mxu0 0.0
      %4108 = vmatprep.subr.mxu0 0.0
      %4109 = vmatpush1.msra.mxu0 0.0
      %4110 = vmatprep.subr.mxu0 0.0
      %4111 = vmatpush1.msra.mxu0 0.0
      %4112 = vmatprep.subr.mxu0 0.0
      %4113 = vmatpush1.msra.mxu0 0.0
      %4114 = vmatprep.subr.mxu0 0.0
      %4115 = vmatpush1.msra.mxu0 0.0
      %4116 = vmatprep.subr.mxu0 0.0
      %4117 = vmatpush1.msra.mxu0 0.0
      %4118 = vmatprep.subr.mxu0 0.0
      %4119 = vmatpush1.msra.mxu0 0.0
      %4120 = vmatprep.subr.mxu0 0.0
      %4121 = vmatpush1.msra.mxu0 0.0
      %4122 = vmatprep.subr.mxu0 0.0
      %4123 = vmatpush1.msra.mxu0 0.0
      %4124 = vmatprep.subr.mxu0 0.0
      %4125 = vmatpush1.msra.mxu0 0.0
      %4126 = vmatprep.subr.mxu0 0.0
      %4127 = vmatpush1.msra.mxu0 0.0
      %4128 = vmatprep.subr.mxu0 0.0
      %4129 = vmatpush1.msra.mxu0 0.0
      %4130 = vmatprep.subr.mxu0 0.0
      %4131 = vmatpush1.msra.mxu0 0.0
      %4132 = vmatprep.subr.mxu0 0.0
      %4133 = vmatpush1.msra.mxu0 0.0
      %4134 = vmatprep.subr.mxu0 0.0
      %4135 = vmatpush1.msra.mxu0 0.0
      %4136 = vmatprep.subr.mxu0 0.0
      %4137 = vmatpush1.msra.mxu0 0.0
      %4138 = vmatprep.subr.mxu0 0.0
      %4139 = vmatpush1.msra.mxu0 0.0
      %4140 = vmatprep.subr.mxu0 0.0
      %4141 = vmatpush1.msra.mxu0 0.0
      %4142 = vmatprep.subr.mxu0 0.0
      %4143 = vmatpush1.msra.mxu0 0.0
      %4144 = vmatprep.subr.mxu0 0.0
      %4145 = vmatpush1.msra.mxu0 0.0
      %4146 = vmatprep.mubr.f32.mxu0 0.0
      %4147 = vmatmul.mubr.f32.gmra.mrb[0].mxu0 %v4080
      %v4148 = vpop.f32.mrb[0].mxu0
      %v4149 = vadd.f32 0.0, %v4148
      %v4150 = vpop.f32.mrb[0].mxu0
      %4151 = vdwg.mxu0
      %v4153 = vsel %vm1047, %v4149, 0
      %4155 = vmatprep.subr.mxu0 0.0
      %4156 = vmatpush1.msra.mxu0 %v3502
      %4157 = vmatprep.subr.mxu0 0.0
      %4158 = vmatpush1.msra.mxu0 0.0
      %4159 = vmatprep.subr.mxu0 0.0
      %4160 = vmatpush1.msra.mxu0 0.0
      %4161 = vmatprep.subr.mxu0 0.0
      %4162 = vmatpush1.msra.mxu0 0.0
      %4163 = vmatprep.subr.mxu0 0.0
      %4164 = vmatpush1.msra.mxu0 0.0
      %4165 = vmatprep.subr.mxu0 0.0
      %4166 = vmatpush1.msra.mxu0 0.0
      %4167 = vmatprep.subr.mxu0 0.0
      %4168 = vmatpush1.msra.mxu0 0.0
      %4169 = vmatprep.subr.mxu0 0.0
      %4170 = vmatpush1.msra.mxu0 0.0
      %4171 = vmatprep.subr.mxu0 0.0
      %4172 = vmatpush1.msra.mxu0 0.0
      %4173 = vmatprep.subr.mxu0 0.0
      %4174 = vmatpush1.msra.mxu0 0.0
      %4175 = vmatprep.subr.mxu0 0.0
      %4176 = vmatpush1.msra.mxu0 0.0
      %4177 = vmatprep.subr.mxu0 0.0
      %4178 = vmatpush1.msra.mxu0 0.0
      %4179 = vmatprep.subr.mxu0 0.0
      %4180 = vmatpush1.msra.mxu0 0.0
      %4181 = vmatprep.subr.mxu0 0.0
      %4182 = vmatpush1.msra.mxu0 0.0
      %4183 = vmatprep.subr.mxu0 0.0
      %4184 = vmatpush1.msra.mxu0 0.0
      %4185 = vmatprep.subr.mxu0 0.0
      %4186 = vmatpush1.msra.mxu0 0.0
      %4187 = vmatprep.subr.mxu0 0.0
      %4188 = vmatpush1.msra.mxu0 0.0
      %4189 = vmatprep.subr.mxu0 0.0
      %4190 = vmatpush1.msra.mxu0 0.0
      %4191 = vmatprep.subr.mxu0 0.0
      %4192 = vmatpush1.msra.mxu0 0.0
      %4193 = vmatprep.subr.mxu0 0.0
      %4194 = vmatpush1.msra.mxu0 0.0
      %4195 = vmatprep.subr.mxu0 0.0
      %4196 = vmatpush1.msra.mxu0 0.0
      %4197 = vmatprep.subr.mxu0 0.0
      %4198 = vmatpush1.msra.mxu0 0.0
      %4199 = vmatprep.subr.mxu0 0.0
      %4200 = vmatpush1.msra.mxu0 0.0
      %4201 = vmatprep.subr.mxu0 0.0
      %4202 = vmatpush1.msra.mxu0 0.0
      %4203 = vmatprep.subr.mxu0 0.0
      %4204 = vmatpush1.msra.mxu0 0.0
      %4205 = vmatprep.subr.mxu0 0.0
      %4206 = vmatpush1.msra.mxu0 0.0
      %4207 = vmatprep.subr.mxu0 0.0
      %4208 = vmatpush1.msra.mxu0 0.0
      %4209 = vmatprep.subr.mxu0 0.0
      %4210 = vmatpush1.msra.mxu0 0.0
      %4211 = vmatprep.subr.mxu0 0.0
      %4212 = vmatpush1.msra.mxu0 0.0
      %4213 = vmatprep.subr.mxu0 0.0
      %4214 = vmatpush1.msra.mxu0 0.0
      %4215 = vmatprep.subr.mxu0 0.0
      %4216 = vmatpush1.msra.mxu0 0.0
      %4217 = vmatprep.subr.mxu0 0.0
      %4218 = vmatpush1.msra.mxu0 0.0
      %4219 = vmatprep.mubr.f32.mxu0 0.0
      %4220 = vmatmul.mubr.f32.gmra.mrb[0].mxu0 %v4153
      %v4221 = vpop.f32.mrb[0].mxu0
      %v4222 = vadd.f32 0.0, %v4221
      %v4223 = vpop.f32.mrb[0].mxu0
      %4224 = vdwg.mxu0
      %v4225 = vadd.f32 %v3982, %v4222
      %4226 = vrot.lane.b32.xlu0 %v3496, 104
      %v4227 = vpop.permute.xlu0 %4226
      %4228 = vrot.lane.b32.xlu0 %v3496, 72
      %v4229 = vpop.permute.xlu0 %4228
      %v4230 = vsel %vm1047, %v4227, 0
      %v4232 = vsel %vm1047, %v4229, 0
      %4234 = vmatprep.subr.mxu0 0.0
      %4235 = vmatpush1.xpose.msra.mxu0 %v4232
      %4236 = vmatprep.subr.mxu0 0.0
      %4237 = vmatpush1.xpose.msra.mxu0 0.0
      %4238 = vmatprep.subr.mxu0 0.0
      %4239 = vmatpush1.xpose.msra.mxu0 0.0
      %4240 = vmatprep.subr.mxu0 0.0
      %4241 = vmatpush1.xpose.msra.mxu0 0.0
      %4242 = vmatprep.subr.mxu0 0.0
      %4243 = vmatpush1.xpose.msra.mxu0 0.0
      %4244 = vmatprep.subr.mxu0 0.0
      %4245 = vmatpush1.xpose.msra.mxu0 0.0
      %4246 = vmatprep.subr.mxu0 0.0
      %4247 = vmatpush1.xpose.msra.mxu0 0.0
      %4248 = vmatprep.subr.mxu0 0.0
      %4249 = vmatpush1.xpose.msra.mxu0 0.0
      %4250 = vmatprep.subr.mxu0 0.0
      %4251 = vmatpush1.xpose.msra.mxu0 0.0
      %4252 = vmatprep.subr.mxu0 0.0
      %4253 = vmatpush1.xpose.msra.mxu0 0.0
      %4254 = vmatprep.subr.mxu0 0.0
      %4255 = vmatpush1.xpose.msra.mxu0 0.0
      %4256 = vmatprep.subr.mxu0 0.0
      %4257 = vmatpush1.xpose.msra.mxu0 0.0
      %4258 = vmatprep.subr.mxu0 0.0
      %4259 = vmatpush1.xpose.msra.mxu0 0.0
      %4260 = vmatprep.subr.mxu0 0.0
      %4261 = vmatpush1.xpose.msra.mxu0 0.0
      %4262 = vmatprep.subr.mxu0 0.0
      %4263 = vmatpush1.xpose.msra.mxu0 0.0
      %4264 = vmatprep.subr.mxu0 0.0
      %4265 = vmatpush1.xpose.msra.mxu0 0.0
      %4266 = vmatprep.subr.mxu0 0.0
      %4267 = vmatpush1.xpose.msra.mxu0 0.0
      %4268 = vmatprep.subr.mxu0 0.0
      %4269 = vmatpush1.xpose.msra.mxu0 0.0
      %4270 = vmatprep.subr.mxu0 0.0
      %4271 = vmatpush1.xpose.msra.mxu0 0.0
      %4272 = vmatprep.subr.mxu0 0.0
      %4273 = vmatpush1.xpose.msra.mxu0 0.0
      %4274 = vmatprep.subr.mxu0 0.0
      %4275 = vmatpush1.xpose.msra.mxu0 0.0
      %4276 = vmatprep.subr.mxu0 0.0
      %4277 = vmatpush1.xpose.msra.mxu0 0.0
      %4278 = vmatprep.subr.mxu0 0.0
      %4279 = vmatpush1.xpose.msra.mxu0 0.0
      %4280 = vmatprep.subr.mxu0 0.0
      %4281 = vmatpush1.xpose.msra.mxu0 0.0
      %4282 = vmatprep.subr.mxu0 0.0
      %4283 = vmatpush1.xpose.msra.mxu0 0.0
      %4284 = vmatprep.subr.mxu0 0.0
      %4285 = vmatpush1.xpose.msra.mxu0 0.0
      %4286 = vmatprep.subr.mxu0 0.0
      %4287 = vmatpush1.xpose.msra.mxu0 0.0
      %4288 = vmatprep.subr.mxu0 0.0
      %4289 = vmatpush1.xpose.msra.mxu0 0.0
      %4290 = vmatprep.subr.mxu0 0.0
      %4291 = vmatpush1.xpose.msra.mxu0 0.0
      %4292 = vmatprep.subr.mxu0 0.0
      %4293 = vmatpush1.xpose.msra.mxu0 0.0
      %4294 = vmatprep.subr.mxu0 0.0
      %4295 = vmatpush1.xpose.msra.mxu0 0.0
      %4296 = vmatprep.subr.mxu0 0.0
      %4297 = vmatpush1.xpose.msra.mxu0 0.0
      %4298 = vmatprep.mubr.f32.mxu0 0.0
      %4299 = vmatmul.mubr.f32.gmra.mrb[0].mxu0 %v4230
      %v4300 = vpop.f32.mrb[0].mxu0
      %v4301 = vadd.f32 0.0, %v4300
      %v4302 = vpop.f32.mrb[0].mxu0
      %4303 = vdwg.mxu0
      %v4304 = vmul.f32 %v4301, 0.35355338
      %v4305 = vadd.f32 %v4304, %v953
      %v4306 = vsel %vm1047, %v4305, -inf
      %4307 = vmax.xlane.f32.xlu0 %v4306
      %v4308 = vpop.xlane.xlu0 %4307
      %v4309 = vsub.f32 %v4305, %v4308
      %v4310 = vmul.f32 %v4309, 1.442695
      %v4311 = vpow.pop %v4310
      %v4312 = vsel %vm1047, %v4311, 0.0
      %4313 = vadd.xlane.f32.xlu0 %v4312
      %v4314 = vpop.xlane.xlu0 %4313
      %v4315 = vrcp.pop %v4314
      %v4316 = vmul.f32 %v4311, %v4315
      %4317 = vrot.lane.b32.xlu0 %v3496, 40
      %v4318 = vpop.permute.xlu0 %4317
      %v4321 = vsel %vm1047, %v4316, 0
      %4323 = vmatprep.subr.mxu0 0.0
      %4324 = vmatpush1.msra.mxu0 %v4318
      %4325 = vmatprep.subr.mxu0 0.0
      %4326 = vmatpush1.msra.mxu0 0.0
      %4327 = vmatprep.subr.mxu0 0.0
      %4328 = vmatpush1.msra.mxu0 0.0
      %4329 = vmatprep.subr.mxu0 0.0
      %4330 = vmatpush1.msra.mxu0 0.0
      %4331 = vmatprep.subr.mxu0 0.0
      %4332 = vmatpush1.msra.mxu0 0.0
      %4333 = vmatprep.subr.mxu0 0.0
      %4334 = vmatpush1.msra.mxu0 0.0
      %4335 = vmatprep.subr.mxu0 0.0
      %4336 = vmatpush1.msra.mxu0 0.0
      %4337 = vmatprep.subr.mxu0 0.0
      %4338 = vmatpush1.msra.mxu0 0.0
      %4339 = vmatprep.subr.mxu0 0.0
      %4340 = vmatpush1.msra.mxu0 0.0
      %4341 = vmatprep.subr.mxu0 0.0
      %4342 = vmatpush1.msra.mxu0 0.0
      %4343 = vmatprep.subr.mxu0 0.0
      %4344 = vmatpush1.msra.mxu0 0.0
      %4345 = vmatprep.subr.mxu0 0.0
      %4346 = vmatpush1.msra.mxu0 0.0
      %4347 = vmatprep.subr.mxu0 0.0
      %4348 = vmatpush1.msra.mxu0 0.0
      %4349 = vmatprep.subr.mxu0 0.0
      %4350 = vmatpush1.msra.mxu0 0.0
      %4351 = vmatprep.subr.mxu0 0.0
      %4352 = vmatpush1.msra.mxu0 0.0
      %4353 = vmatprep.subr.mxu0 0.0
      %4354 = vmatpush1.msra.mxu0 0.0
      %4355 = vmatprep.subr.mxu0 0.0
      %4356 = vmatpush1.msra.mxu0 0.0
      %4357 = vmatprep.subr.mxu0 0.0
      %4358 = vmatpush1.msra.mxu0 0.0
      %4359 = vmatprep.subr.mxu0 0.0
      %4360 = vmatpush1.msra.mxu0 0.0
      %4361 = vmatprep.subr.mxu0 0.0
      %4362 = vmatpush1.msra.mxu0 0.0
      %4363 = vmatprep.subr.mxu0 0.0
      %4364 = vmatpush1.msra.mxu0 0.0
      %4365 = vmatprep.subr.mxu0 0.0
      %4366 = vmatpush1.msra.mxu0 0.0
      %4367 = vmatprep.subr.mxu0 0.0
      %4368 = vmatpush1.msra.mxu0 0.0
      %4369 = vmatprep.subr.mxu0 0.0
      %4370 = vmatpush1.msra.mxu0 0.0
      %4371 = vmatprep.subr.mxu0 0.0
      %4372 = vmatpush1.msra.mxu0 0.0
      %4373 = vmatprep.subr.mxu0 0.0
      %4374 = vmatpush1.msra.mxu0 0.0
      %4375 = vmatprep.subr.mxu0 0.0
      %4376 = vmatpush1.msra.mxu0 0.0
      %4377 = vmatprep.subr.mxu0 0.0
      %4378 = vmatpush1.msra.mxu0 0.0
      %4379 = vmatprep.subr.mxu0 0.0
      %4380 = vmatpush1.msra.mxu0 0.0
      %4381 = vmatprep.subr.mxu0 0.0
      %4382 = vmatpush1.msra.mxu0 0.0
      %4383 = vmatprep.subr.mxu0 0.0
      %4384 = vmatpush1.msra.mxu0 0.0
      %4385 = vmatprep.subr.mxu0 0.0
      %4386 = vmatpush1.msra.mxu0 0.0
      %4387 = vmatprep.mubr.f32.mxu0 0.0
      %4388 = vmatmul.mubr.f32.gmra.mrb[0].mxu0 %v4321
      %v4389 = vpop.f32.mrb[0].mxu0
      %v4390 = vadd.f32 0.0, %v4389
      %v4391 = vpop.f32.mrb[0].mxu0
      %4392 = vdwg.mxu0
      %v4394 = vsel %vm1047, %v4390, 0
      %4396 = vmatprep.subr.mxu0 0.0
      %4397 = vmatpush1.msra.mxu0 %v3503
      %4398 = vmatprep.subr.mxu0 0.0
      %4399 = vmatpush1.msra.mxu0 0.0
      %4400 = vmatprep.subr.mxu0 0.0
      %4401 = vmatpush1.msra.mxu0 0.0
      %4402 = vmatprep.subr.mxu0 0.0
      %4403 = vmatpush1.msra.mxu0 0.0
      %4404 = vmatprep.subr.mxu0 0.0
      %4405 = vmatpush1.msra.mxu0 0.0
      %4406 = vmatprep.subr.mxu0 0.0
      %4407 = vmatpush1.msra.mxu0 0.0
      %4408 = vmatprep.subr.mxu0 0.0
      %4409 = vmatpush1.msra.mxu0 0.0
      %4410 = vmatprep.subr.mxu0 0.0
      %4411 = vmatpush1.msra.mxu0 0.0
      %4412 = vmatprep.subr.mxu0 0.0
      %4413 = vmatpush1.msra.mxu0 0.0
      %4414 = vmatprep.subr.mxu0 0.0
      %4415 = vmatpush1.msra.mxu0 0.0
      %4416 = vmatprep.subr.mxu0 0.0
      %4417 = vmatpush1.msra.mxu0 0.0
      %4418 = vmatprep.subr.mxu0 0.0
      %4419 = vmatpush1.msra.mxu0 0.0
      %4420 = vmatprep.subr.mxu0 0.0
      %4421 = vmatpush1.msra.mxu0 0.0
      %4422 = vmatprep.subr.mxu0 0.0
      %4423 = vmatpush1.msra.mxu0 0.0
      %4424 = vmatprep.subr.mxu0 0.0
      %4425 = vmatpush1.msra.mxu0 0.0
      %4426 = vmatprep.subr.mxu0 0.0
      %4427 = vmatpush1.msra.mxu0 0.0
      %4428 = vmatprep.subr.mxu0 0.0
      %4429 = vmatpush1.msra.mxu0 0.0
      %4430 = vmatprep.subr.mxu0 0.0
      %4431 = vmatpush1.msra.mxu0 0.0
      %4432 = vmatprep.subr.mxu0 0.0
      %4433 = vmatpush1.msra.mxu0 0.0
      %4434 = vmatprep.subr.mxu0 0.0
      %4435 = vmatpush1.msra.mxu0 0.0
      %4436 = vmatprep.subr.mxu0 0.0
      %4437 = vmatpush1.msra.mxu0 0.0
      %4438 = vmatprep.subr.mxu0 0.0
      %4439 = vmatpush1.msra.mxu0 0.0
      %4440 = vmatprep.subr.mxu0 0.0
      %4441 = vmatpush1.msra.mxu0 0.0
      %4442 = vmatprep.subr.mxu0 0.0
      %4443 = vmatpush1.msra.mxu0 0.0
      %4444 = vmatprep.subr.mxu0 0.0
      %4445 = vmatpush1.msra.mxu0 0.0
      %4446 = vmatprep.subr.mxu0 0.0
      %4447 = vmatpush1.msra.mxu0 0.0
      %4448 = vmatprep.subr.mxu0 0.0
      %4449 = vmatpush1.msra.mxu0 0.0
      %4450 = vmatprep.subr.mxu0 0.0
      %4451 = vmatpush1.msra.mxu0 0.0
      %4452 = vmatprep.subr.mxu0 0.0
      %4453 = vmatpush1.msra.mxu0 0.0
      %4454 = vmatprep.subr.mxu0 0.0
      %4455 = vmatpush1.msra.mxu0 0.0
      %4456 = vmatprep.subr.mxu0 0.0
      %4457 = vmatpush1.msra.mxu0 0.0
      %4458 = vmatprep.subr.mxu0 0.0
      %4459 = vmatpush1.msra.mxu0 0.0
      %4460 = vmatprep.mubr.f32.mxu0 0.0
      %4461 = vmatmul.mubr.f32.gmra.mrb[0].mxu0 %v4394
      %v4462 = vpop.f32.mrb[0].mxu0
      %v4463 = vadd.f32 0.0, %v4462
      %v4464 = vpop.f32.mrb[0].mxu0
      %4465 = vdwg.mxu0
      %v4466 = vadd.f32 %v4225, %v4463
      %v4468 = vlaneseq
      %v4469 = vshrl.u32 %v4468, 7
      %v4470 = vsub.s32 0, %v4469
      %v4471 = vrot.slane %v3505, %v4470
      %v4473 = vadd.f32 %v4466, %v4471
      %s4474 = scalar_lea.vmem %s16, 1
      %v4475 = vld [vmem:[%s4474] sm:$0x1]
      %s4476 = scalar_lea.vmem %s17, 1
      %v4477 = vld [vmem:[%s4476] sm:$0x1]
      %v4478 = vadd.f32 %v3412, %v4473
      %v4479 = vsel %vm965, %v4478, 0.0
      %4480 = vadd.xlane.f32.xlu0 %v4479
      %v4481 = vpop.xlane.xlu0 %4480
      %v4482 = vmul.f32 %v4481, %v2019
      %v4483 = vsub.f32 %v4478, %v4482
      %v4484 = vmul.f32 %v4483, %v4483
      %v4485 = vsel %vm965, %v4484, 0.0
      %4486 = vadd.xlane.f32.xlu0 %v4485
      %v4487 = vpop.xlane.xlu0 %4486
      %v4488 = vmul.f32 %v4487, %v2019
      %v4489 = vadd.f32 %v4488, 1e-05
      %v4490 = vrsqrt.pop %v4489
      %v4491 = vmul.f32 %v4483, %v4490
      %v4493 = vlaneseq
      %v4494 = vshrl.u32 %v4493, 7
      %v4495 = vsub.s32 0, %v4494
      %v4496 = vrot.slane %v4475, %v4495
      %v4498 = vmul.f32 %v4491, %v4496
      %v4500 = vlaneseq
      %v4501 = vshrl.u32 %v4500, 7
      %v4502 = vsub.s32 0, %v4501
      %v4503 = vrot.slane %v4477, %v4502
      %v4505 = vadd.f32 %v4498, %v4503
      %s4506 = scalar_lea.vmem %s10, 32
      %v4507 = vld [vmem:[%s4506] sm:$0xff]
      %v4508 = vld [vmem:[%s4506 + $0x8] sm:$0xff]
      %v4509 = vld [vmem:[%s4506 + $0x10] sm:$0xff]
      %v4510 = vld [vmem:[%s4506 + $0x18] sm:$0xff]
      %s4511 = scalar_lea.vmem %s11, 1
      %v4512 = vld [vmem:[%s4511] sm:$0x1]
      %v4514 = vlaneseq
      %v4515 = vshrl.u32 %v4514, 7
      %v4516 = vsub.s32 0, %v4515
      %v4517 = vrot.slane %v4512, %v4516
      %v4520 = vsel %vm965, %v4505, 0
      %4522 = vmatprep.subr.mxu0 0.0
      %4523 = vmatpush1.msra.mxu0 %v4507
      %4524 = vmatprep.subr.mxu0 0.0
      %4525 = vmatpush1.msra.mxu0 %v4508
      %4526 = vmatprep.subr.mxu0 0.0
      %4527 = vmatpush1.msra.mxu0 %v4509
      %4528 = vmatprep.subr.mxu0 0.0
      %4529 = vmatpush1.msra.mxu0 %v4510
      %4530 = vmatprep.subr.mxu0 0.0
      %4531 = vmatpush1.msra.mxu0 0.0
      %4532 = vmatprep.subr.mxu0 0.0
      %4533 = vmatpush1.msra.mxu0 0.0
      %4534 = vmatprep.subr.mxu0 0.0
      %4535 = vmatpush1.msra.mxu0 0.0
      %4536 = vmatprep.subr.mxu0 0.0
      %4537 = vmatpush1.msra.mxu0 0.0
      %4538 = vmatprep.subr.mxu0 0.0
      %4539 = vmatpush1.msra.mxu0 0.0
      %4540 = vmatprep.subr.mxu0 0.0
      %4541 = vmatpush1.msra.mxu0 0.0
      %4542 = vmatprep.subr.mxu0 0.0
      %4543 = vmatpush1.msra.mxu0 0.0
      %4544 = vmatprep.subr.mxu0 0.0
      %4545 = vmatpush1.msra.mxu0 0.0
      %4546 = vmatprep.subr.mxu0 0.0
      %4547 = vmatpush1.msra.mxu0 0.0
      %4548 = vmatprep.subr.mxu0 0.0
      %4549 = vmatpush1.msra.mxu0 0.0
      %4550 = vmatprep.subr.mxu0 0.0
      %4551 = vmatpush1.msra.mxu0 0.0
      %4552 = vmatprep.subr.mxu0 0.0
      %4553 = vmatpush1.msra.mxu0 0.0
      %4554 = vmatprep.subr.mxu0 0.0
      %4555 = vmatpush1.msra.mxu0 0.0
      %4556 = vmatprep.subr.mxu0 0.0
      %4557 = vmatpush1.msra.mxu0 0.0
      %4558 = vmatprep.subr.mxu0 0.0
      %4559 = vmatpush1.msra.mxu0 0.0
      %4560 = vmatprep.subr.mxu0 0.0
      %4561 = vmatpush1.msra.mxu0 0.0
      %4562 = vmatprep.subr.mxu0 0.0
      %4563 = vmatpush1.msra.mxu0 0.0
      %4564 = vmatprep.subr.mxu0 0.0
      %4565 = vmatpush1.msra.mxu0 0.0
      %4566 = vmatprep.subr.mxu0 0.0
      %4567 = vmatpush1.msra.mxu0 0.0
      %4568 = vmatprep.subr.mxu0 0.0
      %4569 = vmatpush1.msra.mxu0 0.0
      %4570 = vmatprep.subr.mxu0 0.0
      %4571 = vmatpush1.msra.mxu0 0.0
      %4572 = vmatprep.subr.mxu0 0.0
      %4573 = vmatpush1.msra.mxu0 0.0
      %4574 = vmatprep.subr.mxu0 0.0
      %4575 = vmatpush1.msra.mxu0 0.0
      %4576 = vmatprep.subr.mxu0 0.0
      %4577 = vmatpush1.msra.mxu0 0.0
      %4578 = vmatprep.subr.mxu0 0.0
      %4579 = vmatpush1.msra.mxu0 0.0
      %4580 = vmatprep.subr.mxu0 0.0
      %4581 = vmatpush1.msra.mxu0 0.0
      %4582 = vmatprep.subr.mxu0 0.0
      %4583 = vmatpush1.msra.mxu0 0.0
      %4584 = vmatprep.subr.mxu0 0.0
      %4585 = vmatpush1.msra.mxu0 0.0
      %4586 = vmatprep.mubr.f32.mxu0 0.0
      %4587 = vmatmul.mubr.f32.gmra.mrb[0].mxu0 %v4520
      %v4588 = vpop.f32.mrb[0].mxu0
      %v4589 = vadd.f32 %v4517, %v4588
      %v4590 = vpop.f32.mrb[0].mxu0
      %4591 = vdwg.mxu0
      %s4592 = scalar_lea.vmem %s12, 32
      %v4593 = vld [vmem:[%s4592] sm:$0xff]
      %v4594 = vld [vmem:[%s4592 + $0x8] sm:$0xff]
      %v4595 = vld [vmem:[%s4592 + $0x10] sm:$0xff]
      %v4596 = vld [vmem:[%s4592 + $0x18] sm:$0xff]
      %s4597 = scalar_lea.vmem %s13, 1
      %v4598 = vld [vmem:[%s4597] sm:$0x1]
      %v4600 = vlaneseq
      %v4601 = vshrl.u32 %v4600, 7
      %v4602 = vsub.s32 0, %v4601
      %v4603 = vrot.slane %v4598, %v4602
      %4605 = vmatprep.subr.mxu0 0.0
      %4606 = vmatpush1.msra.mxu0 %v4593
      %4607 = vmatprep.subr.mxu0 0.0
      %4608 = vmatpush1.msra.mxu0 %v4594
      %4609 = vmatprep.subr.mxu0 0.0
      %4610 = vmatpush1.msra.mxu0 %v4595
      %4611 = vmatprep.subr.mxu0 0.0
      %4612 = vmatpush1.msra.mxu0 %v4596
      %4613 = vmatprep.subr.mxu0 0.0
      %4614 = vmatpush1.msra.mxu0 0.0
      %4615 = vmatprep.subr.mxu0 0.0
      %4616 = vmatpush1.msra.mxu0 0.0
      %4617 = vmatprep.subr.mxu0 0.0
      %4618 = vmatpush1.msra.mxu0 0.0
      %4619 = vmatprep.subr.mxu0 0.0
      %4620 = vmatpush1.msra.mxu0 0.0
      %4621 = vmatprep.subr.mxu0 0.0
      %4622 = vmatpush1.msra.mxu0 0.0
      %4623 = vmatprep.subr.mxu0 0.0
      %4624 = vmatpush1.msra.mxu0 0.0
      %4625 = vmatprep.subr.mxu0 0.0
      %4626 = vmatpush1.msra.mxu0 0.0
      %4627 = vmatprep.subr.mxu0 0.0
      %4628 = vmatpush1.msra.mxu0 0.0
      %4629 = vmatprep.subr.mxu0 0.0
      %4630 = vmatpush1.msra.mxu0 0.0
      %4631 = vmatprep.subr.mxu0 0.0
      %4632 = vmatpush1.msra.mxu0 0.0
      %4633 = vmatprep.subr.mxu0 0.0
      %4634 = vmatpush1.msra.mxu0 0.0
      %4635 = vmatprep.subr.mxu0 0.0
      %4636 = vmatpush1.msra.mxu0 0.0
      %4637 = vmatprep.subr.mxu0 0.0
      %4638 = vmatpush1.msra.mxu0 0.0
      %4639 = vmatprep.subr.mxu0 0.0
      %4640 = vmatpush1.msra.mxu0 0.0
      %4641 = vmatprep.subr.mxu0 0.0
      %4642 = vmatpush1.msra.mxu0 0.0
      %4643 = vmatprep.subr.mxu0 0.0
      %4644 = vmatpush1.msra.mxu0 0.0
      %4645 = vmatprep.subr.mxu0 0.0
      %4646 = vmatpush1.msra.mxu0 0.0
      %4647 = vmatprep.subr.mxu0 0.0
      %4648 = vmatpush1.msra.mxu0 0.0
      %4649 = vmatprep.subr.mxu0 0.0
      %4650 = vmatpush1.msra.mxu0 0.0
      %4651 = vmatprep.subr.mxu0 0.0
      %4652 = vmatpush1.msra.mxu0 0.0
      %4653 = vmatprep.subr.mxu0 0.0
      %4654 = vmatpush1.msra.mxu0 0.0
      %4655 = vmatprep.subr.mxu0 0.0
      %4656 = vmatpush1.msra.mxu0 0.0
      %4657 = vmatprep.subr.mxu0 0.0
      %4658 = vmatpush1.msra.mxu0 0.0
      %4659 = vmatprep.subr.mxu0 0.0
      %4660 = vmatpush1.msra.mxu0 0.0
      %4661 = vmatprep.subr.mxu0 0.0
      %4662 = vmatpush1.msra.mxu0 0.0
      %4663 = vmatprep.subr.mxu0 0.0
      %4664 = vmatpush1.msra.mxu0 0.0
      %4665 = vmatprep.subr.mxu0 0.0
      %4666 = vmatpush1.msra.mxu0 0.0
      %4667 = vmatprep.subr.mxu0 0.0
      %4668 = vmatpush1.msra.mxu0 0.0
      %4669 = vmatprep.mubr.f32.mxu0 0.0
      %4670 = vmatmul.mubr.f32.gmra.mrb[0].mxu0 %v2140
      %v4671 = vpop.f32.mrb[0].mxu0
      %v4672 = vadd.f32 %v4603, %v4671
      %v4673 = vpop.f32.mrb[0].mxu0
      %4674 = vdwg.mxu0
      %s4675 = scalar_lea.vmem %s14, 32
      %v4676 = vld [vmem:[%s4675] sm:$0xff]
      %v4677 = vld [vmem:[%s4675 + $0x8] sm:$0xff]
      %v4678 = vld [vmem:[%s4675 + $0x10] sm:$0xff]
      %v4679 = vld [vmem:[%s4675 + $0x18] sm:$0xff]
      %s4680 = scalar_lea.vmem %s15, 1
      %v4681 = vld [vmem:[%s4680] sm:$0x1]
      %v4683 = vsel %vm1047, %v4589, 0
      %v4686 = vsel %vm1047, %v4672, 0
      %4688 = vmatprep.subr.mxu0 0.0
      %4689 = vmatpush1.xpose.msra.mxu0 %v4686
      %4690 = vmatprep.subr.mxu0 0.0
      %4691 = vmatpush1.xpose.msra.mxu0 0.0
      %4692 = vmatprep.subr.mxu0 0.0
      %4693 = vmatpush1.xpose.msra.mxu0 0.0
      %4694 = vmatprep.subr.mxu0 0.0
      %4695 = vmatpush1.xpose.msra.mxu0 0.0
      %4696 = vmatprep.subr.mxu0 0.0
      %4697 = vmatpush1.xpose.msra.mxu0 0.0
      %4698 = vmatprep.subr.mxu0 0.0
      %4699 = vmatpush1.xpose.msra.mxu0 0.0
      %4700 = vmatprep.subr.mxu0 0.0
      %4701 = vmatpush1.xpose.msra.mxu0 0.0
      %4702 = vmatprep.subr.mxu0 0.0
      %4703 = vmatpush1.xpose.msra.mxu0 0.0
      %4704 = vmatprep.subr.mxu0 0.0
      %4705 = vmatpush1.xpose.msra.mxu0 0.0
      %4706 = vmatprep.subr.mxu0 0.0
      %4707 = vmatpush1.xpose.msra.mxu0 0.0
      %4708 = vmatprep.subr.mxu0 0.0
      %4709 = vmatpush1.xpose.msra.mxu0 0.0
      %4710 = vmatprep.subr.mxu0 0.0
      %4711 = vmatpush1.xpose.msra.mxu0 0.0
      %4712 = vmatprep.subr.mxu0 0.0
      %4713 = vmatpush1.xpose.msra.mxu0 0.0
      %4714 = vmatprep.subr.mxu0 0.0
      %4715 = vmatpush1.xpose.msra.mxu0 0.0
      %4716 = vmatprep.subr.mxu0 0.0
      %4717 = vmatpush1.xpose.msra.mxu0 0.0
      %4718 = vmatprep.subr.mxu0 0.0
      %4719 = vmatpush1.xpose.msra.mxu0 0.0
      %4720 = vmatprep.subr.mxu0 0.0
      %4721 = vmatpush1.xpose.msra.mxu0 0.0
      %4722 = vmatprep.subr.mxu0 0.0
      %4723 = vmatpush1.xpose.msra.mxu0 0.0
      %4724 = vmatprep.subr.mxu0 0.0
      %4725 = vmatpush1.xpose.msra.mxu0 0.0
      %4726 = vmatprep.subr.mxu0 0.0
      %4727 = vmatpush1.xpose.msra.mxu0 0.0
      %4728 = vmatprep.subr.mxu0 0.0
      %4729 = vmatpush1.xpose.msra.mxu0 0.0
      %4730 = vmatprep.subr.mxu0 0.0
      %4731 = vmatpush1.xpose.msra.mxu0 0.0
      %4732 = vmatprep.subr.mxu0 0.0
      %4733 = vmatpush1.xpose.msra.mxu0 0.0
      %4734 = vmatprep.subr.mxu0 0.0
      %4735 = vmatpush1.xpose.msra.mxu0 0.0
      %4736 = vmatprep.subr.mxu0 0.0
      %4737 = vmatpush1.xpose.msra.mxu0 0.0
      %4738 = vmatprep.subr.mxu0 0.0
      %4739 = vmatpush1.xpose.msra.mxu0 0.0
      %4740 = vmatprep.subr.mxu0 0.0
      %4741 = vmatpush1.xpose.msra.mxu0 0.0
      %4742 = vmatprep.subr.mxu0 0.0
      %4743 = vmatpush1.xpose.msra.mxu0 0.0
      %4744 = vmatprep.subr.mxu0 0.0
      %4745 = vmatpush1.xpose.msra.mxu0 0.0
      %4746 = vmatprep.subr.mxu0 0.0
      %4747 = vmatpush1.xpose.msra.mxu0 0.0
      %4748 = vmatprep.subr.mxu0 0.0
      %4749 = vmatpush1.xpose.msra.mxu0 0.0
      %4750 = vmatprep.subr.mxu0 0.0
      %4751 = vmatpush1.xpose.msra.mxu0 0.0
      %4752 = vmatprep.mubr.f32.mxu0 0.0
      %4753 = vmatmul.mubr.f32.gmra.mrb[0].mxu0 %v4683
      %v4754 = vpop.f32.mrb[0].mxu0
      %v4755 = vadd.f32 0.0, %v4754
      %v4756 = vpop.f32.mrb[0].mxu0
      %4757 = vdwg.mxu0
      %v4758 = vmul.f32 %v4755, 0.35355338
      %v4759 = vsel %vm1047, %v4758, -inf
      %4760 = vmax.xlane.f32.xlu0 %v4759
      %v4761 = vpop.xlane.xlu0 %4760
      %v4762 = vsub.f32 %v4758, %v4761
      %v4763 = vmul.f32 %v4762, 1.442695
      %v4764 = vpow.pop %v4763
      %v4765 = vsel %vm1047, %v4764, 0.0
      %4766 = vadd.xlane.f32.xlu0 %v4765
      %v4767 = vpop.xlane.xlu0 %4766
      %v4768 = vrcp.pop %v4767
      %v4769 = vmul.f32 %v4764, %v4768
      %4770 = vrot.lane.b32.xlu0 %v4672, 96
      %v4771 = vpop.permute.xlu0 %4770
      %v4774 = vsel %vm1047, %v4769, 0
      %4776 = vmatprep.subr.mxu0 0.0
      %4777 = vmatpush1.msra.mxu0 %v4771
      %4778 = vmatprep.subr.mxu0 0.0
      %4779 = vmatpush1.msra.mxu0 0.0
      %4780 = vmatprep.subr.mxu0 0.0
      %4781 = vmatpush1.msra.mxu0 0.0
      %4782 = vmatprep.subr.mxu0 0.0
      %4783 = vmatpush1.msra.mxu0 0.0
      %4784 = vmatprep.subr.mxu0 0.0
      %4785 = vmatpush1.msra.mxu0 0.0
      %4786 = vmatprep.subr.mxu0 0.0
      %4787 = vmatpush1.msra.mxu0 0.0
      %4788 = vmatprep.subr.mxu0 0.0
      %4789 = vmatpush1.msra.mxu0 0.0
      %4790 = vmatprep.subr.mxu0 0.0
      %4791 = vmatpush1.msra.mxu0 0.0
      %4792 = vmatprep.subr.mxu0 0.0
      %4793 = vmatpush1.msra.mxu0 0.0
      %4794 = vmatprep.subr.mxu0 0.0
      %4795 = vmatpush1.msra.mxu0 0.0
      %4796 = vmatprep.subr.mxu0 0.0
      %4797 = vmatpush1.msra.mxu0 0.0
      %4798 = vmatprep.subr.mxu0 0.0
      %4799 = vmatpush1.msra.mxu0 0.0
      %4800 = vmatprep.subr.mxu0 0.0
      %4801 = vmatpush1.msra.mxu0 0.0
      %4802 = vmatprep.subr.mxu0 0.0
      %4803 = vmatpush1.msra.mxu0 0.0
      %4804 = vmatprep.subr.mxu0 0.0
      %4805 = vmatpush1.msra.mxu0 0.0
      %4806 = vmatprep.subr.mxu0 0.0
      %4807 = vmatpush1.msra.mxu0 0.0
      %4808 = vmatprep.subr.mxu0 0.0
      %4809 = vmatpush1.msra.mxu0 0.0
      %4810 = vmatprep.subr.mxu0 0.0
      %4811 = vmatpush1.msra.mxu0 0.0
      %4812 = vmatprep.subr.mxu0 0.0
      %4813 = vmatpush1.msra.mxu0 0.0
      %4814 = vmatprep.subr.mxu0 0.0
      %4815 = vmatpush1.msra.mxu0 0.0
      %4816 = vmatprep.subr.mxu0 0.0
      %4817 = vmatpush1.msra.mxu0 0.0
      %4818 = vmatprep.subr.mxu0 0.0
      %4819 = vmatpush1.msra.mxu0 0.0
      %4820 = vmatprep.subr.mxu0 0.0
      %4821 = vmatpush1.msra.mxu0 0.0
      %4822 = vmatprep.subr.mxu0 0.0
      %4823 = vmatpush1.msra.mxu0 0.0
      %4824 = vmatprep.subr.mxu0 0.0
      %4825 = vmatpush1.msra.mxu0 0.0
      %4826 = vmatprep.subr.mxu0 0.0
      %4827 = vmatpush1.msra.mxu0 0.0
      %4828 = vmatprep.subr.mxu0 0.0
      %4829 = vmatpush1.msra.mxu0 0.0
      %4830 = vmatprep.subr.mxu0 0.0
      %4831 = vmatpush1.msra.mxu0 0.0
      %4832 = vmatprep.subr.mxu0 0.0
      %4833 = vmatpush1.msra.mxu0 0.0
      %4834 = vmatprep.subr.mxu0 0.0
      %4835 = vmatpush1.msra.mxu0 0.0
      %4836 = vmatprep.subr.mxu0 0.0
      %4837 = vmatpush1.msra.mxu0 0.0
      %4838 = vmatprep.subr.mxu0 0.0
      %4839 = vmatpush1.msra.mxu0 0.0
      %4840 = vmatprep.mubr.f32.mxu0 0.0
      %4841 = vmatmul.mubr.f32.gmra.mrb[0].mxu0 %v4774
      %v4842 = vpop.f32.mrb[0].mxu0
      %v4843 = vadd.f32 0.0, %v4842
      %v4844 = vpop.f32.mrb[0].mxu0
      %4845 = vdwg.mxu0
      %4846 = vrot.lane.b32.xlu0 %v4589, 120
      %v4847 = vpop.permute.xlu0 %4846
      %4848 = vrot.lane.b32.xlu0 %v4672, 120
      %v4849 = vpop.permute.xlu0 %4848
      %v4850 = vsel %vm1047, %v4847, 0
      %v4852 = vsel %vm1047, %v4849, 0
      %4854 = vmatprep.subr.mxu0 0.0
      %4855 = vmatpush1.xpose.msra.mxu0 %v4852
      %4856 = vmatprep.subr.mxu0 0.0
      %4857 = vmatpush1.xpose.msra.mxu0 0.0
      %4858 = vmatprep.subr.mxu0 0.0
      %4859 = vmatpush1.xpose.msra.mxu0 0.0
      %4860 = vmatprep.subr.mxu0 0.0
      %4861 = vmatpush1.xpose.msra.mxu0 0.0
      %4862 = vmatprep.subr.mxu0 0.0
      %4863 = vmatpush1.xpose.msra.mxu0 0.0
      %4864 = vmatprep.subr.mxu0 0.0
      %4865 = vmatpush1.xpose.msra.mxu0 0.0
      %4866 = vmatprep.subr.mxu0 0.0
      %4867 = vmatpush1.xpose.msra.mxu0 0.0
      %4868 = vmatprep.subr.mxu0 0.0
      %4869 = vmatpush1.xpose.msra.mxu0 0.0
      %4870 = vmatprep.subr.mxu0 0.0
      %4871 = vmatpush1.xpose.msra.mxu0 0.0
      %4872 = vmatprep.subr.mxu0 0.0
      %4873 = vmatpush1.xpose.msra.mxu0 0.0
      %4874 = vmatprep.subr.mxu0 0.0
      %4875 = vmatpush1.xpose.msra.mxu0 0.0
      %4876 = vmatprep.subr.mxu0 0.0
      %4877 = vmatpush1.xpose.msra.mxu0 0.0
      %4878 = vmatprep.subr.mxu0 0.0
      %4879 = vmatpush1.xpose.msra.mxu0 0.0
      %4880 = vmatprep.subr.mxu0 0.0
      %4881 = vmatpush1.xpose.msra.mxu0 0.0
      %4882 = vmatprep.subr.mxu0 0.0
      %4883 = vmatpush1.xpose.msra.mxu0 0.0
      %4884 = vmatprep.subr.mxu0 0.0
      %4885 = vmatpush1.xpose.msra.mxu0 0.0
      %4886 = vmatprep.subr.mxu0 0.0
      %4887 = vmatpush1.xpose.msra.mxu0 0.0
      %4888 = vmatprep.subr.mxu0 0.0
      %4889 = vmatpush1.xpose.msra.mxu0 0.0
      %4890 = vmatprep.subr.mxu0 0.0
      %4891 = vmatpush1.xpose.msra.mxu0 0.0
      %4892 = vmatprep.subr.mxu0 0.0
      %4893 = vmatpush1.xpose.msra.mxu0 0.0
      %4894 = vmatprep.subr.mxu0 0.0
      %4895 = vmatpush1.xpose.msra.mxu0 0.0
      %4896 = vmatprep.subr.mxu0 0.0
      %4897 = vmatpush1.xpose.msra.mxu0 0.0
      %4898 = vmatprep.subr.mxu0 0.0
      %4899 = vmatpush1.xpose.msra.mxu0 0.0
      %4900 = vmatprep.subr.mxu0 0.0
      %4901 = vmatpush1.xpose.msra.mxu0 0.0
      %4902 = vmatprep.subr.mxu0 0.0
      %4903 = vmatpush1.xpose.msra.mxu0 0.0
      %4904 = vmatprep.subr.mxu0 0.0
      %4905 = vmatpush1.xpose.msra.mxu0 0.0
      %4906 = vmatprep.subr.mxu0 0.0
      %4907 = vmatpush1.xpose.msra.mxu0 0.0
      %4908 = vmatprep.subr.mxu0 0.0
      %4909 = vmatpush1.xpose.msra.mxu0 0.0
      %4910 = vmatprep.subr.mxu0 0.0
      %4911 = vmatpush1.xpose.msra.mxu0 0.0
      %4912 = vmatprep.subr.mxu0 0.0
      %4913 = vmatpush1.xpose.msra.mxu0 0.0
      %4914 = vmatprep.subr.mxu0 0.0
      %4915 = vmatpush1.xpose.msra.mxu0 0.0
      %4916 = vmatprep.subr.mxu0 0.0
      %4917 = vmatpush1.xpose.msra.mxu0 0.0
      %4918 = vmatprep.mubr.f32.mxu0 0.0
      %4919 = vmatmul.mubr.f32.gmra.mrb[0].mxu0 %v4850
      %v4920 = vpop.f32.mrb[0].mxu0
      %v4921 = vadd.f32 0.0, %v4920
      %v4922 = vpop.f32.mrb[0].mxu0
      %4923 = vdwg.mxu0
      %v4924 = vmul.f32 %v4921, 0.35355338
      %v4925 = vsel %vm1047, %v4924, -inf
      %4926 = vmax.xlane.f32.xlu0 %v4925
      %v4927 = vpop.xlane.xlu0 %4926
      %v4928 = vsub.f32 %v4924, %v4927
      %v4929 = vmul.f32 %v4928, 1.442695
      %v4930 = vpow.pop %v4929
      %v4931 = vsel %vm1047, %v4930, 0.0
      %4932 = vadd.xlane.f32.xlu0 %v4931
      %v4933 = vpop.xlane.xlu0 %4932
      %v4934 = vrcp.pop %v4933
      %v4935 = vmul.f32 %v4930, %v4934
      %4936 = vrot.lane.b32.xlu0 %v4672, 88
      %v4937 = vpop.permute.xlu0 %4936
      %v4940 = vsel %vm1047, %v4935, 0
      %4942 = vmatprep.subr.mxu0 0.0
      %4943 = vmatpush1.msra.mxu0 %v4937
      %4944 = vmatprep.subr.mxu0 0.0
      %4945 = vmatpush1.msra.mxu0 0.0
      %4946 = vmatprep.subr.mxu0 0.0
      %4947 = vmatpush1.msra.mxu0 0.0
      %4948 = vmatprep.subr.mxu0 0.0
      %4949 = vmatpush1.msra.mxu0 0.0
      %4950 = vmatprep.subr.mxu0 0.0
      %4951 = vmatpush1.msra.mxu0 0.0
      %4952 = vmatprep.subr.mxu0 0.0
      %4953 = vmatpush1.msra.mxu0 0.0
      %4954 = vmatprep.subr.mxu0 0.0
      %4955 = vmatpush1.msra.mxu0 0.0
      %4956 = vmatprep.subr.mxu0 0.0
      %4957 = vmatpush1.msra.mxu0 0.0
      %4958 = vmatprep.subr.mxu0 0.0
      %4959 = vmatpush1.msra.mxu0 0.0
      %4960 = vmatprep.subr.mxu0 0.0
      %4961 = vmatpush1.msra.mxu0 0.0
      %4962 = vmatprep.subr.mxu0 0.0
      %4963 = vmatpush1.msra.mxu0 0.0
      %4964 = vmatprep.subr.mxu0 0.0
      %4965 = vmatpush1.msra.mxu0 0.0
      %4966 = vmatprep.subr.mxu0 0.0
      %4967 = vmatpush1.msra.mxu0 0.0
      %4968 = vmatprep.subr.mxu0 0.0
      %4969 = vmatpush1.msra.mxu0 0.0
      %4970 = vmatprep.subr.mxu0 0.0
      %4971 = vmatpush1.msra.mxu0 0.0
      %4972 = vmatprep.subr.mxu0 0.0
      %4973 = vmatpush1.msra.mxu0 0.0
      %4974 = vmatprep.subr.mxu0 0.0
      %4975 = vmatpush1.msra.mxu0 0.0
      %4976 = vmatprep.subr.mxu0 0.0
      %4977 = vmatpush1.msra.mxu0 0.0
      %4978 = vmatprep.subr.mxu0 0.0
      %4979 = vmatpush1.msra.mxu0 0.0
      %4980 = vmatprep.subr.mxu0 0.0
      %4981 = vmatpush1.msra.mxu0 0.0
      %4982 = vmatprep.subr.mxu0 0.0
      %4983 = vmatpush1.msra.mxu0 0.0
      %4984 = vmatprep.subr.mxu0 0.0
      %4985 = vmatpush1.msra.mxu0 0.0
      %4986 = vmatprep.subr.mxu0 0.0
      %4987 = vmatpush1.msra.mxu0 0.0
      %4988 = vmatprep.subr.mxu0 0.0
      %4989 = vmatpush1.msra.mxu0 0.0
      %4990 = vmatprep.subr.mxu0 0.0
      %4991 = vmatpush1.msra.mxu0 0.0
      %4992 = vmatprep.subr.mxu0 0.0
      %4993 = vmatpush1.msra.mxu0 0.0
      %4994 = vmatprep.subr.mxu0 0.0
      %4995 = vmatpush1.msra.mxu0 0.0
      %4996 = vmatprep.subr.mxu0 0.0
      %4997 = vmatpush1.msra.mxu0 0.0
      %4998 = vmatprep.subr.mxu0 0.0
      %4999 = vmatpush1.msra.mxu0 0.0
      %5000 = vmatprep.subr.mxu0 0.0
      %5001 = vmatpush1.msra.mxu0 0.0
      %5002 = vmatprep.subr.mxu0 0.0
      %5003 = vmatpush1.msra.mxu0 0.0
      %5004 = vmatprep.subr.mxu0 0.0
      %5005 = vmatpush1.msra.mxu0 0.0
      %5006 = vmatprep.mubr.f32.mxu0 0.0
      %5007 = vmatmul.mubr.f32.gmra.mrb[0].mxu0 %v4940
      %v5008 = vpop.f32.mrb[0].mxu0
      %v5009 = vadd.f32 0.0, %v5008
      %v5010 = vpop.f32.mrb[0].mxu0
      %5011 = vdwg.mxu0
      %v5013 = vsel %vm1047, %v5009, 0
      %5015 = vmatprep.subr.mxu0 0.0
      %5016 = vmatpush1.msra.mxu0 %v4677
      %5017 = vmatprep.subr.mxu0 0.0
      %5018 = vmatpush1.msra.mxu0 0.0
      %5019 = vmatprep.subr.mxu0 0.0
      %5020 = vmatpush1.msra.mxu0 0.0
      %5021 = vmatprep.subr.mxu0 0.0
      %5022 = vmatpush1.msra.mxu0 0.0
      %5023 = vmatprep.subr.mxu0 0.0
      %5024 = vmatpush1.msra.mxu0 0.0
      %5025 = vmatprep.subr.mxu0 0.0
      %5026 = vmatpush1.msra.mxu0 0.0
      %5027 = vmatprep.subr.mxu0 0.0
      %5028 = vmatpush1.msra.mxu0 0.0
      %5029 = vmatprep.subr.mxu0 0.0
      %5030 = vmatpush1.msra.mxu0 0.0
      %5031 = vmatprep.subr.mxu0 0.0
      %5032 = vmatpush1.msra.mxu0 0.0
      %5033 = vmatprep.subr.mxu0 0.0
      %5034 = vmatpush1.msra.mxu0 0.0
      %5035 = vmatprep.subr.mxu0 0.0
      %5036 = vmatpush1.msra.mxu0 0.0
      %5037 = vmatprep.subr.mxu0 0.0
      %5038 = vmatpush1.msra.mxu0 0.0
      %5039 = vmatprep.subr.mxu0 0.0
      %5040 = vmatpush1.msra.mxu0 0.0
      %5041 = vmatprep.subr.mxu0 0.0
      %5042 = vmatpush1.msra.mxu0 0.0
      %5043 = vmatprep.subr.mxu0 0.0
      %5044 = vmatpush1.msra.mxu0 0.0
      %5045 = vmatprep.subr.mxu0 0.0
      %5046 = vmatpush1.msra.mxu0 0.0
      %5047 = vmatprep.subr.mxu0 0.0
      %5048 = vmatpush1.msra.mxu0 0.0
      %5049 = vmatprep.subr.mxu0 0.0
      %5050 = vmatpush1.msra.mxu0 0.0
      %5051 = vmatprep.subr.mxu0 0.0
      %5052 = vmatpush1.msra.mxu0 0.0
      %5053 = vmatprep.subr.mxu0 0.0
      %5054 = vmatpush1.msra.mxu0 0.0
      %5055 = vmatprep.subr.mxu0 0.0
      %5056 = vmatpush1.msra.mxu0 0.0
      %5057 = vmatprep.subr.mxu0 0.0
      %5058 = vmatpush1.msra.mxu0 0.0
      %5059 = vmatprep.subr.mxu0 0.0
      %5060 = vmatpush1.msra.mxu0 0.0
      %5061 = vmatprep.subr.mxu0 0.0
      %5062 = vmatpush1.msra.mxu0 0.0
      %5063 = vmatprep.subr.mxu0 0.0
      %5064 = vmatpush1.msra.mxu0 0.0
      %5065 = vmatprep.subr.mxu0 0.0
      %5066 = vmatpush1.msra.mxu0 0.0
      %5067 = vmatprep.subr.mxu0 0.0
      %5068 = vmatpush1.msra.mxu0 0.0
      %5069 = vmatprep.subr.mxu0 0.0
      %5070 = vmatpush1.msra.mxu0 0.0
      %5071 = vmatprep.subr.mxu0 0.0
      %5072 = vmatpush1.msra.mxu0 0.0
      %5073 = vmatprep.subr.mxu0 0.0
      %5074 = vmatpush1.msra.mxu0 0.0
      %5075 = vmatprep.subr.mxu0 0.0
      %5076 = vmatpush1.msra.mxu0 0.0
      %5077 = vmatprep.subr.mxu0 0.0
      %5078 = vmatpush1.msra.mxu0 0.0
      %5079 = vmatprep.mubr.f32.mxu0 0.0
      %5080 = vmatmul.mubr.f32.gmra.mrb[0].mxu0 %v5013
      %v5081 = vpop.f32.mrb[0].mxu0
      %v5082 = vadd.f32 0.0, %v5081
      %v5083 = vpop.f32.mrb[0].mxu0
      %5084 = vdwg.mxu0
      %v5086 = vsel %vm1047, %v4843, 0
      %5088 = vmatprep.subr.mxu0 0.0
      %5089 = vmatpush1.msra.mxu0 %v4676
      %5090 = vmatprep.subr.mxu0 0.0
      %5091 = vmatpush1.msra.mxu0 0.0
      %5092 = vmatprep.subr.mxu0 0.0
      %5093 = vmatpush1.msra.mxu0 0.0
      %5094 = vmatprep.subr.mxu0 0.0
      %5095 = vmatpush1.msra.mxu0 0.0
      %5096 = vmatprep.subr.mxu0 0.0
      %5097 = vmatpush1.msra.mxu0 0.0
      %5098 = vmatprep.subr.mxu0 0.0
      %5099 = vmatpush1.msra.mxu0 0.0
      %5100 = vmatprep.subr.mxu0 0.0
      %5101 = vmatpush1.msra.mxu0 0.0
      %5102 = vmatprep.subr.mxu0 0.0
      %5103 = vmatpush1.msra.mxu0 0.0
      %5104 = vmatprep.subr.mxu0 0.0
      %5105 = vmatpush1.msra.mxu0 0.0
      %5106 = vmatprep.subr.mxu0 0.0
      %5107 = vmatpush1.msra.mxu0 0.0
      %5108 = vmatprep.subr.mxu0 0.0
      %5109 = vmatpush1.msra.mxu0 0.0
      %5110 = vmatprep.subr.mxu0 0.0
      %5111 = vmatpush1.msra.mxu0 0.0
      %5112 = vmatprep.subr.mxu0 0.0
      %5113 = vmatpush1.msra.mxu0 0.0
      %5114 = vmatprep.subr.mxu0 0.0
      %5115 = vmatpush1.msra.mxu0 0.0
      %5116 = vmatprep.subr.mxu0 0.0
      %5117 = vmatpush1.msra.mxu0 0.0
      %5118 = vmatprep.subr.mxu0 0.0
      %5119 = vmatpush1.msra.mxu0 0.0
      %5120 = vmatprep.subr.mxu0 0.0
      %5121 = vmatpush1.msra.mxu0 0.0
      %5122 = vmatprep.subr.mxu0 0.0
      %5123 = vmatpush1.msra.mxu0 0.0
      %5124 = vmatprep.subr.mxu0 0.0
      %5125 = vmatpush1.msra.mxu0 0.0
      %5126 = vmatprep.subr.mxu0 0.0
      %5127 = vmatpush1.msra.mxu0 0.0
      %5128 = vmatprep.subr.mxu0 0.0
      %5129 = vmatpush1.msra.mxu0 0.0
      %5130 = vmatprep.subr.mxu0 0.0
      %5131 = vmatpush1.msra.mxu0 0.0
      %5132 = vmatprep.subr.mxu0 0.0
      %5133 = vmatpush1.msra.mxu0 0.0
      %5134 = vmatprep.subr.mxu0 0.0
      %5135 = vmatpush1.msra.mxu0 0.0
      %5136 = vmatprep.subr.mxu0 0.0
      %5137 = vmatpush1.msra.mxu0 0.0
      %5138 = vmatprep.subr.mxu0 0.0
      %5139 = vmatpush1.msra.mxu0 0.0
      %5140 = vmatprep.subr.mxu0 0.0
      %5141 = vmatpush1.msra.mxu0 0.0
      %5142 = vmatprep.subr.mxu0 0.0
      %5143 = vmatpush1.msra.mxu0 0.0
      %5144 = vmatprep.subr.mxu0 0.0
      %5145 = vmatpush1.msra.mxu0 0.0
      %5146 = vmatprep.subr.mxu0 0.0
      %5147 = vmatpush1.msra.mxu0 0.0
      %5148 = vmatprep.subr.mxu0 0.0
      %5149 = vmatpush1.msra.mxu0 0.0
      %5150 = vmatprep.subr.mxu0 0.0
      %5151 = vmatpush1.msra.mxu0 0.0
      %5152 = vmatprep.mubr.f32.mxu0 0.0
      %5153 = vmatmul.mubr.f32.gmra.mrb[0].mxu0 %v5086
      %v5154 = vpop.f32.mrb[0].mxu0
      %v5155 = vadd.f32 %v5082, %v5154
      %v5156 = vpop.f32.mrb[0].mxu0
      %5157 = vdwg.mxu0
      %5158 = vrot.lane.b32.xlu0 %v4589, 112
      %v5159 = vpop.permute.xlu0 %5158
      %5160 = vrot.lane.b32.xlu0 %v4672, 112
      %v5161 = vpop.permute.xlu0 %5160
      %v5162 = vsel %vm1047, %v5159, 0
      %v5164 = vsel %vm1047, %v5161, 0
      %5166 = vmatprep.subr.mxu0 0.0
      %5167 = vmatpush1.xpose.msra.mxu0 %v5164
      %5168 = vmatprep.subr.mxu0 0.0
      %5169 = vmatpush1.xpose.msra.mxu0 0.0
      %5170 = vmatprep.subr.mxu0 0.0
      %5171 = vmatpush1.xpose.msra.mxu0 0.0
      %5172 = vmatprep.subr.mxu0 0.0
      %5173 = vmatpush1.xpose.msra.mxu0 0.0
      %5174 = vmatprep.subr.mxu0 0.0
      %5175 = vmatpush1.xpose.msra.mxu0 0.0
      %5176 = vmatprep.subr.mxu0 0.0
      %5177 = vmatpush1.xpose.msra.mxu0 0.0
      %5178 = vmatprep.subr.mxu0 0.0
      %5179 = vmatpush1.xpose.msra.mxu0 0.0
      %5180 = vmatprep.subr.mxu0 0.0
      %5181 = vmatpush1.xpose.msra.mxu0 0.0
      %5182 = vmatprep.subr.mxu0 0.0
      %5183 = vmatpush1.xpose.msra.mxu0 0.0
      %5184 = vmatprep.subr.mxu0 0.0
      %5185 = vmatpush1.xpose.msra.mxu0 0.0
      %5186 = vmatprep.subr.mxu0 0.0
      %5187 = vmatpush1.xpose.msra.mxu0 0.0
      %5188 = vmatprep.subr.mxu0 0.0
      %5189 = vmatpush1.xpose.msra.mxu0 0.0
      %5190 = vmatprep.subr.mxu0 0.0
      %5191 = vmatpush1.xpose.msra.mxu0 0.0
      %5192 = vmatprep.subr.mxu0 0.0
      %5193 = vmatpush1.xpose.msra.mxu0 0.0
      %5194 = vmatprep.subr.mxu0 0.0
      %5195 = vmatpush1.xpose.msra.mxu0 0.0
      %5196 = vmatprep.subr.mxu0 0.0
      %5197 = vmatpush1.xpose.msra.mxu0 0.0
      %5198 = vmatprep.subr.mxu0 0.0
      %5199 = vmatpush1.xpose.msra.mxu0 0.0
      %5200 = vmatprep.subr.mxu0 0.0
      %5201 = vmatpush1.xpose.msra.mxu0 0.0
      %5202 = vmatprep.subr.mxu0 0.0
      %5203 = vmatpush1.xpose.msra.mxu0 0.0
      %5204 = vmatprep.subr.mxu0 0.0
      %5205 = vmatpush1.xpose.msra.mxu0 0.0
      %5206 = vmatprep.subr.mxu0 0.0
      %5207 = vmatpush1.xpose.msra.mxu0 0.0
      %5208 = vmatprep.subr.mxu0 0.0
      %5209 = vmatpush1.xpose.msra.mxu0 0.0
      %5210 = vmatprep.subr.mxu0 0.0
      %5211 = vmatpush1.xpose.msra.mxu0 0.0
      %5212 = vmatprep.subr.mxu0 0.0
      %5213 = vmatpush1.xpose.msra.mxu0 0.0
      %5214 = vmatprep.subr.mxu0 0.0
      %5215 = vmatpush1.xpose.msra.mxu0 0.0
      %5216 = vmatprep.subr.mxu0 0.0
      %5217 = vmatpush1.xpose.msra.mxu0 0.0
      %5218 = vmatprep.subr.mxu0 0.0
      %5219 = vmatpush1.xpose.msra.mxu0 0.0
      %5220 = vmatprep.subr.mxu0 0.0
      %5221 = vmatpush1.xpose.msra.mxu0 0.0
      %5222 = vmatprep.subr.mxu0 0.0
      %5223 = vmatpush1.xpose.msra.mxu0 0.0
      %5224 = vmatprep.subr.mxu0 0.0
      %5225 = vmatpush1.xpose.msra.mxu0 0.0
      %5226 = vmatprep.subr.mxu0 0.0
      %5227 = vmatpush1.xpose.msra.mxu0 0.0
      %5228 = vmatprep.subr.mxu0 0.0
      %5229 = vmatpush1.xpose.msra.mxu0 0.0
      %5230 = vmatprep.mubr.f32.mxu0 0.0
      %5231 = vmatmul.mubr.f32.gmra.mrb[0].mxu0 %v5162
      %v5232 = vpop.f32.mrb[0].mxu0
      %v5233 = vadd.f32 0.0, %v5232
      %v5234 = vpop.f32.mrb[0].mxu0
      %5235 = vdwg.mxu0
      %v5236 = vmul.f32 %v5233, 0.35355338
      %v5237 = vsel %vm1047, %v5236, -inf
      %5238 = vmax.xlane.f32.xlu0 %v5237
      %v5239 = vpop.xlane.xlu0 %5238
      %v5240 = vsub.f32 %v5236, %v5239
      %v5241 = vmul.f32 %v5240, 1.442695
      %v5242 = vpow.pop %v5241
      %v5243 = vsel %vm1047, %v5242, 0.0
      %5244 = vadd.xlane.f32.xlu0 %v5243
      %v5245 = vpop.xlane.xlu0 %5244
      %v5246 = vrcp.pop %v5245
      %v5247 = vmul.f32 %v5242, %v5246
      %5248 = vrot.lane.b32.xlu0 %v4672, 80
      %v5249 = vpop.permute.xlu0 %5248
      %v5252 = vsel %vm1047, %v5247, 0
      %5254 = vmatprep.subr.mxu0 0.0
      %5255 = vmatpush1.msra.mxu0 %v5249
      %5256 = vmatprep.subr.mxu0 0.0
      %5257 = vmatpush1.msra.mxu0 0.0
      %5258 = vmatprep.subr.mxu0 0.0
      %5259 = vmatpush1.msra.mxu0 0.0
      %5260 = vmatprep.subr.mxu0 0.0
      %5261 = vmatpush1.msra.mxu0 0.0
      %5262 = vmatprep.subr.mxu0 0.0
      %5263 = vmatpush1.msra.mxu0 0.0
      %5264 = vmatprep.subr.mxu0 0.0
      %5265 = vmatpush1.msra.mxu0 0.0
      %5266 = vmatprep.subr.mxu0 0.0
      %5267 = vmatpush1.msra.mxu0 0.0
      %5268 = vmatprep.subr.mxu0 0.0
      %5269 = vmatpush1.msra.mxu0 0.0
      %5270 = vmatprep.subr.mxu0 0.0
      %5271 = vmatpush1.msra.mxu0 0.0
      %5272 = vmatprep.subr.mxu0 0.0
      %5273 = vmatpush1.msra.mxu0 0.0
      %5274 = vmatprep.subr.mxu0 0.0
      %5275 = vmatpush1.msra.mxu0 0.0
      %5276 = vmatprep.subr.mxu0 0.0
      %5277 = vmatpush1.msra.mxu0 0.0
      %5278 = vmatprep.subr.mxu0 0.0
      %5279 = vmatpush1.msra.mxu0 0.0
      %5280 = vmatprep.subr.mxu0 0.0
      %5281 = vmatpush1.msra.mxu0 0.0
      %5282 = vmatprep.subr.mxu0 0.0
      %5283 = vmatpush1.msra.mxu0 0.0
      %5284 = vmatprep.subr.mxu0 0.0
      %5285 = vmatpush1.msra.mxu0 0.0
      %5286 = vmatprep.subr.mxu0 0.0
      %5287 = vmatpush1.msra.mxu0 0.0
      %5288 = vmatprep.subr.mxu0 0.0
      %5289 = vmatpush1.msra.mxu0 0.0
      %5290 = vmatprep.subr.mxu0 0.0
      %5291 = vmatpush1.msra.mxu0 0.0
      %5292 = vmatprep.subr.mxu0 0.0
      %5293 = vmatpush1.msra.mxu0 0.0
      %5294 = vmatprep.subr.mxu0 0.0
      %5295 = vmatpush1.msra.mxu0 0.0
      %5296 = vmatprep.subr.mxu0 0.0
      %5297 = vmatpush1.msra.mxu0 0.0
      %5298 = vmatprep.subr.mxu0 0.0
      %5299 = vmatpush1.msra.mxu0 0.0
      %5300 = vmatprep.subr.mxu0 0.0
      %5301 = vmatpush1.msra.mxu0 0.0
      %5302 = vmatprep.subr.mxu0 0.0
      %5303 = vmatpush1.msra.mxu0 0.0
      %5304 = vmatprep.subr.mxu0 0.0
      %5305 = vmatpush1.msra.mxu0 0.0
      %5306 = vmatprep.subr.mxu0 0.0
      %5307 = vmatpush1.msra.mxu0 0.0
      %5308 = vmatprep.subr.mxu0 0.0
      %5309 = vmatpush1.msra.mxu0 0.0
      %5310 = vmatprep.subr.mxu0 0.0
      %5311 = vmatpush1.msra.mxu0 0.0
      %5312 = vmatprep.subr.mxu0 0.0
      %5313 = vmatpush1.msra.mxu0 0.0
      %5314 = vmatprep.subr.mxu0 0.0
      %5315 = vmatpush1.msra.mxu0 0.0
      %5316 = vmatprep.subr.mxu0 0.0
      %5317 = vmatpush1.msra.mxu0 0.0
      %5318 = vmatprep.mubr.f32.mxu0 0.0
      %5319 = vmatmul.mubr.f32.gmra.mrb[0].mxu0 %v5252
      %v5320 = vpop.f32.mrb[0].mxu0
      %v5321 = vadd.f32 0.0, %v5320
      %v5322 = vpop.f32.mrb[0].mxu0
      %5323 = vdwg.mxu0
      %v5325 = vsel %vm1047, %v5321, 0
      %5327 = vmatprep.subr.mxu0 0.0
      %5328 = vmatpush1.msra.mxu0 %v4678
      %5329 = vmatprep.subr.mxu0 0.0
      %5330 = vmatpush1.msra.mxu0 0.0
      %5331 = vmatprep.subr.mxu0 0.0
      %5332 = vmatpush1.msra.mxu0 0.0
      %5333 = vmatprep.subr.mxu0 0.0
      %5334 = vmatpush1.msra.mxu0 0.0
      %5335 = vmatprep.subr.mxu0 0.0
      %5336 = vmatpush1.msra.mxu0 0.0
      %5337 = vmatprep.subr.mxu0 0.0
      %5338 = vmatpush1.msra.mxu0 0.0
      %5339 = vmatprep.subr.mxu0 0.0
      %5340 = vmatpush1.msra.mxu0 0.0
      %5341 = vmatprep.subr.mxu0 0.0
      %5342 = vmatpush1.msra.mxu0 0.0
      %5343 = vmatprep.subr.mxu0 0.0
      %5344 = vmatpush1.msra.mxu0 0.0
      %5345 = vmatprep.subr.mxu0 0.0
      %5346 = vmatpush1.msra.mxu0 0.0
      %5347 = vmatprep.subr.mxu0 0.0
      %5348 = vmatpush1.msra.mxu0 0.0
      %5349 = vmatprep.subr.mxu0 0.0
      %5350 = vmatpush1.msra.mxu0 0.0
      %5351 = vmatprep.subr.mxu0 0.0
      %5352 = vmatpush1.msra.mxu0 0.0
      %5353 = vmatprep.subr.mxu0 0.0
      %5354 = vmatpush1.msra.mxu0 0.0
      %5355 = vmatprep.subr.mxu0 0.0
      %5356 = vmatpush1.msra.mxu0 0.0
      %5357 = vmatprep.subr.mxu0 0.0
      %5358 = vmatpush1.msra.mxu0 0.0
      %5359 = vmatprep.subr.mxu0 0.0
      %5360 = vmatpush1.msra.mxu0 0.0
      %5361 = vmatprep.subr.mxu0 0.0
      %5362 = vmatpush1.msra.mxu0 0.0
      %5363 = vmatprep.subr.mxu0 0.0
      %5364 = vmatpush1.msra.mxu0 0.0
      %5365 = vmatprep.subr.mxu0 0.0
      %5366 = vmatpush1.msra.mxu0 0.0
      %5367 = vmatprep.subr.mxu0 0.0
      %5368 = vmatpush1.msra.mxu0 0.0
      %5369 = vmatprep.subr.mxu0 0.0
      %5370 = vmatpush1.msra.mxu0 0.0
      %5371 = vmatprep.subr.mxu0 0.0
      %5372 = vmatpush1.msra.mxu0 0.0
      %5373 = vmatprep.subr.mxu0 0.0
      %5374 = vmatpush1.msra.mxu0 0.0
      %5375 = vmatprep.subr.mxu0 0.0
      %5376 = vmatpush1.msra.mxu0 0.0
      %5377 = vmatprep.subr.mxu0 0.0
      %5378 = vmatpush1.msra.mxu0 0.0
      %5379 = vmatprep.subr.mxu0 0.0
      %5380 = vmatpush1.msra.mxu0 0.0
      %5381 = vmatprep.subr.mxu0 0.0
      %5382 = vmatpush1.msra.mxu0 0.0
      %5383 = vmatprep.subr.mxu0 0.0
      %5384 = vmatpush1.msra.mxu0 0.0
      %5385 = vmatprep.subr.mxu0 0.0
      %5386 = vmatpush1.msra.mxu0 0.0
      %5387 = vmatprep.subr.mxu0 0.0
      %5388 = vmatpush1.msra.mxu0 0.0
      %5389 = vmatprep.subr.mxu0 0.0
      %5390 = vmatpush1.msra.mxu0 0.0
      %5391 = vmatprep.mubr.f32.mxu0 0.0
      %5392 = vmatmul.mubr.f32.gmra.mrb[0].mxu0 %v5325
      %v5393 = vpop.f32.mrb[0].mxu0
      %v5394 = vadd.f32 0.0, %v5393
      %v5395 = vpop.f32.mrb[0].mxu0
      %5396 = vdwg.mxu0
      %v5397 = vadd.f32 %v5155, %v5394
      %5398 = vrot.lane.b32.xlu0 %v4589, 104
      %v5399 = vpop.permute.xlu0 %5398
      %5400 = vrot.lane.b32.xlu0 %v4672, 104
      %v5401 = vpop.permute.xlu0 %5400
      %v5402 = vsel %vm1047, %v5399, 0
      %v5404 = vsel %vm1047, %v5401, 0
      %5406 = vmatprep.subr.mxu0 0.0
      %5407 = vmatpush1.xpose.msra.mxu0 %v5404
      %5408 = vmatprep.subr.mxu0 0.0
      %5409 = vmatpush1.xpose.msra.mxu0 0.0
      %5410 = vmatprep.subr.mxu0 0.0
      %5411 = vmatpush1.xpose.msra.mxu0 0.0
      %5412 = vmatprep.subr.mxu0 0.0
      %5413 = vmatpush1.xpose.msra.mxu0 0.0
      %5414 = vmatprep.subr.mxu0 0.0
      %5415 = vmatpush1.xpose.msra.mxu0 0.0
      %5416 = vmatprep.subr.mxu0 0.0
      %5417 = vmatpush1.xpose.msra.mxu0 0.0
      %5418 = vmatprep.subr.mxu0 0.0
      %5419 = vmatpush1.xpose.msra.mxu0 0.0
      %5420 = vmatprep.subr.mxu0 0.0
      %5421 = vmatpush1.xpose.msra.mxu0 0.0
      %5422 = vmatprep.subr.mxu0 0.0
      %5423 = vmatpush1.xpose.msra.mxu0 0.0
      %5424 = vmatprep.subr.mxu0 0.0
      %5425 = vmatpush1.xpose.msra.mxu0 0.0
      %5426 = vmatprep.subr.mxu0 0.0
      %5427 = vmatpush1.xpose.msra.mxu0 0.0
      %5428 = vmatprep.subr.mxu0 0.0
      %5429 = vmatpush1.xpose.msra.mxu0 0.0
      %5430 = vmatprep.subr.mxu0 0.0
      %5431 = vmatpush1.xpose.msra.mxu0 0.0
      %5432 = vmatprep.subr.mxu0 0.0
      %5433 = vmatpush1.xpose.msra.mxu0 0.0
      %5434 = vmatprep.subr.mxu0 0.0
      %5435 = vmatpush1.xpose.msra.mxu0 0.0
      %5436 = vmatprep.subr.mxu0 0.0
      %5437 = vmatpush1.xpose.msra.mxu0 0.0
      %5438 = vmatprep.subr.mxu0 0.0
      %5439 = vmatpush1.xpose.msra.mxu0 0.0
      %5440 = vmatprep.subr.mxu0 0.0
      %5441 = vmatpush1.xpose.msra.mxu0 0.0
      %5442 = vmatprep.subr.mxu0 0.0
      %5443 = vmatpush1.xpose.msra.mxu0 0.0
      %5444 = vmatprep.subr.mxu0 0.0
      %5445 = vmatpush1.xpose.msra.mxu0 0.0
      %5446 = vmatprep.subr.mxu0 0.0
      %5447 = vmatpush1.xpose.msra.mxu0 0.0
      %5448 = vmatprep.subr.mxu0 0.0
      %5449 = vmatpush1.xpose.msra.mxu0 0.0
      %5450 = vmatprep.subr.mxu0 0.0
      %5451 = vmatpush1.xpose.msra.mxu0 0.0
      %5452 = vmatprep.subr.mxu0 0.0
      %5453 = vmatpush1.xpose.msra.mxu0 0.0
      %5454 = vmatprep.subr.mxu0 0.0
      %5455 = vmatpush1.xpose.msra.mxu0 0.0
      %5456 = vmatprep.subr.mxu0 0.0
      %5457 = vmatpush1.xpose.msra.mxu0 0.0
      %5458 = vmatprep.subr.mxu0 0.0
      %5459 = vmatpush1.xpose.msra.mxu0 0.0
      %5460 = vmatprep.subr.mxu0 0.0
      %5461 = vmatpush1.xpose.msra.mxu0 0.0
      %5462 = vmatprep.subr.mxu0 0.0
      %5463 = vmatpush1.xpose.msra.mxu0 0.0
      %5464 = vmatprep.subr.mxu0 0.0
      %5465 = vmatpush1.xpose.msra.mxu0 0.0
      %5466 = vmatprep.subr.mxu0 0.0
      %5467 = vmatpush1.xpose.msra.mxu0 0.0
      %5468 = vmatprep.subr.mxu0 0.0
      %5469 = vmatpush1.xpose.msra.mxu0 0.0
      %5470 = vmatprep.mubr.f32.mxu0 0.0
      %5471 = vmatmul.mubr.f32.gmra.mrb[0].mxu0 %v5402
      %v5472 = vpop.f32.mrb[0].mxu0
      %v5473 = vadd.f32 0.0, %v5472
      %v5474 = vpop.f32.mrb[0].mxu0
      %5475 = vdwg.mxu0
      %v5476 = vmul.f32 %v5473, 0.35355338
      %v5477 = vsel %vm1047, %v5476, -inf
      %5478 = vmax.xlane.f32.xlu0 %v5477
      %v5479 = vpop.xlane.xlu0 %5478
      %v5480 = vsub.f32 %v5476, %v5479
      %v5481 = vmul.f32 %v5480, 1.442695
      %v5482 = vpow.pop %v5481
      %v5483 = vsel %vm1047, %v5482, 0.0
      %5484 = vadd.xlane.f32.xlu0 %v5483
      %v5485 = vpop.xlane.xlu0 %5484
      %v5486 = vrcp.pop %v5485
      %v5487 = vmul.f32 %v5482, %v5486
      %5488 = vrot.lane.b32.xlu0 %v4672, 72
      %v5489 = vpop.permute.xlu0 %5488
      %v5492 = vsel %vm1047, %v5487, 0
      %5494 = vmatprep.subr.mxu0 0.0
      %5495 = vmatpush1.msra.mxu0 %v5489
      %5496 = vmatprep.subr.mxu0 0.0
      %5497 = vmatpush1.msra.mxu0 0.0
      %5498 = vmatprep.subr.mxu0 0.0
      %5499 = vmatpush1.msra.mxu0 0.0
      %5500 = vmatprep.subr.mxu0 0.0
      %5501 = vmatpush1.msra.mxu0 0.0
      %5502 = vmatprep.subr.mxu0 0.0
      %5503 = vmatpush1.msra.mxu0 0.0
      %5504 = vmatprep.subr.mxu0 0.0
      %5505 = vmatpush1.msra.mxu0 0.0
      %5506 = vmatprep.subr.mxu0 0.0
      %5507 = vmatpush1.msra.mxu0 0.0
      %5508 = vmatprep.subr.mxu0 0.0
      %5509 = vmatpush1.msra.mxu0 0.0
      %5510 = vmatprep.subr.mxu0 0.0
      %5511 = vmatpush1.msra.mxu0 0.0
      %5512 = vmatprep.subr.mxu0 0.0
      %5513 = vmatpush1.msra.mxu0 0.0
      %5514 = vmatprep.subr.mxu0 0.0
      %5515 = vmatpush1.msra.mxu0 0.0
      %5516 = vmatprep.subr.mxu0 0.0
      %5517 = vmatpush1.msra.mxu0 0.0
      %5518 = vmatprep.subr.mxu0 0.0
      %5519 = vmatpush1.msra.mxu0 0.0
      %5520 = vmatprep.subr.mxu0 0.0
      %5521 = vmatpush1.msra.mxu0 0.0
      %5522 = vmatprep.subr.mxu0 0.0
      %5523 = vmatpush1.msra.mxu0 0.0
      %5524 = vmatprep.subr.mxu0 0.0
      %5525 = vmatpush1.msra.mxu0 0.0
      %5526 = vmatprep.subr.mxu0 0.0
      %5527 = vmatpush1.msra.mxu0 0.0
      %5528 = vmatprep.subr.mxu0 0.0
      %5529 = vmatpush1.msra.mxu0 0.0
      %5530 = vmatprep.subr.mxu0 0.0
      %5531 = vmatpush1.msra.mxu0 0.0
      %5532 = vmatprep.subr.mxu0 0.0
      %5533 = vmatpush1.msra.mxu0 0.0
      %5534 = vmatprep.subr.mxu0 0.0
      %5535 = vmatpush1.msra.mxu0 0.0
      %5536 = vmatprep.subr.mxu0 0.0
      %5537 = vmatpush1.msra.mxu0 0.0
      %5538 = vmatprep.subr.mxu0 0.0
      %5539 = vmatpush1.msra.mxu0 0.0
      %5540 = vmatprep.subr.mxu0 0.0
      %5541 = vmatpush1.msra.mxu0 0.0
      %5542 = vmatprep.subr.mxu0 0.0
      %5543 = vmatpush1.msra.mxu0 0.0
      %5544 = vmatprep.subr.mxu0 0.0
      %5545 = vmatpush1.msra.mxu0 0.0
      %5546 = vmatprep.subr.mxu0 0.0
      %5547 = vmatpush1.msra.mxu0 0.0
      %5548 = vmatprep.subr.mxu0 0.0
      %5549 = vmatpush1.msra.mxu0 0.0
      %5550 = vmatprep.subr.mxu0 0.0
      %5551 = vmatpush1.msra.mxu0 0.0
      %5552 = vmatprep.subr.mxu0 0.0
      %5553 = vmatpush1.msra.mxu0 0.0
      %5554 = vmatprep.subr.mxu0 0.0
      %5555 = vmatpush1.msra.mxu0 0.0
      %5556 = vmatprep.subr.mxu0 0.0
      %5557 = vmatpush1.msra.mxu0 0.0
      %5558 = vmatprep.mubr.f32.mxu0 0.0
      %5559 = vmatmul.mubr.f32.gmra.mrb[0].mxu0 %v5492
      %v5560 = vpop.f32.mrb[0].mxu0
      %v5561 = vadd.f32 0.0, %v5560
      %v5562 = vpop.f32.mrb[0].mxu0
      %5563 = vdwg.mxu0
      %v5565 = vsel %vm1047, %v5561, 0
      %5567 = vmatprep.subr.mxu0 0.0
      %5568 = vmatpush1.msra.mxu0 %v4679
      %5569 = vmatprep.subr.mxu0 0.0
      %5570 = vmatpush1.msra.mxu0 0.0
      %5571 = vmatprep.subr.mxu0 0.0
      %5572 = vmatpush1.msra.mxu0 0.0
      %5573 = vmatprep.subr.mxu0 0.0
      %5574 = vmatpush1.msra.mxu0 0.0
      %5575 = vmatprep.subr.mxu0 0.0
      %5576 = vmatpush1.msra.mxu0 0.0
      %5577 = vmatprep.subr.mxu0 0.0
      %5578 = vmatpush1.msra.mxu0 0.0
      %5579 = vmatprep.subr.mxu0 0.0
      %5580 = vmatpush1.msra.mxu0 0.0
      %5581 = vmatprep.subr.mxu0 0.0
      %5582 = vmatpush1.msra.mxu0 0.0
      %5583 = vmatprep.subr.mxu0 0.0
      %5584 = vmatpush1.msra.mxu0 0.0
      %5585 = vmatprep.subr.mxu0 0.0
      %5586 = vmatpush1.msra.mxu0 0.0
      %5587 = vmatprep.subr.mxu0 0.0
      %5588 = vmatpush1.msra.mxu0 0.0
      %5589 = vmatprep.subr.mxu0 0.0
      %5590 = vmatpush1.msra.mxu0 0.0
      %5591 = vmatprep.subr.mxu0 0.0
      %5592 = vmatpush1.msra.mxu0 0.0
      %5593 = vmatprep.subr.mxu0 0.0
      %5594 = vmatpush1.msra.mxu0 0.0
      %5595 = vmatprep.subr.mxu0 0.0
      %5596 = vmatpush1.msra.mxu0 0.0
      %5597 = vmatprep.subr.mxu0 0.0
      %5598 = vmatpush1.msra.mxu0 0.0
      %5599 = vmatprep.subr.mxu0 0.0
      %5600 = vmatpush1.msra.mxu0 0.0
      %5601 = vmatprep.subr.mxu0 0.0
      %5602 = vmatpush1.msra.mxu0 0.0
      %5603 = vmatprep.subr.mxu0 0.0
      %5604 = vmatpush1.msra.mxu0 0.0
      %5605 = vmatprep.subr.mxu0 0.0
      %5606 = vmatpush1.msra.mxu0 0.0
      %5607 = vmatprep.subr.mxu0 0.0
      %5608 = vmatpush1.msra.mxu0 0.0
      %5609 = vmatprep.subr.mxu0 0.0
      %5610 = vmatpush1.msra.mxu0 0.0
      %5611 = vmatprep.subr.mxu0 0.0
      %5612 = vmatpush1.msra.mxu0 0.0
      %5613 = vmatprep.subr.mxu0 0.0
      %5614 = vmatpush1.msra.mxu0 0.0
      %5615 = vmatprep.subr.mxu0 0.0
      %5616 = vmatpush1.msra.mxu0 0.0
      %5617 = vmatprep.subr.mxu0 0.0
      %5618 = vmatpush1.msra.mxu0 0.0
      %5619 = vmatprep.subr.mxu0 0.0
      %5620 = vmatpush1.msra.mxu0 0.0
      %5621 = vmatprep.subr.mxu0 0.0
      %5622 = vmatpush1.msra.mxu0 0.0
      %5623 = vmatprep.subr.mxu0 0.0
      %5624 = vmatpush1.msra.mxu0 0.0
      %5625 = vmatprep.subr.mxu0 0.0
      %5626 = vmatpush1.msra.mxu0 0.0
      %5627 = vmatprep.subr.mxu0 0.0
      %5628 = vmatpush1.msra.mxu0 0.0
      %5629 = vmatprep.subr.mxu0 0.0
      %5630 = vmatpush1.msra.mxu0 0.0
      %5631 = vmatprep.mubr.f32.mxu0 0.0
      %5632 = vmatmul.mubr.f32.gmra.mrb[0].mxu0 %v5565
      %v5633 = vpop.f32.mrb[0].mxu0
      %v5634 = vadd.f32 0.0, %v5633
      %v5635 = vpop.f32.mrb[0].mxu0
      %5636 = vdwg.mxu0
      %v5637 = vadd.f32 %v5397, %v5634
      %v5639 = vlaneseq
      %v5640 = vshrl.u32 %v5639, 7
      %v5641 = vsub.s32 0, %v5640
      %v5642 = vrot.slane %v4681, %v5641
      %v5644 = vadd.f32 %v5637, %v5642
      %s5645 = scalar_lea.vmem %s18, 1
      %v5646 = vld [vmem:[%s5645] sm:$0x1]
      %s5647 = scalar_lea.vmem %s19, 1
      %v5648 = vld [vmem:[%s5647] sm:$0x1]
      %v5649 = vadd.f32 %v4505, %v5644
      %v5650 = vsel %vm965, %v5649, 0.0
      %5651 = vadd.xlane.f32.xlu0 %v5650
      %v5652 = vpop.xlane.xlu0 %5651
      %v5653 = vmul.f32 %v5652, %v2019
      %v5654 = vsub.f32 %v5649, %v5653
      %v5655 = vmul.f32 %v5654, %v5654
      %v5656 = vsel %vm965, %v5655, 0.0
      %5657 = vadd.xlane.f32.xlu0 %v5656
      %v5658 = vpop.xlane.xlu0 %5657
      %v5659 = vmul.f32 %v5658, %v2019
      %v5660 = vadd.f32 %v5659, 1e-05
      %v5661 = vrsqrt.pop %v5660
      %v5662 = vmul.f32 %v5654, %v5661
      %v5664 = vlaneseq
      %v5665 = vshrl.u32 %v5664, 7
      %v5666 = vsub.s32 0, %v5665
      %v5667 = vrot.slane %v5646, %v5666
      %v5669 = vmul.f32 %v5662, %v5667
      %v5671 = vlaneseq
      %v5672 = vshrl.u32 %v5671, 7
      %v5673 = vsub.s32 0, %v5672
      %v5674 = vrot.slane %v5648, %v5673
      %v5676 = vadd.f32 %v5669, %v5674
      %s5677 = scalar_lea.vmem %s22, 32
      %v5678 = vld [vmem:[%s5677] sm:$0xff]
      %v5679 = vld [vmem:[%s5677 + $0x8] sm:$0xff]
      %v5680 = vld [vmem:[%s5677 + $0x10] sm:$0xff]
      %v5681 = vld [vmem:[%s5677 + $0x18] sm:$0xff]
      %s5682 = scalar_lea.vmem %s23, 1
      %v5683 = vld [vmem:[%s5682] sm:$0x1]
      %v5685 = vlaneseq
      %v5686 = vshrl.u32 %v5685, 7
      %v5687 = vsub.s32 0, %v5686
      %v5688 = vrot.slane %v5683, %v5687
      %v5691 = vsel %vm965, %v5676, 0
      %5693 = vmatprep.subr.mxu0 0.0
      %5694 = vmatpush1.msra.mxu0 %v5678
      %5695 = vmatprep.subr.mxu0 0.0
      %5696 = vmatpush1.msra.mxu0 %v5679
      %5697 = vmatprep.subr.mxu0 0.0
      %5698 = vmatpush1.msra.mxu0 %v5680
      %5699 = vmatprep.subr.mxu0 0.0
      %5700 = vmatpush1.msra.mxu0 %v5681
      %5701 = vmatprep.subr.mxu0 0.0
      %5702 = vmatpush1.msra.mxu0 0.0
      %5703 = vmatprep.subr.mxu0 0.0
      %5704 = vmatpush1.msra.mxu0 0.0
      %5705 = vmatprep.subr.mxu0 0.0
      %5706 = vmatpush1.msra.mxu0 0.0
      %5707 = vmatprep.subr.mxu0 0.0
      %5708 = vmatpush1.msra.mxu0 0.0
      %5709 = vmatprep.subr.mxu0 0.0
      %5710 = vmatpush1.msra.mxu0 0.0
      %5711 = vmatprep.subr.mxu0 0.0
      %5712 = vmatpush1.msra.mxu0 0.0
      %5713 = vmatprep.subr.mxu0 0.0
      %5714 = vmatpush1.msra.mxu0 0.0
      %5715 = vmatprep.subr.mxu0 0.0
      %5716 = vmatpush1.msra.mxu0 0.0
      %5717 = vmatprep.subr.mxu0 0.0
      %5718 = vmatpush1.msra.mxu0 0.0
      %5719 = vmatprep.subr.mxu0 0.0
      %5720 = vmatpush1.msra.mxu0 0.0
      %5721 = vmatprep.subr.mxu0 0.0
      %5722 = vmatpush1.msra.mxu0 0.0
      %5723 = vmatprep.subr.mxu0 0.0
      %5724 = vmatpush1.msra.mxu0 0.0
      %5725 = vmatprep.subr.mxu0 0.0
      %5726 = vmatpush1.msra.mxu0 0.0
      %5727 = vmatprep.subr.mxu0 0.0
      %5728 = vmatpush1.msra.mxu0 0.0
      %5729 = vmatprep.subr.mxu0 0.0
      %5730 = vmatpush1.msra.mxu0 0.0
      %5731 = vmatprep.subr.mxu0 0.0
      %5732 = vmatpush1.msra.mxu0 0.0
      %5733 = vmatprep.subr.mxu0 0.0
      %5734 = vmatpush1.msra.mxu0 0.0
      %5735 = vmatprep.subr.mxu0 0.0
      %5736 = vmatpush1.msra.mxu0 0.0
      %5737 = vmatprep.subr.mxu0 0.0
      %5738 = vmatpush1.msra.mxu0 0.0
      %5739 = vmatprep.subr.mxu0 0.0
      %5740 = vmatpush1.msra.mxu0 0.0
      %5741 = vmatprep.subr.mxu0 0.0
      %5742 = vmatpush1.msra.mxu0 0.0
      %5743 = vmatprep.subr.mxu0 0.0
      %5744 = vmatpush1.msra.mxu0 0.0
      %5745 = vmatprep.subr.mxu0 0.0
      %5746 = vmatpush1.msra.mxu0 0.0
      %5747 = vmatprep.subr.mxu0 0.0
      %5748 = vmatpush1.msra.mxu0 0.0
      %5749 = vmatprep.subr.mxu0 0.0
      %5750 = vmatpush1.msra.mxu0 0.0
      %5751 = vmatprep.subr.mxu0 0.0
      %5752 = vmatpush1.msra.mxu0 0.0
      %5753 = vmatprep.subr.mxu0 0.0
      %5754 = vmatpush1.msra.mxu0 0.0
      %5755 = vmatprep.subr.mxu0 0.0
      %5756 = vmatpush1.msra.mxu0 0.0
      %5757 = vmatprep.mubr.f32.mxu0 0.0
      %5758 = vmatmul.mubr.f32.gmra.mrb[0].mxu0 %v5691
      %v5759 = vpop.f32.mrb[0].mxu0
      %v5760 = vadd.f32 %v5688, %v5759
      %v5761 = vpop.f32.mrb[0].mxu0
      %5762 = vdwg.mxu0
      %v5763 = vmax.f32 %v5760, 0.0
      %s5764 = scalar_lea.vmem %s24, 64
      %v5765 = vld [vmem:[%s5764] sm:$0xff]
      %v5766 = vld [vmem:[%s5764 + $0x8] sm:$0xff]
      %v5767 = vld [vmem:[%s5764 + $0x10] sm:$0xff]
      %v5768 = vld [vmem:[%s5764 + $0x18] sm:$0xff]
      %v5769 = vld [vmem:[%s5764 + $0x20] sm:$0xff]
      %v5770 = vld [vmem:[%s5764 + $0x28] sm:$0xff]
      %v5771 = vld [vmem:[%s5764 + $0x30] sm:$0xff]
      %v5772 = vld [vmem:[%s5764 + $0x38] sm:$0xff]
      %s5773 = scalar_lea.vmem %s25, 1
      %v5774 = vld [vmem:[%s5773] sm:$0x1]
      %v5776 = vlaneseq
      %v5777 = vshrl.u32 %v5776, 7
      %v5778 = vsub.s32 0, %v5777
      %v5779 = vrot.slane %v5774, %v5778
      %v5782 = vsel %vm874, %v5763, 0
      %5784 = vmatprep.subr.mxu0 0.0
      %5785 = vmatpush1.msra.mxu0 %v5765
      %5786 = vmatprep.subr.mxu0 0.0
      %5787 = vmatpush1.msra.mxu0 %v5766
      %5788 = vmatprep.subr.mxu0 0.0
      %5789 = vmatpush1.msra.mxu0 %v5767
      %5790 = vmatprep.subr.mxu0 0.0
      %5791 = vmatpush1.msra.mxu0 %v5768
      %5792 = vmatprep.subr.mxu0 0.0
      %5793 = vmatpush1.msra.mxu0 %v5769
      %5794 = vmatprep.subr.mxu0 0.0
      %5795 = vmatpush1.msra.mxu0 %v5770
      %5796 = vmatprep.subr.mxu0 0.0
      %5797 = vmatpush1.msra.mxu0 %v5771
      %5798 = vmatprep.subr.mxu0 0.0
      %5799 = vmatpush1.msra.mxu0 %v5772
      %5800 = vmatprep.subr.mxu0 0.0
      %5801 = vmatpush1.msra.mxu0 0.0
      %5802 = vmatprep.subr.mxu0 0.0
      %5803 = vmatpush1.msra.mxu0 0.0
      %5804 = vmatprep.subr.mxu0 0.0
      %5805 = vmatpush1.msra.mxu0 0.0
      %5806 = vmatprep.subr.mxu0 0.0
      %5807 = vmatpush1.msra.mxu0 0.0
      %5808 = vmatprep.subr.mxu0 0.0
      %5809 = vmatpush1.msra.mxu0 0.0
      %5810 = vmatprep.subr.mxu0 0.0
      %5811 = vmatpush1.msra.mxu0 0.0
      %5812 = vmatprep.subr.mxu0 0.0
      %5813 = vmatpush1.msra.mxu0 0.0
      %5814 = vmatprep.subr.mxu0 0.0
      %5815 = vmatpush1.msra.mxu0 0.0
      %5816 = vmatprep.subr.mxu0 0.0
      %5817 = vmatpush1.msra.mxu0 0.0
      %5818 = vmatprep.subr.mxu0 0.0
      %5819 = vmatpush1.msra.mxu0 0.0
      %5820 = vmatprep.subr.mxu0 0.0
      %5821 = vmatpush1.msra.mxu0 0.0
      %5822 = vmatprep.subr.mxu0 0.0
      %5823 = vmatpush1.msra.mxu0 0.0
      %5824 = vmatprep.subr.mxu0 0.0
      %5825 = vmatpush1.msra.mxu0 0.0
      %5826 = vmatprep.subr.mxu0 0.0
      %5827 = vmatpush1.msra.mxu0 0.0
      %5828 = vmatprep.subr.mxu0 0.0
      %5829 = vmatpush1.msra.mxu0 0.0
      %5830 = vmatprep.subr.mxu0 0.0
      %5831 = vmatpush1.msra.mxu0 0.0
      %5832 = vmatprep.subr.mxu0 0.0
      %5833 = vmatpush1.msra.mxu0 0.0
      %5834 = vmatprep.subr.mxu0 0.0
      %5835 = vmatpush1.msra.mxu0 0.0
      %5836 = vmatprep.subr.mxu0 0.0
      %5837 = vmatpush1.msra.mxu0 0.0
      %5838 = vmatprep.subr.mxu0 0.0
      %5839 = vmatpush1.msra.mxu0 0.0
      %5840 = vmatprep.subr.mxu0 0.0
      %5841 = vmatpush1.msra.mxu0 0.0
      %5842 = vmatprep.subr.mxu0 0.0
      %5843 = vmatpush1.msra.mxu0 0.0
      %5844 = vmatprep.subr.mxu0 0.0
      %5845 = vmatpush1.msra.mxu0 0.0
      %5846 = vmatprep.subr.mxu0 0.0
      %5847 = vmatpush1.msra.mxu0 0.0
      %5848 = vmatprep.mubr.f32.mxu0 0.0
      %5849 = vmatmul.mubr.f32.gmra.mrb[0].mxu0 %v5782
      %v5850 = vpop.f32.mrb[0].mxu0
      %v5851 = vadd.f32 %v5779, %v5850
      %v5852 = vpop.f32.mrb[0].mxu0
      %5853 = vdwg.mxu0
      %s5854 = scalar_lea.vmem %s20, 1
      %v5855 = vld [vmem:[%s5854] sm:$0x1]
      %s5856 = scalar_lea.vmem %s21, 1
      %v5857 = vld [vmem:[%s5856] sm:$0x1]
      %v5858 = vadd.f32 %v5676, %v5851
      %v5859 = vsel %vm965, %v5858, 0.0
      %5860 = vadd.xlane.f32.xlu0 %v5859
      %v5861 = vpop.xlane.xlu0 %5860
      %v5862 = vmul.f32 %v5861, %v2019
      %v5863 = vsub.f32 %v5858, %v5862
      %v5864 = vmul.f32 %v5863, %v5863
      %v5865 = vsel %vm965, %v5864, 0.0
      %5866 = vadd.xlane.f32.xlu0 %v5865
      %v5867 = vpop.xlane.xlu0 %5866
      %v5868 = vmul.f32 %v5867, %v2019
      %v5869 = vadd.f32 %v5868, 1e-05
      %v5870 = vrsqrt.pop %v5869
      %v5871 = vmul.f32 %v5863, %v5870
      %v5873 = vlaneseq
      %v5874 = vshrl.u32 %v5873, 7
      %v5875 = vsub.s32 0, %v5874
      %v5876 = vrot.slane %v5855, %v5875
      %v5878 = vmul.f32 %v5871, %v5876
      %v5880 = vlaneseq
      %v5881 = vshrl.u32 %v5880, 7
      %v5882 = vsub.s32 0, %v5881
      %v5883 = vrot.slane %v5857, %v5882
      %v5885 = vadd.f32 %v5878, %v5883
      %v5886 = vld [vmem:[%s26] sm:$0xff]
      %v5887 = vld [vmem:[%s26 + $0x8] sm:$0xff]
      %v5888 = vld [vmem:[%s26 + $0x10] sm:$0xff]
      %v5889 = vld [vmem:[%s26 + $0x18] sm:$0xff]
      %v5890 = vld [vmem:[%s27] sm:$0x1]
      %v5892 = vlaneseq
      %v5893 = vshrl.u32 %v5892, 7
      %v5894 = vsub.s32 0, %v5893
      %v5895 = vrot.slane %v5890, %v5894
      %v5898 = vsel %vm965, %v5885, 0
      %5900 = vmatprep.subr.mxu0 0.0
      %5901 = vmatpush1.msra.mxu0 %v5886
      %5902 = vmatprep.subr.mxu0 0.0
      %5903 = vmatpush1.msra.mxu0 %v5887
      %5904 = vmatprep.subr.mxu0 0.0
      %5905 = vmatpush1.msra.mxu0 %v5888
      %5906 = vmatprep.subr.mxu0 0.0
      %5907 = vmatpush1.msra.mxu0 %v5889
      %5908 = vmatprep.subr.mxu0 0.0
      %5909 = vmatpush1.msra.mxu0 0.0
      %5910 = vmatprep.subr.mxu0 0.0
      %5911 = vmatpush1.msra.mxu0 0.0
      %5912 = vmatprep.subr.mxu0 0.0
      %5913 = vmatpush1.msra.mxu0 0.0
      %5914 = vmatprep.subr.mxu0 0.0
      %5915 = vmatpush1.msra.mxu0 0.0
      %5916 = vmatprep.subr.mxu0 0.0
      %5917 = vmatpush1.msra.mxu0 0.0
      %5918 = vmatprep.subr.mxu0 0.0
      %5919 = vmatpush1.msra.mxu0 0.0
      %5920 = vmatprep.subr.mxu0 0.0
      %5921 = vmatpush1.msra.mxu0 0.0
      %5922 = vmatprep.subr.mxu0 0.0
      %5923 = vmatpush1.msra.mxu0 0.0
      %5924 = vmatprep.subr.mxu0 0.0
      %5925 = vmatpush1.msra.mxu0 0.0
      %5926 = vmatprep.subr.mxu0 0.0
      %5927 = vmatpush1.msra.mxu0 0.0
      %5928 = vmatprep.subr.mxu0 0.0
      %5929 = vmatpush1.msra.mxu0 0.0
      %5930 = vmatprep.subr.mxu0 0.0
      %5931 = vmatpush1.msra.mxu0 0.0
      %5932 = vmatprep.subr.mxu0 0.0
      %5933 = vmatpush1.msra.mxu0 0.0
      %5934 = vmatprep.subr.mxu0 0.0
      %5935 = vmatpush1.msra.mxu0 0.0
      %5936 = vmatprep.subr.mxu0 0.0
      %5937 = vmatpush1.msra.mxu0 0.0
      %5938 = vmatprep.subr.mxu0 0.0
      %5939 = vmatpush1.msra.mxu0 0.0
      %5940 = vmatprep.subr.mxu0 0.0
      %5941 = vmatpush1.msra.mxu0 0.0
      %5942 = vmatprep.subr.mxu0 0.0
      %5943 = vmatpush1.msra.mxu0 0.0
      %5944 = vmatprep.subr.mxu0 0.0
      %5945 = vmatpush1.msra.mxu0 0.0
      %5946 = vmatprep.subr.mxu0 0.0
      %5947 = vmatpush1.msra.mxu0 0.0
      %5948 = vmatprep.subr.mxu0 0.0
      %5949 = vmatpush1.msra.mxu0 0.0
      %5950 = vmatprep.subr.mxu0 0.0
      %5951 = vmatpush1.msra.mxu0 0.0
      %5952 = vmatprep.subr.mxu0 0.0
      %5953 = vmatpush1.msra.mxu0 0.0
      %5954 = vmatprep.subr.mxu0 0.0
      %5955 = vmatpush1.msra.mxu0 0.0
      %5956 = vmatprep.subr.mxu0 0.0
      %5957 = vmatpush1.msra.mxu0 0.0
      %5958 = vmatprep.subr.mxu0 0.0
      %5959 = vmatpush1.msra.mxu0 0.0
      %5960 = vmatprep.subr.mxu0 0.0
      %5961 = vmatpush1.msra.mxu0 0.0
      %5962 = vmatprep.subr.mxu0 0.0
      %5963 = vmatpush1.msra.mxu0 0.0
      %5964 = vmatprep.mubr.f32.mxu0 0.0
      %5965 = vmatmul.mubr.f32.gmra.mrb[0].mxu0 %v5898
      %v5966 = vpop.f32.mrb[0].mxu0
      %v5967 = vadd.f32 %v5895, %v5966
      %v5968 = vpop.f32.mrb[0].mxu0
      %5969 = vdwg.mxu0
      %5970 = vst [vmem:[%s857] sm:$0xff] %v5967
      %p5971 = scmp.lt.s32.totalorder %s39, 1
      %s5972 = scalar_select %p5971, %s39, 1
      %s5973 = smul.addr %s5972, 8
      %s5974 = scalar_lea.vmem %s28, %s5973
      // Predicated region
      $region133: #{caption_passt_forward.1} parent=131 // pred_check
        %p5975 = pneg %p655
      $region134: #{caption_passt_forward.1} parent=131 // pred_check_branch
        %5977 = sbr.rel (%p5975) target = $region136
      $region135: #{caption_passt_forward.1} parent=131 // pred_region
        _
      $region136: #{caption_passt_forward.1} parent=131 // pred_fallthru
        _
    $region132: #{caption_passt_forward.1} parent=5 // pred_fallthru
      _
    %p5978 = scmp.le.s32.totalorder 2, %s34
    // Predicated region
    $region137: #{caption_passt_forward.1} parent=5 // pred_check
      %p5979 = pneg %p5978
    $region138: #{caption_passt_forward.1} parent=5 // pred_check_branch
      %5981 = sbr.rel (%p5979) target = $region140
    $region139: #{caption_passt_forward.1} parent=5 // pred_region
      %s5982 = ssub.s32 %s34, 2
      // Predicated region
      $region141: #{caption_passt_forward.1} parent=139 // pred_check
        %p5983 = pneg %p661
      $region142: #{caption_passt_forward.1} parent=139 // pred_check_branch
        %5985 = sbr.rel (%p5983) target = $region144
      $region143: #{caption_passt_forward.1} parent=139 // pred_region
        %p5986 = scmp.lt.s32.totalorder %s40, 1
        %s5987 = scalar_select %p5986, %s40, 1
        %s5988 = smul.addr %s5987, 8
        %s5989 = scalar_lea.vmem %s28, %s5988
      $region144: #{caption_passt_forward.1} parent=139 // pred_fallthru
        _
    $region140: #{caption_passt_forward.1} parent=5 // pred_fallthru
      _
  $region6: #{caption_passt_forward.1} parent=0 // loop_footer
    %s38 = sadd.s32 1, %s34
  $region7: #{caption_passt_forward.1} parent=0 // loop_footer_branch
    %33 = sbr.rel target = $region3
  $region8: #{caption_passt_forward.1} parent=0 // loop_exit
    _

</llo_original>
